<compile_context>
chip_gen: v7x
topology: tpu7x:2x2x1
jax: 0.10.0
libtpu: 0.0.40
codegen_flags: <defaults>
</compile_context>

<pallas_src>
import functools

import jax
import jax.numpy as jnp
from jax import lax
from jax.experimental import pallas as pl
from jax.experimental.pallas import tpu as pltpu


# ----------------------------- kernel ---------------------------------------


def _gates_to_hc(gates, c, HP):
    """PyTorch gate order [i, f, g, o]; each gate occupies an aligned HP block."""
    i = jax.nn.sigmoid(gates[:, 0 * HP:1 * HP])
    f = jax.nn.sigmoid(gates[:, 1 * HP:2 * HP])
    g = jnp.tanh(gates[:, 2 * HP:3 * HP])
    o = jax.nn.sigmoid(gates[:, 3 * HP:4 * HP])
    c_new = f * c + i * g
    h_new = o * jnp.tanh(c_new)
    return h_new, c_new


def bidir_lstm_kernel(
        x_ref,                                   # (T, BT, DP)   proj dtype
        wih0_ref, b0_ref,                        # (DP, 8HP) proj, (1, 8HP) f32
        whh0_ref,                                # (2HP, 8HP) f32, block-diagonal
        wih1f_ref, b1f_ref, whh1f_ref,           # (2HP,4HP) proj, (1,4HP), (HP,4HP)
        wih1b_ref, b1b_ref,                      # (2HP, 4HP), (1, 4HP)   f32
        wfc_f_ref, wfc_b_ref, bfc_ref,           # (HP, OP), (HP, OP), (1, OP)
        out_ref,                                 # (BT, OP)
        ih_buf,                                  # scratch (T, BT, 8HP) f32
        seq0_buf,                                # scratch (T, BT, 2HP) f32
        h0cat_buf,                               # scratch (BT, 2HP) f32
        *, T, BT, HP, unroll):
    f32 = jnp.float32
    G = 4 * HP

    # ---- layer-0 input projection, both directions: one big MXU matmul ------
    x_flat = x_ref[...].reshape(T * BT, -1)
    ih_buf[...] = (jnp.dot(x_flat, wih0_ref[...], preferred_element_type=f32)
                   + b0_ref[...]).reshape(T, BT, 2 * G)

    # ---- fused fwd + bwd layer-0 recurrence ----------------------------------
    # One block-diagonal K=2*HP matmul per step: rows [0,HP) of whh0 carry the
    # forward Whh into gate lanes [0,4HP), rows [HP,2HP) carry the backward Whh
    # into lanes [4HP,8HP).  h0cat_buf holds [h_fwd | h_bwd].
    h0cat_buf[...] = jnp.zeros_like(h0cat_buf)

    def step0(t, carry):
        cf, cb = carry
        tb = T - 1 - t
        hh = jnp.dot(h0cat_buf[...], whh0_ref[...], preferred_element_type=f32)
        g_f = ih_buf[t, :, 0:G] + hh[:, 0:G]
        g_b = ih_buf[tb, :, G:2 * G] + hh[:, G:2 * G]
        hf, cf = _gates_to_hc(g_f, cf, HP)
        hb, cb = _gates_to_hc(g_b, cb, HP)
        h0cat_buf[:, 0:HP] = hf
        h0cat_buf[:, HP:2 * HP] = hb
        seq0_buf[t, :, 0:HP] = hf
        seq0_buf[tb, :, HP:2 * HP] = hb
        return cf, cb

    z = jnp.zeros((BT, HP), f32)
    lax.fori_loop(0, T, step0, (z, z), unroll=unroll)

    # ---- layer-1 forward: hoisted input projection + recurrence --------------
    seq0_flat = seq0_buf[...].reshape(T * BT, 2 * HP).astype(wih1f_ref.dtype)
    ih_buf[:, :, 0:G] = (jnp.dot(seq0_flat, wih1f_ref[...],
                                 preferred_element_type=f32)
                         + b1f_ref[...]).reshape(T, BT, G)

    def step1(t, carry):
        h, c = carry
        g = ih_buf[t, :, 0:G] + jnp.dot(h, whh1f_ref[...],
                                        preferred_element_type=f32)
        return _gates_to_hc(g, c, HP)

    h1f, _ = lax.fori_loop(0, T, step1, (z, z), unroll=unroll)

    # ---- layer-1 backward output at position T-1: single cell, zero state ----
    g1b = (jnp.dot(seq0_buf[T - 1], wih1b_ref[...], preferred_element_type=f32)
           + b1b_ref[...])
    h1b, _ = _gates_to_hc(g1b, z, HP)

    # ---- FC head on concat([h1f, h1b]) expressed as two aligned matmuls ------
    out_ref[...] = (jnp.dot(h1f, wfc_f_ref[...], preferred_element_type=f32)
                    + jnp.dot(h1b, wfc_b_ref[...], preferred_element_type=f32)
                    + bfc_ref[...])


# ------------------------- weight packing / wrapper -------------------------


def _round_up(x, m):
    return (x + m - 1) // m * m


def _pack_ih(w, rows_pad, H, HP):
    """PyTorch (4H, Din) gate-stacked weight -> zero-padded, transposed
    (rows_pad, 4*HP), gate k occupying lane block [k*HP, k*HP + H)."""
    din = w.shape[1]
    out = jnp.zeros((rows_pad, 4 * HP), jnp.float32)
    for k in range(4):
        out = out.at[:din, k * HP:k * HP + H].set(w[k * H:(k + 1) * H, :].T)
    return out


def _pack_ih_bidir(w, H, HP):
    """PyTorch (4H, 2H) layer-1 input weight -> (2*HP, 4*HP); forward input
    half maps to rows [0, H), backward half to rows [HP, HP + H)."""
    out = jnp.zeros((2 * HP, 4 * HP), jnp.float32)
    for k in range(4):
        blk = w[k * H:(k + 1) * H, :]
        out = out.at[0:H, k * HP:k * HP + H].set(blk[:, 0:H].T)
        out = out.at[HP:HP + H, k * HP:k * HP + H].set(blk[:, H:2 * H].T)
    return out


def _pack_bias(bih, bhh, H, HP):
    out = jnp.zeros((1, 4 * HP), jnp.float32)
    b = (bih + bhh).astype(jnp.float32)
    for k in range(4):
        out = out.at[0, k * HP:k * HP + H].set(b[k * H:(k + 1) * H])
    return out


def init_params(key, input_dim, hidden_dim, output_dim):
    """Deterministic parameter init with PyTorch nn.LSTM-style shapes."""
    H = hidden_dim
    k = 1.0 / jnp.sqrt(jnp.float32(H))
    shapes = {
        "wih_l0": (4 * H, input_dim), "whh_l0": (4 * H, H),
        "bih_l0": (4 * H,), "bhh_l0": (4 * H,),
        "wih_l0_rev": (4 * H, input_dim), "whh_l0_rev": (4 * H, H),
        "bih_l0_rev": (4 * H,), "bhh_l0_rev": (4 * H,),
        "wih_l1": (4 * H, 2 * H), "whh_l1": (4 * H, H),
        "bih_l1": (4 * H,), "bhh_l1": (4 * H,),
        "wih_l1_rev": (4 * H, 2 * H), "whh_l1_rev": (4 * H, H),
        "bih_l1_rev": (4 * H,), "bhh_l1_rev": (4 * H,),
        "w_fc": (output_dim, 2 * H), "b_fc": (output_dim,),
    }
    keys = jax.random.split(key, len(shapes))
    return {n: jax.random.uniform(kk, s, jnp.float32, -k, k)
            for kk, (n, s) in zip(keys, shapes.items())}


def bidirectional_lstm(x, params, projection_dtype=jnp.bfloat16):
    """Forward pass of BidirectionalLSTM (eval mode): fc(lstm(x)[:, -1, :]).

    projection_dtype: dtype of the hoisted input-projection operands
    (x, wih_l0, wih_l1 forward).  bf16 (default) uses the fast MXU path with
    f32 accumulation; pass jnp.float32 for bit-tight numerics.
    """
    B, T, D = x.shape
    H = params["whh_l0"].shape[1]
    O = params["w_fc"].shape[0]

    HP = _round_up(H, 128)
    DP = _round_up(D, 128)
    OP = _round_up(O, 128)

    # Batch tiling: cap tiles at 64 rows (vreg pressure) and split so the
    # parallel grid has >= 2 entries whenever batch allows (v7x dual-TC).
    BP8 = _round_up(B, 8)
    if BP8 <= 8:
        B_TILE = BP8
    else:
        B_TILE = min(64, _round_up(-(-BP8 // 2), 8))
    BP = _round_up(BP8, B_TILE)

    proj_dt = projection_dtype

    # time-major, zero-padded input (projection dtype)
    x_tm = jnp.transpose(x, (1, 0, 2)).astype(jnp.float32)
    x_p = jnp.zeros((T, BP, DP), proj_dt).at[:, :B, :D].set(x_tm.astype(proj_dt))

    # layer 0 (fwd | bwd) packed input weights + folded biases
    wih0 = jnp.concatenate([_pack_ih(params["wih_l0"], DP, H, HP),
                            _pack_ih(params["wih_l0_rev"], DP, H, HP)],
                           axis=1).astype(proj_dt)
    b0 = jnp.concatenate(
        [_pack_bias(params["bih_l0"], params["bhh_l0"], H, HP),
         _pack_bias(params["bih_l0_rev"], params["bhh_l0_rev"], H, HP)], axis=1)
    # block-diagonal fused recurrent weight: [h_fwd | h_bwd] -> 8 gate blocks
    whh0 = jnp.zeros((2 * HP, 8 * HP), jnp.float32)
    whh0 = whh0.at[0:HP, 0:4 * HP].set(_pack_ih(params["whh_l0"], HP, H, HP))
    whh0 = whh0.at[HP:2 * HP, 4 * HP:8 * HP].set(
        _pack_ih(params["whh_l0_rev"], HP, H, HP))

    # layer 1 (whh_l1_rev not needed: only the first backward step contributes)
    wih1f = _pack_ih_bidir(params["wih_l1"], H, HP).astype(proj_dt)
    b1f = _pack_bias(params["bih_l1"], params["bhh_l1"], H, HP)
    whh1f = _pack_ih(params["whh_l1"], HP, H, HP)
    wih1b = _pack_ih_bidir(params["wih_l1_rev"], H, HP)
    b1b = _pack_bias(params["bih_l1_rev"], params["bhh_l1_rev"], H, HP)

    # FC head split into forward- / backward-hidden halves (lane-dense OP)
    wfc_f = jnp.zeros((HP, OP), jnp.float32).at[:H, :O].set(params["w_fc"][:, :H].T)
    wfc_b = jnp.zeros((HP, OP), jnp.float32).at[:H, :O].set(params["w_fc"][:, H:].T)
    bfc = jnp.zeros((1, OP), jnp.float32).at[0, :O].set(params["b_fc"])

    unroll = max(1, min(T, 8))
    kernel = functools.partial(bidir_lstm_kernel, T=T, BT=B_TILE, HP=HP,
                               unroll=unroll)

    # Explicit scoped-VMEM budget: scratch + double-buffered x/out tiles +
    # (default double-buffered) weights, with 25% headroom; clamp [16, 128] MiB.
    isz = jnp.dtype(proj_dt).itemsize
    scratch_b = T * B_TILE * (8 * HP + 2 * HP) * 4 + B_TILE * 2 * HP * 4
    x_b = 2 * T * B_TILE * DP * isz
    out_b = 2 * B_TILE * OP * 4
    w_b = 2 * ((DP * 8 * HP + 2 * HP * 4 * HP) * isz
               + (2 * HP * 8 * HP + HP * 4 * HP + 2 * HP * 4 * HP
                  + 2 * HP * OP) * 4
               + (8 * HP + 2 * 4 * HP + OP) * 4)
    vmem_limit = int(min(max((scratch_b + x_b + out_b + w_b) * 5 // 4
                             + (2 << 20), 16 * 1024 * 1024),
                         128 * 1024 * 1024))

    def full(shape):
        return pl.BlockSpec(shape, lambda b, _s=shape: (0,) * len(_s))

    out_pad = pl.pallas_call(
        kernel,
        out_shape=jax.ShapeDtypeStruct((BP, OP), jnp.float32),
        grid=(BP // B_TILE,),
        in_specs=[
            pl.BlockSpec((T, B_TILE, DP), lambda b: (0, b, 0)),   # x
            full((DP, 8 * HP)), full((1, 8 * HP)),
            full((2 * HP, 8 * HP)),
            full((2 * HP, 4 * HP)), full((1, 4 * HP)), full((HP, 4 * HP)),
            full((2 * HP, 4 * HP)), full((1, 4 * HP)),
            full((HP, OP)), full((HP, OP)), full((1, OP)),
        ],
        out_specs=pl.BlockSpec((B_TILE, OP), lambda b: (b, 0)),
        scratch_shapes=[
            pltpu.VMEM((T, B_TILE, 8 * HP), jnp.float32),
            pltpu.VMEM((T, B_TILE, 2 * HP), jnp.float32),
            pltpu.VMEM((B_TILE, 2 * HP), jnp.float32),
        ],
        compiler_params=pltpu.CompilerParams(
            dimension_semantics=("parallel",),
            vmem_limit_bytes=vmem_limit),
    )(x_p, wih0, b0, whh0, wih1f, b1f, whh1f, wih1b, b1b,
      wfc_f, wfc_b, bfc)
    return out_pad[:B, :O]


# ----------------------------- reference -------------------------------------


def _reference(x, params):
    """Pure-JAX reference mirroring the PyTorch forward (eval mode)."""
    B, T, D = x.shape
    H = params["whh_l0"].shape[1]

    def run_dir(seq, wih, whh, bih, bhh, reverse):
        def step(carry, x_t):
            h, c = carry
            gates = x_t @ wih.T + bih + h @ whh.T + bhh
            i = jax.nn.sigmoid(gates[:, 0 * H:1 * H])
            f = jax.nn.sigmoid(gates[:, 1 * H:2 * H])
            g = jnp.tanh(gates[:, 2 * H:3 * H])
            o = jax.nn.sigmoid(gates[:, 3 * H:4 * H])
            c = f * c + i * g
            h = o * jnp.tanh(c)
            return (h, c), h
        xs = jnp.transpose(seq, (1, 0, 2))
        if reverse:
            xs = xs[::-1]
        init = (jnp.zeros((B, H)), jnp.zeros((B, H)))
        _, hs = lax.scan(step, init, xs)
        if reverse:
            hs = hs[::-1]
        return jnp.transpose(hs, (1, 0, 2))            # (B, T, H)

    def bidir_layer(seq, pfx):
        f = run_dir(seq, params[f"wih_{pfx}"], params[f"whh_{pfx}"],
                    params[f"bih_{pfx}"], params[f"bhh_{pfx}"], False)
        b = run_dir(seq, params[f"wih_{pfx}_rev"], params[f"whh_{pfx}_rev"],
                    params[f"bih_{pfx}_rev"], params[f"bhh_{pfx}_rev"], True)
        return jnp.concatenate([f, b], axis=-1)

    out = bidir_layer(x, "l0")
    out = bidir_layer(out, "l1")                        # dropout: no-op in eval
    last = out[:, -1, :]
    return last @ params["w_fc"].T + params["b_fc"]


if __name__ == "__main__":
    B, T, D, H, O = 2, 8, 16, 32, 4
    key = jax.random.PRNGKey(0)
    k_x, k_p = jax.random.split(key)
    x = jax.random.normal(k_x, (B, T, D), jnp.float32)
    params = init_params(k_p, D, H, O)
    y_ref = _reference(x, params)

    # default fast path: bf16 projection operands, f32 accumulation/state
    y = bidirectional_lstm(x, params)
    jax.block_until_ready(y)
    assert y.shape == (B, O)
    assert jnp.allclose(y, y_ref, atol=2e-2, rtol=2e-2), (y, y_ref)

    # exact path: f32 projections must match the PyTorch-equivalent reference
    y32 = bidirectional_lstm(x, params, projection_dtype=jnp.float32)
    jax.block_until_ready(y32)
    assert jnp.allclose(y32, y_ref, atol=1e-4, rtol=1e-4), (y32, y_ref)

    print("KERNEL_OK")
</pallas_src>

<mosaic_0001>
module attributes {stable_mosaic.version = 11 : i64} {
  func.func @bidir_lstm_kernel(%arg0: i32, %arg1: memref<8x8x128xbf16, #tpu.memory_space<vmem>>, %arg2: memref<128x1024xbf16, #tpu.memory_space<vmem>>, %arg3: memref<1x1024xf32, #tpu.memory_space<vmem>>, %arg4: memref<256x1024xf32, #tpu.memory_space<vmem>>, %arg5: memref<256x512xbf16, #tpu.memory_space<vmem>>, %arg6: memref<1x512xf32, #tpu.memory_space<vmem>>, %arg7: memref<128x512xf32, #tpu.memory_space<vmem>>, %arg8: memref<256x512xf32, #tpu.memory_space<vmem>>, %arg9: memref<1x512xf32, #tpu.memory_space<vmem>>, %arg10: memref<128x128xf32, #tpu.memory_space<vmem>>, %arg11: memref<128x128xf32, #tpu.memory_space<vmem>>, %arg12: memref<1x128xf32, #tpu.memory_space<vmem>>, %arg13: memref<8x128xf32, #tpu.memory_space<vmem>>, %arg14: memref<8x8x1024xf32, #tpu.memory_space<vmem>>, %arg15: memref<8x8x256xf32, #tpu.memory_space<vmem>>, %arg16: memref<8x256xf32, #tpu.memory_space<vmem>>) attributes {dimension_semantics = [#tpu.dimension_semantics<parallel>], iteration_bounds = array<i64: 1>, scalar_prefetch = 0 : i64, scratch_operands = 3 : i64, tpu.core_type = #tpu.core_type<tc>, window_params = [{transform_indices = @transform_0, window_bounds = array<i64: 8, 8, 128>}, {pipeline_mode = #tpu.pipeline_mode<synchronous>, transform_indices = @transform_1, window_bounds = array<i64: 128, 1024>}, {pipeline_mode = #tpu.pipeline_mode<synchronous>, transform_indices = @transform_2, window_bounds = array<i64: 1, 1024>}, {pipeline_mode = #tpu.pipeline_mode<synchronous>, transform_indices = @transform_3, window_bounds = array<i64: 256, 1024>}, {pipeline_mode = #tpu.pipeline_mode<synchronous>, transform_indices = @transform_4, window_bounds = array<i64: 256, 512>}, {pipeline_mode = #tpu.pipeline_mode<synchronous>, transform_indices = @transform_5, window_bounds = array<i64: 1, 512>}, {pipeline_mode = #tpu.pipeline_mode<synchronous>, transform_indices = @transform_6, window_bounds = array<i64: 128, 512>}, {pipeline_mode = #tpu.pipeline_mode<synchronous>, transform_indices = @transform_7, window_bounds = array<i64: 256, 512>}, {pipeline_mode = #tpu.pipeline_mode<synchronous>, transform_indices = @transform_8, window_bounds = array<i64: 1, 512>}, {pipeline_mode = #tpu.pipeline_mode<synchronous>, transform_indices = @transform_9, window_bounds = array<i64: 128, 128>}, {pipeline_mode = #tpu.pipeline_mode<synchronous>, transform_indices = @transform_10, window_bounds = array<i64: 128, 128>}, {pipeline_mode = #tpu.pipeline_mode<synchronous>, transform_indices = @transform_11, window_bounds = array<i64: 1, 128>}, {transform_indices = @transform_12, window_bounds = array<i64: 8, 128>}]} {
    %c0 = arith.constant 0 : index
    %c0_0 = arith.constant 0 : index
    %c0_1 = arith.constant 0 : index
    %0 = vector.load %arg1[%c0, %c0_0, %c0_1] : memref<8x8x128xbf16, #tpu.memory_space<vmem>>, vector<8x8x128xbf16>
    %1 = vector.shape_cast %0 : vector<8x8x128xbf16> to vector<64x128xbf16>
    %c0_2 = arith.constant 0 : index
    %c0_3 = arith.constant 0 : index
    %2 = vector.load %arg2[%c0_2, %c0_3] : memref<128x1024xbf16, #tpu.memory_space<vmem>>, vector<128x1024xbf16>
    %cst = arith.constant dense<0.000000e+00> : vector<64x1024xf32>
    %3 = tpu.matmul %1, %2, %cst {dimension_numbers = #tpu.dot_dimension_numbers<[1], [0], [0], [1], [0, 0, 1, 1], [], []>} : vector<64x128xbf16>, vector<128x1024xbf16>, vector<64x1024xf32> -> vector<64x1024xf32>
    %c0_4 = arith.constant 0 : index
    %c0_5 = arith.constant 0 : index
    %4 = vector.load %arg3[%c0_4, %c0_5] : memref<1x1024xf32, #tpu.memory_space<vmem>>, vector<1x1024xf32>
    %5 = vector.broadcast %4 : vector<1x1024xf32> to vector<64x1024xf32>
    %6 = arith.addf %3, %5 : vector<64x1024xf32>
    %7 = vector.shape_cast %6 : vector<64x1024xf32> to vector<8x8x1024xf32>
    %c0_6 = arith.constant 0 : index
    %c0_7 = arith.constant 0 : index
    %c0_8 = arith.constant 0 : index
    %8 = vector.load %arg14[%c0_6, %c0_7, %c0_8] : memref<8x8x1024xf32, #tpu.memory_space<vmem>>, vector<8x8x1024xf32>
    tpu.vector_store %arg14[%c0_6, %c0_7, %c0_8], %7 {strides = array<i32>} : memref<8x8x1024xf32, #tpu.memory_space<vmem>>, vector<8x8x1024xf32>,
    %cst_9 = arith.constant 0.000000e+00 : f32
    %9 = vector.broadcast %cst_9 : f32 to vector<8x256xf32>
    %c0_10 = arith.constant 0 : index
    %c0_11 = arith.constant 0 : index
    %10 = vector.load %arg16[%c0_10, %c0_11] : memref<8x256xf32, #tpu.memory_space<vmem>>, vector<8x256xf32>
    tpu.vector_store %arg16[%c0_10, %c0_11], %9 {strides = array<i32>} : memref<8x256xf32, #tpu.memory_space<vmem>>, vector<8x256xf32>,
    %cst_12 = arith.constant 0.000000e+00 : f32
    %11 = vector.broadcast %cst_12 : f32 to vector<8x128xf32>
    %c0_i32 = arith.constant 0 : i32
    %c7_i32 = arith.constant 7 : i32
    %12 = arith.subi %c7_i32, %c0_i32 : i32
    %c0_13 = arith.constant 0 : index
    %c0_14 = arith.constant 0 : index
    %13 = vector.load %arg16[%c0_13, %c0_14] : memref<8x256xf32, #tpu.memory_space<vmem>>, vector<8x256xf32>
    %c0_15 = arith.constant 0 : index
    %c0_16 = arith.constant 0 : index
    %14 = vector.load %arg4[%c0_15, %c0_16] : memref<256x1024xf32, #tpu.memory_space<vmem>>, vector<256x1024xf32>
    %cst_17 = arith.constant dense<0.000000e+00> : vector<8x1024xf32>
    %15 = tpu.matmul %13, %14, %cst_17 {dimension_numbers = #tpu.dot_dimension_numbers<[1], [0], [0], [1], [0, 0, 1, 1], [], []>} : vector<8x256xf32>, vector<256x1024xf32>, vector<8x1024xf32> -> vector<8x1024xf32>
    %16 = arith.index_cast %c0_i32 : i32 to index
    %c0_18 = arith.constant 0 : index
    %c0_19 = arith.constant 0 : index
    %17 = vector.load %arg14[%16, %c0_18, %c0_19] : memref<8x8x1024xf32, #tpu.memory_space<vmem>>, vector<1x8x512xf32>
    %18 = vector.shape_cast %17 : vector<1x8x512xf32> to vector<8x512xf32>
    %19 = vector.extract_strided_slice %15 {offsets = [0, 0], sizes = [8, 512], strides = [1, 1]} : vector<8x1024xf32> to vector<8x512xf32>
    %20 = arith.addf %18, %19 : vector<8x512xf32>
    %21 = arith.index_cast %12 : i32 to index
    %c0_20 = arith.constant 0 : index
    %c512 = arith.constant 512 : index
    %22 = vector.load %arg14[%21, %c0_20, %c512] : memref<8x8x1024xf32, #tpu.memory_space<vmem>>, vector<1x8x512xf32>
    %23 = vector.shape_cast %22 : vector<1x8x512xf32> to vector<8x512xf32>
    %24 = vector.extract_strided_slice %15 {offsets = [0, 512], sizes = [8, 512], strides = [1, 1]} : vector<8x1024xf32> to vector<8x512xf32>
    %25 = arith.addf %23, %24 : vector<8x512xf32>
    %26 = vector.extract_strided_slice %20 {offsets = [0, 0], sizes = [8, 128], strides = [1, 1]} : vector<8x512xf32> to vector<8x128xf32>
    %27 = arith.negf %26 : vector<8x128xf32>
    %28 = math.exp %27 : vector<8x128xf32>
    %cst_21 = arith.constant 1.000000e+00 : f32
    %29 = vector.broadcast %cst_21 : f32 to vector<8x128xf32>
    %30 = arith.addf %29, %28 : vector<8x128xf32>
    %31 = arith.divf %29, %30 : vector<8x128xf32>
    %32 = vector.extract_strided_slice %20 {offsets = [0, 128], sizes = [8, 128], strides = [1, 1]} : vector<8x512xf32> to vector<8x128xf32>
    %33 = arith.negf %32 : vector<8x128xf32>
    %34 = math.exp %33 : vector<8x128xf32>
    %cst_22 = arith.constant 1.000000e+00 : f32
    %35 = vector.broadcast %cst_22 : f32 to vector<8x128xf32>
    %36 = arith.addf %35, %34 : vector<8x128xf32>
    %37 = arith.divf %35, %36 : vector<8x128xf32>
    %38 = vector.extract_strided_slice %20 {offsets = [0, 256], sizes = [8, 128], strides = [1, 1]} : vector<8x512xf32> to vector<8x128xf32>
    %39 = math.tanh %38 : vector<8x128xf32>
    %40 = vector.extract_strided_slice %20 {offsets = [0, 384], sizes = [8, 128], strides = [1, 1]} : vector<8x512xf32> to vector<8x128xf32>
    %41 = arith.negf %40 : vector<8x128xf32>
    %42 = math.exp %41 : vector<8x128xf32>
    %cst_23 = arith.constant 1.000000e+00 : f32
    %43 = vector.broadcast %cst_23 : f32 to vector<8x128xf32>
    %44 = arith.addf %43, %42 : vector<8x128xf32>
    %45 = arith.divf %43, %44 : vector<8x128xf32>
    %46 = arith.mulf %37, %11 : vector<8x128xf32>
    %47 = arith.mulf %31, %39 : vector<8x128xf32>
    %48 = arith.addf %46, %47 : vector<8x128xf32>
    %49 = math.tanh %48 : vector<8x128xf32>
    %50 = arith.mulf %45, %49 : vector<8x128xf32>
    %51 = vector.extract_strided_slice %25 {offsets = [0, 0], sizes = [8, 128], strides = [1, 1]} : vector<8x512xf32> to vector<8x128xf32>
    %52 = arith.negf %51 : vector<8x128xf32>
    %53 = math.exp %52 : vector<8x128xf32>
    %cst_24 = arith.constant 1.000000e+00 : f32
    %54 = vector.broadcast %cst_24 : f32 to vector<8x128xf32>
    %55 = arith.addf %54, %53 : vector<8x128xf32>
    %56 = arith.divf %54, %55 : vector<8x128xf32>
    %57 = vector.extract_strided_slice %25 {offsets = [0, 128], sizes = [8, 128], strides = [1, 1]} : vector<8x512xf32> to vector<8x128xf32>
    %58 = arith.negf %57 : vector<8x128xf32>
    %59 = math.exp %58 : vector<8x128xf32>
    %cst_25 = arith.constant 1.000000e+00 : f32
    %60 = vector.broadcast %cst_25 : f32 to vector<8x128xf32>
    %61 = arith.addf %60, %59 : vector<8x128xf32>
    %62 = arith.divf %60, %61 : vector<8x128xf32>
    %63 = vector.extract_strided_slice %25 {offsets = [0, 256], sizes = [8, 128], strides = [1, 1]} : vector<8x512xf32> to vector<8x128xf32>
    %64 = math.tanh %63 : vector<8x128xf32>
    %65 = vector.extract_strided_slice %25 {offsets = [0, 384], sizes = [8, 128], strides = [1, 1]} : vector<8x512xf32> to vector<8x128xf32>
    %66 = arith.negf %65 : vector<8x128xf32>
    %67 = math.exp %66 : vector<8x128xf32>
    %cst_26 = arith.constant 1.000000e+00 : f32
    %68 = vector.broadcast %cst_26 : f32 to vector<8x128xf32>
    %69 = arith.addf %68, %67 : vector<8x128xf32>
    %70 = arith.divf %68, %69 : vector<8x128xf32>
    %71 = arith.mulf %62, %11 : vector<8x128xf32>
    %72 = arith.mulf %56, %64 : vector<8x128xf32>
    %73 = arith.addf %71, %72 : vector<8x128xf32>
    %74 = math.tanh %73 : vector<8x128xf32>
    %75 = arith.mulf %70, %74 : vector<8x128xf32>
    %c0_27 = arith.constant 0 : index
    %c0_28 = arith.constant 0 : index
    %76 = vector.load %arg16[%c0_27, %c0_28] : memref<8x256xf32, #tpu.memory_space<vmem>>, vector<8x128xf32>
    tpu.vector_store %arg16[%c0_27, %c0_28], %50 {strides = array<i32>} : memref<8x256xf32, #tpu.memory_space<vmem>>, vector<8x128xf32>,
    %c0_29 = arith.constant 0 : index
    %c128 = arith.constant 128 : index
    %77 = vector.load %arg16[%c0_29, %c128] : memref<8x256xf32, #tpu.memory_space<vmem>>, vector<8x128xf32>
    tpu.vector_store %arg16[%c0_29, %c128], %75 {strides = array<i32>} : memref<8x256xf32, #tpu.memory_space<vmem>>, vector<8x128xf32>,
    %78 = arith.index_cast %c0_i32 : i32 to index
    %c0_30 = arith.constant 0 : index
    %c0_31 = arith.constant 0 : index
    %79 = vector.load %arg15[%78, %c0_30, %c0_31] : memref<8x8x256xf32, #tpu.memory_space<vmem>>, vector<1x8x128xf32>
    %80 = vector.shape_cast %79 : vector<1x8x128xf32> to vector<8x128xf32>
    %81 = vector.shape_cast %50 : vector<8x128xf32> to vector<1x8x128xf32>
    tpu.vector_store %arg15[%78, %c0_30, %c0_31], %81 {strides = array<i32>} : memref<8x8x256xf32, #tpu.memory_space<vmem>>, vector<1x8x128xf32>,
    %82 = arith.index_cast %12 : i32 to index
    %c0_32 = arith.constant 0 : index
    %c128_33 = arith.constant 128 : index
    %83 = vector.load %arg15[%82, %c0_32, %c128_33] : memref<8x8x256xf32, #tpu.memory_space<vmem>>, vector<1x8x128xf32>
    %84 = vector.shape_cast %83 : vector<1x8x128xf32> to vector<8x128xf32>
    %85 = vector.shape_cast %75 : vector<8x128xf32> to vector<1x8x128xf32>
    tpu.vector_store %arg15[%82, %c0_32, %c128_33], %85 {strides = array<i32>} : memref<8x8x256xf32, #tpu.memory_space<vmem>>, vector<1x8x128xf32>,
    %c1_i32 = arith.constant 1 : i32
    %c7_i32_34 = arith.constant 7 : i32
    %86 = arith.subi %c7_i32_34, %c1_i32 : i32
    %c0_35 = arith.constant 0 : index
    %c0_36 = arith.constant 0 : index
    %87 = vector.load %arg16[%c0_35, %c0_36] : memref<8x256xf32, #tpu.memory_space<vmem>>, vector<8x256xf32>
    %c0_37 = arith.constant 0 : index
    %c0_38 = arith.constant 0 : index
    %88 = vector.load %arg4[%c0_37, %c0_38] : memref<256x1024xf32, #tpu.memory_space<vmem>>, vector<256x1024xf32>
    %cst_39 = arith.constant dense<0.000000e+00> : vector<8x1024xf32>
    %89 = tpu.matmul %87, %88, %cst_39 {dimension_numbers = #tpu.dot_dimension_numbers<[1], [0], [0], [1], [0, 0, 1, 1], [], []>} : vector<8x256xf32>, vector<256x1024xf32>, vector<8x1024xf32> -> vector<8x1024xf32>
    %90 = arith.index_cast %c1_i32 : i32 to index
    %c0_40 = arith.constant 0 : index
    %c0_41 = arith.constant 0 : index
    %91 = vector.load %arg14[%90, %c0_40, %c0_41] : memref<8x8x1024xf32, #tpu.memory_space<vmem>>, vector<1x8x512xf32>
    %92 = vector.shape_cast %91 : vector<1x8x512xf32> to vector<8x512xf32>
    %93 = vector.extract_strided_slice %89 {offsets = [0, 0], sizes = [8, 512], strides = [1, 1]} : vector<8x1024xf32> to vector<8x512xf32>
    %94 = arith.addf %92, %93 : vector<8x512xf32>
    %95 = arith.index_cast %86 : i32 to index
    %c0_42 = arith.constant 0 : index
    %c512_43 = arith.constant 512 : index
    %96 = vector.load %arg14[%95, %c0_42, %c512_43] : memref<8x8x1024xf32, #tpu.memory_space<vmem>>, vector<1x8x512xf32>
    %97 = vector.shape_cast %96 : vector<1x8x512xf32> to vector<8x512xf32>
    %98 = vector.extract_strided_slice %89 {offsets = [0, 512], sizes = [8, 512], strides = [1, 1]} : vector<8x1024xf32> to vector<8x512xf32>
    %99 = arith.addf %97, %98 : vector<8x512xf32>
    %100 = vector.extract_strided_slice %94 {offsets = [0, 0], sizes = [8, 128], strides = [1, 1]} : vector<8x512xf32> to vector<8x128xf32>
    %101 = arith.negf %100 : vector<8x128xf32>
    %102 = math.exp %101 : vector<8x128xf32>
    %cst_44 = arith.constant 1.000000e+00 : f32
    %103 = vector.broadcast %cst_44 : f32 to vector<8x128xf32>
    %104 = arith.addf %103, %102 : vector<8x128xf32>
    %105 = arith.divf %103, %104 : vector<8x128xf32>
    %106 = vector.extract_strided_slice %94 {offsets = [0, 128], sizes = [8, 128], strides = [1, 1]} : vector<8x512xf32> to vector<8x128xf32>
    %107 = arith.negf %106 : vector<8x128xf32>
    %108 = math.exp %107 : vector<8x128xf32>
    %cst_45 = arith.constant 1.000000e+00 : f32
    %109 = vector.broadcast %cst_45 : f32 to vector<8x128xf32>
    %110 = arith.addf %109, %108 : vector<8x128xf32>
    %111 = arith.divf %109, %110 : vector<8x128xf32>
    %112 = vector.extract_strided_slice %94 {offsets = [0, 256], sizes = [8, 128], strides = [1, 1]} : vector<8x512xf32> to vector<8x128xf32>
    %113 = math.tanh %112 : vector<8x128xf32>
    %114 = vector.extract_strided_slice %94 {offsets = [0, 384], sizes = [8, 128], strides = [1, 1]} : vector<8x512xf32> to vector<8x128xf32>
    %115 = arith.negf %114 : vector<8x128xf32>
    %116 = math.exp %115 : vector<8x128xf32>
    %cst_46 = arith.constant 1.000000e+00 : f32
    %117 = vector.broadcast %cst_46 : f32 to vector<8x128xf32>
    %118 = arith.addf %117, %116 : vector<8x128xf32>
    %119 = arith.divf %117, %118 : vector<8x128xf32>
    %120 = arith.mulf %111, %48 : vector<8x128xf32>
    %121 = arith.mulf %105, %113 : vector<8x128xf32>
    %122 = arith.addf %120, %121 : vector<8x128xf32>
    %123 = math.tanh %122 : vector<8x128xf32>
    %124 = arith.mulf %119, %123 : vector<8x128xf32>
    %125 = vector.extract_strided_slice %99 {offsets = [0, 0], sizes = [8, 128], strides = [1, 1]} : vector<8x512xf32> to vector<8x128xf32>
    %126 = arith.negf %125 : vector<8x128xf32>
    %127 = math.exp %126 : vector<8x128xf32>
    %cst_47 = arith.constant 1.000000e+00 : f32
    %128 = vector.broadcast %cst_47 : f32 to vector<8x128xf32>
    %129 = arith.addf %128, %127 : vector<8x128xf32>
    %130 = arith.divf %128, %129 : vector<8x128xf32>
    %131 = vector.extract_strided_slice %99 {offsets = [0, 128], sizes = [8, 128], strides = [1, 1]} : vector<8x512xf32> to vector<8x128xf32>
    %132 = arith.negf %131 : vector<8x128xf32>
    %133 = math.exp %132 : vector<8x128xf32>
    %cst_48 = arith.constant 1.000000e+00 : f32
    %134 = vector.broadcast %cst_48 : f32 to vector<8x128xf32>
    %135 = arith.addf %134, %133 : vector<8x128xf32>
    %136 = arith.divf %134, %135 : vector<8x128xf32>
    %137 = vector.extract_strided_slice %99 {offsets = [0, 256], sizes = [8, 128], strides = [1, 1]} : vector<8x512xf32> to vector<8x128xf32>
    %138 = math.tanh %137 : vector<8x128xf32>
    %139 = vector.extract_strided_slice %99 {offsets = [0, 384], sizes = [8, 128], strides = [1, 1]} : vector<8x512xf32> to vector<8x128xf32>
    %140 = arith.negf %139 : vector<8x128xf32>
    %141 = math.exp %140 : vector<8x128xf32>
    %cst_49 = arith.constant 1.000000e+00 : f32
    %142 = vector.broadcast %cst_49 : f32 to vector<8x128xf32>
    %143 = arith.addf %142, %141 : vector<8x128xf32>
    %144 = arith.divf %142, %143 : vector<8x128xf32>
    %145 = arith.mulf %136, %73 : vector<8x128xf32>
    %146 = arith.mulf %130, %138 : vector<8x128xf32>
    %147 = arith.addf %145, %146 : vector<8x128xf32>
    %148 = math.tanh %147 : vector<8x128xf32>
    %149 = arith.mulf %144, %148 : vector<8x128xf32>
    %c0_50 = arith.constant 0 : index
    %c0_51 = arith.constant 0 : index
    %150 = vector.load %arg16[%c0_50, %c0_51] : memref<8x256xf32, #tpu.memory_space<vmem>>, vector<8x128xf32>
    tpu.vector_store %arg16[%c0_50, %c0_51], %124 {strides = array<i32>} : memref<8x256xf32, #tpu.memory_space<vmem>>, vector<8x128xf32>,
    %c0_52 = arith.constant 0 : index
    %c128_53 = arith.constant 128 : index
    %151 = vector.load %arg16[%c0_52, %c128_53] : memref<8x256xf32, #tpu.memory_space<vmem>>, vector<8x128xf32>
    tpu.vector_store %arg16[%c0_52, %c128_53], %149 {strides = array<i32>} : memref<8x256xf32, #tpu.memory_space<vmem>>, vector<8x128xf32>,
    %152 = arith.index_cast %c1_i32 : i32 to index
    %c0_54 = arith.constant 0 : index
    %c0_55 = arith.constant 0 : index
    %153 = vector.load %arg15[%152, %c0_54, %c0_55] : memref<8x8x256xf32, #tpu.memory_space<vmem>>, vector<1x8x128xf32>
    %154 = vector.shape_cast %153 : vector<1x8x128xf32> to vector<8x128xf32>
    %155 = vector.shape_cast %124 : vector<8x128xf32> to vector<1x8x128xf32>
    tpu.vector_store %arg15[%152, %c0_54, %c0_55], %155 {strides = array<i32>} : memref<8x8x256xf32, #tpu.memory_space<vmem>>, vector<1x8x128xf32>,
    %156 = arith.index_cast %86 : i32 to index
    %c0_56 = arith.constant 0 : index
    %c128_57 = arith.constant 128 : index
    %157 = vector.load %arg15[%156, %c0_56, %c128_57] : memref<8x8x256xf32, #tpu.memory_space<vmem>>, vector<1x8x128xf32>
    %158 = vector.shape_cast %157 : vector<1x8x128xf32> to vector<8x128xf32>
    %159 = vector.shape_cast %149 : vector<8x128xf32> to vector<1x8x128xf32>
    tpu.vector_store %arg15[%156, %c0_56, %c128_57], %159 {strides = array<i32>} : memref<8x8x256xf32, #tpu.memory_space<vmem>>, vector<1x8x128xf32>,
    %c2_i32 = arith.constant 2 : i32
    %c7_i32_58 = arith.constant 7 : i32
    %160 = arith.subi %c7_i32_58, %c2_i32 : i32
    %c0_59 = arith.constant 0 : index
    %c0_60 = arith.constant 0 : index
    %161 = vector.load %arg16[%c0_59, %c0_60] : memref<8x256xf32, #tpu.memory_space<vmem>>, vector<8x256xf32>
    %c0_61 = arith.constant 0 : index
    %c0_62 = arith.constant 0 : index
    %162 = vector.load %arg4[%c0_61, %c0_62] : memref<256x1024xf32, #tpu.memory_space<vmem>>, vector<256x1024xf32>
    %cst_63 = arith.constant dense<0.000000e+00> : vector<8x1024xf32>
    %163 = tpu.matmul %161, %162, %cst_63 {dimension_numbers = #tpu.dot_dimension_numbers<[1], [0], [0], [1], [0, 0, 1, 1], [], []>} : vector<8x256xf32>, vector<256x1024xf32>, vector<8x1024xf32> -> vector<8x1024xf32>
    %164 = arith.index_cast %c2_i32 : i32 to index
    %c0_64 = arith.constant 0 : index
    %c0_65 = arith.constant 0 : index
    %165 = vector.load %arg14[%164, %c0_64, %c0_65] : memref<8x8x1024xf32, #tpu.memory_space<vmem>>, vector<1x8x512xf32>
    %166 = vector.shape_cast %165 : vector<1x8x512xf32> to vector<8x512xf32>
    %167 = vector.extract_strided_slice %163 {offsets = [0, 0], sizes = [8, 512], strides = [1, 1]} : vector<8x1024xf32> to vector<8x512xf32>
    %168 = arith.addf %166, %167 : vector<8x512xf32>
    %169 = arith.index_cast %160 : i32 to index
    %c0_66 = arith.constant 0 : index
    %c512_67 = arith.constant 512 : index
    %170 = vector.load %arg14[%169, %c0_66, %c512_67] : memref<8x8x1024xf32, #tpu.memory_space<vmem>>, vector<1x8x512xf32>
    %171 = vector.shape_cast %170 : vector<1x8x512xf32> to vector<8x512xf32>
    %172 = vector.extract_strided_slice %163 {offsets = [0, 512], sizes = [8, 512], strides = [1, 1]} : vector<8x1024xf32> to vector<8x512xf32>
    %173 = arith.addf %171, %172 : vector<8x512xf32>
    %174 = vector.extract_strided_slice %168 {offsets = [0, 0], sizes = [8, 128], strides = [1, 1]} : vector<8x512xf32> to vector<8x128xf32>
    %175 = arith.negf %174 : vector<8x128xf32>
    %176 = math.exp %175 : vector<8x128xf32>
    %cst_68 = arith.constant 1.000000e+00 : f32
    %177 = vector.broadcast %cst_68 : f32 to vector<8x128xf32>
    %178 = arith.addf %177, %176 : vector<8x128xf32>
    %179 = arith.divf %177, %178 : vector<8x128xf32>
    %180 = vector.extract_strided_slice %168 {offsets = [0, 128], sizes = [8, 128], strides = [1, 1]} : vector<8x512xf32> to vector<8x128xf32>
    %181 = arith.negf %180 : vector<8x128xf32>
    %182 = math.exp %181 : vector<8x128xf32>
    %cst_69 = arith.constant 1.000000e+00 : f32
    %183 = vector.broadcast %cst_69 : f32 to vector<8x128xf32>
    %184 = arith.addf %183, %182 : vector<8x128xf32>
    %185 = arith.divf %183, %184 : vector<8x128xf32>
    %186 = vector.extract_strided_slice %168 {offsets = [0, 256], sizes = [8, 128], strides = [1, 1]} : vector<8x512xf32> to vector<8x128xf32>
    %187 = math.tanh %186 : vector<8x128xf32>
    %188 = vector.extract_strided_slice %168 {offsets = [0, 384], sizes = [8, 128], strides = [1, 1]} : vector<8x512xf32> to vector<8x128xf32>
    %189 = arith.negf %188 : vector<8x128xf32>
    %190 = math.exp %189 : vector<8x128xf32>
    %cst_70 = arith.constant 1.000000e+00 : f32
    %191 = vector.broadcast %cst_70 : f32 to vector<8x128xf32>
    %192 = arith.addf %191, %190 : vector<8x128xf32>
    %193 = arith.divf %191, %192 : vector<8x128xf32>
    %194 = arith.mulf %185, %122 : vector<8x128xf32>
    %195 = arith.mulf %179, %187 : vector<8x128xf32>
    %196 = arith.addf %194, %195 : vector<8x128xf32>
    %197 = math.tanh %196 : vector<8x128xf32>
    %198 = arith.mulf %193, %197 : vector<8x128xf32>
    %199 = vector.extract_strided_slice %173 {offsets = [0, 0], sizes = [8, 128], strides = [1, 1]} : vector<8x512xf32> to vector<8x128xf32>
    %200 = arith.negf %199 : vector<8x128xf32>
    %201 = math.exp %200 : vector<8x128xf32>
    %cst_71 = arith.constant 1.000000e+00 : f32
    %202 = vector.broadcast %cst_71 : f32 to vector<8x128xf32>
    %203 = arith.addf %202, %201 : vector<8x128xf32>
    %204 = arith.divf %202, %203 : vector<8x128xf32>
    %205 = vector.extract_strided_slice %173 {offsets = [0, 128], sizes = [8, 128], strides = [1, 1]} : vector<8x512xf32> to vector<8x128xf32>
    %206 = arith.negf %205 : vector<8x128xf32>
    %207 = math.exp %206 : vector<8x128xf32>
    %cst_72 = arith.constant 1.000000e+00 : f32
    %208 = vector.broadcast %cst_72 : f32 to vector<8x128xf32>
    %209 = arith.addf %208, %207 : vector<8x128xf32>
    %210 = arith.divf %208, %209 : vector<8x128xf32>
    %211 = vector.extract_strided_slice %173 {offsets = [0, 256], sizes = [8, 128], strides = [1, 1]} : vector<8x512xf32> to vector<8x128xf32>
    %212 = math.tanh %211 : vector<8x128xf32>
    %213 = vector.extract_strided_slice %173 {offsets = [0, 384], sizes = [8, 128], strides = [1, 1]} : vector<8x512xf32> to vector<8x128xf32>
    %214 = arith.negf %213 : vector<8x128xf32>
    %215 = math.exp %214 : vector<8x128xf32>
    %cst_73 = arith.constant 1.000000e+00 : f32
    %216 = vector.broadcast %cst_73 : f32 to vector<8x128xf32>
    %217 = arith.addf %216, %215 : vector<8x128xf32>
    %218 = arith.divf %216, %217 : vector<8x128xf32>
    %219 = arith.mulf %210, %147 : vector<8x128xf32>
    %220 = arith.mulf %204, %212 : vector<8x128xf32>
    %221 = arith.addf %219, %220 : vector<8x128xf32>
    %222 = math.tanh %221 : vector<8x128xf32>
    %223 = arith.mulf %218, %222 : vector<8x128xf32>
    %c0_74 = arith.constant 0 : index
    %c0_75 = arith.constant 0 : index
    %224 = vector.load %arg16[%c0_74, %c0_75] : memref<8x256xf32, #tpu.memory_space<vmem>>, vector<8x128xf32>
    tpu.vector_store %arg16[%c0_74, %c0_75], %198 {strides = array<i32>} : memref<8x256xf32, #tpu.memory_space<vmem>>, vector<8x128xf32>,
    %c0_76 = arith.constant 0 : index
    %c128_77 = arith.constant 128 : index
    %225 = vector.load %arg16[%c0_76, %c128_77] : memref<8x256xf32, #tpu.memory_space<vmem>>, vector<8x128xf32>
    tpu.vector_store %arg16[%c0_76, %c128_77], %223 {strides = array<i32>} : memref<8x256xf32, #tpu.memory_space<vmem>>, vector<8x128xf32>,
    %226 = arith.index_cast %c2_i32 : i32 to index
    %c0_78 = arith.constant 0 : index
    %c0_79 = arith.constant 0 : index
    %227 = vector.load %arg15[%226, %c0_78, %c0_79] : memref<8x8x256xf32, #tpu.memory_space<vmem>>, vector<1x8x128xf32>
    %228 = vector.shape_cast %227 : vector<1x8x128xf32> to vector<8x128xf32>
    %229 = vector.shape_cast %198 : vector<8x128xf32> to vector<1x8x128xf32>
    tpu.vector_store %arg15[%226, %c0_78, %c0_79], %229 {strides = array<i32>} : memref<8x8x256xf32, #tpu.memory_space<vmem>>, vector<1x8x128xf32>,
    %230 = arith.index_cast %160 : i32 to index
    %c0_80 = arith.constant 0 : index
    %c128_81 = arith.constant 128 : index
    %231 = vector.load %arg15[%230, %c0_80, %c128_81] : memref<8x8x256xf32, #tpu.memory_space<vmem>>, vector<1x8x128xf32>
    %232 = vector.shape_cast %231 : vector<1x8x128xf32> to vector<8x128xf32>
    %233 = vector.shape_cast %223 : vector<8x128xf32> to vector<1x8x128xf32>
    tpu.vector_store %arg15[%230, %c0_80, %c128_81], %233 {strides = array<i32>} : memref<8x8x256xf32, #tpu.memory_space<vmem>>, vector<1x8x128xf32>,
    %c3_i32 = arith.constant 3 : i32
    %c7_i32_82 = arith.constant 7 : i32
    %234 = arith.subi %c7_i32_82, %c3_i32 : i32
    %c0_83 = arith.constant 0 : index
    %c0_84 = arith.constant 0 : index
    %235 = vector.load %arg16[%c0_83, %c0_84] : memref<8x256xf32, #tpu.memory_space<vmem>>, vector<8x256xf32>
    %c0_85 = arith.constant 0 : index
    %c0_86 = arith.constant 0 : index
    %236 = vector.load %arg4[%c0_85, %c0_86] : memref<256x1024xf32, #tpu.memory_space<vmem>>, vector<256x1024xf32>
    %cst_87 = arith.constant dense<0.000000e+00> : vector<8x1024xf32>
    %237 = tpu.matmul %235, %236, %cst_87 {dimension_numbers = #tpu.dot_dimension_numbers<[1], [0], [0], [1], [0, 0, 1, 1], [], []>} : vector<8x256xf32>, vector<256x1024xf32>, vector<8x1024xf32> -> vector<8x1024xf32>
    %238 = arith.index_cast %c3_i32 : i32 to index
    %c0_88 = arith.constant 0 : index
    %c0_89 = arith.constant 0 : index
    %239 = vector.load %arg14[%238, %c0_88, %c0_89] : memref<8x8x1024xf32, #tpu.memory_space<vmem>>, vector<1x8x512xf32>
    %240 = vector.shape_cast %239 : vector<1x8x512xf32> to vector<8x512xf32>
    %241 = vector.extract_strided_slice %237 {offsets = [0, 0], sizes = [8, 512], strides = [1, 1]} : vector<8x1024xf32> to vector<8x512xf32>
    %242 = arith.addf %240, %241 : vector<8x512xf32>
    %243 = arith.index_cast %234 : i32 to index
    %c0_90 = arith.constant 0 : index
    %c512_91 = arith.constant 512 : index
    %244 = vector.load %arg14[%243, %c0_90, %c512_91] : memref<8x8x1024xf32, #tpu.memory_space<vmem>>, vector<1x8x512xf32>
    %245 = vector.shape_cast %244 : vector<1x8x512xf32> to vector<8x512xf32>
    %246 = vector.extract_strided_slice %237 {offsets = [0, 512], sizes = [8, 512], strides = [1, 1]} : vector<8x1024xf32> to vector<8x512xf32>
    %247 = arith.addf %245, %246 : vector<8x512xf32>
    %248 = vector.extract_strided_slice %242 {offsets = [0, 0], sizes = [8, 128], strides = [1, 1]} : vector<8x512xf32> to vector<8x128xf32>
    %249 = arith.negf %248 : vector<8x128xf32>
    %250 = math.exp %249 : vector<8x128xf32>
    %cst_92 = arith.constant 1.000000e+00 : f32
    %251 = vector.broadcast %cst_92 : f32 to vector<8x128xf32>
    %252 = arith.addf %251, %250 : vector<8x128xf32>
    %253 = arith.divf %251, %252 : vector<8x128xf32>
    %254 = vector.extract_strided_slice %242 {offsets = [0, 128], sizes = [8, 128], strides = [1, 1]} : vector<8x512xf32> to vector<8x128xf32>
    %255 = arith.negf %254 : vector<8x128xf32>
    %256 = math.exp %255 : vector<8x128xf32>
    %cst_93 = arith.constant 1.000000e+00 : f32
    %257 = vector.broadcast %cst_93 : f32 to vector<8x128xf32>
    %258 = arith.addf %257, %256 : vector<8x128xf32>
    %259 = arith.divf %257, %258 : vector<8x128xf32>
    %260 = vector.extract_strided_slice %242 {offsets = [0, 256], sizes = [8, 128], strides = [1, 1]} : vector<8x512xf32> to vector<8x128xf32>
    %261 = math.tanh %260 : vector<8x128xf32>
    %262 = vector.extract_strided_slice %242 {offsets = [0, 384], sizes = [8, 128], strides = [1, 1]} : vector<8x512xf32> to vector<8x128xf32>
    %263 = arith.negf %262 : vector<8x128xf32>
    %264 = math.exp %263 : vector<8x128xf32>
    %cst_94 = arith.constant 1.000000e+00 : f32
    %265 = vector.broadcast %cst_94 : f32 to vector<8x128xf32>
    %266 = arith.addf %265, %264 : vector<8x128xf32>
    %267 = arith.divf %265, %266 : vector<8x128xf32>
    %268 = arith.mulf %259, %196 : vector<8x128xf32>
    %269 = arith.mulf %253, %261 : vector<8x128xf32>
    %270 = arith.addf %268, %269 : vector<8x128xf32>
    %271 = math.tanh %270 : vector<8x128xf32>
    %272 = arith.mulf %267, %271 : vector<8x128xf32>
    %273 = vector.extract_strided_slice %247 {offsets = [0, 0], sizes = [8, 128], strides = [1, 1]} : vector<8x512xf32> to vector<8x128xf32>
    %274 = arith.negf %273 : vector<8x128xf32>
    %275 = math.exp %274 : vector<8x128xf32>
    %cst_95 = arith.constant 1.000000e+00 : f32
    %276 = vector.broadcast %cst_95 : f32 to vector<8x128xf32>
    %277 = arith.addf %276, %275 : vector<8x128xf32>
    %278 = arith.divf %276, %277 : vector<8x128xf32>
    %279 = vector.extract_strided_slice %247 {offsets = [0, 128], sizes = [8, 128], strides = [1, 1]} : vector<8x512xf32> to vector<8x128xf32>
    %280 = arith.negf %279 : vector<8x128xf32>
    %281 = math.exp %280 : vector<8x128xf32>
    %cst_96 = arith.constant 1.000000e+00 : f32
    %282 = vector.broadcast %cst_96 : f32 to vector<8x128xf32>
    %283 = arith.addf %282, %281 : vector<8x128xf32>
    %284 = arith.divf %282, %283 : vector<8x128xf32>
    %285 = vector.extract_strided_slice %247 {offsets = [0, 256], sizes = [8, 128], strides = [1, 1]} : vector<8x512xf32> to vector<8x128xf32>
    %286 = math.tanh %285 : vector<8x128xf32>
    %287 = vector.extract_strided_slice %247 {offsets = [0, 384], sizes = [8, 128], strides = [1, 1]} : vector<8x512xf32> to vector<8x128xf32>
    %288 = arith.negf %287 : vector<8x128xf32>
    %289 = math.exp %288 : vector<8x128xf32>
    %cst_97 = arith.constant 1.000000e+00 : f32
    %290 = vector.broadcast %cst_97 : f32 to vector<8x128xf32>
    %291 = arith.addf %290, %289 : vector<8x128xf32>
    %292 = arith.divf %290, %291 : vector<8x128xf32>
    %293 = arith.mulf %284, %221 : vector<8x128xf32>
    %294 = arith.mulf %278, %286 : vector<8x128xf32>
    %295 = arith.addf %293, %294 : vector<8x128xf32>
    %296 = math.tanh %295 : vector<8x128xf32>
    %297 = arith.mulf %292, %296 : vector<8x128xf32>
    %c0_98 = arith.constant 0 : index
    %c0_99 = arith.constant 0 : index
    %298 = vector.load %arg16[%c0_98, %c0_99] : memref<8x256xf32, #tpu.memory_space<vmem>>, vector<8x128xf32>
    tpu.vector_store %arg16[%c0_98, %c0_99], %272 {strides = array<i32>} : memref<8x256xf32, #tpu.memory_space<vmem>>, vector<8x128xf32>,
    %c0_100 = arith.constant 0 : index
    %c128_101 = arith.constant 128 : index
    %299 = vector.load %arg16[%c0_100, %c128_101] : memref<8x256xf32, #tpu.memory_space<vmem>>, vector<8x128xf32>
    tpu.vector_store %arg16[%c0_100, %c128_101], %297 {strides = array<i32>} : memref<8x256xf32, #tpu.memory_space<vmem>>, vector<8x128xf32>,
    %300 = arith.index_cast %c3_i32 : i32 to index
    %c0_102 = arith.constant 0 : index
    %c0_103 = arith.constant 0 : index
    %301 = vector.load %arg15[%300, %c0_102, %c0_103] : memref<8x8x256xf32, #tpu.memory_space<vmem>>, vector<1x8x128xf32>
    %302 = vector.shape_cast %301 : vector<1x8x128xf32> to vector<8x128xf32>
    %303 = vector.shape_cast %272 : vector<8x128xf32> to vector<1x8x128xf32>
    tpu.vector_store %arg15[%300, %c0_102, %c0_103], %303 {strides = array<i32>} : memref<8x8x256xf32, #tpu.memory_space<vmem>>, vector<1x8x128xf32>,
    %304 = arith.index_cast %234 : i32 to index
    %c0_104 = arith.constant 0 : index
    %c128_105 = arith.constant 128 : index
    %305 = vector.load %arg15[%304, %c0_104, %c128_105] : memref<8x8x256xf32, #tpu.memory_space<vmem>>, vector<1x8x128xf32>
    %306 = vector.shape_cast %305 : vector<1x8x128xf32> to vector<8x128xf32>
    %307 = vector.shape_cast %297 : vector<8x128xf32> to vector<1x8x128xf32>
    tpu.vector_store %arg15[%304, %c0_104, %c128_105], %307 {strides = array<i32>} : memref<8x8x256xf32, #tpu.memory_space<vmem>>, vector<1x8x128xf32>,
    %c4_i32 = arith.constant 4 : i32
    %c7_i32_106 = arith.constant 7 : i32
    %308 = arith.subi %c7_i32_106, %c4_i32 : i32
    %c0_107 = arith.constant 0 : index
    %c0_108 = arith.constant 0 : index
    %309 = vector.load %arg16[%c0_107, %c0_108] : memref<8x256xf32, #tpu.memory_space<vmem>>, vector<8x256xf32>
    %c0_109 = arith.constant 0 : index
    %c0_110 = arith.constant 0 : index
    %310 = vector.load %arg4[%c0_109, %c0_110] : memref<256x1024xf32, #tpu.memory_space<vmem>>, vector<256x1024xf32>
    %cst_111 = arith.constant dense<0.000000e+00> : vector<8x1024xf32>
    %311 = tpu.matmul %309, %310, %cst_111 {dimension_numbers = #tpu.dot_dimension_numbers<[1], [0], [0], [1], [0, 0, 1, 1], [], []>} : vector<8x256xf32>, vector<256x1024xf32>, vector<8x1024xf32> -> vector<8x1024xf32>
    %312 = arith.index_cast %c4_i32 : i32 to index
    %c0_112 = arith.constant 0 : index
    %c0_113 = arith.constant 0 : index
    %313 = vector.load %arg14[%312, %c0_112, %c0_113] : memref<8x8x1024xf32, #tpu.memory_space<vmem>>, vector<1x8x512xf32>
    %314 = vector.shape_cast %313 : vector<1x8x512xf32> to vector<8x512xf32>
    %315 = vector.extract_strided_slice %311 {offsets = [0, 0], sizes = [8, 512], strides = [1, 1]} : vector<8x1024xf32> to vector<8x512xf32>
    %316 = arith.addf %314, %315 : vector<8x512xf32>
    %317 = arith.index_cast %308 : i32 to index
    %c0_114 = arith.constant 0 : index
    %c512_115 = arith.constant 512 : index
    %318 = vector.load %arg14[%317, %c0_114, %c512_115] : memref<8x8x1024xf32, #tpu.memory_space<vmem>>, vector<1x8x512xf32>
    %319 = vector.shape_cast %318 : vector<1x8x512xf32> to vector<8x512xf32>
    %320 = vector.extract_strided_slice %311 {offsets = [0, 512], sizes = [8, 512], strides = [1, 1]} : vector<8x1024xf32> to vector<8x512xf32>
    %321 = arith.addf %319, %320 : vector<8x512xf32>
    %322 = vector.extract_strided_slice %316 {offsets = [0, 0], sizes = [8, 128], strides = [1, 1]} : vector<8x512xf32> to vector<8x128xf32>
    %323 = arith.negf %322 : vector<8x128xf32>
    %324 = math.exp %323 : vector<8x128xf32>
    %cst_116 = arith.constant 1.000000e+00 : f32
    %325 = vector.broadcast %cst_116 : f32 to vector<8x128xf32>
    %326 = arith.addf %325, %324 : vector<8x128xf32>
    %327 = arith.divf %325, %326 : vector<8x128xf32>
    %328 = vector.extract_strided_slice %316 {offsets = [0, 128], sizes = [8, 128], strides = [1, 1]} : vector<8x512xf32> to vector<8x128xf32>
    %329 = arith.negf %328 : vector<8x128xf32>
    %330 = math.exp %329 : vector<8x128xf32>
    %cst_117 = arith.constant 1.000000e+00 : f32
    %331 = vector.broadcast %cst_117 : f32 to vector<8x128xf32>
    %332 = arith.addf %331, %330 : vector<8x128xf32>
    %333 = arith.divf %331, %332 : vector<8x128xf32>
    %334 = vector.extract_strided_slice %316 {offsets = [0, 256], sizes = [8, 128], strides = [1, 1]} : vector<8x512xf32> to vector<8x128xf32>
    %335 = math.tanh %334 : vector<8x128xf32>
    %336 = vector.extract_strided_slice %316 {offsets = [0, 384], sizes = [8, 128], strides = [1, 1]} : vector<8x512xf32> to vector<8x128xf32>
    %337 = arith.negf %336 : vector<8x128xf32>
    %338 = math.exp %337 : vector<8x128xf32>
    %cst_118 = arith.constant 1.000000e+00 : f32
    %339 = vector.broadcast %cst_118 : f32 to vector<8x128xf32>
    %340 = arith.addf %339, %338 : vector<8x128xf32>
    %341 = arith.divf %339, %340 : vector<8x128xf32>
    %342 = arith.mulf %333, %270 : vector<8x128xf32>
    %343 = arith.mulf %327, %335 : vector<8x128xf32>
    %344 = arith.addf %342, %343 : vector<8x128xf32>
    %345 = math.tanh %344 : vector<8x128xf32>
    %346 = arith.mulf %341, %345 : vector<8x128xf32>
    %347 = vector.extract_strided_slice %321 {offsets = [0, 0], sizes = [8, 128], strides = [1, 1]} : vector<8x512xf32> to vector<8x128xf32>
    %348 = arith.negf %347 : vector<8x128xf32>
    %349 = math.exp %348 : vector<8x128xf32>
    %cst_119 = arith.constant 1.000000e+00 : f32
    %350 = vector.broadcast %cst_119 : f32 to vector<8x128xf32>
    %351 = arith.addf %350, %349 : vector<8x128xf32>
    %352 = arith.divf %350, %351 : vector<8x128xf32>
    %353 = vector.extract_strided_slice %321 {offsets = [0, 128], sizes = [8, 128], strides = [1, 1]} : vector<8x512xf32> to vector<8x128xf32>
    %354 = arith.negf %353 : vector<8x128xf32>
    %355 = math.exp %354 : vector<8x128xf32>
    %cst_120 = arith.constant 1.000000e+00 : f32
    %356 = vector.broadcast %cst_120 : f32 to vector<8x128xf32>
    %357 = arith.addf %356, %355 : vector<8x128xf32>
    %358 = arith.divf %356, %357 : vector<8x128xf32>
    %359 = vector.extract_strided_slice %321 {offsets = [0, 256], sizes = [8, 128], strides = [1, 1]} : vector<8x512xf32> to vector<8x128xf32>
    %360 = math.tanh %359 : vector<8x128xf32>
    %361 = vector.extract_strided_slice %321 {offsets = [0, 384], sizes = [8, 128], strides = [1, 1]} : vector<8x512xf32> to vector<8x128xf32>
    %362 = arith.negf %361 : vector<8x128xf32>
    %363 = math.exp %362 : vector<8x128xf32>
    %cst_121 = arith.constant 1.000000e+00 : f32
    %364 = vector.broadcast %cst_121 : f32 to vector<8x128xf32>
    %365 = arith.addf %364, %363 : vector<8x128xf32>
    %366 = arith.divf %364, %365 : vector<8x128xf32>
    %367 = arith.mulf %358, %295 : vector<8x128xf32>
    %368 = arith.mulf %352, %360 : vector<8x128xf32>
    %369 = arith.addf %367, %368 : vector<8x128xf32>
    %370 = math.tanh %369 : vector<8x128xf32>
    %371 = arith.mulf %366, %370 : vector<8x128xf32>
    %c0_122 = arith.constant 0 : index
    %c0_123 = arith.constant 0 : index
    %372 = vector.load %arg16[%c0_122, %c0_123] : memref<8x256xf32, #tpu.memory_space<vmem>>, vector<8x128xf32>
    tpu.vector_store %arg16[%c0_122, %c0_123], %346 {strides = array<i32>} : memref<8x256xf32, #tpu.memory_space<vmem>>, vector<8x128xf32>,
    %c0_124 = arith.constant 0 : index
    %c128_125 = arith.constant 128 : index
    %373 = vector.load %arg16[%c0_124, %c128_125] : memref<8x256xf32, #tpu.memory_space<vmem>>, vector<8x128xf32>
    tpu.vector_store %arg16[%c0_124, %c128_125], %371 {strides = array<i32>} : memref<8x256xf32, #tpu.memory_space<vmem>>, vector<8x128xf32>,
    %374 = arith.index_cast %c4_i32 : i32 to index
    %c0_126 = arith.constant 0 : index
    %c0_127 = arith.constant 0 : index
    %375 = vector.load %arg15[%374, %c0_126, %c0_127] : memref<8x8x256xf32, #tpu.memory_space<vmem>>, vector<1x8x128xf32>
    %376 = vector.shape_cast %375 : vector<1x8x128xf32> to vector<8x128xf32>
    %377 = vector.shape_cast %346 : vector<8x128xf32> to vector<1x8x128xf32>
    tpu.vector_store %arg15[%374, %c0_126, %c0_127], %377 {strides = array<i32>} : memref<8x8x256xf32, #tpu.memory_space<vmem>>, vector<1x8x128xf32>,
    %378 = arith.index_cast %308 : i32 to index
    %c0_128 = arith.constant 0 : index
    %c128_129 = arith.constant 128 : index
    %379 = vector.load %arg15[%378, %c0_128, %c128_129] : memref<8x8x256xf32, #tpu.memory_space<vmem>>, vector<1x8x128xf32>
    %380 = vector.shape_cast %379 : vector<1x8x128xf32> to vector<8x128xf32>
    %381 = vector.shape_cast %371 : vector<8x128xf32> to vector<1x8x128xf32>
    tpu.vector_store %arg15[%378, %c0_128, %c128_129], %381 {strides = array<i32>} : memref<8x8x256xf32, #tpu.memory_space<vmem>>, vector<1x8x128xf32>,
    %c5_i32 = arith.constant 5 : i32
    %c7_i32_130 = arith.constant 7 : i32
    %382 = arith.subi %c7_i32_130, %c5_i32 : i32
    %c0_131 = arith.constant 0 : index
    %c0_132 = arith.constant 0 : index
    %383 = vector.load %arg16[%c0_131, %c0_132] : memref<8x256xf32, #tpu.memory_space<vmem>>, vector<8x256xf32>
    %c0_133 = arith.constant 0 : index
    %c0_134 = arith.constant 0 : index
    %384 = vector.load %arg4[%c0_133, %c0_134] : memref<256x1024xf32, #tpu.memory_space<vmem>>, vector<256x1024xf32>
    %cst_135 = arith.constant dense<0.000000e+00> : vector<8x1024xf32>
    %385 = tpu.matmul %383, %384, %cst_135 {dimension_numbers = #tpu.dot_dimension_numbers<[1], [0], [0], [1], [0, 0, 1, 1], [], []>} : vector<8x256xf32>, vector<256x1024xf32>, vector<8x1024xf32> -> vector<8x1024xf32>
    %386 = arith.index_cast %c5_i32 : i32 to index
    %c0_136 = arith.constant 0 : index
    %c0_137 = arith.constant 0 : index
    %387 = vector.load %arg14[%386, %c0_136, %c0_137] : memref<8x8x1024xf32, #tpu.memory_space<vmem>>, vector<1x8x512xf32>
    %388 = vector.shape_cast %387 : vector<1x8x512xf32> to vector<8x512xf32>
    %389 = vector.extract_strided_slice %385 {offsets = [0, 0], sizes = [8, 512], strides = [1, 1]} : vector<8x1024xf32> to vector<8x512xf32>
    %390 = arith.addf %388, %389 : vector<8x512xf32>
    %391 = arith.index_cast %382 : i32 to index
    %c0_138 = arith.constant 0 : index
    %c512_139 = arith.constant 512 : index
    %392 = vector.load %arg14[%391, %c0_138, %c512_139] : memref<8x8x1024xf32, #tpu.memory_space<vmem>>, vector<1x8x512xf32>
    %393 = vector.shape_cast %392 : vector<1x8x512xf32> to vector<8x512xf32>
    %394 = vector.extract_strided_slice %385 {offsets = [0, 512], sizes = [8, 512], strides = [1, 1]} : vector<8x1024xf32> to vector<8x512xf32>
    %395 = arith.addf %393, %394 : vector<8x512xf32>
    %396 = vector.extract_strided_slice %390 {offsets = [0, 0], sizes = [8, 128], strides = [1, 1]} : vector<8x512xf32> to vector<8x128xf32>
    %397 = arith.negf %396 : vector<8x128xf32>
    %398 = math.exp %397 : vector<8x128xf32>
    %cst_140 = arith.constant 1.000000e+00 : f32
    %399 = vector.broadcast %cst_140 : f32 to vector<8x128xf32>
    %400 = arith.addf %399, %398 : vector<8x128xf32>
    %401 = arith.divf %399, %400 : vector<8x128xf32>
    %402 = vector.extract_strided_slice %390 {offsets = [0, 128], sizes = [8, 128], strides = [1, 1]} : vector<8x512xf32> to vector<8x128xf32>
    %403 = arith.negf %402 : vector<8x128xf32>
    %404 = math.exp %403 : vector<8x128xf32>
    %cst_141 = arith.constant 1.000000e+00 : f32
    %405 = vector.broadcast %cst_141 : f32 to vector<8x128xf32>
    %406 = arith.addf %405, %404 : vector<8x128xf32>
    %407 = arith.divf %405, %406 : vector<8x128xf32>
    %408 = vector.extract_strided_slice %390 {offsets = [0, 256], sizes = [8, 128], strides = [1, 1]} : vector<8x512xf32> to vector<8x128xf32>
    %409 = math.tanh %408 : vector<8x128xf32>
    %410 = vector.extract_strided_slice %390 {offsets = [0, 384], sizes = [8, 128], strides = [1, 1]} : vector<8x512xf32> to vector<8x128xf32>
    %411 = arith.negf %410 : vector<8x128xf32>
    %412 = math.exp %411 : vector<8x128xf32>
    %cst_142 = arith.constant 1.000000e+00 : f32
    %413 = vector.broadcast %cst_142 : f32 to vector<8x128xf32>
    %414 = arith.addf %413, %412 : vector<8x128xf32>
    %415 = arith.divf %413, %414 : vector<8x128xf32>
    %416 = arith.mulf %407, %344 : vector<8x128xf32>
    %417 = arith.mulf %401, %409 : vector<8x128xf32>
    %418 = arith.addf %416, %417 : vector<8x128xf32>
    %419 = math.tanh %418 : vector<8x128xf32>
    %420 = arith.mulf %415, %419 : vector<8x128xf32>
    %421 = vector.extract_strided_slice %395 {offsets = [0, 0], sizes = [8, 128], strides = [1, 1]} : vector<8x512xf32> to vector<8x128xf32>
    %422 = arith.negf %421 : vector<8x128xf32>
    %423 = math.exp %422 : vector<8x128xf32>
    %cst_143 = arith.constant 1.000000e+00 : f32
    %424 = vector.broadcast %cst_143 : f32 to vector<8x128xf32>
    %425 = arith.addf %424, %423 : vector<8x128xf32>
    %426 = arith.divf %424, %425 : vector<8x128xf32>
    %427 = vector.extract_strided_slice %395 {offsets = [0, 128], sizes = [8, 128], strides = [1, 1]} : vector<8x512xf32> to vector<8x128xf32>
    %428 = arith.negf %427 : vector<8x128xf32>
    %429 = math.exp %428 : vector<8x128xf32>
    %cst_144 = arith.constant 1.000000e+00 : f32
    %430 = vector.broadcast %cst_144 : f32 to vector<8x128xf32>
    %431 = arith.addf %430, %429 : vector<8x128xf32>
    %432 = arith.divf %430, %431 : vector<8x128xf32>
    %433 = vector.extract_strided_slice %395 {offsets = [0, 256], sizes = [8, 128], strides = [1, 1]} : vector<8x512xf32> to vector<8x128xf32>
    %434 = math.tanh %433 : vector<8x128xf32>
    %435 = vector.extract_strided_slice %395 {offsets = [0, 384], sizes = [8, 128], strides = [1, 1]} : vector<8x512xf32> to vector<8x128xf32>
    %436 = arith.negf %435 : vector<8x128xf32>
    %437 = math.exp %436 : vector<8x128xf32>
    %cst_145 = arith.constant 1.000000e+00 : f32
    %438 = vector.broadcast %cst_145 : f32 to vector<8x128xf32>
    %439 = arith.addf %438, %437 : vector<8x128xf32>
    %440 = arith.divf %438, %439 : vector<8x128xf32>
    %441 = arith.mulf %432, %369 : vector<8x128xf32>
    %442 = arith.mulf %426, %434 : vector<8x128xf32>
    %443 = arith.addf %441, %442 : vector<8x128xf32>
    %444 = math.tanh %443 : vector<8x128xf32>
    %445 = arith.mulf %440, %444 : vector<8x128xf32>
    %c0_146 = arith.constant 0 : index
    %c0_147 = arith.constant 0 : index
    %446 = vector.load %arg16[%c0_146, %c0_147] : memref<8x256xf32, #tpu.memory_space<vmem>>, vector<8x128xf32>
    tpu.vector_store %arg16[%c0_146, %c0_147], %420 {strides = array<i32>} : memref<8x256xf32, #tpu.memory_space<vmem>>, vector<8x128xf32>,
    %c0_148 = arith.constant 0 : index
    %c128_149 = arith.constant 128 : index
    %447 = vector.load %arg16[%c0_148, %c128_149] : memref<8x256xf32, #tpu.memory_space<vmem>>, vector<8x128xf32>
    tpu.vector_store %arg16[%c0_148, %c128_149], %445 {strides = array<i32>} : memref<8x256xf32, #tpu.memory_space<vmem>>, vector<8x128xf32>,
    %448 = arith.index_cast %c5_i32 : i32 to index
    %c0_150 = arith.constant 0 : index
    %c0_151 = arith.constant 0 : index
    %449 = vector.load %arg15[%448, %c0_150, %c0_151] : memref<8x8x256xf32, #tpu.memory_space<vmem>>, vector<1x8x128xf32>
    %450 = vector.shape_cast %449 : vector<1x8x128xf32> to vector<8x128xf32>
    %451 = vector.shape_cast %420 : vector<8x128xf32> to vector<1x8x128xf32>
    tpu.vector_store %arg15[%448, %c0_150, %c0_151], %451 {strides = array<i32>} : memref<8x8x256xf32, #tpu.memory_space<vmem>>, vector<1x8x128xf32>,
    %452 = arith.index_cast %382 : i32 to index
    %c0_152 = arith.constant 0 : index
    %c128_153 = arith.constant 128 : index
    %453 = vector.load %arg15[%452, %c0_152, %c128_153] : memref<8x8x256xf32, #tpu.memory_space<vmem>>, vector<1x8x128xf32>
    %454 = vector.shape_cast %453 : vector<1x8x128xf32> to vector<8x128xf32>
    %455 = vector.shape_cast %445 : vector<8x128xf32> to vector<1x8x128xf32>
    tpu.vector_store %arg15[%452, %c0_152, %c128_153], %455 {strides = array<i32>} : memref<8x8x256xf32, #tpu.memory_space<vmem>>, vector<1x8x128xf32>,
    %c6_i32 = arith.constant 6 : i32
    %c7_i32_154 = arith.constant 7 : i32
    %456 = arith.subi %c7_i32_154, %c6_i32 : i32
    %c0_155 = arith.constant 0 : index
    %c0_156 = arith.constant 0 : index
    %457 = vector.load %arg16[%c0_155, %c0_156] : memref<8x256xf32, #tpu.memory_space<vmem>>, vector<8x256xf32>
    %c0_157 = arith.constant 0 : index
    %c0_158 = arith.constant 0 : index
    %458 = vector.load %arg4[%c0_157, %c0_158] : memref<256x1024xf32, #tpu.memory_space<vmem>>, vector<256x1024xf32>
    %cst_159 = arith.constant dense<0.000000e+00> : vector<8x1024xf32>
    %459 = tpu.matmul %457, %458, %cst_159 {dimension_numbers = #tpu.dot_dimension_numbers<[1], [0], [0], [1], [0, 0, 1, 1], [], []>} : vector<8x256xf32>, vector<256x1024xf32>, vector<8x1024xf32> -> vector<8x1024xf32>
    %460 = arith.index_cast %c6_i32 : i32 to index
    %c0_160 = arith.constant 0 : index
    %c0_161 = arith.constant 0 : index
    %461 = vector.load %arg14[%460, %c0_160, %c0_161] : memref<8x8x1024xf32, #tpu.memory_space<vmem>>, vector<1x8x512xf32>
    %462 = vector.shape_cast %461 : vector<1x8x512xf32> to vector<8x512xf32>
    %463 = vector.extract_strided_slice %459 {offsets = [0, 0], sizes = [8, 512], strides = [1, 1]} : vector<8x1024xf32> to vector<8x512xf32>
    %464 = arith.addf %462, %463 : vector<8x512xf32>
    %465 = arith.index_cast %456 : i32 to index
    %c0_162 = arith.constant 0 : index
    %c512_163 = arith.constant 512 : index
    %466 = vector.load %arg14[%465, %c0_162, %c512_163] : memref<8x8x1024xf32, #tpu.memory_space<vmem>>, vector<1x8x512xf32>
    %467 = vector.shape_cast %466 : vector<1x8x512xf32> to vector<8x512xf32>
    %468 = vector.extract_strided_slice %459 {offsets = [0, 512], sizes = [8, 512], strides = [1, 1]} : vector<8x1024xf32> to vector<8x512xf32>
    %469 = arith.addf %467, %468 : vector<8x512xf32>
    %470 = vector.extract_strided_slice %464 {offsets = [0, 0], sizes = [8, 128], strides = [1, 1]} : vector<8x512xf32> to vector<8x128xf32>
    %471 = arith.negf %470 : vector<8x128xf32>
    %472 = math.exp %471 : vector<8x128xf32>
    %cst_164 = arith.constant 1.000000e+00 : f32
    %473 = vector.broadcast %cst_164 : f32 to vector<8x128xf32>
    %474 = arith.addf %473, %472 : vector<8x128xf32>
    %475 = arith.divf %473, %474 : vector<8x128xf32>
    %476 = vector.extract_strided_slice %464 {offsets = [0, 128], sizes = [8, 128], strides = [1, 1]} : vector<8x512xf32> to vector<8x128xf32>
    %477 = arith.negf %476 : vector<8x128xf32>
    %478 = math.exp %477 : vector<8x128xf32>
    %cst_165 = arith.constant 1.000000e+00 : f32
    %479 = vector.broadcast %cst_165 : f32 to vector<8x128xf32>
    %480 = arith.addf %479, %478 : vector<8x128xf32>
    %481 = arith.divf %479, %480 : vector<8x128xf32>
    %482 = vector.extract_strided_slice %464 {offsets = [0, 256], sizes = [8, 128], strides = [1, 1]} : vector<8x512xf32> to vector<8x128xf32>
    %483 = math.tanh %482 : vector<8x128xf32>
    %484 = vector.extract_strided_slice %464 {offsets = [0, 384], sizes = [8, 128], strides = [1, 1]} : vector<8x512xf32> to vector<8x128xf32>
    %485 = arith.negf %484 : vector<8x128xf32>
    %486 = math.exp %485 : vector<8x128xf32>
    %cst_166 = arith.constant 1.000000e+00 : f32
    %487 = vector.broadcast %cst_166 : f32 to vector<8x128xf32>
    %488 = arith.addf %487, %486 : vector<8x128xf32>
    %489 = arith.divf %487, %488 : vector<8x128xf32>
    %490 = arith.mulf %481, %418 : vector<8x128xf32>
    %491 = arith.mulf %475, %483 : vector<8x128xf32>
    %492 = arith.addf %490, %491 : vector<8x128xf32>
    %493 = math.tanh %492 : vector<8x128xf32>
    %494 = arith.mulf %489, %493 : vector<8x128xf32>
    %495 = vector.extract_strided_slice %469 {offsets = [0, 0], sizes = [8, 128], strides = [1, 1]} : vector<8x512xf32> to vector<8x128xf32>
    %496 = arith.negf %495 : vector<8x128xf32>
    %497 = math.exp %496 : vector<8x128xf32>
    %cst_167 = arith.constant 1.000000e+00 : f32
    %498 = vector.broadcast %cst_167 : f32 to vector<8x128xf32>
    %499 = arith.addf %498, %497 : vector<8x128xf32>
    %500 = arith.divf %498, %499 : vector<8x128xf32>
    %501 = vector.extract_strided_slice %469 {offsets = [0, 128], sizes = [8, 128], strides = [1, 1]} : vector<8x512xf32> to vector<8x128xf32>
    %502 = arith.negf %501 : vector<8x128xf32>
    %503 = math.exp %502 : vector<8x128xf32>
    %cst_168 = arith.constant 1.000000e+00 : f32
    %504 = vector.broadcast %cst_168 : f32 to vector<8x128xf32>
    %505 = arith.addf %504, %503 : vector<8x128xf32>
    %506 = arith.divf %504, %505 : vector<8x128xf32>
    %507 = vector.extract_strided_slice %469 {offsets = [0, 256], sizes = [8, 128], strides = [1, 1]} : vector<8x512xf32> to vector<8x128xf32>
    %508 = math.tanh %507 : vector<8x128xf32>
    %509 = vector.extract_strided_slice %469 {offsets = [0, 384], sizes = [8, 128], strides = [1, 1]} : vector<8x512xf32> to vector<8x128xf32>
    %510 = arith.negf %509 : vector<8x128xf32>
    %511 = math.exp %510 : vector<8x128xf32>
    %cst_169 = arith.constant 1.000000e+00 : f32
    %512 = vector.broadcast %cst_169 : f32 to vector<8x128xf32>
    %513 = arith.addf %512, %511 : vector<8x128xf32>
    %514 = arith.divf %512, %513 : vector<8x128xf32>
    %515 = arith.mulf %506, %443 : vector<8x128xf32>
    %516 = arith.mulf %500, %508 : vector<8x128xf32>
    %517 = arith.addf %515, %516 : vector<8x128xf32>
    %518 = math.tanh %517 : vector<8x128xf32>
    %519 = arith.mulf %514, %518 : vector<8x128xf32>
    %c0_170 = arith.constant 0 : index
    %c0_171 = arith.constant 0 : index
    %520 = vector.load %arg16[%c0_170, %c0_171] : memref<8x256xf32, #tpu.memory_space<vmem>>, vector<8x128xf32>
    tpu.vector_store %arg16[%c0_170, %c0_171], %494 {strides = array<i32>} : memref<8x256xf32, #tpu.memory_space<vmem>>, vector<8x128xf32>,
    %c0_172 = arith.constant 0 : index
    %c128_173 = arith.constant 128 : index
    %521 = vector.load %arg16[%c0_172, %c128_173] : memref<8x256xf32, #tpu.memory_space<vmem>>, vector<8x128xf32>
    tpu.vector_store %arg16[%c0_172, %c128_173], %519 {strides = array<i32>} : memref<8x256xf32, #tpu.memory_space<vmem>>, vector<8x128xf32>,
    %522 = arith.index_cast %c6_i32 : i32 to index
    %c0_174 = arith.constant 0 : index
    %c0_175 = arith.constant 0 : index
    %523 = vector.load %arg15[%522, %c0_174, %c0_175] : memref<8x8x256xf32, #tpu.memory_space<vmem>>, vector<1x8x128xf32>
    %524 = vector.shape_cast %523 : vector<1x8x128xf32> to vector<8x128xf32>
    %525 = vector.shape_cast %494 : vector<8x128xf32> to vector<1x8x128xf32>
    tpu.vector_store %arg15[%522, %c0_174, %c0_175], %525 {strides = array<i32>} : memref<8x8x256xf32, #tpu.memory_space<vmem>>, vector<1x8x128xf32>,
    %526 = arith.index_cast %456 : i32 to index
    %c0_176 = arith.constant 0 : index
    %c128_177 = arith.constant 128 : index
    %527 = vector.load %arg15[%526, %c0_176, %c128_177] : memref<8x8x256xf32, #tpu.memory_space<vmem>>, vector<1x8x128xf32>
    %528 = vector.shape_cast %527 : vector<1x8x128xf32> to vector<8x128xf32>
    %529 = vector.shape_cast %519 : vector<8x128xf32> to vector<1x8x128xf32>
    tpu.vector_store %arg15[%526, %c0_176, %c128_177], %529 {strides = array<i32>} : memref<8x8x256xf32, #tpu.memory_space<vmem>>, vector<1x8x128xf32>,
    %c7_i32_178 = arith.constant 7 : i32
    %c7_i32_179 = arith.constant 7 : i32
    %530 = arith.subi %c7_i32_179, %c7_i32_178 : i32
    %c0_180 = arith.constant 0 : index
    %c0_181 = arith.constant 0 : index
    %531 = vector.load %arg16[%c0_180, %c0_181] : memref<8x256xf32, #tpu.memory_space<vmem>>, vector<8x256xf32>
    %c0_182 = arith.constant 0 : index
    %c0_183 = arith.constant 0 : index
    %532 = vector.load %arg4[%c0_182, %c0_183] : memref<256x1024xf32, #tpu.memory_space<vmem>>, vector<256x1024xf32>
    %cst_184 = arith.constant dense<0.000000e+00> : vector<8x1024xf32>
    %533 = tpu.matmul %531, %532, %cst_184 {dimension_numbers = #tpu.dot_dimension_numbers<[1], [0], [0], [1], [0, 0, 1, 1], [], []>} : vector<8x256xf32>, vector<256x1024xf32>, vector<8x1024xf32> -> vector<8x1024xf32>
    %534 = arith.index_cast %c7_i32_178 : i32 to index
    %c0_185 = arith.constant 0 : index
    %c0_186 = arith.constant 0 : index
    %535 = vector.load %arg14[%534, %c0_185, %c0_186] : memref<8x8x1024xf32, #tpu.memory_space<vmem>>, vector<1x8x512xf32>
    %536 = vector.shape_cast %535 : vector<1x8x512xf32> to vector<8x512xf32>
    %537 = vector.extract_strided_slice %533 {offsets = [0, 0], sizes = [8, 512], strides = [1, 1]} : vector<8x1024xf32> to vector<8x512xf32>
    %538 = arith.addf %536, %537 : vector<8x512xf32>
    %539 = arith.index_cast %530 : i32 to index
    %c0_187 = arith.constant 0 : index
    %c512_188 = arith.constant 512 : index
    %540 = vector.load %arg14[%539, %c0_187, %c512_188] : memref<8x8x1024xf32, #tpu.memory_space<vmem>>, vector<1x8x512xf32>
    %541 = vector.shape_cast %540 : vector<1x8x512xf32> to vector<8x512xf32>
    %542 = vector.extract_strided_slice %533 {offsets = [0, 512], sizes = [8, 512], strides = [1, 1]} : vector<8x1024xf32> to vector<8x512xf32>
    %543 = arith.addf %541, %542 : vector<8x512xf32>
    %544 = vector.extract_strided_slice %538 {offsets = [0, 0], sizes = [8, 128], strides = [1, 1]} : vector<8x512xf32> to vector<8x128xf32>
    %545 = arith.negf %544 : vector<8x128xf32>
    %546 = math.exp %545 : vector<8x128xf32>
    %cst_189 = arith.constant 1.000000e+00 : f32
    %547 = vector.broadcast %cst_189 : f32 to vector<8x128xf32>
    %548 = arith.addf %547, %546 : vector<8x128xf32>
    %549 = arith.divf %547, %548 : vector<8x128xf32>
    %550 = vector.extract_strided_slice %538 {offsets = [0, 128], sizes = [8, 128], strides = [1, 1]} : vector<8x512xf32> to vector<8x128xf32>
    %551 = arith.negf %550 : vector<8x128xf32>
    %552 = math.exp %551 : vector<8x128xf32>
    %cst_190 = arith.constant 1.000000e+00 : f32
    %553 = vector.broadcast %cst_190 : f32 to vector<8x128xf32>
    %554 = arith.addf %553, %552 : vector<8x128xf32>
    %555 = arith.divf %553, %554 : vector<8x128xf32>
    %556 = vector.extract_strided_slice %538 {offsets = [0, 256], sizes = [8, 128], strides = [1, 1]} : vector<8x512xf32> to vector<8x128xf32>
    %557 = math.tanh %556 : vector<8x128xf32>
    %558 = vector.extract_strided_slice %538 {offsets = [0, 384], sizes = [8, 128], strides = [1, 1]} : vector<8x512xf32> to vector<8x128xf32>
    %559 = arith.negf %558 : vector<8x128xf32>
    %560 = math.exp %559 : vector<8x128xf32>
    %cst_191 = arith.constant 1.000000e+00 : f32
    %561 = vector.broadcast %cst_191 : f32 to vector<8x128xf32>
    %562 = arith.addf %561, %560 : vector<8x128xf32>
    %563 = arith.divf %561, %562 : vector<8x128xf32>
    %564 = arith.mulf %555, %492 : vector<8x128xf32>
    %565 = arith.mulf %549, %557 : vector<8x128xf32>
    %566 = arith.addf %564, %565 : vector<8x128xf32>
    %567 = math.tanh %566 : vector<8x128xf32>
    %568 = arith.mulf %563, %567 : vector<8x128xf32>
    %569 = vector.extract_strided_slice %543 {offsets = [0, 0], sizes = [8, 128], strides = [1, 1]} : vector<8x512xf32> to vector<8x128xf32>
    %570 = arith.negf %569 : vector<8x128xf32>
    %571 = math.exp %570 : vector<8x128xf32>
    %cst_192 = arith.constant 1.000000e+00 : f32
    %572 = vector.broadcast %cst_192 : f32 to vector<8x128xf32>
    %573 = arith.addf %572, %571 : vector<8x128xf32>
    %574 = arith.divf %572, %573 : vector<8x128xf32>
    %575 = vector.extract_strided_slice %543 {offsets = [0, 128], sizes = [8, 128], strides = [1, 1]} : vector<8x512xf32> to vector<8x128xf32>
    %576 = arith.negf %575 : vector<8x128xf32>
    %577 = math.exp %576 : vector<8x128xf32>
    %cst_193 = arith.constant 1.000000e+00 : f32
    %578 = vector.broadcast %cst_193 : f32 to vector<8x128xf32>
    %579 = arith.addf %578, %577 : vector<8x128xf32>
    %580 = arith.divf %578, %579 : vector<8x128xf32>
    %581 = vector.extract_strided_slice %543 {offsets = [0, 256], sizes = [8, 128], strides = [1, 1]} : vector<8x512xf32> to vector<8x128xf32>
    %582 = math.tanh %581 : vector<8x128xf32>
    %583 = vector.extract_strided_slice %543 {offsets = [0, 384], sizes = [8, 128], strides = [1, 1]} : vector<8x512xf32> to vector<8x128xf32>
    %584 = arith.negf %583 : vector<8x128xf32>
    %585 = math.exp %584 : vector<8x128xf32>
    %cst_194 = arith.constant 1.000000e+00 : f32
    %586 = vector.broadcast %cst_194 : f32 to vector<8x128xf32>
    %587 = arith.addf %586, %585 : vector<8x128xf32>
    %588 = arith.divf %586, %587 : vector<8x128xf32>
    %589 = arith.mulf %580, %517 : vector<8x128xf32>
    %590 = arith.mulf %574, %582 : vector<8x128xf32>
    %591 = arith.addf %589, %590 : vector<8x128xf32>
    %592 = math.tanh %591 : vector<8x128xf32>
    %593 = arith.mulf %588, %592 : vector<8x128xf32>
    %c0_195 = arith.constant 0 : index
    %c0_196 = arith.constant 0 : index
    %594 = vector.load %arg16[%c0_195, %c0_196] : memref<8x256xf32, #tpu.memory_space<vmem>>, vector<8x128xf32>
    tpu.vector_store %arg16[%c0_195, %c0_196], %568 {strides = array<i32>} : memref<8x256xf32, #tpu.memory_space<vmem>>, vector<8x128xf32>,
    %c0_197 = arith.constant 0 : index
    %c128_198 = arith.constant 128 : index
    %595 = vector.load %arg16[%c0_197, %c128_198] : memref<8x256xf32, #tpu.memory_space<vmem>>, vector<8x128xf32>
    tpu.vector_store %arg16[%c0_197, %c128_198], %593 {strides = array<i32>} : memref<8x256xf32, #tpu.memory_space<vmem>>, vector<8x128xf32>,
    %596 = arith.index_cast %c7_i32_178 : i32 to index
    %c0_199 = arith.constant 0 : index
    %c0_200 = arith.constant 0 : index
    %597 = vector.load %arg15[%596, %c0_199, %c0_200] : memref<8x8x256xf32, #tpu.memory_space<vmem>>, vector<1x8x128xf32>
    %598 = vector.shape_cast %597 : vector<1x8x128xf32> to vector<8x128xf32>
    %599 = vector.shape_cast %568 : vector<8x128xf32> to vector<1x8x128xf32>
    tpu.vector_store %arg15[%596, %c0_199, %c0_200], %599 {strides = array<i32>} : memref<8x8x256xf32, #tpu.memory_space<vmem>>, vector<1x8x128xf32>,
    %600 = arith.index_cast %530 : i32 to index
    %c0_201 = arith.constant 0 : index
    %c128_202 = arith.constant 128 : index
    %601 = vector.load %arg15[%600, %c0_201, %c128_202] : memref<8x8x256xf32, #tpu.memory_space<vmem>>, vector<1x8x128xf32>
    %602 = vector.shape_cast %601 : vector<1x8x128xf32> to vector<8x128xf32>
    %603 = vector.shape_cast %593 : vector<8x128xf32> to vector<1x8x128xf32>
    tpu.vector_store %arg15[%600, %c0_201, %c128_202], %603 {strides = array<i32>} : memref<8x8x256xf32, #tpu.memory_space<vmem>>, vector<1x8x128xf32>,
    %c8_i32 = arith.constant 8 : i32
    %c0_203 = arith.constant 0 : index
    %c0_204 = arith.constant 0 : index
    %c0_205 = arith.constant 0 : index
    %604 = vector.load %arg15[%c0_203, %c0_204, %c0_205] : memref<8x8x256xf32, #tpu.memory_space<vmem>>, vector<8x8x256xf32>
    %605 = vector.shape_cast %604 : vector<8x8x256xf32> to vector<64x256xf32>
    %606 = arith.truncf %605 : vector<64x256xf32> to vector<64x256xbf16>
    %c0_206 = arith.constant 0 : index
    %c0_207 = arith.constant 0 : index
    %607 = vector.load %arg5[%c0_206, %c0_207] : memref<256x512xbf16, #tpu.memory_space<vmem>>, vector<256x512xbf16>
    %cst_208 = arith.constant dense<0.000000e+00> : vector<64x512xf32>
    %608 = tpu.matmul %606, %607, %cst_208 {dimension_numbers = #tpu.dot_dimension_numbers<[1], [0], [0], [1], [0, 0, 1, 1], [], []>} : vector<64x256xbf16>, vector<256x512xbf16>, vector<64x512xf32> -> vector<64x512xf32>
    %c0_209 = arith.constant 0 : index
    %c0_210 = arith.constant 0 : index
    %609 = vector.load %arg6[%c0_209, %c0_210] : memref<1x512xf32, #tpu.memory_space<vmem>>, vector<1x512xf32>
    %610 = vector.broadcast %609 : vector<1x512xf32> to vector<64x512xf32>
    %611 = arith.addf %608, %610 : vector<64x512xf32>
    %612 = vector.shape_cast %611 : vector<64x512xf32> to vector<8x8x512xf32>
    %c0_211 = arith.constant 0 : index
    %c0_212 = arith.constant 0 : index
    %c0_213 = arith.constant 0 : index
    %613 = vector.load %arg14[%c0_211, %c0_212, %c0_213] : memref<8x8x1024xf32, #tpu.memory_space<vmem>>, vector<8x8x512xf32>
    tpu.vector_store %arg14[%c0_211, %c0_212, %c0_213], %612 {strides = array<i32>} : memref<8x8x1024xf32, #tpu.memory_space<vmem>>, vector<8x8x512xf32>,
    %c0_i32_214 = arith.constant 0 : i32
    %614 = arith.index_cast %c0_i32_214 : i32 to index
    %c0_215 = arith.constant 0 : index
    %c0_216 = arith.constant 0 : index
    %615 = vector.load %arg14[%614, %c0_215, %c0_216] : memref<8x8x1024xf32, #tpu.memory_space<vmem>>, vector<1x8x512xf32>
    %616 = vector.shape_cast %615 : vector<1x8x512xf32> to vector<8x512xf32>
    %c0_217 = arith.constant 0 : index
    %c0_218 = arith.constant 0 : index
    %617 = vector.load %arg7[%c0_217, %c0_218] : memref<128x512xf32, #tpu.memory_space<vmem>>, vector<128x512xf32>
    %cst_219 = arith.constant dense<0.000000e+00> : vector<8x512xf32>
    %618 = tpu.matmul %11, %617, %cst_219 {dimension_numbers = #tpu.dot_dimension_numbers<[1], [0], [0], [1], [0, 0, 1, 1], [], []>} : vector<8x128xf32>, vector<128x512xf32>, vector<8x512xf32> -> vector<8x512xf32>
    %619 = arith.addf %616, %618 : vector<8x512xf32>
    %620 = vector.extract_strided_slice %619 {offsets = [0, 0], sizes = [8, 128], strides = [1, 1]} : vector<8x512xf32> to vector<8x128xf32>
    %621 = arith.negf %620 : vector<8x128xf32>
    %622 = math.exp %621 : vector<8x128xf32>
    %cst_220 = arith.constant 1.000000e+00 : f32
    %623 = vector.broadcast %cst_220 : f32 to vector<8x128xf32>
    %624 = arith.addf %623, %622 : vector<8x128xf32>
    %625 = arith.divf %623, %624 : vector<8x128xf32>
    %626 = vector.extract_strided_slice %619 {offsets = [0, 128], sizes = [8, 128], strides = [1, 1]} : vector<8x512xf32> to vector<8x128xf32>
    %627 = arith.negf %626 : vector<8x128xf32>
    %628 = math.exp %627 : vector<8x128xf32>
    %cst_221 = arith.constant 1.000000e+00 : f32
    %629 = vector.broadcast %cst_221 : f32 to vector<8x128xf32>
    %630 = arith.addf %629, %628 : vector<8x128xf32>
    %631 = arith.divf %629, %630 : vector<8x128xf32>
    %632 = vector.extract_strided_slice %619 {offsets = [0, 256], sizes = [8, 128], strides = [1, 1]} : vector<8x512xf32> to vector<8x128xf32>
    %633 = math.tanh %632 : vector<8x128xf32>
    %634 = vector.extract_strided_slice %619 {offsets = [0, 384], sizes = [8, 128], strides = [1, 1]} : vector<8x512xf32> to vector<8x128xf32>
    %635 = arith.negf %634 : vector<8x128xf32>
    %636 = math.exp %635 : vector<8x128xf32>
    %cst_222 = arith.constant 1.000000e+00 : f32
    %637 = vector.broadcast %cst_222 : f32 to vector<8x128xf32>
    %638 = arith.addf %637, %636 : vector<8x128xf32>
    %639 = arith.divf %637, %638 : vector<8x128xf32>
    %640 = arith.mulf %631, %11 : vector<8x128xf32>
    %641 = arith.mulf %625, %633 : vector<8x128xf32>
    %642 = arith.addf %640, %641 : vector<8x128xf32>
    %643 = math.tanh %642 : vector<8x128xf32>
    %644 = arith.mulf %639, %643 : vector<8x128xf32>
    %c1_i32_223 = arith.constant 1 : i32
    %645 = arith.index_cast %c1_i32_223 : i32 to index
    %c0_224 = arith.constant 0 : index
    %c0_225 = arith.constant 0 : index
    %646 = vector.load %arg14[%645, %c0_224, %c0_225] : memref<8x8x1024xf32, #tpu.memory_space<vmem>>, vector<1x8x512xf32>
    %647 = vector.shape_cast %646 : vector<1x8x512xf32> to vector<8x512xf32>
    %c0_226 = arith.constant 0 : index
    %c0_227 = arith.constant 0 : index
    %648 = vector.load %arg7[%c0_226, %c0_227] : memref<128x512xf32, #tpu.memory_space<vmem>>, vector<128x512xf32>
    %cst_228 = arith.constant dense<0.000000e+00> : vector<8x512xf32>
    %649 = tpu.matmul %644, %648, %cst_228 {dimension_numbers = #tpu.dot_dimension_numbers<[1], [0], [0], [1], [0, 0, 1, 1], [], []>} : vector<8x128xf32>, vector<128x512xf32>, vector<8x512xf32> -> vector<8x512xf32>
    %650 = arith.addf %647, %649 : vector<8x512xf32>
    %651 = vector.extract_strided_slice %650 {offsets = [0, 0], sizes = [8, 128], strides = [1, 1]} : vector<8x512xf32> to vector<8x128xf32>
    %652 = arith.negf %651 : vector<8x128xf32>
    %653 = math.exp %652 : vector<8x128xf32>
    %cst_229 = arith.constant 1.000000e+00 : f32
    %654 = vector.broadcast %cst_229 : f32 to vector<8x128xf32>
    %655 = arith.addf %654, %653 : vector<8x128xf32>
    %656 = arith.divf %654, %655 : vector<8x128xf32>
    %657 = vector.extract_strided_slice %650 {offsets = [0, 128], sizes = [8, 128], strides = [1, 1]} : vector<8x512xf32> to vector<8x128xf32>
    %658 = arith.negf %657 : vector<8x128xf32>
    %659 = math.exp %658 : vector<8x128xf32>
    %cst_230 = arith.constant 1.000000e+00 : f32
    %660 = vector.broadcast %cst_230 : f32 to vector<8x128xf32>
    %661 = arith.addf %660, %659 : vector<8x128xf32>
    %662 = arith.divf %660, %661 : vector<8x128xf32>
    %663 = vector.extract_strided_slice %650 {offsets = [0, 256], sizes = [8, 128], strides = [1, 1]} : vector<8x512xf32> to vector<8x128xf32>
    %664 = math.tanh %663 : vector<8x128xf32>
    %665 = vector.extract_strided_slice %650 {offsets = [0, 384], sizes = [8, 128], strides = [1, 1]} : vector<8x512xf32> to vector<8x128xf32>
    %666 = arith.negf %665 : vector<8x128xf32>
    %667 = math.exp %666 : vector<8x128xf32>
    %cst_231 = arith.constant 1.000000e+00 : f32
    %668 = vector.broadcast %cst_231 : f32 to vector<8x128xf32>
    %669 = arith.addf %668, %667 : vector<8x128xf32>
    %670 = arith.divf %668, %669 : vector<8x128xf32>
    %671 = arith.mulf %662, %642 : vector<8x128xf32>
    %672 = arith.mulf %656, %664 : vector<8x128xf32>
    %673 = arith.addf %671, %672 : vector<8x128xf32>
    %674 = math.tanh %673 : vector<8x128xf32>
    %675 = arith.mulf %670, %674 : vector<8x128xf32>
    %c2_i32_232 = arith.constant 2 : i32
    %676 = arith.index_cast %c2_i32_232 : i32 to index
    %c0_233 = arith.constant 0 : index
    %c0_234 = arith.constant 0 : index
    %677 = vector.load %arg14[%676, %c0_233, %c0_234] : memref<8x8x1024xf32, #tpu.memory_space<vmem>>, vector<1x8x512xf32>
    %678 = vector.shape_cast %677 : vector<1x8x512xf32> to vector<8x512xf32>
    %c0_235 = arith.constant 0 : index
    %c0_236 = arith.constant 0 : index
    %679 = vector.load %arg7[%c0_235, %c0_236] : memref<128x512xf32, #tpu.memory_space<vmem>>, vector<128x512xf32>
    %cst_237 = arith.constant dense<0.000000e+00> : vector<8x512xf32>
    %680 = tpu.matmul %675, %679, %cst_237 {dimension_numbers = #tpu.dot_dimension_numbers<[1], [0], [0], [1], [0, 0, 1, 1], [], []>} : vector<8x128xf32>, vector<128x512xf32>, vector<8x512xf32> -> vector<8x512xf32>
    %681 = arith.addf %678, %680 : vector<8x512xf32>
    %682 = vector.extract_strided_slice %681 {offsets = [0, 0], sizes = [8, 128], strides = [1, 1]} : vector<8x512xf32> to vector<8x128xf32>
    %683 = arith.negf %682 : vector<8x128xf32>
    %684 = math.exp %683 : vector<8x128xf32>
    %cst_238 = arith.constant 1.000000e+00 : f32
    %685 = vector.broadcast %cst_238 : f32 to vector<8x128xf32>
    %686 = arith.addf %685, %684 : vector<8x128xf32>
    %687 = arith.divf %685, %686 : vector<8x128xf32>
    %688 = vector.extract_strided_slice %681 {offsets = [0, 128], sizes = [8, 128], strides = [1, 1]} : vector<8x512xf32> to vector<8x128xf32>
    %689 = arith.negf %688 : vector<8x128xf32>
    %690 = math.exp %689 : vector<8x128xf32>
    %cst_239 = arith.constant 1.000000e+00 : f32
    %691 = vector.broadcast %cst_239 : f32 to vector<8x128xf32>
    %692 = arith.addf %691, %690 : vector<8x128xf32>
    %693 = arith.divf %691, %692 : vector<8x128xf32>
    %694 = vector.extract_strided_slice %681 {offsets = [0, 256], sizes = [8, 128], strides = [1, 1]} : vector<8x512xf32> to vector<8x128xf32>
    %695 = math.tanh %694 : vector<8x128xf32>
    %696 = vector.extract_strided_slice %681 {offsets = [0, 384], sizes = [8, 128], strides = [1, 1]} : vector<8x512xf32> to vector<8x128xf32>
    %697 = arith.negf %696 : vector<8x128xf32>
    %698 = math.exp %697 : vector<8x128xf32>
    %cst_240 = arith.constant 1.000000e+00 : f32
    %699 = vector.broadcast %cst_240 : f32 to vector<8x128xf32>
    %700 = arith.addf %699, %698 : vector<8x128xf32>
    %701 = arith.divf %699, %700 : vector<8x128xf32>
    %702 = arith.mulf %693, %673 : vector<8x128xf32>
    %703 = arith.mulf %687, %695 : vector<8x128xf32>
    %704 = arith.addf %702, %703 : vector<8x128xf32>
    %705 = math.tanh %704 : vector<8x128xf32>
    %706 = arith.mulf %701, %705 : vector<8x128xf32>
    %c3_i32_241 = arith.constant 3 : i32
    %707 = arith.index_cast %c3_i32_241 : i32 to index
    %c0_242 = arith.constant 0 : index
    %c0_243 = arith.constant 0 : index
    %708 = vector.load %arg14[%707, %c0_242, %c0_243] : memref<8x8x1024xf32, #tpu.memory_space<vmem>>, vector<1x8x512xf32>
    %709 = vector.shape_cast %708 : vector<1x8x512xf32> to vector<8x512xf32>
    %c0_244 = arith.constant 0 : index
    %c0_245 = arith.constant 0 : index
    %710 = vector.load %arg7[%c0_244, %c0_245] : memref<128x512xf32, #tpu.memory_space<vmem>>, vector<128x512xf32>
    %cst_246 = arith.constant dense<0.000000e+00> : vector<8x512xf32>
    %711 = tpu.matmul %706, %710, %cst_246 {dimension_numbers = #tpu.dot_dimension_numbers<[1], [0], [0], [1], [0, 0, 1, 1], [], []>} : vector<8x128xf32>, vector<128x512xf32>, vector<8x512xf32> -> vector<8x512xf32>
    %712 = arith.addf %709, %711 : vector<8x512xf32>
    %713 = vector.extract_strided_slice %712 {offsets = [0, 0], sizes = [8, 128], strides = [1, 1]} : vector<8x512xf32> to vector<8x128xf32>
    %714 = arith.negf %713 : vector<8x128xf32>
    %715 = math.exp %714 : vector<8x128xf32>
    %cst_247 = arith.constant 1.000000e+00 : f32
    %716 = vector.broadcast %cst_247 : f32 to vector<8x128xf32>
    %717 = arith.addf %716, %715 : vector<8x128xf32>
    %718 = arith.divf %716, %717 : vector<8x128xf32>
    %719 = vector.extract_strided_slice %712 {offsets = [0, 128], sizes = [8, 128], strides = [1, 1]} : vector<8x512xf32> to vector<8x128xf32>
    %720 = arith.negf %719 : vector<8x128xf32>
    %721 = math.exp %720 : vector<8x128xf32>
    %cst_248 = arith.constant 1.000000e+00 : f32
    %722 = vector.broadcast %cst_248 : f32 to vector<8x128xf32>
    %723 = arith.addf %722, %721 : vector<8x128xf32>
    %724 = arith.divf %722, %723 : vector<8x128xf32>
    %725 = vector.extract_strided_slice %712 {offsets = [0, 256], sizes = [8, 128], strides = [1, 1]} : vector<8x512xf32> to vector<8x128xf32>
    %726 = math.tanh %725 : vector<8x128xf32>
    %727 = vector.extract_strided_slice %712 {offsets = [0, 384], sizes = [8, 128], strides = [1, 1]} : vector<8x512xf32> to vector<8x128xf32>
    %728 = arith.negf %727 : vector<8x128xf32>
    %729 = math.exp %728 : vector<8x128xf32>
    %cst_249 = arith.constant 1.000000e+00 : f32
    %730 = vector.broadcast %cst_249 : f32 to vector<8x128xf32>
    %731 = arith.addf %730, %729 : vector<8x128xf32>
    %732 = arith.divf %730, %731 : vector<8x128xf32>
    %733 = arith.mulf %724, %704 : vector<8x128xf32>
    %734 = arith.mulf %718, %726 : vector<8x128xf32>
    %735 = arith.addf %733, %734 : vector<8x128xf32>
    %736 = math.tanh %735 : vector<8x128xf32>
    %737 = arith.mulf %732, %736 : vector<8x128xf32>
    %c4_i32_250 = arith.constant 4 : i32
    %738 = arith.index_cast %c4_i32_250 : i32 to index
    %c0_251 = arith.constant 0 : index
    %c0_252 = arith.constant 0 : index
    %739 = vector.load %arg14[%738, %c0_251, %c0_252] : memref<8x8x1024xf32, #tpu.memory_space<vmem>>, vector<1x8x512xf32>
    %740 = vector.shape_cast %739 : vector<1x8x512xf32> to vector<8x512xf32>
    %c0_253 = arith.constant 0 : index
    %c0_254 = arith.constant 0 : index
    %741 = vector.load %arg7[%c0_253, %c0_254] : memref<128x512xf32, #tpu.memory_space<vmem>>, vector<128x512xf32>
    %cst_255 = arith.constant dense<0.000000e+00> : vector<8x512xf32>
    %742 = tpu.matmul %737, %741, %cst_255 {dimension_numbers = #tpu.dot_dimension_numbers<[1], [0], [0], [1], [0, 0, 1, 1], [], []>} : vector<8x128xf32>, vector<128x512xf32>, vector<8x512xf32> -> vector<8x512xf32>
    %743 = arith.addf %740, %742 : vector<8x512xf32>
    %744 = vector.extract_strided_slice %743 {offsets = [0, 0], sizes = [8, 128], strides = [1, 1]} : vector<8x512xf32> to vector<8x128xf32>
    %745 = arith.negf %744 : vector<8x128xf32>
    %746 = math.exp %745 : vector<8x128xf32>
    %cst_256 = arith.constant 1.000000e+00 : f32
    %747 = vector.broadcast %cst_256 : f32 to vector<8x128xf32>
    %748 = arith.addf %747, %746 : vector<8x128xf32>
    %749 = arith.divf %747, %748 : vector<8x128xf32>
    %750 = vector.extract_strided_slice %743 {offsets = [0, 128], sizes = [8, 128], strides = [1, 1]} : vector<8x512xf32> to vector<8x128xf32>
    %751 = arith.negf %750 : vector<8x128xf32>
    %752 = math.exp %751 : vector<8x128xf32>
    %cst_257 = arith.constant 1.000000e+00 : f32
    %753 = vector.broadcast %cst_257 : f32 to vector<8x128xf32>
    %754 = arith.addf %753, %752 : vector<8x128xf32>
    %755 = arith.divf %753, %754 : vector<8x128xf32>
    %756 = vector.extract_strided_slice %743 {offsets = [0, 256], sizes = [8, 128], strides = [1, 1]} : vector<8x512xf32> to vector<8x128xf32>
    %757 = math.tanh %756 : vector<8x128xf32>
    %758 = vector.extract_strided_slice %743 {offsets = [0, 384], sizes = [8, 128], strides = [1, 1]} : vector<8x512xf32> to vector<8x128xf32>
    %759 = arith.negf %758 : vector<8x128xf32>
    %760 = math.exp %759 : vector<8x128xf32>
    %cst_258 = arith.constant 1.000000e+00 : f32
    %761 = vector.broadcast %cst_258 : f32 to vector<8x128xf32>
    %762 = arith.addf %761, %760 : vector<8x128xf32>
    %763 = arith.divf %761, %762 : vector<8x128xf32>
    %764 = arith.mulf %755, %735 : vector<8x128xf32>
    %765 = arith.mulf %749, %757 : vector<8x128xf32>
    %766 = arith.addf %764, %765 : vector<8x128xf32>
    %767 = math.tanh %766 : vector<8x128xf32>
    %768 = arith.mulf %763, %767 : vector<8x128xf32>
    %c5_i32_259 = arith.constant 5 : i32
    %769 = arith.index_cast %c5_i32_259 : i32 to index
    %c0_260 = arith.constant 0 : index
    %c0_261 = arith.constant 0 : index
    %770 = vector.load %arg14[%769, %c0_260, %c0_261] : memref<8x8x1024xf32, #tpu.memory_space<vmem>>, vector<1x8x512xf32>
    %771 = vector.shape_cast %770 : vector<1x8x512xf32> to vector<8x512xf32>
    %c0_262 = arith.constant 0 : index
    %c0_263 = arith.constant 0 : index
    %772 = vector.load %arg7[%c0_262, %c0_263] : memref<128x512xf32, #tpu.memory_space<vmem>>, vector<128x512xf32>
    %cst_264 = arith.constant dense<0.000000e+00> : vector<8x512xf32>
    %773 = tpu.matmul %768, %772, %cst_264 {dimension_numbers = #tpu.dot_dimension_numbers<[1], [0], [0], [1], [0, 0, 1, 1], [], []>} : vector<8x128xf32>, vector<128x512xf32>, vector<8x512xf32> -> vector<8x512xf32>
    %774 = arith.addf %771, %773 : vector<8x512xf32>
    %775 = vector.extract_strided_slice %774 {offsets = [0, 0], sizes = [8, 128], strides = [1, 1]} : vector<8x512xf32> to vector<8x128xf32>
    %776 = arith.negf %775 : vector<8x128xf32>
    %777 = math.exp %776 : vector<8x128xf32>
    %cst_265 = arith.constant 1.000000e+00 : f32
    %778 = vector.broadcast %cst_265 : f32 to vector<8x128xf32>
    %779 = arith.addf %778, %777 : vector<8x128xf32>
    %780 = arith.divf %778, %779 : vector<8x128xf32>
    %781 = vector.extract_strided_slice %774 {offsets = [0, 128], sizes = [8, 128], strides = [1, 1]} : vector<8x512xf32> to vector<8x128xf32>
    %782 = arith.negf %781 : vector<8x128xf32>
    %783 = math.exp %782 : vector<8x128xf32>
    %cst_266 = arith.constant 1.000000e+00 : f32
    %784 = vector.broadcast %cst_266 : f32 to vector<8x128xf32>
    %785 = arith.addf %784, %783 : vector<8x128xf32>
    %786 = arith.divf %784, %785 : vector<8x128xf32>
    %787 = vector.extract_strided_slice %774 {offsets = [0, 256], sizes = [8, 128], strides = [1, 1]} : vector<8x512xf32> to vector<8x128xf32>
    %788 = math.tanh %787 : vector<8x128xf32>
    %789 = vector.extract_strided_slice %774 {offsets = [0, 384], sizes = [8, 128], strides = [1, 1]} : vector<8x512xf32> to vector<8x128xf32>
    %790 = arith.negf %789 : vector<8x128xf32>
    %791 = math.exp %790 : vector<8x128xf32>
    %cst_267 = arith.constant 1.000000e+00 : f32
    %792 = vector.broadcast %cst_267 : f32 to vector<8x128xf32>
    %793 = arith.addf %792, %791 : vector<8x128xf32>
    %794 = arith.divf %792, %793 : vector<8x128xf32>
    %795 = arith.mulf %786, %766 : vector<8x128xf32>
    %796 = arith.mulf %780, %788 : vector<8x128xf32>
    %797 = arith.addf %795, %796 : vector<8x128xf32>
    %798 = math.tanh %797 : vector<8x128xf32>
    %799 = arith.mulf %794, %798 : vector<8x128xf32>
    %c6_i32_268 = arith.constant 6 : i32
    %800 = arith.index_cast %c6_i32_268 : i32 to index
    %c0_269 = arith.constant 0 : index
    %c0_270 = arith.constant 0 : index
    %801 = vector.load %arg14[%800, %c0_269, %c0_270] : memref<8x8x1024xf32, #tpu.memory_space<vmem>>, vector<1x8x512xf32>
    %802 = vector.shape_cast %801 : vector<1x8x512xf32> to vector<8x512xf32>
    %c0_271 = arith.constant 0 : index
    %c0_272 = arith.constant 0 : index
    %803 = vector.load %arg7[%c0_271, %c0_272] : memref<128x512xf32, #tpu.memory_space<vmem>>, vector<128x512xf32>
    %cst_273 = arith.constant dense<0.000000e+00> : vector<8x512xf32>
    %804 = tpu.matmul %799, %803, %cst_273 {dimension_numbers = #tpu.dot_dimension_numbers<[1], [0], [0], [1], [0, 0, 1, 1], [], []>} : vector<8x128xf32>, vector<128x512xf32>, vector<8x512xf32> -> vector<8x512xf32>
    %805 = arith.addf %802, %804 : vector<8x512xf32>
    %806 = vector.extract_strided_slice %805 {offsets = [0, 0], sizes = [8, 128], strides = [1, 1]} : vector<8x512xf32> to vector<8x128xf32>
    %807 = arith.negf %806 : vector<8x128xf32>
    %808 = math.exp %807 : vector<8x128xf32>
    %cst_274 = arith.constant 1.000000e+00 : f32
    %809 = vector.broadcast %cst_274 : f32 to vector<8x128xf32>
    %810 = arith.addf %809, %808 : vector<8x128xf32>
    %811 = arith.divf %809, %810 : vector<8x128xf32>
    %812 = vector.extract_strided_slice %805 {offsets = [0, 128], sizes = [8, 128], strides = [1, 1]} : vector<8x512xf32> to vector<8x128xf32>
    %813 = arith.negf %812 : vector<8x128xf32>
    %814 = math.exp %813 : vector<8x128xf32>
    %cst_275 = arith.constant 1.000000e+00 : f32
    %815 = vector.broadcast %cst_275 : f32 to vector<8x128xf32>
    %816 = arith.addf %815, %814 : vector<8x128xf32>
    %817 = arith.divf %815, %816 : vector<8x128xf32>
    %818 = vector.extract_strided_slice %805 {offsets = [0, 256], sizes = [8, 128], strides = [1, 1]} : vector<8x512xf32> to vector<8x128xf32>
    %819 = math.tanh %818 : vector<8x128xf32>
    %820 = vector.extract_strided_slice %805 {offsets = [0, 384], sizes = [8, 128], strides = [1, 1]} : vector<8x512xf32> to vector<8x128xf32>
    %821 = arith.negf %820 : vector<8x128xf32>
    %822 = math.exp %821 : vector<8x128xf32>
    %cst_276 = arith.constant 1.000000e+00 : f32
    %823 = vector.broadcast %cst_276 : f32 to vector<8x128xf32>
    %824 = arith.addf %823, %822 : vector<8x128xf32>
    %825 = arith.divf %823, %824 : vector<8x128xf32>
    %826 = arith.mulf %817, %797 : vector<8x128xf32>
    %827 = arith.mulf %811, %819 : vector<8x128xf32>
    %828 = arith.addf %826, %827 : vector<8x128xf32>
    %829 = math.tanh %828 : vector<8x128xf32>
    %830 = arith.mulf %825, %829 : vector<8x128xf32>
    %c7_i32_277 = arith.constant 7 : i32
    %831 = arith.index_cast %c7_i32_277 : i32 to index
    %c0_278 = arith.constant 0 : index
    %c0_279 = arith.constant 0 : index
    %832 = vector.load %arg14[%831, %c0_278, %c0_279] : memref<8x8x1024xf32, #tpu.memory_space<vmem>>, vector<1x8x512xf32>
    %833 = vector.shape_cast %832 : vector<1x8x512xf32> to vector<8x512xf32>
    %c0_280 = arith.constant 0 : index
    %c0_281 = arith.constant 0 : index
    %834 = vector.load %arg7[%c0_280, %c0_281] : memref<128x512xf32, #tpu.memory_space<vmem>>, vector<128x512xf32>
    %cst_282 = arith.constant dense<0.000000e+00> : vector<8x512xf32>
    %835 = tpu.matmul %830, %834, %cst_282 {dimension_numbers = #tpu.dot_dimension_numbers<[1], [0], [0], [1], [0, 0, 1, 1], [], []>} : vector<8x128xf32>, vector<128x512xf32>, vector<8x512xf32> -> vector<8x512xf32>
    %836 = arith.addf %833, %835 : vector<8x512xf32>
    %837 = vector.extract_strided_slice %836 {offsets = [0, 0], sizes = [8, 128], strides = [1, 1]} : vector<8x512xf32> to vector<8x128xf32>
    %838 = arith.negf %837 : vector<8x128xf32>
    %839 = math.exp %838 : vector<8x128xf32>
    %cst_283 = arith.constant 1.000000e+00 : f32
    %840 = vector.broadcast %cst_283 : f32 to vector<8x128xf32>
    %841 = arith.addf %840, %839 : vector<8x128xf32>
    %842 = arith.divf %840, %841 : vector<8x128xf32>
    %843 = vector.extract_strided_slice %836 {offsets = [0, 128], sizes = [8, 128], strides = [1, 1]} : vector<8x512xf32> to vector<8x128xf32>
    %844 = arith.negf %843 : vector<8x128xf32>
    %845 = math.exp %844 : vector<8x128xf32>
    %cst_284 = arith.constant 1.000000e+00 : f32
    %846 = vector.broadcast %cst_284 : f32 to vector<8x128xf32>
    %847 = arith.addf %846, %845 : vector<8x128xf32>
    %848 = arith.divf %846, %847 : vector<8x128xf32>
    %849 = vector.extract_strided_slice %836 {offsets = [0, 256], sizes = [8, 128], strides = [1, 1]} : vector<8x512xf32> to vector<8x128xf32>
    %850 = math.tanh %849 : vector<8x128xf32>
    %851 = vector.extract_strided_slice %836 {offsets = [0, 384], sizes = [8, 128], strides = [1, 1]} : vector<8x512xf32> to vector<8x128xf32>
    %852 = arith.negf %851 : vector<8x128xf32>
    %853 = math.exp %852 : vector<8x128xf32>
    %cst_285 = arith.constant 1.000000e+00 : f32
    %854 = vector.broadcast %cst_285 : f32 to vector<8x128xf32>
    %855 = arith.addf %854, %853 : vector<8x128xf32>
    %856 = arith.divf %854, %855 : vector<8x128xf32>
    %857 = arith.mulf %848, %828 : vector<8x128xf32>
    %858 = arith.mulf %842, %850 : vector<8x128xf32>
    %859 = arith.addf %857, %858 : vector<8x128xf32>
    %860 = math.tanh %859 : vector<8x128xf32>
    %861 = arith.mulf %856, %860 : vector<8x128xf32>
    %c8_i32_286 = arith.constant 8 : i32
    %c7 = arith.constant 7 : index
    %c0_287 = arith.constant 0 : index
    %c0_288 = arith.constant 0 : index
    %862 = vector.load %arg15[%c7, %c0_287, %c0_288] : memref<8x8x256xf32, #tpu.memory_space<vmem>>, vector<1x8x256xf32>
    %863 = vector.shape_cast %862 : vector<1x8x256xf32> to vector<8x256xf32>
    %c0_289 = arith.constant 0 : index
    %c0_290 = arith.constant 0 : index
    %864 = vector.load %arg8[%c0_289, %c0_290] : memref<256x512xf32, #tpu.memory_space<vmem>>, vector<256x512xf32>
    %cst_291 = arith.constant dense<0.000000e+00> : vector<8x512xf32>
    %865 = tpu.matmul %863, %864, %cst_291 {dimension_numbers = #tpu.dot_dimension_numbers<[1], [0], [0], [1], [0, 0, 1, 1], [], []>} : vector<8x256xf32>, vector<256x512xf32>, vector<8x512xf32> -> vector<8x512xf32>
    %c0_292 = arith.constant 0 : index
    %c0_293 = arith.constant 0 : index
    %866 = vector.load %arg9[%c0_292, %c0_293] : memref<1x512xf32, #tpu.memory_space<vmem>>, vector<1x512xf32>
    %867 = vector.broadcast %866 : vector<1x512xf32> to vector<8x512xf32>
    %868 = arith.addf %865, %867 : vector<8x512xf32>
    %869 = vector.extract_strided_slice %868 {offsets = [0, 0], sizes = [8, 128], strides = [1, 1]} : vector<8x512xf32> to vector<8x128xf32>
    %870 = arith.negf %869 : vector<8x128xf32>
    %871 = math.exp %870 : vector<8x128xf32>
    %cst_294 = arith.constant 1.000000e+00 : f32
    %872 = vector.broadcast %cst_294 : f32 to vector<8x128xf32>
    %873 = arith.addf %872, %871 : vector<8x128xf32>
    %874 = arith.divf %872, %873 : vector<8x128xf32>
    %875 = vector.extract_strided_slice %868 {offsets = [0, 128], sizes = [8, 128], strides = [1, 1]} : vector<8x512xf32> to vector<8x128xf32>
    %876 = arith.negf %875 : vector<8x128xf32>
    %877 = math.exp %876 : vector<8x128xf32>
    %cst_295 = arith.constant 1.000000e+00 : f32
    %878 = vector.broadcast %cst_295 : f32 to vector<8x128xf32>
    %879 = arith.addf %878, %877 : vector<8x128xf32>
    %880 = arith.divf %878, %879 : vector<8x128xf32>
    %881 = vector.extract_strided_slice %868 {offsets = [0, 256], sizes = [8, 128], strides = [1, 1]} : vector<8x512xf32> to vector<8x128xf32>
    %882 = math.tanh %881 : vector<8x128xf32>
    %883 = vector.extract_strided_slice %868 {offsets = [0, 384], sizes = [8, 128], strides = [1, 1]} : vector<8x512xf32> to vector<8x128xf32>
    %884 = arith.negf %883 : vector<8x128xf32>
    %885 = math.exp %884 : vector<8x128xf32>
    %cst_296 = arith.constant 1.000000e+00 : f32
    %886 = vector.broadcast %cst_296 : f32 to vector<8x128xf32>
    %887 = arith.addf %886, %885 : vector<8x128xf32>
    %888 = arith.divf %886, %887 : vector<8x128xf32>
    %889 = arith.mulf %880, %11 : vector<8x128xf32>
    %890 = arith.mulf %874, %882 : vector<8x128xf32>
    %891 = arith.addf %889, %890 : vector<8x128xf32>
    %892 = math.tanh %891 : vector<8x128xf32>
    %893 = arith.mulf %888, %892 : vector<8x128xf32>
    %c0_297 = arith.constant 0 : index
    %c0_298 = arith.constant 0 : index
    %894 = vector.load %arg10[%c0_297, %c0_298] : memref<128x128xf32, #tpu.memory_space<vmem>>, vector<128x128xf32>
    %cst_299 = arith.constant dense<0.000000e+00> : vector<8x128xf32>
    %895 = tpu.matmul %861, %894, %cst_299 {dimension_numbers = #tpu.dot_dimension_numbers<[1], [0], [0], [1], [0, 0, 1, 1], [], []>} : vector<8x128xf32>, vector<128x128xf32>, vector<8x128xf32> -> vector<8x128xf32>
    %c0_300 = arith.constant 0 : index
    %c0_301 = arith.constant 0 : index
    %896 = vector.load %arg11[%c0_300, %c0_301] : memref<128x128xf32, #tpu.memory_space<vmem>>, vector<128x128xf32>
    %cst_302 = arith.constant dense<0.000000e+00> : vector<8x128xf32>
    %897 = tpu.matmul %893, %896, %cst_302 {dimension_numbers = #tpu.dot_dimension_numbers<[1], [0], [0], [1], [0, 0, 1, 1], [], []>} : vector<8x128xf32>, vector<128x128xf32>, vector<8x128xf32> -> vector<8x128xf32>
    %898 = arith.addf %895, %897 : vector<8x128xf32>
    %c0_303 = arith.constant 0 : index
    %c0_304 = arith.constant 0 : index
    %899 = vector.load %arg12[%c0_303, %c0_304] : memref<1x128xf32, #tpu.memory_space<vmem>>, vector<1x128xf32>
    %900 = vector.broadcast %899 : vector<1x128xf32> to vector<8x128xf32>
    %901 = arith.addf %898, %900 : vector<8x128xf32>
    %c0_305 = arith.constant 0 : index
    %c0_306 = arith.constant 0 : index
    %902 = vector.load %arg13[%c0_305, %c0_306] : memref<8x128xf32, #tpu.memory_space<vmem>>, vector<8x128xf32>
    tpu.vector_store %arg13[%c0_305, %c0_306], %901 {strides = array<i32>} : memref<8x128xf32, #tpu.memory_space<vmem>>, vector<8x128xf32>,
    return
  }
  func.func @transform_0(%arg0: i32) -> (i32, i32, i32) {
    %c0_i32 = arith.constant 0 : i32
    %c0_i32_0 = arith.constant 0 : i32
    %c0_i32_1 = arith.constant 0 : i32
    return %c0_i32, %arg0, %c0_i32_0 : i32, i32, i32
  }
  func.func @transform_1(%arg0: i32) -> (i32, i32) {
    %c0_i32 = arith.constant 0 : i32
    %c0_i32_0 = arith.constant 0 : i32
    %c0_i32_1 = arith.constant 0 : i32
    return %c0_i32, %c0_i32_0 : i32, i32
  }
  func.func @transform_2(%arg0: i32) -> (i32, i32) {
    %c0_i32 = arith.constant 0 : i32
    %c0_i32_0 = arith.constant 0 : i32
    %c0_i32_1 = arith.constant 0 : i32
    return %c0_i32, %c0_i32_0 : i32, i32
  }
  func.func @transform_3(%arg0: i32) -> (i32, i32) {
    %c0_i32 = arith.constant 0 : i32
    %c0_i32_0 = arith.constant 0 : i32
    %c0_i32_1 = arith.constant 0 : i32
    return %c0_i32, %c0_i32_0 : i32, i32
  }
  func.func @transform_4(%arg0: i32) -> (i32, i32) {
    %c0_i32 = arith.constant 0 : i32
    %c0_i32_0 = arith.constant 0 : i32
    %c0_i32_1 = arith.constant 0 : i32
    return %c0_i32, %c0_i32_0 : i32, i32
  }
  func.func @transform_5(%arg0: i32) -> (i32, i32) {
    %c0_i32 = arith.constant 0 : i32
    %c0_i32_0 = arith.constant 0 : i32
    %c0_i32_1 = arith.constant 0 : i32
    return %c0_i32, %c0_i32_0 : i32, i32
  }
  func.func @transform_6(%arg0: i32) -> (i32, i32) {
    %c0_i32 = arith.constant 0 : i32
    %c0_i32_0 = arith.constant 0 : i32
    %c0_i32_1 = arith.constant 0 : i32
    return %c0_i32, %c0_i32_0 : i32, i32
  }
  func.func @transform_7(%arg0: i32) -> (i32, i32) {
    %c0_i32 = arith.constant 0 : i32
    %c0_i32_0 = arith.constant 0 : i32
    %c0_i32_1 = arith.constant 0 : i32
    return %c0_i32, %c0_i32_0 : i32, i32
  }
  func.func @transform_8(%arg0: i32) -> (i32, i32) {
    %c0_i32 = arith.constant 0 : i32
    %c0_i32_0 = arith.constant 0 : i32
    %c0_i32_1 = arith.constant 0 : i32
    return %c0_i32, %c0_i32_0 : i32, i32
  }
  func.func @transform_9(%arg0: i32) -> (i32, i32) {
    %c0_i32 = arith.constant 0 : i32
    %c0_i32_0 = arith.constant 0 : i32
    %c0_i32_1 = arith.constant 0 : i32
    return %c0_i32, %c0_i32_0 : i32, i32
  }
  func.func @transform_10(%arg0: i32) -> (i32, i32) {
    %c0_i32 = arith.constant 0 : i32
    %c0_i32_0 = arith.constant 0 : i32
    %c0_i32_1 = arith.constant 0 : i32
    return %c0_i32, %c0_i32_0 : i32, i32
  }
  func.func @transform_11(%arg0: i32) -> (i32, i32) {
    %c0_i32 = arith.constant 0 : i32
    %c0_i32_0 = arith.constant 0 : i32
    %c0_i32_1 = arith.constant 0 : i32
    return %c0_i32, %c0_i32_0 : i32, i32
  }
  func.func @transform_12(%arg0: i32) -> (i32, i32) {
    %c0_i32 = arith.constant 0 : i32
    %c0_i32_0 = arith.constant 0 : i32
    return %arg0, %c0_i32 : i32, i32
  }
}

</mosaic_0001>

<llo_original>
// kernel: tpu_custom_call.1
$region0: #{tpu_custom_call.1}
  #allocation0 [shape = 'u32[]', space=smem, size = 0x4, offset = 0x4, fixed_abs, tag = 'smem constant byte address 0x4 - core index']
  #allocation1 [shape = 'u32[144,128]{1,0:T(1,128)}', space=vmem, size = 0x12000, scoped, tag = 'internal scratch']
  #allocation2 [shape = 'f32[8,8,1024]{2,1,0:T(8,128)}', space=vmem, size = 0x40000, scoped, tag = 'scratch operand']
  #allocation3 [shape = 'f32[8,8,256]{2,1,0:T(8,128)}', space=vmem, size = 0x10000, scoped, tag = 'scratch operand']
  #allocation4 [shape = 'f32[8,256]{1,0:T(8,128)}', space=vmem, size = 0x2000, scoped, tag = 'scratch operand']
  %s0 = inlined_call_operand.hbm [shape: bf16[8,8,128], index: 0, kind: input, shape index: {}]
  %s1 = inlined_call_operand.hbm [shape: bf16[128,1024], index: 1, kind: input, shape index: {}]
  %s2 = inlined_call_operand.hbm [shape: f32[1,1024], index: 2, kind: input, shape index: {}]
  %s3 = inlined_call_operand.hbm [shape: f32[256,1024], index: 3, kind: input, shape index: {}]
  %s4 = inlined_call_operand.hbm [shape: bf16[256,512], index: 4, kind: input, shape index: {}]
  %s5 = inlined_call_operand.vmem [shape: f32[1,512], index: 5, kind: input, shape index: {}]
  %s6 = inlined_call_operand.hbm [shape: f32[128,512], index: 6, kind: input, shape index: {}]
  %s7 = inlined_call_operand.hbm [shape: f32[256,512], index: 7, kind: input, shape index: {}]
  %s8 = inlined_call_operand.vmem [shape: f32[1,512], index: 8, kind: input, shape index: {}]
  %s9 = inlined_call_operand.hbm [shape: f32[128,128], index: 9, kind: input, shape index: {}]
  %s10 = inlined_call_operand.hbm [shape: f32[128,128], index: 10, kind: input, shape index: {}]
  %s11 = inlined_call_operand.vmem [shape: f32[1,128], index: 11, kind: input, shape index: {}]
  %s12 = inlined_call_operand.hbm [shape: f32[8,128], index: 12, kind: output, shape index: {}]
  %s13 = sld [smem:[#allocation0]]
  $region94: #{tpu_custom_call.1} parent=0
    _
  %s15 = ssub.s32 1, %s13
  %s16 = scalar_select 0, %s15, %s13
  $region1: #{tpu_custom_call.1} parent=0
    #allocation5 [shape = 'u8[16384]{0}', space=vmem, size = 0x4000, scoped, tag = 'input window, operand 0, single buffered']
    #allocation6 [shape = 's32[1]{0}', space=sflag, size = 0x4, scoped, tag = 'scoped memory for tpu_custom_call.1']
    #allocation7 [shape = 's32[1]{0}', space=sflag, size = 0x4, scoped, tag = 'scoped memory for tpu_custom_call.1']
    #allocation8 [shape = 'u8[262144]{0}', space=vmem, size = 0x40000, scoped, tag = 'input window, operand 1, single buffered']
    #allocation9 [shape = 's32[1]{0}', space=sflag, size = 0x4, scoped, tag = 'scoped memory for tpu_custom_call.1']
    #allocation10 [shape = 'u8[4096]{0}', space=vmem, size = 0x1000, scoped, tag = 'input window, operand 2, single buffered']
    #allocation11 [shape = 'u8[1048576]{0}', space=vmem, size = 0x100000, scoped, tag = 'input window, operand 3, single buffered']
    #allocation12 [shape = 's32[1]{0}', space=sflag, size = 0x4, scoped, tag = 'scoped memory for tpu_custom_call.1']
    #allocation13 [shape = 'u8[262144]{0}', space=vmem, size = 0x40000, scoped, tag = 'input window, operand 4, single buffered']
    #allocation14 [shape = 'u8[262144]{0}', space=vmem, size = 0x40000, scoped, tag = 'input window, operand 6, single buffered']
    #allocation15 [shape = 's32[1]{0}', space=sflag, size = 0x4, scoped, tag = 'scoped memory for tpu_custom_call.1']
    #allocation16 [shape = 'u8[524288]{0}', space=vmem, size = 0x80000, scoped, tag = 'input window, operand 7, single buffered']
    #allocation17 [shape = 'u8[65536]{0}', space=vmem, size = 0x10000, scoped, tag = 'input window, operand 9, single buffered']
    #allocation18 [shape = 's32[1]{0}', space=sflag, size = 0x4, scoped, tag = 'scoped memory for tpu_custom_call.1']
    #allocation19 [shape = 'u8[65536]{0}', space=vmem, size = 0x10000, scoped, tag = 'input window, operand 10, single buffered']
    #allocation20 [shape = 'u8[4096]{0}', space=vmem, size = 0x1000, scoped, tag = 'output window, operand 0, single buffered']
    %17 = vsyncpa [#allocation6], 0
    %18 = vsyncpa [#allocation9], 0
    %19 = vsyncpa [#allocation12], 0
    %20 = vsyncpa [#allocation15], 0
    %21 = vsyncpa [#allocation18], 0
    %22 = vsyncpa [#allocation7], 0
    // Predicated region
    $region2: #{tpu_custom_call.1} parent=1 // pred_check
      _
    $region3: #{tpu_custom_call.1} parent=1 // pred_check_branch
      %24 = sbr.rel (0) target = $region5
    $region4: #{tpu_custom_call.1} parent=1 // pred_region
      %s26 = ssub.s32 512, 512
      %27 = vsyncadd [#allocation6], %s26
      %s28 = sshll.u32 [#allocation5], 4
      %s29 = int_to_ptr.vmem [resolvable:$true] %s28
      %34 = dma.hbm_to_vmem [thread:$0]  %s0, 512, %s29, [#allocation6], 64, 64, 4
    $region5: #{tpu_custom_call.1} parent=1 // pred_fallthru
      _
    // Predicated region
    $region6: #{tpu_custom_call.1} parent=1 // pred_check
      _
    $region7: #{tpu_custom_call.1} parent=1 // pred_check_branch
      %36 = sbr.rel (0) target = $region9
    $region8: #{tpu_custom_call.1} parent=1 // pred_region
      %s38 = ssub.s32 8192, 8192
      %39 = vsyncadd [#allocation9], %s38
      %s40 = sshll.u32 [#allocation8], 4
      %s41 = int_to_ptr.vmem [resolvable:$true] %s40
      %46 = dma.hbm_to_vmem [thread:$0]  %s1, 8192, %s41, [#allocation9], 512, 512, 32
    $region9: #{tpu_custom_call.1} parent=1 // pred_fallthru
      _
    // Predicated region
    $region10: #{tpu_custom_call.1} parent=1 // pred_check
      _
    $region11: #{tpu_custom_call.1} parent=1 // pred_check_branch
      %48 = sbr.rel (0) target = $region13
    $region12: #{tpu_custom_call.1} parent=1 // pred_region
      %s50 = ssub.s32 128, 128
      %51 = vsyncadd [#allocation9], %s50
      %s53 = sshll.u32 [#allocation10], 4
      %s54 = int_to_ptr.vmem [resolvable:$true] %s53
      %56 = dma.hbm_to_vmem [thread:$0]  %s2, 128, %s54, [#allocation9]
    $region13: #{tpu_custom_call.1} parent=1 // pred_fallthru
      _
    // Predicated region
    $region14: #{tpu_custom_call.1} parent=1 // pred_check
      _
    $region15: #{tpu_custom_call.1} parent=1 // pred_check_branch
      %58 = sbr.rel (0) target = $region17
    $region16: #{tpu_custom_call.1} parent=1 // pred_region
      %s60 = ssub.s32 32768, 32768
      %61 = vsyncadd [#allocation12], %s60
      %s62 = sshll.u32 [#allocation11], 4
      %s63 = int_to_ptr.vmem [resolvable:$true] %s62
      %68 = dma.hbm_to_vmem [thread:$0]  %s3, 32768, %s63, [#allocation12], 1024, 1024, 64
    $region17: #{tpu_custom_call.1} parent=1 // pred_fallthru
      _
    // Predicated region
    $region18: #{tpu_custom_call.1} parent=1 // pred_check
      _
    $region19: #{tpu_custom_call.1} parent=1 // pred_check_branch
      %70 = sbr.rel (0) target = $region21
    $region20: #{tpu_custom_call.1} parent=1 // pred_region
      %s72 = ssub.s32 8192, 8192
      %73 = vsyncadd [#allocation12], %s72
      %s74 = sshll.u32 [#allocation13], 4
      %s75 = int_to_ptr.vmem [resolvable:$true] %s74
      %80 = dma.hbm_to_vmem [thread:$0]  %s4, 8192, %s75, [#allocation12], 256, 256, 16
    $region21: #{tpu_custom_call.1} parent=1 // pred_fallthru
      _
    // Predicated region
    $region22: #{tpu_custom_call.1} parent=1 // pred_check
      _
    $region23: #{tpu_custom_call.1} parent=1 // pred_check_branch
      %82 = sbr.rel (0) target = $region25
    $region24: #{tpu_custom_call.1} parent=1 // pred_region
      _
    $region25: #{tpu_custom_call.1} parent=1 // pred_fallthru
      _
    // Predicated region
    $region26: #{tpu_custom_call.1} parent=1 // pred_check
      _
    $region27: #{tpu_custom_call.1} parent=1 // pred_check_branch
      %84 = sbr.rel (0) target = $region29
    $region28: #{tpu_custom_call.1} parent=1 // pred_region
      %s86 = ssub.s32 8192, 8192
      %87 = vsyncadd [#allocation15], %s86
      %s88 = sshll.u32 [#allocation14], 4
      %s89 = int_to_ptr.vmem [resolvable:$true] %s88
      %94 = dma.hbm_to_vmem [thread:$0]  %s6, 8192, %s89, [#allocation15], 512, 512, 32
    $region29: #{tpu_custom_call.1} parent=1 // pred_fallthru
      _
    // Predicated region
    $region30: #{tpu_custom_call.1} parent=1 // pred_check
      _
    $region31: #{tpu_custom_call.1} parent=1 // pred_check_branch
      %96 = sbr.rel (0) target = $region33
    $region32: #{tpu_custom_call.1} parent=1 // pred_region
      %s98 = ssub.s32 16384, 16384
      %99 = vsyncadd [#allocation15], %s98
      %s100 = sshll.u32 [#allocation16], 4
      %s101 = int_to_ptr.vmem [resolvable:$true] %s100
      %106 = dma.hbm_to_vmem [thread:$0]  %s7, 16384, %s101, [#allocation15], 512, 512, 32
    $region33: #{tpu_custom_call.1} parent=1 // pred_fallthru
      _
    // Predicated region
    $region34: #{tpu_custom_call.1} parent=1 // pred_check
      _
    $region35: #{tpu_custom_call.1} parent=1 // pred_check_branch
      %108 = sbr.rel (0) target = $region37
    $region36: #{tpu_custom_call.1} parent=1 // pred_region
      _
    $region37: #{tpu_custom_call.1} parent=1 // pred_fallthru
      _
    // Predicated region
    $region38: #{tpu_custom_call.1} parent=1 // pred_check
      _
    $region39: #{tpu_custom_call.1} parent=1 // pred_check_branch
      %110 = sbr.rel (0) target = $region41
    $region40: #{tpu_custom_call.1} parent=1 // pred_region
      %s112 = ssub.s32 2048, 2048
      %113 = vsyncadd [#allocation18], %s112
      %s114 = sshll.u32 [#allocation17], 4
      %s115 = int_to_ptr.vmem [resolvable:$true] %s114
      %120 = dma.hbm_to_vmem [thread:$0]  %s9, 2048, %s115, [#allocation18], 128, 128, 8
    $region41: #{tpu_custom_call.1} parent=1 // pred_fallthru
      _
    // Predicated region
    $region42: #{tpu_custom_call.1} parent=1 // pred_check
      _
    $region43: #{tpu_custom_call.1} parent=1 // pred_check_branch
      %122 = sbr.rel (0) target = $region45
    $region44: #{tpu_custom_call.1} parent=1 // pred_region
      %s124 = ssub.s32 2048, 2048
      %125 = vsyncadd [#allocation18], %s124
      %s126 = sshll.u32 [#allocation19], 4
      %s127 = int_to_ptr.vmem [resolvable:$true] %s126
      %132 = dma.hbm_to_vmem [thread:$0]  %s10, 2048, %s127, [#allocation18], 128, 128, 8
    $region45: #{tpu_custom_call.1} parent=1 // pred_fallthru
      _
    // Predicated region
    $region46: #{tpu_custom_call.1} parent=1 // pred_check
      _
    $region47: #{tpu_custom_call.1} parent=1 // pred_check_branch
      %134 = sbr.rel (0) target = $region49
    $region48: #{tpu_custom_call.1} parent=1 // pred_region
      _
    $region49: #{tpu_custom_call.1} parent=1 // pred_fallthru
      _
    // Predicated region
    $region50: #{tpu_custom_call.1} parent=1 // pred_check
      _
    $region51: #{tpu_custom_call.1} parent=1 // pred_check_branch
      %136 = sbr.rel (0) target = $region53
    $region52: #{tpu_custom_call.1} parent=1 // pred_region
      %137 = dma.done [#allocation6], 512
    $region53: #{tpu_custom_call.1} parent=1 // pred_fallthru
      _
    // Predicated region
    $region54: #{tpu_custom_call.1} parent=1 // pred_check
      _
    $region55: #{tpu_custom_call.1} parent=1 // pred_check_branch
      %139 = sbr.rel (0) target = $region57
    $region56: #{tpu_custom_call.1} parent=1 // pred_region
      %140 = dma.done [#allocation9], 8192
    $region57: #{tpu_custom_call.1} parent=1 // pred_fallthru
      _
    // Predicated region
    $region58: #{tpu_custom_call.1} parent=1 // pred_check
      _
    $region59: #{tpu_custom_call.1} parent=1 // pred_check_branch
      %142 = sbr.rel (0) target = $region61
    $region60: #{tpu_custom_call.1} parent=1 // pred_region
      %143 = dma.done [#allocation9], 128
    $region61: #{tpu_custom_call.1} parent=1 // pred_fallthru
      _
    // Predicated region
    $region62: #{tpu_custom_call.1} parent=1 // pred_check
      _
    $region63: #{tpu_custom_call.1} parent=1 // pred_check_branch
      %145 = sbr.rel (0) target = $region65
    $region64: #{tpu_custom_call.1} parent=1 // pred_region
      %146 = dma.done [#allocation12], 32768
    $region65: #{tpu_custom_call.1} parent=1 // pred_fallthru
      _
    // Predicated region
    $region66: #{tpu_custom_call.1} parent=1 // pred_check
      _
    $region67: #{tpu_custom_call.1} parent=1 // pred_check_branch
      %148 = sbr.rel (0) target = $region69
    $region68: #{tpu_custom_call.1} parent=1 // pred_region
      %149 = dma.done [#allocation12], 8192
    $region69: #{tpu_custom_call.1} parent=1 // pred_fallthru
      _
    // Predicated region
    $region70: #{tpu_custom_call.1} parent=1 // pred_check
      _
    $region71: #{tpu_custom_call.1} parent=1 // pred_check_branch
      %151 = sbr.rel (0) target = $region73
    $region72: #{tpu_custom_call.1} parent=1 // pred_region
      %152 = dma.done [#allocation15], 8192
    $region73: #{tpu_custom_call.1} parent=1 // pred_fallthru
      _
    // Predicated region
    $region74: #{tpu_custom_call.1} parent=1 // pred_check
      _
    $region75: #{tpu_custom_call.1} parent=1 // pred_check_branch
      %154 = sbr.rel (0) target = $region77
    $region76: #{tpu_custom_call.1} parent=1 // pred_region
      %155 = dma.done [#allocation15], 16384
    $region77: #{tpu_custom_call.1} parent=1 // pred_fallthru
      _
    // Predicated region
    $region78: #{tpu_custom_call.1} parent=1 // pred_check
      _
    $region79: #{tpu_custom_call.1} parent=1 // pred_check_branch
      %157 = sbr.rel (0) target = $region81
    $region80: #{tpu_custom_call.1} parent=1 // pred_region
      %158 = dma.done [#allocation18], 2048
    $region81: #{tpu_custom_call.1} parent=1 // pred_fallthru
      _
    // Predicated region
    $region82: #{tpu_custom_call.1} parent=1 // pred_check
      _
    $region83: #{tpu_custom_call.1} parent=1 // pred_check_branch
      %160 = sbr.rel (0) target = $region85
    $region84: #{tpu_custom_call.1} parent=1 // pred_region
      %161 = dma.done [#allocation18], 2048
    $region85: #{tpu_custom_call.1} parent=1 // pred_fallthru
      _
    %v163 = vld [vmem:[#allocation5] sm:$0xf]
    %v164 = vld [vmem:[#allocation5 + $0x4] sm:$0xf]
    %v165 = vld [vmem:[#allocation5 + $0x8] sm:$0xf]
    %v166 = vld [vmem:[#allocation5 + $0xc] sm:$0xf]
    %v167 = vld [vmem:[#allocation5 + $0x10] sm:$0xf]
    %v168 = vld [vmem:[#allocation5 + $0x14] sm:$0xf]
    %v169 = vld [vmem:[#allocation5 + $0x18] sm:$0xf]
    %v170 = vld [vmem:[#allocation5 + $0x1c] sm:$0xf]
    %v171 = vld [vmem:[#allocation8] sm:$0xff]
    %v172 = vld [vmem:[#allocation8 + $0x8] sm:$0xff]
    %v173 = vld [vmem:[#allocation8 + $0x10] sm:$0xff]
    %v174 = vld [vmem:[#allocation8 + $0x18] sm:$0xff]
    %v175 = vld [vmem:[#allocation8 + $0x20] sm:$0xff]
    %v176 = vld [vmem:[#allocation8 + $0x28] sm:$0xff]
    %v177 = vld [vmem:[#allocation8 + $0x30] sm:$0xff]
    %v178 = vld [vmem:[#allocation8 + $0x38] sm:$0xff]
    %v179 = vld [vmem:[#allocation8 + $0x40] sm:$0xff]
    %v180 = vld [vmem:[#allocation8 + $0x48] sm:$0xff]
    %v181 = vld [vmem:[#allocation8 + $0x50] sm:$0xff]
    %v182 = vld [vmem:[#allocation8 + $0x58] sm:$0xff]
    %v183 = vld [vmem:[#allocation8 + $0x60] sm:$0xff]
    %v184 = vld [vmem:[#allocation8 + $0x68] sm:$0xff]
    %v185 = vld [vmem:[#allocation8 + $0x70] sm:$0xff]
    %v186 = vld [vmem:[#allocation8 + $0x78] sm:$0xff]
    %v187 = vld [vmem:[#allocation8 + $0x80] sm:$0xff]
    %v188 = vld [vmem:[#allocation8 + $0x88] sm:$0xff]
    %v189 = vld [vmem:[#allocation8 + $0x90] sm:$0xff]
    %v190 = vld [vmem:[#allocation8 + $0x98] sm:$0xff]
    %v191 = vld [vmem:[#allocation8 + $0xa0] sm:$0xff]
    %v192 = vld [vmem:[#allocation8 + $0xa8] sm:$0xff]
    %v193 = vld [vmem:[#allocation8 + $0xb0] sm:$0xff]
    %v194 = vld [vmem:[#allocation8 + $0xb8] sm:$0xff]
    %v195 = vld [vmem:[#allocation8 + $0xc0] sm:$0xff]
    %v196 = vld [vmem:[#allocation8 + $0xc8] sm:$0xff]
    %v197 = vld [vmem:[#allocation8 + $0xd0] sm:$0xff]
    %v198 = vld [vmem:[#allocation8 + $0xd8] sm:$0xff]
    %v199 = vld [vmem:[#allocation8 + $0xe0] sm:$0xff]
    %v200 = vld [vmem:[#allocation8 + $0xe8] sm:$0xff]
    %v201 = vld [vmem:[#allocation8 + $0xf0] sm:$0xff]
    %v202 = vld [vmem:[#allocation8 + $0xf8] sm:$0xff]
    %v203 = vld [vmem:[#allocation8 + $0x100] sm:$0xff]
    %v204 = vld [vmem:[#allocation8 + $0x108] sm:$0xff]
    %v205 = vld [vmem:[#allocation8 + $0x110] sm:$0xff]
    %v206 = vld [vmem:[#allocation8 + $0x118] sm:$0xff]
    %v207 = vld [vmem:[#allocation8 + $0x120] sm:$0xff]
    %v208 = vld [vmem:[#allocation8 + $0x128] sm:$0xff]
    %v209 = vld [vmem:[#allocation8 + $0x130] sm:$0xff]
    %v210 = vld [vmem:[#allocation8 + $0x138] sm:$0xff]
    %v211 = vld [vmem:[#allocation8 + $0x140] sm:$0xff]
    %v212 = vld [vmem:[#allocation8 + $0x148] sm:$0xff]
    %v213 = vld [vmem:[#allocation8 + $0x150] sm:$0xff]
    %v214 = vld [vmem:[#allocation8 + $0x158] sm:$0xff]
    %v215 = vld [vmem:[#allocation8 + $0x160] sm:$0xff]
    %v216 = vld [vmem:[#allocation8 + $0x168] sm:$0xff]
    %v217 = vld [vmem:[#allocation8 + $0x170] sm:$0xff]
    %v218 = vld [vmem:[#allocation8 + $0x178] sm:$0xff]
    %v219 = vld [vmem:[#allocation8 + $0x180] sm:$0xff]
    %v220 = vld [vmem:[#allocation8 + $0x188] sm:$0xff]
    %v221 = vld [vmem:[#allocation8 + $0x190] sm:$0xff]
    %v222 = vld [vmem:[#allocation8 + $0x198] sm:$0xff]
    %v223 = vld [vmem:[#allocation8 + $0x1a0] sm:$0xff]
    %v224 = vld [vmem:[#allocation8 + $0x1a8] sm:$0xff]
    %v225 = vld [vmem:[#allocation8 + $0x1b0] sm:$0xff]
    %v226 = vld [vmem:[#allocation8 + $0x1b8] sm:$0xff]
    %v227 = vld [vmem:[#allocation8 + $0x1c0] sm:$0xff]
    %v228 = vld [vmem:[#allocation8 + $0x1c8] sm:$0xff]
    %v229 = vld [vmem:[#allocation8 + $0x1d0] sm:$0xff]
    %v230 = vld [vmem:[#allocation8 + $0x1d8] sm:$0xff]
    %v231 = vld [vmem:[#allocation8 + $0x1e0] sm:$0xff]
    %v232 = vld [vmem:[#allocation8 + $0x1e8] sm:$0xff]
    %v233 = vld [vmem:[#allocation8 + $0x1f0] sm:$0xff]
    %v234 = vld [vmem:[#allocation8 + $0x1f8] sm:$0xff]
    %v235 = vld [vmem:[#allocation10] sm:$0xff]
    %v237 = vlaneseq
    %v238 = vshrl.u32 %v237, 7
    %v239 = vsub.s32 0, %v238
    %v240 = vrot.slane %v235, %v239
    %v241 = vlaneseq
    %v242 = vshrl.u32 %v241, 7
    %v243 = vsub.s32 1, %v242
    %v244 = vrot.slane %v235, %v243
    %v245 = vlaneseq
    %v246 = vshrl.u32 %v245, 7
    %v247 = vsub.s32 2, %v246
    %v248 = vrot.slane %v235, %v247
    %v249 = vlaneseq
    %v250 = vshrl.u32 %v249, 7
    %v251 = vsub.s32 3, %v250
    %v252 = vrot.slane %v235, %v251
    %v253 = vlaneseq
    %v254 = vshrl.u32 %v253, 7
    %v255 = vsub.s32 4, %v254
    %v256 = vrot.slane %v235, %v255
    %v257 = vlaneseq
    %v258 = vshrl.u32 %v257, 7
    %v259 = vsub.s32 5, %v258
    %v260 = vrot.slane %v235, %v259
    %v261 = vlaneseq
    %v262 = vshrl.u32 %v261, 7
    %v263 = vsub.s32 6, %v262
    %v264 = vrot.slane %v235, %v263
    %v265 = vlaneseq
    %v266 = vshrl.u32 %v265, 7
    %v267 = vsub.s32 7, %v266
    %v268 = vrot.slane %v235, %v267
    %v285 = vunpack.c.l.b16 %v163
    %v286 = vunpack.c.l.b16 %v164
    %v287 = vunpack.c.l.b16 %v165
    %v288 = vunpack.c.l.b16 %v166
    %v289 = vunpack.c.l.b16 %v167
    %v290 = vunpack.c.l.b16 %v168
    %v291 = vunpack.c.l.b16 %v169
    %v292 = vunpack.c.l.b16 %v170
    %v293 = vpack.c.b16 %v286, %v285
    %v294 = vpack.c.b16 %v288, %v287
    %v295 = vpack.c.b16 %v290, %v289
    %v296 = vpack.c.b16 %v292, %v291
    %v365 = vunpack.c.l.b16 %v171
    %v366 = vunpack.c.h.b16 %v171
    %v367 = vunpack.c.l.b16 %v172
    %v368 = vunpack.c.h.b16 %v172
    %v369 = vunpack.c.l.b16 %v173
    %v370 = vunpack.c.h.b16 %v173
    %v371 = vunpack.c.l.b16 %v174
    %v372 = vunpack.c.h.b16 %v174
    %v373 = vunpack.c.l.b16 %v175
    %v374 = vunpack.c.h.b16 %v175
    %v375 = vunpack.c.l.b16 %v176
    %v376 = vunpack.c.h.b16 %v176
    %v377 = vunpack.c.l.b16 %v177
    %v378 = vunpack.c.h.b16 %v177
    %v379 = vunpack.c.l.b16 %v178
    %v380 = vunpack.c.h.b16 %v178
    %v381 = vunpack.c.l.b16 %v179
    %v382 = vunpack.c.h.b16 %v179
    %v383 = vunpack.c.l.b16 %v180
    %v384 = vunpack.c.h.b16 %v180
    %v385 = vunpack.c.l.b16 %v181
    %v386 = vunpack.c.h.b16 %v181
    %v387 = vunpack.c.l.b16 %v182
    %v388 = vunpack.c.h.b16 %v182
    %v389 = vunpack.c.l.b16 %v183
    %v390 = vunpack.c.h.b16 %v183
    %v391 = vunpack.c.l.b16 %v184
    %v392 = vunpack.c.h.b16 %v184
    %v393 = vunpack.c.l.b16 %v185
    %v394 = vunpack.c.h.b16 %v185
    %v395 = vunpack.c.l.b16 %v186
    %v396 = vunpack.c.h.b16 %v186
    %v397 = vunpack.c.l.b16 %v187
    %v398 = vunpack.c.h.b16 %v187
    %v399 = vunpack.c.l.b16 %v188
    %v400 = vunpack.c.h.b16 %v188
    %v401 = vunpack.c.l.b16 %v189
    %v402 = vunpack.c.h.b16 %v189
    %v403 = vunpack.c.l.b16 %v190
    %v404 = vunpack.c.h.b16 %v190
    %v405 = vunpack.c.l.b16 %v191
    %v406 = vunpack.c.h.b16 %v191
    %v407 = vunpack.c.l.b16 %v192
    %v408 = vunpack.c.h.b16 %v192
    %v409 = vunpack.c.l.b16 %v193
    %v410 = vunpack.c.h.b16 %v193
    %v411 = vunpack.c.l.b16 %v194
    %v412 = vunpack.c.h.b16 %v194
    %v413 = vunpack.c.l.b16 %v195
    %v414 = vunpack.c.h.b16 %v195
    %v415 = vunpack.c.l.b16 %v196
    %v416 = vunpack.c.h.b16 %v196
    %v417 = vunpack.c.l.b16 %v197
    %v418 = vunpack.c.h.b16 %v197
    %v419 = vunpack.c.l.b16 %v198
    %v420 = vunpack.c.h.b16 %v198
    %v421 = vunpack.c.l.b16 %v199
    %v422 = vunpack.c.h.b16 %v199
    %v423 = vunpack.c.l.b16 %v200
    %v424 = vunpack.c.h.b16 %v200
    %v425 = vunpack.c.l.b16 %v201
    %v426 = vunpack.c.h.b16 %v201
    %v427 = vunpack.c.l.b16 %v202
    %v428 = vunpack.c.h.b16 %v202
    %v429 = vunpack.c.l.b16 %v203
    %v430 = vunpack.c.h.b16 %v203
    %v431 = vunpack.c.l.b16 %v204
    %v432 = vunpack.c.h.b16 %v204
    %v433 = vunpack.c.l.b16 %v205
    %v434 = vunpack.c.h.b16 %v205
    %v435 = vunpack.c.l.b16 %v206
    %v436 = vunpack.c.h.b16 %v206
    %v437 = vunpack.c.l.b16 %v207
    %v438 = vunpack.c.h.b16 %v207
    %v439 = vunpack.c.l.b16 %v208
    %v440 = vunpack.c.h.b16 %v208
    %v441 = vunpack.c.l.b16 %v209
    %v442 = vunpack.c.h.b16 %v209
    %v443 = vunpack.c.l.b16 %v210
    %v444 = vunpack.c.h.b16 %v210
    %v445 = vunpack.c.l.b16 %v211
    %v446 = vunpack.c.h.b16 %v211
    %v447 = vunpack.c.l.b16 %v212
    %v448 = vunpack.c.h.b16 %v212
    %v449 = vunpack.c.l.b16 %v213
    %v450 = vunpack.c.h.b16 %v213
    %v451 = vunpack.c.l.b16 %v214
    %v452 = vunpack.c.h.b16 %v214
    %v453 = vunpack.c.l.b16 %v215
    %v454 = vunpack.c.h.b16 %v215
    %v455 = vunpack.c.l.b16 %v216
    %v456 = vunpack.c.h.b16 %v216
    %v457 = vunpack.c.l.b16 %v217
    %v458 = vunpack.c.h.b16 %v217
    %v459 = vunpack.c.l.b16 %v218
    %v460 = vunpack.c.h.b16 %v218
    %v461 = vunpack.c.l.b16 %v219
    %v462 = vunpack.c.h.b16 %v219
    %v463 = vunpack.c.l.b16 %v220
    %v464 = vunpack.c.h.b16 %v220
    %v465 = vunpack.c.l.b16 %v221
    %v466 = vunpack.c.h.b16 %v221
    %v467 = vunpack.c.l.b16 %v222
    %v468 = vunpack.c.h.b16 %v222
    %v469 = vunpack.c.l.b16 %v223
    %v470 = vunpack.c.h.b16 %v223
    %v471 = vunpack.c.l.b16 %v224
    %v472 = vunpack.c.h.b16 %v224
    %v473 = vunpack.c.l.b16 %v225
    %v474 = vunpack.c.h.b16 %v225
    %v475 = vunpack.c.l.b16 %v226
    %v476 = vunpack.c.h.b16 %v226
    %v477 = vunpack.c.l.b16 %v227
    %v478 = vunpack.c.h.b16 %v227
    %v479 = vunpack.c.l.b16 %v228
    %v480 = vunpack.c.h.b16 %v228
    %v481 = vunpack.c.l.b16 %v229
    %v482 = vunpack.c.h.b16 %v229
    %v483 = vunpack.c.l.b16 %v230
    %v484 = vunpack.c.h.b16 %v230
    %v485 = vunpack.c.l.b16 %v231
    %v486 = vunpack.c.h.b16 %v231
    %v487 = vunpack.c.l.b16 %v232
    %v488 = vunpack.c.h.b16 %v232
    %v489 = vunpack.c.l.b16 %v233
    %v490 = vunpack.c.h.b16 %v233
    %v491 = vunpack.c.l.b16 %v234
    %v492 = vunpack.c.h.b16 %v234
    %v493 = vpack.c.b16 %v373, %v365
    %v494 = vpack.c.b16 %v374, %v366
    %v495 = vpack.c.b16 %v375, %v367
    %v496 = vpack.c.b16 %v376, %v368
    %v497 = vpack.c.b16 %v377, %v369
    %v498 = vpack.c.b16 %v378, %v370
    %v499 = vpack.c.b16 %v379, %v371
    %v500 = vpack.c.b16 %v380, %v372
    %v501 = vpack.c.b16 %v389, %v381
    %v502 = vpack.c.b16 %v390, %v382
    %v503 = vpack.c.b16 %v391, %v383
    %v504 = vpack.c.b16 %v392, %v384
    %v505 = vpack.c.b16 %v393, %v385
    %v506 = vpack.c.b16 %v394, %v386
    %v507 = vpack.c.b16 %v395, %v387
    %v508 = vpack.c.b16 %v396, %v388
    %v509 = vpack.c.b16 %v405, %v397
    %v510 = vpack.c.b16 %v406, %v398
    %v511 = vpack.c.b16 %v407, %v399
    %v512 = vpack.c.b16 %v408, %v400
    %v513 = vpack.c.b16 %v409, %v401
    %v514 = vpack.c.b16 %v410, %v402
    %v515 = vpack.c.b16 %v411, %v403
    %v516 = vpack.c.b16 %v412, %v404
    %v517 = vpack.c.b16 %v421, %v413
    %v518 = vpack.c.b16 %v422, %v414
    %v519 = vpack.c.b16 %v423, %v415
    %v520 = vpack.c.b16 %v424, %v416
    %v521 = vpack.c.b16 %v425, %v417
    %v522 = vpack.c.b16 %v426, %v418
    %v523 = vpack.c.b16 %v427, %v419
    %v524 = vpack.c.b16 %v428, %v420
    %v525 = vpack.c.b16 %v437, %v429
    %v526 = vpack.c.b16 %v438, %v430
    %v527 = vpack.c.b16 %v439, %v431
    %v528 = vpack.c.b16 %v440, %v432
    %v529 = vpack.c.b16 %v441, %v433
    %v530 = vpack.c.b16 %v442, %v434
    %v531 = vpack.c.b16 %v443, %v435
    %v532 = vpack.c.b16 %v444, %v436
    %v533 = vpack.c.b16 %v453, %v445
    %v534 = vpack.c.b16 %v454, %v446
    %v535 = vpack.c.b16 %v455, %v447
    %v536 = vpack.c.b16 %v456, %v448
    %v537 = vpack.c.b16 %v457, %v449
    %v538 = vpack.c.b16 %v458, %v450
    %v539 = vpack.c.b16 %v459, %v451
    %v540 = vpack.c.b16 %v460, %v452
    %v541 = vpack.c.b16 %v469, %v461
    %v542 = vpack.c.b16 %v470, %v462
    %v543 = vpack.c.b16 %v471, %v463
    %v544 = vpack.c.b16 %v472, %v464
    %v545 = vpack.c.b16 %v473, %v465
    %v546 = vpack.c.b16 %v474, %v466
    %v547 = vpack.c.b16 %v475, %v467
    %v548 = vpack.c.b16 %v476, %v468
    %v549 = vpack.c.b16 %v485, %v477
    %v550 = vpack.c.b16 %v486, %v478
    %v551 = vpack.c.b16 %v487, %v479
    %v552 = vpack.c.b16 %v488, %v480
    %v553 = vpack.c.b16 %v489, %v481
    %v554 = vpack.c.b16 %v490, %v482
    %v555 = vpack.c.b16 %v491, %v483
    %v556 = vpack.c.b16 %v492, %v484
    %621 = vmatprep.subr.bf16.mxu0 %v494
    %622 = vmatpush1.bf16.msra.mxu0 %v493
    %623 = vmatprep.subr.bf16.mxu0 %v502
    %624 = vmatpush1.bf16.msra.mxu0 %v501
    %625 = vmatprep.subr.bf16.mxu0 %v510
    %626 = vmatpush1.bf16.msra.mxu0 %v509
    %627 = vmatprep.subr.bf16.mxu0 %v518
    %628 = vmatpush1.bf16.msra.mxu0 %v517
    %629 = vmatprep.subr.bf16.mxu0 %v526
    %630 = vmatpush1.bf16.msra.mxu0 %v525
    %631 = vmatprep.subr.bf16.mxu0 %v534
    %632 = vmatpush1.bf16.msra.mxu0 %v533
    %633 = vmatprep.subr.bf16.mxu0 %v542
    %634 = vmatpush1.bf16.msra.mxu0 %v541
    %635 = vmatprep.subr.bf16.mxu0 %v550
    %636 = vmatpush1.bf16.msra.mxu0 %v549
    %637 = vmatprep.subr.bf16.mxu0 0
    %638 = vmatpush1.bf16.msra.mxu0 0
    %639 = vmatprep.subr.bf16.mxu0 0
    %640 = vmatpush1.bf16.msra.mxu0 0
    %641 = vmatprep.subr.bf16.mxu0 0
    %642 = vmatpush1.bf16.msra.mxu0 0
    %643 = vmatprep.subr.bf16.mxu0 0
    %644 = vmatpush1.bf16.msra.mxu0 0
    %645 = vmatprep.subr.bf16.mxu0 0
    %646 = vmatpush1.bf16.msra.mxu0 0
    %647 = vmatprep.subr.bf16.mxu0 0
    %648 = vmatpush1.bf16.msra.mxu0 0
    %649 = vmatprep.subr.bf16.mxu0 0
    %650 = vmatpush1.bf16.msra.mxu0 0
    %651 = vmatprep.subr.bf16.mxu0 0
    %652 = vmatpush1.bf16.msra.mxu0 0
    %653 = vmatprep.mubr.bf16.mxu0 0
    %654 = vmatmul.mubr.bf16.gmra.mrb[0].mxu0 %v293
    %v655 = vpop.f32.mrb[0].mxu0
    %v656 = vadd.f32 %v240, %v655
    %v657 = vpop.f32.mrb[0].mxu0
    %v658 = vadd.f32 %v244, %v657
    %v659 = vpop.f32.mrb[0].mxu0
    %v660 = vadd.f32 %v240, %v659
    %v661 = vpop.f32.mrb[0].mxu0
    %v662 = vadd.f32 %v244, %v661
    %663 = vmatprep.mubr.bf16.mxu0 0
    %664 = vmatmul.mubr.bf16.gmra.mrb[0].mxu0 %v294
    %v665 = vpop.f32.mrb[0].mxu0
    %v666 = vadd.f32 %v240, %v665
    %v667 = vpop.f32.mrb[0].mxu0
    %v668 = vadd.f32 %v244, %v667
    %v669 = vpop.f32.mrb[0].mxu0
    %v670 = vadd.f32 %v240, %v669
    %v671 = vpop.f32.mrb[0].mxu0
    %v672 = vadd.f32 %v244, %v671
    %673 = vmatprep.mubr.bf16.mxu0 0
    %674 = vmatmul.mubr.bf16.gmra.mrb[0].mxu0 %v295
    %v675 = vpop.f32.mrb[0].mxu0
    %v676 = vadd.f32 %v240, %v675
    %v677 = vpop.f32.mrb[0].mxu0
    %v678 = vadd.f32 %v244, %v677
    %v679 = vpop.f32.mrb[0].mxu0
    %v680 = vadd.f32 %v240, %v679
    %v681 = vpop.f32.mrb[0].mxu0
    %v682 = vadd.f32 %v244, %v681
    %683 = vmatprep.mubr.bf16.mxu0 0
    %684 = vmatmul.mubr.bf16.gmra.mrb[0].mxu0 %v296
    %v685 = vpop.f32.mrb[0].mxu0
    %v686 = vadd.f32 %v240, %v685
    %v687 = vpop.f32.mrb[0].mxu0
    %v688 = vadd.f32 %v244, %v687
    %v689 = vpop.f32.mrb[0].mxu0
    %v690 = vadd.f32 %v240, %v689
    %v691 = vpop.f32.mrb[0].mxu0
    %v692 = vadd.f32 %v244, %v691
    %693 = vdwg.mxu0
    %694 = vmatprep.subr.bf16.mxu0 %v496
    %695 = vmatpush1.bf16.msra.mxu0 %v495
    %696 = vmatprep.subr.bf16.mxu0 %v504
    %697 = vmatpush1.bf16.msra.mxu0 %v503
    %698 = vmatprep.subr.bf16.mxu0 %v512
    %699 = vmatpush1.bf16.msra.mxu0 %v511
    %700 = vmatprep.subr.bf16.mxu0 %v520
    %701 = vmatpush1.bf16.msra.mxu0 %v519
    %702 = vmatprep.subr.bf16.mxu0 %v528
    %703 = vmatpush1.bf16.msra.mxu0 %v527
    %704 = vmatprep.subr.bf16.mxu0 %v536
    %705 = vmatpush1.bf16.msra.mxu0 %v535
    %706 = vmatprep.subr.bf16.mxu0 %v544
    %707 = vmatpush1.bf16.msra.mxu0 %v543
    %708 = vmatprep.subr.bf16.mxu0 %v552
    %709 = vmatpush1.bf16.msra.mxu0 %v551
    %710 = vmatprep.subr.bf16.mxu0 0
    %711 = vmatpush1.bf16.msra.mxu0 0
    %712 = vmatprep.subr.bf16.mxu0 0
    %713 = vmatpush1.bf16.msra.mxu0 0
    %714 = vmatprep.subr.bf16.mxu0 0
    %715 = vmatpush1.bf16.msra.mxu0 0
    %716 = vmatprep.subr.bf16.mxu0 0
    %717 = vmatpush1.bf16.msra.mxu0 0
    %718 = vmatprep.subr.bf16.mxu0 0
    %719 = vmatpush1.bf16.msra.mxu0 0
    %720 = vmatprep.subr.bf16.mxu0 0
    %721 = vmatpush1.bf16.msra.mxu0 0
    %722 = vmatprep.subr.bf16.mxu0 0
    %723 = vmatpush1.bf16.msra.mxu0 0
    %724 = vmatprep.subr.bf16.mxu0 0
    %725 = vmatpush1.bf16.msra.mxu0 0
    %726 = vmatprep.mubr.bf16.mxu0 0
    %727 = vmatmul.mubr.bf16.gmra.mrb[0].mxu0 %v293
    %v728 = vpop.f32.mrb[0].mxu0
    %v729 = vadd.f32 %v248, %v728
    %v730 = vpop.f32.mrb[0].mxu0
    %v731 = vadd.f32 %v252, %v730
    %v732 = vpop.f32.mrb[0].mxu0
    %v733 = vadd.f32 %v248, %v732
    %v734 = vpop.f32.mrb[0].mxu0
    %v735 = vadd.f32 %v252, %v734
    %736 = vmatprep.mubr.bf16.mxu0 0
    %737 = vmatmul.mubr.bf16.gmra.mrb[0].mxu0 %v294
    %v738 = vpop.f32.mrb[0].mxu0
    %v739 = vadd.f32 %v248, %v738
    %v740 = vpop.f32.mrb[0].mxu0
    %v741 = vadd.f32 %v252, %v740
    %v742 = vpop.f32.mrb[0].mxu0
    %v743 = vadd.f32 %v248, %v742
    %v744 = vpop.f32.mrb[0].mxu0
    %v745 = vadd.f32 %v252, %v744
    %746 = vmatprep.mubr.bf16.mxu0 0
    %747 = vmatmul.mubr.bf16.gmra.mrb[0].mxu0 %v295
    %v748 = vpop.f32.mrb[0].mxu0
    %v749 = vadd.f32 %v248, %v748
    %v750 = vpop.f32.mrb[0].mxu0
    %v751 = vadd.f32 %v252, %v750
    %v752 = vpop.f32.mrb[0].mxu0
    %v753 = vadd.f32 %v248, %v752
    %v754 = vpop.f32.mrb[0].mxu0
    %v755 = vadd.f32 %v252, %v754
    %756 = vmatprep.mubr.bf16.mxu0 0
    %757 = vmatmul.mubr.bf16.gmra.mrb[0].mxu0 %v296
    %v758 = vpop.f32.mrb[0].mxu0
    %v759 = vadd.f32 %v248, %v758
    %v760 = vpop.f32.mrb[0].mxu0
    %v761 = vadd.f32 %v252, %v760
    %v762 = vpop.f32.mrb[0].mxu0
    %v763 = vadd.f32 %v248, %v762
    %v764 = vpop.f32.mrb[0].mxu0
    %v765 = vadd.f32 %v252, %v764
    %766 = vdwg.mxu0
    %767 = vmatprep.subr.bf16.mxu0 %v498
    %768 = vmatpush1.bf16.msra.mxu0 %v497
    %769 = vmatprep.subr.bf16.mxu0 %v506
    %770 = vmatpush1.bf16.msra.mxu0 %v505
    %771 = vmatprep.subr.bf16.mxu0 %v514
    %772 = vmatpush1.bf16.msra.mxu0 %v513
    %773 = vmatprep.subr.bf16.mxu0 %v522
    %774 = vmatpush1.bf16.msra.mxu0 %v521
    %775 = vmatprep.subr.bf16.mxu0 %v530
    %776 = vmatpush1.bf16.msra.mxu0 %v529
    %777 = vmatprep.subr.bf16.mxu0 %v538
    %778 = vmatpush1.bf16.msra.mxu0 %v537
    %779 = vmatprep.subr.bf16.mxu0 %v546
    %780 = vmatpush1.bf16.msra.mxu0 %v545
    %781 = vmatprep.subr.bf16.mxu0 %v554
    %782 = vmatpush1.bf16.msra.mxu0 %v553
    %783 = vmatprep.subr.bf16.mxu0 0
    %784 = vmatpush1.bf16.msra.mxu0 0
    %785 = vmatprep.subr.bf16.mxu0 0
    %786 = vmatpush1.bf16.msra.mxu0 0
    %787 = vmatprep.subr.bf16.mxu0 0
    %788 = vmatpush1.bf16.msra.mxu0 0
    %789 = vmatprep.subr.bf16.mxu0 0
    %790 = vmatpush1.bf16.msra.mxu0 0
    %791 = vmatprep.subr.bf16.mxu0 0
    %792 = vmatpush1.bf16.msra.mxu0 0
    %793 = vmatprep.subr.bf16.mxu0 0
    %794 = vmatpush1.bf16.msra.mxu0 0
    %795 = vmatprep.subr.bf16.mxu0 0
    %796 = vmatpush1.bf16.msra.mxu0 0
    %797 = vmatprep.subr.bf16.mxu0 0
    %798 = vmatpush1.bf16.msra.mxu0 0
    %799 = vmatprep.mubr.bf16.mxu0 0
    %800 = vmatmul.mubr.bf16.gmra.mrb[0].mxu0 %v293
    %v801 = vpop.f32.mrb[0].mxu0
    %v802 = vadd.f32 %v256, %v801
    %v803 = vpop.f32.mrb[0].mxu0
    %v804 = vadd.f32 %v260, %v803
    %v805 = vpop.f32.mrb[0].mxu0
    %v806 = vadd.f32 %v256, %v805
    %v807 = vpop.f32.mrb[0].mxu0
    %v808 = vadd.f32 %v260, %v807
    %809 = vmatprep.mubr.bf16.mxu0 0
    %810 = vmatmul.mubr.bf16.gmra.mrb[0].mxu0 %v294
    %v811 = vpop.f32.mrb[0].mxu0
    %v812 = vadd.f32 %v256, %v811
    %v813 = vpop.f32.mrb[0].mxu0
    %v814 = vadd.f32 %v260, %v813
    %v815 = vpop.f32.mrb[0].mxu0
    %v816 = vadd.f32 %v256, %v815
    %v817 = vpop.f32.mrb[0].mxu0
    %v818 = vadd.f32 %v260, %v817
    %819 = vmatprep.mubr.bf16.mxu0 0
    %820 = vmatmul.mubr.bf16.gmra.mrb[0].mxu0 %v295
    %v821 = vpop.f32.mrb[0].mxu0
    %v822 = vadd.f32 %v256, %v821
    %v823 = vpop.f32.mrb[0].mxu0
    %v824 = vadd.f32 %v260, %v823
    %v825 = vpop.f32.mrb[0].mxu0
    %v826 = vadd.f32 %v256, %v825
    %v827 = vpop.f32.mrb[0].mxu0
    %v828 = vadd.f32 %v260, %v827
    %829 = vmatprep.mubr.bf16.mxu0 0
    %830 = vmatmul.mubr.bf16.gmra.mrb[0].mxu0 %v296
    %v831 = vpop.f32.mrb[0].mxu0
    %v832 = vadd.f32 %v256, %v831
    %v833 = vpop.f32.mrb[0].mxu0
    %v834 = vadd.f32 %v260, %v833
    %v835 = vpop.f32.mrb[0].mxu0
    %v836 = vadd.f32 %v256, %v835
    %v837 = vpop.f32.mrb[0].mxu0
    %v838 = vadd.f32 %v260, %v837
    %839 = vdwg.mxu0
    %840 = vmatprep.subr.bf16.mxu0 %v500
    %841 = vmatpush1.bf16.msra.mxu0 %v499
    %842 = vmatprep.subr.bf16.mxu0 %v508
    %843 = vmatpush1.bf16.msra.mxu0 %v507
    %844 = vmatprep.subr.bf16.mxu0 %v516
    %845 = vmatpush1.bf16.msra.mxu0 %v515
    %846 = vmatprep.subr.bf16.mxu0 %v524
    %847 = vmatpush1.bf16.msra.mxu0 %v523
    %848 = vmatprep.subr.bf16.mxu0 %v532
    %849 = vmatpush1.bf16.msra.mxu0 %v531
    %850 = vmatprep.subr.bf16.mxu0 %v540
    %851 = vmatpush1.bf16.msra.mxu0 %v539
    %852 = vmatprep.subr.bf16.mxu0 %v548
    %853 = vmatpush1.bf16.msra.mxu0 %v547
    %854 = vmatprep.subr.bf16.mxu0 %v556
    %855 = vmatpush1.bf16.msra.mxu0 %v555
    %856 = vmatprep.subr.bf16.mxu0 0
    %857 = vmatpush1.bf16.msra.mxu0 0
    %858 = vmatprep.subr.bf16.mxu0 0
    %859 = vmatpush1.bf16.msra.mxu0 0
    %860 = vmatprep.subr.bf16.mxu0 0
    %861 = vmatpush1.bf16.msra.mxu0 0
    %862 = vmatprep.subr.bf16.mxu0 0
    %863 = vmatpush1.bf16.msra.mxu0 0
    %864 = vmatprep.subr.bf16.mxu0 0
    %865 = vmatpush1.bf16.msra.mxu0 0
    %866 = vmatprep.subr.bf16.mxu0 0
    %867 = vmatpush1.bf16.msra.mxu0 0
    %868 = vmatprep.subr.bf16.mxu0 0
    %869 = vmatpush1.bf16.msra.mxu0 0
    %870 = vmatprep.subr.bf16.mxu0 0
    %871 = vmatpush1.bf16.msra.mxu0 0
    %872 = vmatprep.mubr.bf16.mxu0 0
    %873 = vmatmul.mubr.bf16.gmra.mrb[0].mxu0 %v293
    %v874 = vpop.f32.mrb[0].mxu0
    %v875 = vadd.f32 %v264, %v874
    %v876 = vpop.f32.mrb[0].mxu0
    %v877 = vadd.f32 %v268, %v876
    %v878 = vpop.f32.mrb[0].mxu0
    %v879 = vadd.f32 %v264, %v878
    %v880 = vpop.f32.mrb[0].mxu0
    %v881 = vadd.f32 %v268, %v880
    %882 = vmatprep.mubr.bf16.mxu0 0
    %883 = vmatmul.mubr.bf16.gmra.mrb[0].mxu0 %v294
    %v884 = vpop.f32.mrb[0].mxu0
    %v885 = vadd.f32 %v264, %v884
    %v886 = vpop.f32.mrb[0].mxu0
    %v887 = vadd.f32 %v268, %v886
    %v888 = vpop.f32.mrb[0].mxu0
    %v889 = vadd.f32 %v264, %v888
    %v890 = vpop.f32.mrb[0].mxu0
    %v891 = vadd.f32 %v268, %v890
    %892 = vmatprep.mubr.bf16.mxu0 0
    %893 = vmatmul.mubr.bf16.gmra.mrb[0].mxu0 %v295
    %v894 = vpop.f32.mrb[0].mxu0
    %v895 = vadd.f32 %v264, %v894
    %v896 = vpop.f32.mrb[0].mxu0
    %v897 = vadd.f32 %v268, %v896
    %v898 = vpop.f32.mrb[0].mxu0
    %v899 = vadd.f32 %v264, %v898
    %v900 = vpop.f32.mrb[0].mxu0
    %v901 = vadd.f32 %v268, %v900
    %902 = vmatprep.mubr.bf16.mxu0 0
    %903 = vmatmul.mubr.bf16.gmra.mrb[0].mxu0 %v296
    %v904 = vpop.f32.mrb[0].mxu0
    %v905 = vadd.f32 %v264, %v904
    %v906 = vpop.f32.mrb[0].mxu0
    %v907 = vadd.f32 %v268, %v906
    %v908 = vpop.f32.mrb[0].mxu0
    %v909 = vadd.f32 %v264, %v908
    %v910 = vpop.f32.mrb[0].mxu0
    %v911 = vadd.f32 %v268, %v910
    %912 = vdwg.mxu0
    %913 = vst [vmem:[#allocation2] sm:$0xff] %v656
    %914 = vst [vmem:[#allocation2 + $0x8] sm:$0xff] %v658
    %915 = vst [vmem:[#allocation2 + $0x10] sm:$0xff] %v729
    %916 = vst [vmem:[#allocation2 + $0x18] sm:$0xff] %v731
    %917 = vst [vmem:[#allocation2 + $0x20] sm:$0xff] %v802
    %918 = vst [vmem:[#allocation2 + $0x28] sm:$0xff] %v804
    %919 = vst [vmem:[#allocation2 + $0x30] sm:$0xff] %v875
    %920 = vst [vmem:[#allocation2 + $0x38] sm:$0xff] %v877
    %921 = vst [vmem:[#allocation2 + $0x40] sm:$0xff] %v660
    %922 = vst [vmem:[#allocation2 + $0x48] sm:$0xff] %v662
    %923 = vst [vmem:[#allocation2 + $0x50] sm:$0xff] %v733
    %924 = vst [vmem:[#allocation2 + $0x58] sm:$0xff] %v735
    %925 = vst [vmem:[#allocation2 + $0x60] sm:$0xff] %v806
    %926 = vst [vmem:[#allocation2 + $0x68] sm:$0xff] %v808
    %927 = vst [vmem:[#allocation2 + $0x70] sm:$0xff] %v879
    %928 = vst [vmem:[#allocation2 + $0x78] sm:$0xff] %v881
    %929 = vst [vmem:[#allocation2 + $0x80] sm:$0xff] %v666
    %930 = vst [vmem:[#allocation2 + $0x88] sm:$0xff] %v668
    %931 = vst [vmem:[#allocation2 + $0x90] sm:$0xff] %v739
    %932 = vst [vmem:[#allocation2 + $0x98] sm:$0xff] %v741
    %933 = vst [vmem:[#allocation2 + $0xa0] sm:$0xff] %v812
    %934 = vst [vmem:[#allocation2 + $0xa8] sm:$0xff] %v814
    %935 = vst [vmem:[#allocation2 + $0xb0] sm:$0xff] %v885
    %936 = vst [vmem:[#allocation2 + $0xb8] sm:$0xff] %v887
    %937 = vst [vmem:[#allocation2 + $0xc0] sm:$0xff] %v670
    %938 = vst [vmem:[#allocation2 + $0xc8] sm:$0xff] %v672
    %939 = vst [vmem:[#allocation2 + $0xd0] sm:$0xff] %v743
    %940 = vst [vmem:[#allocation2 + $0xd8] sm:$0xff] %v745
    %941 = vst [vmem:[#allocation2 + $0xe0] sm:$0xff] %v816
    %942 = vst [vmem:[#allocation2 + $0xe8] sm:$0xff] %v818
    %943 = vst [vmem:[#allocation2 + $0xf0] sm:$0xff] %v889
    %944 = vst [vmem:[#allocation2 + $0xf8] sm:$0xff] %v891
    %945 = vst [vmem:[#allocation2 + $0x100] sm:$0xff] %v676
    %946 = vst [vmem:[#allocation2 + $0x108] sm:$0xff] %v678
    %947 = vst [vmem:[#allocation2 + $0x110] sm:$0xff] %v749
    %948 = vst [vmem:[#allocation2 + $0x118] sm:$0xff] %v751
    %949 = vst [vmem:[#allocation2 + $0x120] sm:$0xff] %v822
    %950 = vst [vmem:[#allocation2 + $0x128] sm:$0xff] %v824
    %951 = vst [vmem:[#allocation2 + $0x130] sm:$0xff] %v895
    %952 = vst [vmem:[#allocation2 + $0x138] sm:$0xff] %v897
    %953 = vst [vmem:[#allocation2 + $0x140] sm:$0xff] %v680
    %954 = vst [vmem:[#allocation2 + $0x148] sm:$0xff] %v682
    %955 = vst [vmem:[#allocation2 + $0x150] sm:$0xff] %v753
    %956 = vst [vmem:[#allocation2 + $0x158] sm:$0xff] %v755
    %957 = vst [vmem:[#allocation2 + $0x160] sm:$0xff] %v826
    %958 = vst [vmem:[#allocation2 + $0x168] sm:$0xff] %v828
    %959 = vst [vmem:[#allocation2 + $0x170] sm:$0xff] %v899
    %960 = vst [vmem:[#allocation2 + $0x178] sm:$0xff] %v901
    %961 = vst [vmem:[#allocation2 + $0x180] sm:$0xff] %v686
    %962 = vst [vmem:[#allocation2 + $0x188] sm:$0xff] %v688
    %963 = vst [vmem:[#allocation2 + $0x190] sm:$0xff] %v759
    %964 = vst [vmem:[#allocation2 + $0x198] sm:$0xff] %v761
    %965 = vst [vmem:[#allocation2 + $0x1a0] sm:$0xff] %v832
    %966 = vst [vmem:[#allocation2 + $0x1a8] sm:$0xff] %v834
    %967 = vst [vmem:[#allocation2 + $0x1b0] sm:$0xff] %v905
    %968 = vst [vmem:[#allocation2 + $0x1b8] sm:$0xff] %v907
    %969 = vst [vmem:[#allocation2 + $0x1c0] sm:$0xff] %v690
    %970 = vst [vmem:[#allocation2 + $0x1c8] sm:$0xff] %v692
    %971 = vst [vmem:[#allocation2 + $0x1d0] sm:$0xff] %v763
    %972 = vst [vmem:[#allocation2 + $0x1d8] sm:$0xff] %v765
    %973 = vst [vmem:[#allocation2 + $0x1e0] sm:$0xff] %v836
    %974 = vst [vmem:[#allocation2 + $0x1e8] sm:$0xff] %v838
    %975 = vst [vmem:[#allocation2 + $0x1f0] sm:$0xff] %v909
    %976 = vst [vmem:[#allocation2 + $0x1f8] sm:$0xff] %v911
    %977 = vst [vmem:[#allocation4] sm:$0xff] 0.0
    %978 = vst [vmem:[#allocation4 + $0x8] sm:$0xff] 0.0
    %v979 = vld [vmem:[#allocation4] sm:$0xff]
    %v980 = vld [vmem:[#allocation4 + $0x8] sm:$0xff]
    %v981 = vld [vmem:[#allocation11] sm:$0xff]
    %v982 = vld [vmem:[#allocation11 + $0x8] sm:$0xff]
    %v983 = vld [vmem:[#allocation11 + $0x10] sm:$0xff]
    %v984 = vld [vmem:[#allocation11 + $0x18] sm:$0xff]
    %v985 = vld [vmem:[#allocation11 + $0x20] sm:$0xff]
    %v986 = vld [vmem:[#allocation11 + $0x28] sm:$0xff]
    %v987 = vld [vmem:[#allocation11 + $0x30] sm:$0xff]
    %v988 = vld [vmem:[#allocation11 + $0x38] sm:$0xff]
    %v989 = vld [vmem:[#allocation11 + $0x40] sm:$0xff]
    %v990 = vld [vmem:[#allocation11 + $0x48] sm:$0xff]
    %v991 = vld [vmem:[#allocation11 + $0x50] sm:$0xff]
    %v992 = vld [vmem:[#allocation11 + $0x58] sm:$0xff]
    %v993 = vld [vmem:[#allocation11 + $0x60] sm:$0xff]
    %v994 = vld [vmem:[#allocation11 + $0x68] sm:$0xff]
    %v995 = vld [vmem:[#allocation11 + $0x70] sm:$0xff]
    %v996 = vld [vmem:[#allocation11 + $0x78] sm:$0xff]
    %v997 = vld [vmem:[#allocation11 + $0x80] sm:$0xff]
    %v998 = vld [vmem:[#allocation11 + $0x88] sm:$0xff]
    %v999 = vld [vmem:[#allocation11 + $0x90] sm:$0xff]
    %v1000 = vld [vmem:[#allocation11 + $0x98] sm:$0xff]
    %v1001 = vld [vmem:[#allocation11 + $0xa0] sm:$0xff]
    %v1002 = vld [vmem:[#allocation11 + $0xa8] sm:$0xff]
    %v1003 = vld [vmem:[#allocation11 + $0xb0] sm:$0xff]
    %v1004 = vld [vmem:[#allocation11 + $0xb8] sm:$0xff]
    %v1005 = vld [vmem:[#allocation11 + $0xc0] sm:$0xff]
    %v1006 = vld [vmem:[#allocation11 + $0xc8] sm:$0xff]
    %v1007 = vld [vmem:[#allocation11 + $0xd0] sm:$0xff]
    %v1008 = vld [vmem:[#allocation11 + $0xd8] sm:$0xff]
    %v1009 = vld [vmem:[#allocation11 + $0xe0] sm:$0xff]
    %v1010 = vld [vmem:[#allocation11 + $0xe8] sm:$0xff]
    %v1011 = vld [vmem:[#allocation11 + $0xf0] sm:$0xff]
    %v1012 = vld [vmem:[#allocation11 + $0xf8] sm:$0xff]
    %v1013 = vld [vmem:[#allocation11 + $0x100] sm:$0xff]
    %v1014 = vld [vmem:[#allocation11 + $0x108] sm:$0xff]
    %v1015 = vld [vmem:[#allocation11 + $0x110] sm:$0xff]
    %v1016 = vld [vmem:[#allocation11 + $0x118] sm:$0xff]
    %v1017 = vld [vmem:[#allocation11 + $0x120] sm:$0xff]
    %v1018 = vld [vmem:[#allocation11 + $0x128] sm:$0xff]
    %v1019 = vld [vmem:[#allocation11 + $0x130] sm:$0xff]
    %v1020 = vld [vmem:[#allocation11 + $0x138] sm:$0xff]
    %v1021 = vld [vmem:[#allocation11 + $0x140] sm:$0xff]
    %v1022 = vld [vmem:[#allocation11 + $0x148] sm:$0xff]
    %v1023 = vld [vmem:[#allocation11 + $0x150] sm:$0xff]
    %v1024 = vld [vmem:[#allocation11 + $0x158] sm:$0xff]
    %v1025 = vld [vmem:[#allocation11 + $0x160] sm:$0xff]
    %v1026 = vld [vmem:[#allocation11 + $0x168] sm:$0xff]
    %v1027 = vld [vmem:[#allocation11 + $0x170] sm:$0xff]
    %v1028 = vld [vmem:[#allocation11 + $0x178] sm:$0xff]
    %v1029 = vld [vmem:[#allocation11 + $0x180] sm:$0xff]
    %v1030 = vld [vmem:[#allocation11 + $0x188] sm:$0xff]
    %v1031 = vld [vmem:[#allocation11 + $0x190] sm:$0xff]
    %v1032 = vld [vmem:[#allocation11 + $0x198] sm:$0xff]
    %v1033 = vld [vmem:[#allocation11 + $0x1a0] sm:$0xff]
    %v1034 = vld [vmem:[#allocation11 + $0x1a8] sm:$0xff]
    %v1035 = vld [vmem:[#allocation11 + $0x1b0] sm:$0xff]
    %v1036 = vld [vmem:[#allocation11 + $0x1b8] sm:$0xff]
    %v1037 = vld [vmem:[#allocation11 + $0x1c0] sm:$0xff]
    %v1038 = vld [vmem:[#allocation11 + $0x1c8] sm:$0xff]
    %v1039 = vld [vmem:[#allocation11 + $0x1d0] sm:$0xff]
    %v1040 = vld [vmem:[#allocation11 + $0x1d8] sm:$0xff]
    %v1041 = vld [vmem:[#allocation11 + $0x1e0] sm:$0xff]
    %v1042 = vld [vmem:[#allocation11 + $0x1e8] sm:$0xff]
    %v1043 = vld [vmem:[#allocation11 + $0x1f0] sm:$0xff]
    %v1044 = vld [vmem:[#allocation11 + $0x1f8] sm:$0xff]
    %v1045 = vld [vmem:[#allocation11 + $0x200] sm:$0xff]
    %v1046 = vld [vmem:[#allocation11 + $0x208] sm:$0xff]
    %v1047 = vld [vmem:[#allocation11 + $0x210] sm:$0xff]
    %v1048 = vld [vmem:[#allocation11 + $0x218] sm:$0xff]
    %v1049 = vld [vmem:[#allocation11 + $0x220] sm:$0xff]
    %v1050 = vld [vmem:[#allocation11 + $0x228] sm:$0xff]
    %v1051 = vld [vmem:[#allocation11 + $0x230] sm:$0xff]
    %v1052 = vld [vmem:[#allocation11 + $0x238] sm:$0xff]
    %v1053 = vld [vmem:[#allocation11 + $0x240] sm:$0xff]
    %v1054 = vld [vmem:[#allocation11 + $0x248] sm:$0xff]
    %v1055 = vld [vmem:[#allocation11 + $0x250] sm:$0xff]
    %v1056 = vld [vmem:[#allocation11 + $0x258] sm:$0xff]
    %v1057 = vld [vmem:[#allocation11 + $0x260] sm:$0xff]
    %v1058 = vld [vmem:[#allocation11 + $0x268] sm:$0xff]
    %v1059 = vld [vmem:[#allocation11 + $0x270] sm:$0xff]
    %v1060 = vld [vmem:[#allocation11 + $0x278] sm:$0xff]
    %v1061 = vld [vmem:[#allocation11 + $0x280] sm:$0xff]
    %v1062 = vld [vmem:[#allocation11 + $0x288] sm:$0xff]
    %v1063 = vld [vmem:[#allocation11 + $0x290] sm:$0xff]
    %v1064 = vld [vmem:[#allocation11 + $0x298] sm:$0xff]
    %v1065 = vld [vmem:[#allocation11 + $0x2a0] sm:$0xff]
    %v1066 = vld [vmem:[#allocation11 + $0x2a8] sm:$0xff]
    %v1067 = vld [vmem:[#allocation11 + $0x2b0] sm:$0xff]
    %v1068 = vld [vmem:[#allocation11 + $0x2b8] sm:$0xff]
    %v1069 = vld [vmem:[#allocation11 + $0x2c0] sm:$0xff]
    %v1070 = vld [vmem:[#allocation11 + $0x2c8] sm:$0xff]
    %v1071 = vld [vmem:[#allocation11 + $0x2d0] sm:$0xff]
    %v1072 = vld [vmem:[#allocation11 + $0x2d8] sm:$0xff]
    %v1073 = vld [vmem:[#allocation11 + $0x2e0] sm:$0xff]
    %v1074 = vld [vmem:[#allocation11 + $0x2e8] sm:$0xff]
    %v1075 = vld [vmem:[#allocation11 + $0x2f0] sm:$0xff]
    %v1076 = vld [vmem:[#allocation11 + $0x2f8] sm:$0xff]
    %v1077 = vld [vmem:[#allocation11 + $0x300] sm:$0xff]
    %v1078 = vld [vmem:[#allocation11 + $0x308] sm:$0xff]
    %v1079 = vld [vmem:[#allocation11 + $0x310] sm:$0xff]
    %v1080 = vld [vmem:[#allocation11 + $0x318] sm:$0xff]
    %v1081 = vld [vmem:[#allocation11 + $0x320] sm:$0xff]
    %v1082 = vld [vmem:[#allocation11 + $0x328] sm:$0xff]
    %v1083 = vld [vmem:[#allocation11 + $0x330] sm:$0xff]
    %v1084 = vld [vmem:[#allocation11 + $0x338] sm:$0xff]
    %v1085 = vld [vmem:[#allocation11 + $0x340] sm:$0xff]
    %v1086 = vld [vmem:[#allocation11 + $0x348] sm:$0xff]
    %v1087 = vld [vmem:[#allocation11 + $0x350] sm:$0xff]
    %v1088 = vld [vmem:[#allocation11 + $0x358] sm:$0xff]
    %v1089 = vld [vmem:[#allocation11 + $0x360] sm:$0xff]
    %v1090 = vld [vmem:[#allocation11 + $0x368] sm:$0xff]
    %v1091 = vld [vmem:[#allocation11 + $0x370] sm:$0xff]
    %v1092 = vld [vmem:[#allocation11 + $0x378] sm:$0xff]
    %v1093 = vld [vmem:[#allocation11 + $0x380] sm:$0xff]
    %v1094 = vld [vmem:[#allocation11 + $0x388] sm:$0xff]
    %v1095 = vld [vmem:[#allocation11 + $0x390] sm:$0xff]
    %v1096 = vld [vmem:[#allocation11 + $0x398] sm:$0xff]
    %v1097 = vld [vmem:[#allocation11 + $0x3a0] sm:$0xff]
    %v1098 = vld [vmem:[#allocation11 + $0x3a8] sm:$0xff]
    %v1099 = vld [vmem:[#allocation11 + $0x3b0] sm:$0xff]
    %v1100 = vld [vmem:[#allocation11 + $0x3b8] sm:$0xff]
    %v1101 = vld [vmem:[#allocation11 + $0x3c0] sm:$0xff]
    %v1102 = vld [vmem:[#allocation11 + $0x3c8] sm:$0xff]
    %v1103 = vld [vmem:[#allocation11 + $0x3d0] sm:$0xff]
    %v1104 = vld [vmem:[#allocation11 + $0x3d8] sm:$0xff]
    %v1105 = vld [vmem:[#allocation11 + $0x3e0] sm:$0xff]
    %v1106 = vld [vmem:[#allocation11 + $0x3e8] sm:$0xff]
    %v1107 = vld [vmem:[#allocation11 + $0x3f0] sm:$0xff]
    %v1108 = vld [vmem:[#allocation11 + $0x3f8] sm:$0xff]
    %v1109 = vld [vmem:[#allocation11 + $0x400] sm:$0xff]
    %v1110 = vld [vmem:[#allocation11 + $0x408] sm:$0xff]
    %v1111 = vld [vmem:[#allocation11 + $0x410] sm:$0xff]
    %v1112 = vld [vmem:[#allocation11 + $0x418] sm:$0xff]
    %v1113 = vld [vmem:[#allocation11 + $0x420] sm:$0xff]
    %v1114 = vld [vmem:[#allocation11 + $0x428] sm:$0xff]
    %v1115 = vld [vmem:[#allocation11 + $0x430] sm:$0xff]
    %v1116 = vld [vmem:[#allocation11 + $0x438] sm:$0xff]
    %v1117 = vld [vmem:[#allocation11 + $0x440] sm:$0xff]
    %v1118 = vld [vmem:[#allocation11 + $0x448] sm:$0xff]
    %v1119 = vld [vmem:[#allocation11 + $0x450] sm:$0xff]
    %v1120 = vld [vmem:[#allocation11 + $0x458] sm:$0xff]
    %v1121 = vld [vmem:[#allocation11 + $0x460] sm:$0xff]
    %v1122 = vld [vmem:[#allocation11 + $0x468] sm:$0xff]
    %v1123 = vld [vmem:[#allocation11 + $0x470] sm:$0xff]
    %v1124 = vld [vmem:[#allocation11 + $0x478] sm:$0xff]
    %v1125 = vld [vmem:[#allocation11 + $0x480] sm:$0xff]
    %v1126 = vld [vmem:[#allocation11 + $0x488] sm:$0xff]
    %v1127 = vld [vmem:[#allocation11 + $0x490] sm:$0xff]
    %v1128 = vld [vmem:[#allocation11 + $0x498] sm:$0xff]
    %v1129 = vld [vmem:[#allocation11 + $0x4a0] sm:$0xff]
    %v1130 = vld [vmem:[#allocation11 + $0x4a8] sm:$0xff]
    %v1131 = vld [vmem:[#allocation11 + $0x4b0] sm:$0xff]
    %v1132 = vld [vmem:[#allocation11 + $0x4b8] sm:$0xff]
    %v1133 = vld [vmem:[#allocation11 + $0x4c0] sm:$0xff]
    %v1134 = vld [vmem:[#allocation11 + $0x4c8] sm:$0xff]
    %v1135 = vld [vmem:[#allocation11 + $0x4d0] sm:$0xff]
    %v1136 = vld [vmem:[#allocation11 + $0x4d8] sm:$0xff]
    %v1137 = vld [vmem:[#allocation11 + $0x4e0] sm:$0xff]
    %v1138 = vld [vmem:[#allocation11 + $0x4e8] sm:$0xff]
    %v1139 = vld [vmem:[#allocation11 + $0x4f0] sm:$0xff]
    %v1140 = vld [vmem:[#allocation11 + $0x4f8] sm:$0xff]
    %v1141 = vld [vmem:[#allocation11 + $0x500] sm:$0xff]
    %v1142 = vld [vmem:[#allocation11 + $0x508] sm:$0xff]
    %v1143 = vld [vmem:[#allocation11 + $0x510] sm:$0xff]
    %v1144 = vld [vmem:[#allocation11 + $0x518] sm:$0xff]
    %v1145 = vld [vmem:[#allocation11 + $0x520] sm:$0xff]
    %v1146 = vld [vmem:[#allocation11 + $0x528] sm:$0xff]
    %v1147 = vld [vmem:[#allocation11 + $0x530] sm:$0xff]
    %v1148 = vld [vmem:[#allocation11 + $0x538] sm:$0xff]
    %v1149 = vld [vmem:[#allocation11 + $0x540] sm:$0xff]
    %v1150 = vld [vmem:[#allocation11 + $0x548] sm:$0xff]
    %v1151 = vld [vmem:[#allocation11 + $0x550] sm:$0xff]
    %v1152 = vld [vmem:[#allocation11 + $0x558] sm:$0xff]
    %v1153 = vld [vmem:[#allocation11 + $0x560] sm:$0xff]
    %v1154 = vld [vmem:[#allocation11 + $0x568] sm:$0xff]
    %v1155 = vld [vmem:[#allocation11 + $0x570] sm:$0xff]
    %v1156 = vld [vmem:[#allocation11 + $0x578] sm:$0xff]
    %v1157 = vld [vmem:[#allocation11 + $0x580] sm:$0xff]
    %v1158 = vld [vmem:[#allocation11 + $0x588] sm:$0xff]
    %v1159 = vld [vmem:[#allocation11 + $0x590] sm:$0xff]
    %v1160 = vld [vmem:[#allocation11 + $0x598] sm:$0xff]
    %v1161 = vld [vmem:[#allocation11 + $0x5a0] sm:$0xff]
    %v1162 = vld [vmem:[#allocation11 + $0x5a8] sm:$0xff]
    %v1163 = vld [vmem:[#allocation11 + $0x5b0] sm:$0xff]
    %v1164 = vld [vmem:[#allocation11 + $0x5b8] sm:$0xff]
    %v1165 = vld [vmem:[#allocation11 + $0x5c0] sm:$0xff]
    %v1166 = vld [vmem:[#allocation11 + $0x5c8] sm:$0xff]
    %v1167 = vld [vmem:[#allocation11 + $0x5d0] sm:$0xff]
    %v1168 = vld [vmem:[#allocation11 + $0x5d8] sm:$0xff]
    %v1169 = vld [vmem:[#allocation11 + $0x5e0] sm:$0xff]
    %v1170 = vld [vmem:[#allocation11 + $0x5e8] sm:$0xff]
    %v1171 = vld [vmem:[#allocation11 + $0x5f0] sm:$0xff]
    %v1172 = vld [vmem:[#allocation11 + $0x5f8] sm:$0xff]
    %v1173 = vld [vmem:[#allocation11 + $0x600] sm:$0xff]
    %v1174 = vld [vmem:[#allocation11 + $0x608] sm:$0xff]
    %v1175 = vld [vmem:[#allocation11 + $0x610] sm:$0xff]
    %v1176 = vld [vmem:[#allocation11 + $0x618] sm:$0xff]
    %v1177 = vld [vmem:[#allocation11 + $0x620] sm:$0xff]
    %v1178 = vld [vmem:[#allocation11 + $0x628] sm:$0xff]
    %v1179 = vld [vmem:[#allocation11 + $0x630] sm:$0xff]
    %v1180 = vld [vmem:[#allocation11 + $0x638] sm:$0xff]
    %v1181 = vld [vmem:[#allocation11 + $0x640] sm:$0xff]
    %v1182 = vld [vmem:[#allocation11 + $0x648] sm:$0xff]
    %v1183 = vld [vmem:[#allocation11 + $0x650] sm:$0xff]
    %v1184 = vld [vmem:[#allocation11 + $0x658] sm:$0xff]
    %v1185 = vld [vmem:[#allocation11 + $0x660] sm:$0xff]
    %v1186 = vld [vmem:[#allocation11 + $0x668] sm:$0xff]
    %v1187 = vld [vmem:[#allocation11 + $0x670] sm:$0xff]
    %v1188 = vld [vmem:[#allocation11 + $0x678] sm:$0xff]
    %v1189 = vld [vmem:[#allocation11 + $0x680] sm:$0xff]
    %v1190 = vld [vmem:[#allocation11 + $0x688] sm:$0xff]
    %v1191 = vld [vmem:[#allocation11 + $0x690] sm:$0xff]
    %v1192 = vld [vmem:[#allocation11 + $0x698] sm:$0xff]
    %v1193 = vld [vmem:[#allocation11 + $0x6a0] sm:$0xff]
    %v1194 = vld [vmem:[#allocation11 + $0x6a8] sm:$0xff]
    %v1195 = vld [vmem:[#allocation11 + $0x6b0] sm:$0xff]
    %v1196 = vld [vmem:[#allocation11 + $0x6b8] sm:$0xff]
    %v1197 = vld [vmem:[#allocation11 + $0x6c0] sm:$0xff]
    %v1198 = vld [vmem:[#allocation11 + $0x6c8] sm:$0xff]
    %v1199 = vld [vmem:[#allocation11 + $0x6d0] sm:$0xff]
    %v1200 = vld [vmem:[#allocation11 + $0x6d8] sm:$0xff]
    %v1201 = vld [vmem:[#allocation11 + $0x6e0] sm:$0xff]
    %v1202 = vld [vmem:[#allocation11 + $0x6e8] sm:$0xff]
    %v1203 = vld [vmem:[#allocation11 + $0x6f0] sm:$0xff]
    %v1204 = vld [vmem:[#allocation11 + $0x6f8] sm:$0xff]
    %v1205 = vld [vmem:[#allocation11 + $0x700] sm:$0xff]
    %v1206 = vld [vmem:[#allocation11 + $0x708] sm:$0xff]
    %v1207 = vld [vmem:[#allocation11 + $0x710] sm:$0xff]
    %v1208 = vld [vmem:[#allocation11 + $0x718] sm:$0xff]
    %v1209 = vld [vmem:[#allocation11 + $0x720] sm:$0xff]
    %v1210 = vld [vmem:[#allocation11 + $0x728] sm:$0xff]
    %v1211 = vld [vmem:[#allocation11 + $0x730] sm:$0xff]
    %v1212 = vld [vmem:[#allocation11 + $0x738] sm:$0xff]
    %v1213 = vld [vmem:[#allocation11 + $0x740] sm:$0xff]
    %v1214 = vld [vmem:[#allocation11 + $0x748] sm:$0xff]
    %v1215 = vld [vmem:[#allocation11 + $0x750] sm:$0xff]
    %v1216 = vld [vmem:[#allocation11 + $0x758] sm:$0xff]
    %v1217 = vld [vmem:[#allocation11 + $0x760] sm:$0xff]
    %v1218 = vld [vmem:[#allocation11 + $0x768] sm:$0xff]
    %v1219 = vld [vmem:[#allocation11 + $0x770] sm:$0xff]
    %v1220 = vld [vmem:[#allocation11 + $0x778] sm:$0xff]
    %v1221 = vld [vmem:[#allocation11 + $0x780] sm:$0xff]
    %v1222 = vld [vmem:[#allocation11 + $0x788] sm:$0xff]
    %v1223 = vld [vmem:[#allocation11 + $0x790] sm:$0xff]
    %v1224 = vld [vmem:[#allocation11 + $0x798] sm:$0xff]
    %v1225 = vld [vmem:[#allocation11 + $0x7a0] sm:$0xff]
    %v1226 = vld [vmem:[#allocation11 + $0x7a8] sm:$0xff]
    %v1227 = vld [vmem:[#allocation11 + $0x7b0] sm:$0xff]
    %v1228 = vld [vmem:[#allocation11 + $0x7b8] sm:$0xff]
    %v1229 = vld [vmem:[#allocation11 + $0x7c0] sm:$0xff]
    %v1230 = vld [vmem:[#allocation11 + $0x7c8] sm:$0xff]
    %v1231 = vld [vmem:[#allocation11 + $0x7d0] sm:$0xff]
    %v1232 = vld [vmem:[#allocation11 + $0x7d8] sm:$0xff]
    %v1233 = vld [vmem:[#allocation11 + $0x7e0] sm:$0xff]
    %v1234 = vld [vmem:[#allocation11 + $0x7e8] sm:$0xff]
    %v1235 = vld [vmem:[#allocation11 + $0x7f0] sm:$0xff]
    %v1236 = vld [vmem:[#allocation11 + $0x7f8] sm:$0xff]
    %1237 = vmatprep.subr.mxu0 %v982
    %1238 = vmatpush1.msra.mxu0 %v981
    %1239 = vmatprep.subr.mxu0 %v990
    %1240 = vmatpush1.msra.mxu0 %v989
    %1241 = vmatprep.subr.mxu0 %v998
    %1242 = vmatpush1.msra.mxu0 %v997
    %1243 = vmatprep.subr.mxu0 %v1006
    %1244 = vmatpush1.msra.mxu0 %v1005
    %1245 = vmatprep.subr.mxu0 %v1014
    %1246 = vmatpush1.msra.mxu0 %v1013
    %1247 = vmatprep.subr.mxu0 %v1022
    %1248 = vmatpush1.msra.mxu0 %v1021
    %1249 = vmatprep.subr.mxu0 %v1030
    %1250 = vmatpush1.msra.mxu0 %v1029
    %1251 = vmatprep.subr.mxu0 %v1038
    %1252 = vmatpush1.msra.mxu0 %v1037
    %1253 = vmatprep.subr.mxu0 %v1046
    %1254 = vmatpush1.msra.mxu0 %v1045
    %1255 = vmatprep.subr.mxu0 %v1054
    %1256 = vmatpush1.msra.mxu0 %v1053
    %1257 = vmatprep.subr.mxu0 %v1062
    %1258 = vmatpush1.msra.mxu0 %v1061
    %1259 = vmatprep.subr.mxu0 %v1070
    %1260 = vmatpush1.msra.mxu0 %v1069
    %1261 = vmatprep.subr.mxu0 %v1078
    %1262 = vmatpush1.msra.mxu0 %v1077
    %1263 = vmatprep.subr.mxu0 %v1086
    %1264 = vmatpush1.msra.mxu0 %v1085
    %1265 = vmatprep.subr.mxu0 %v1094
    %1266 = vmatpush1.msra.mxu0 %v1093
    %1267 = vmatprep.subr.mxu0 %v1102
    %1268 = vmatpush1.msra.mxu0 %v1101
    %1269 = vmatprep.subr.mxu0 %v1110
    %1270 = vmatpush1.msra.mxu0 %v1109
    %1271 = vmatprep.subr.mxu0 %v1118
    %1272 = vmatpush1.msra.mxu0 %v1117
    %1273 = vmatprep.subr.mxu0 %v1126
    %1274 = vmatpush1.msra.mxu0 %v1125
    %1275 = vmatprep.subr.mxu0 %v1134
    %1276 = vmatpush1.msra.mxu0 %v1133
    %1277 = vmatprep.subr.mxu0 %v1142
    %1278 = vmatpush1.msra.mxu0 %v1141
    %1279 = vmatprep.subr.mxu0 %v1150
    %1280 = vmatpush1.msra.mxu0 %v1149
    %1281 = vmatprep.subr.mxu0 %v1158
    %1282 = vmatpush1.msra.mxu0 %v1157
    %1283 = vmatprep.subr.mxu0 %v1166
    %1284 = vmatpush1.msra.mxu0 %v1165
    %1285 = vmatprep.subr.mxu0 %v1174
    %1286 = vmatpush1.msra.mxu0 %v1173
    %1287 = vmatprep.subr.mxu0 %v1182
    %1288 = vmatpush1.msra.mxu0 %v1181
    %1289 = vmatprep.subr.mxu0 %v1190
    %1290 = vmatpush1.msra.mxu0 %v1189
    %1291 = vmatprep.subr.mxu0 %v1198
    %1292 = vmatpush1.msra.mxu0 %v1197
    %1293 = vmatprep.subr.mxu0 %v1206
    %1294 = vmatpush1.msra.mxu0 %v1205
    %1295 = vmatprep.subr.mxu0 %v1214
    %1296 = vmatpush1.msra.mxu0 %v1213
    %1297 = vmatprep.subr.mxu0 %v1222
    %1298 = vmatpush1.msra.mxu0 %v1221
    %1299 = vmatprep.subr.mxu0 %v1230
    %1300 = vmatpush1.msra.mxu0 %v1229
    %1301 = vmatprep.mubr.f32.mxu0 %v980
    %1302 = vmatmul.mubr.f32.gmra.mrb[0].mxu0 %v979
    %v1303 = vpop.f32.mrb[0].mxu0
    %v1304 = vadd.f32 0.0, %v1303
    %v1305 = vpop.f32.mrb[0].mxu0
    %v1306 = vadd.f32 0.0, %v1305
    %1307 = vdwg.mxu0
    %1308 = vmatprep.subr.mxu0 %v984
    %1309 = vmatpush1.msra.mxu0 %v983
    %1310 = vmatprep.subr.mxu0 %v992
    %1311 = vmatpush1.msra.mxu0 %v991
    %1312 = vmatprep.subr.mxu0 %v1000
    %1313 = vmatpush1.msra.mxu0 %v999
    %1314 = vmatprep.subr.mxu0 %v1008
    %1315 = vmatpush1.msra.mxu0 %v1007
    %1316 = vmatprep.subr.mxu0 %v1016
    %1317 = vmatpush1.msra.mxu0 %v1015
    %1318 = vmatprep.subr.mxu0 %v1024
    %1319 = vmatpush1.msra.mxu0 %v1023
    %1320 = vmatprep.subr.mxu0 %v1032
    %1321 = vmatpush1.msra.mxu0 %v1031
    %1322 = vmatprep.subr.mxu0 %v1040
    %1323 = vmatpush1.msra.mxu0 %v1039
    %1324 = vmatprep.subr.mxu0 %v1048
    %1325 = vmatpush1.msra.mxu0 %v1047
    %1326 = vmatprep.subr.mxu0 %v1056
    %1327 = vmatpush1.msra.mxu0 %v1055
    %1328 = vmatprep.subr.mxu0 %v1064
    %1329 = vmatpush1.msra.mxu0 %v1063
    %1330 = vmatprep.subr.mxu0 %v1072
    %1331 = vmatpush1.msra.mxu0 %v1071
    %1332 = vmatprep.subr.mxu0 %v1080
    %1333 = vmatpush1.msra.mxu0 %v1079
    %1334 = vmatprep.subr.mxu0 %v1088
    %1335 = vmatpush1.msra.mxu0 %v1087
    %1336 = vmatprep.subr.mxu0 %v1096
    %1337 = vmatpush1.msra.mxu0 %v1095
    %1338 = vmatprep.subr.mxu0 %v1104
    %1339 = vmatpush1.msra.mxu0 %v1103
    %1340 = vmatprep.subr.mxu0 %v1112
    %1341 = vmatpush1.msra.mxu0 %v1111
    %1342 = vmatprep.subr.mxu0 %v1120
    %1343 = vmatpush1.msra.mxu0 %v1119
    %1344 = vmatprep.subr.mxu0 %v1128
    %1345 = vmatpush1.msra.mxu0 %v1127
    %1346 = vmatprep.subr.mxu0 %v1136
    %1347 = vmatpush1.msra.mxu0 %v1135
    %1348 = vmatprep.subr.mxu0 %v1144
    %1349 = vmatpush1.msra.mxu0 %v1143
    %1350 = vmatprep.subr.mxu0 %v1152
    %1351 = vmatpush1.msra.mxu0 %v1151
    %1352 = vmatprep.subr.mxu0 %v1160
    %1353 = vmatpush1.msra.mxu0 %v1159
    %1354 = vmatprep.subr.mxu0 %v1168
    %1355 = vmatpush1.msra.mxu0 %v1167
    %1356 = vmatprep.subr.mxu0 %v1176
    %1357 = vmatpush1.msra.mxu0 %v1175
    %1358 = vmatprep.subr.mxu0 %v1184
    %1359 = vmatpush1.msra.mxu0 %v1183
    %1360 = vmatprep.subr.mxu0 %v1192
    %1361 = vmatpush1.msra.mxu0 %v1191
    %1362 = vmatprep.subr.mxu0 %v1200
    %1363 = vmatpush1.msra.mxu0 %v1199
    %1364 = vmatprep.subr.mxu0 %v1208
    %1365 = vmatpush1.msra.mxu0 %v1207
    %1366 = vmatprep.subr.mxu0 %v1216
    %1367 = vmatpush1.msra.mxu0 %v1215
    %1368 = vmatprep.subr.mxu0 %v1224
    %1369 = vmatpush1.msra.mxu0 %v1223
    %1370 = vmatprep.subr.mxu0 %v1232
    %1371 = vmatpush1.msra.mxu0 %v1231
    %1372 = vmatprep.mubr.f32.mxu0 %v980
    %1373 = vmatmul.mubr.f32.gmra.mrb[0].mxu0 %v979
    %v1374 = vpop.f32.mrb[0].mxu0
    %v1375 = vadd.f32 0.0, %v1374
    %v1376 = vpop.f32.mrb[0].mxu0
    %v1377 = vadd.f32 0.0, %v1376
    %1378 = vdwg.mxu0
    %1379 = vmatprep.subr.mxu0 %v986
    %1380 = vmatpush1.msra.mxu0 %v985
    %1381 = vmatprep.subr.mxu0 %v994
    %1382 = vmatpush1.msra.mxu0 %v993
    %1383 = vmatprep.subr.mxu0 %v1002
    %1384 = vmatpush1.msra.mxu0 %v1001
    %1385 = vmatprep.subr.mxu0 %v1010
    %1386 = vmatpush1.msra.mxu0 %v1009
    %1387 = vmatprep.subr.mxu0 %v1018
    %1388 = vmatpush1.msra.mxu0 %v1017
    %1389 = vmatprep.subr.mxu0 %v1026
    %1390 = vmatpush1.msra.mxu0 %v1025
    %1391 = vmatprep.subr.mxu0 %v1034
    %1392 = vmatpush1.msra.mxu0 %v1033
    %1393 = vmatprep.subr.mxu0 %v1042
    %1394 = vmatpush1.msra.mxu0 %v1041
    %1395 = vmatprep.subr.mxu0 %v1050
    %1396 = vmatpush1.msra.mxu0 %v1049
    %1397 = vmatprep.subr.mxu0 %v1058
    %1398 = vmatpush1.msra.mxu0 %v1057
    %1399 = vmatprep.subr.mxu0 %v1066
    %1400 = vmatpush1.msra.mxu0 %v1065
    %1401 = vmatprep.subr.mxu0 %v1074
    %1402 = vmatpush1.msra.mxu0 %v1073
    %1403 = vmatprep.subr.mxu0 %v1082
    %1404 = vmatpush1.msra.mxu0 %v1081
    %1405 = vmatprep.subr.mxu0 %v1090
    %1406 = vmatpush1.msra.mxu0 %v1089
    %1407 = vmatprep.subr.mxu0 %v1098
    %1408 = vmatpush1.msra.mxu0 %v1097
    %1409 = vmatprep.subr.mxu0 %v1106
    %1410 = vmatpush1.msra.mxu0 %v1105
    %1411 = vmatprep.subr.mxu0 %v1114
    %1412 = vmatpush1.msra.mxu0 %v1113
    %1413 = vmatprep.subr.mxu0 %v1122
    %1414 = vmatpush1.msra.mxu0 %v1121
    %1415 = vmatprep.subr.mxu0 %v1130
    %1416 = vmatpush1.msra.mxu0 %v1129
    %1417 = vmatprep.subr.mxu0 %v1138
    %1418 = vmatpush1.msra.mxu0 %v1137
    %1419 = vmatprep.subr.mxu0 %v1146
    %1420 = vmatpush1.msra.mxu0 %v1145
    %1421 = vmatprep.subr.mxu0 %v1154
    %1422 = vmatpush1.msra.mxu0 %v1153
    %1423 = vmatprep.subr.mxu0 %v1162
    %1424 = vmatpush1.msra.mxu0 %v1161
    %1425 = vmatprep.subr.mxu0 %v1170
    %1426 = vmatpush1.msra.mxu0 %v1169
    %1427 = vmatprep.subr.mxu0 %v1178
    %1428 = vmatpush1.msra.mxu0 %v1177
    %1429 = vmatprep.subr.mxu0 %v1186
    %1430 = vmatpush1.msra.mxu0 %v1185
    %1431 = vmatprep.subr.mxu0 %v1194
    %1432 = vmatpush1.msra.mxu0 %v1193
    %1433 = vmatprep.subr.mxu0 %v1202
    %1434 = vmatpush1.msra.mxu0 %v1201
    %1435 = vmatprep.subr.mxu0 %v1210
    %1436 = vmatpush1.msra.mxu0 %v1209
    %1437 = vmatprep.subr.mxu0 %v1218
    %1438 = vmatpush1.msra.mxu0 %v1217
    %1439 = vmatprep.subr.mxu0 %v1226
    %1440 = vmatpush1.msra.mxu0 %v1225
    %1441 = vmatprep.subr.mxu0 %v1234
    %1442 = vmatpush1.msra.mxu0 %v1233
    %1443 = vmatprep.mubr.f32.mxu0 %v980
    %1444 = vmatmul.mubr.f32.gmra.mrb[0].mxu0 %v979
    %v1445 = vpop.f32.mrb[0].mxu0
    %v1446 = vadd.f32 0.0, %v1445
    %v1447 = vpop.f32.mrb[0].mxu0
    %v1448 = vadd.f32 0.0, %v1447
    %1449 = vdwg.mxu0
    %1450 = vmatprep.subr.mxu0 %v988
    %1451 = vmatpush1.msra.mxu0 %v987
    %1452 = vmatprep.subr.mxu0 %v996
    %1453 = vmatpush1.msra.mxu0 %v995
    %1454 = vmatprep.subr.mxu0 %v1004
    %1455 = vmatpush1.msra.mxu0 %v1003
    %1456 = vmatprep.subr.mxu0 %v1012
    %1457 = vmatpush1.msra.mxu0 %v1011
    %1458 = vmatprep.subr.mxu0 %v1020
    %1459 = vmatpush1.msra.mxu0 %v1019
    %1460 = vmatprep.subr.mxu0 %v1028
    %1461 = vmatpush1.msra.mxu0 %v1027
    %1462 = vmatprep.subr.mxu0 %v1036
    %1463 = vmatpush1.msra.mxu0 %v1035
    %1464 = vmatprep.subr.mxu0 %v1044
    %1465 = vmatpush1.msra.mxu0 %v1043
    %1466 = vmatprep.subr.mxu0 %v1052
    %1467 = vmatpush1.msra.mxu0 %v1051
    %1468 = vmatprep.subr.mxu0 %v1060
    %1469 = vmatpush1.msra.mxu0 %v1059
    %1470 = vmatprep.subr.mxu0 %v1068
    %1471 = vmatpush1.msra.mxu0 %v1067
    %1472 = vmatprep.subr.mxu0 %v1076
    %1473 = vmatpush1.msra.mxu0 %v1075
    %1474 = vmatprep.subr.mxu0 %v1084
    %1475 = vmatpush1.msra.mxu0 %v1083
    %1476 = vmatprep.subr.mxu0 %v1092
    %1477 = vmatpush1.msra.mxu0 %v1091
    %1478 = vmatprep.subr.mxu0 %v1100
    %1479 = vmatpush1.msra.mxu0 %v1099
    %1480 = vmatprep.subr.mxu0 %v1108
    %1481 = vmatpush1.msra.mxu0 %v1107
    %1482 = vmatprep.subr.mxu0 %v1116
    %1483 = vmatpush1.msra.mxu0 %v1115
    %1484 = vmatprep.subr.mxu0 %v1124
    %1485 = vmatpush1.msra.mxu0 %v1123
    %1486 = vmatprep.subr.mxu0 %v1132
    %1487 = vmatpush1.msra.mxu0 %v1131
    %1488 = vmatprep.subr.mxu0 %v1140
    %1489 = vmatpush1.msra.mxu0 %v1139
    %1490 = vmatprep.subr.mxu0 %v1148
    %1491 = vmatpush1.msra.mxu0 %v1147
    %1492 = vmatprep.subr.mxu0 %v1156
    %1493 = vmatpush1.msra.mxu0 %v1155
    %1494 = vmatprep.subr.mxu0 %v1164
    %1495 = vmatpush1.msra.mxu0 %v1163
    %1496 = vmatprep.subr.mxu0 %v1172
    %1497 = vmatpush1.msra.mxu0 %v1171
    %1498 = vmatprep.subr.mxu0 %v1180
    %1499 = vmatpush1.msra.mxu0 %v1179
    %1500 = vmatprep.subr.mxu0 %v1188
    %1501 = vmatpush1.msra.mxu0 %v1187
    %1502 = vmatprep.subr.mxu0 %v1196
    %1503 = vmatpush1.msra.mxu0 %v1195
    %1504 = vmatprep.subr.mxu0 %v1204
    %1505 = vmatpush1.msra.mxu0 %v1203
    %1506 = vmatprep.subr.mxu0 %v1212
    %1507 = vmatpush1.msra.mxu0 %v1211
    %1508 = vmatprep.subr.mxu0 %v1220
    %1509 = vmatpush1.msra.mxu0 %v1219
    %1510 = vmatprep.subr.mxu0 %v1228
    %1511 = vmatpush1.msra.mxu0 %v1227
    %1512 = vmatprep.subr.mxu0 %v1236
    %1513 = vmatpush1.msra.mxu0 %v1235
    %1514 = vmatprep.mubr.f32.mxu0 %v980
    %1515 = vmatmul.mubr.f32.gmra.mrb[0].mxu0 %v979
    %v1516 = vpop.f32.mrb[0].mxu0
    %v1517 = vadd.f32 0.0, %v1516
    %v1518 = vpop.f32.mrb[0].mxu0
    %v1519 = vadd.f32 0.0, %v1518
    %1520 = vdwg.mxu0
    %v1521 = vld [vmem:[#allocation2] sm:$0xff]
    %v1522 = vld [vmem:[#allocation2 + $0x8] sm:$0xff]
    %v1523 = vld [vmem:[#allocation2 + $0x10] sm:$0xff]
    %v1524 = vld [vmem:[#allocation2 + $0x18] sm:$0xff]
    %v1525 = vadd.f32 %v1521, %v1304
    %v1526 = vadd.f32 %v1522, %v1306
    %v1527 = vadd.f32 %v1523, %v1375
    %v1528 = vadd.f32 %v1524, %v1377
    %s1529 = scalar_lea.vmem [#allocation2], 448
    %v1530 = vld [vmem:[%s1529 + $0x20] sm:$0xff]
    %v1531 = vld [vmem:[%s1529 + $0x28] sm:$0xff]
    %v1532 = vld [vmem:[%s1529 + $0x30] sm:$0xff]
    %v1533 = vld [vmem:[%s1529 + $0x38] sm:$0xff]
    %v1534 = vadd.f32 %v1530, %v1446
    %v1535 = vadd.f32 %v1531, %v1448
    %v1536 = vadd.f32 %v1532, %v1517
    %v1537 = vadd.f32 %v1533, %v1519
    %v1538 = vxor.u32 %v1525, 2147483648
    %v1539 = vmul.f32 %v1538, 1.442695
    %v1540 = vpow.pop %v1539
    %v1541 = vadd.f32 %v1540, 1.0
    %v1542 = vrcp.pop %v1541
    %v1543 = vmul.f32 1.0, %v1542
    %v1544 = vxor.u32 %v1526, 2147483648
    %v1545 = vmul.f32 %v1544, 1.442695
    %v1546 = vpow.pop %v1545
    %v1547 = vadd.f32 %v1546, 1.0
    %v1548 = vrcp.pop %v1547
    %v1549 = vmul.f32 1.0, %v1548
    %v1550 = vtanh.pop %v1527
    %v1551 = vxor.u32 %v1528, 2147483648
    %v1552 = vmul.f32 %v1551, 1.442695
    %v1553 = vpow.pop %v1552
    %v1554 = vadd.f32 %v1553, 1.0
    %v1555 = vrcp.pop %v1554
    %v1556 = vmul.f32 1.0, %v1555
    %v1557 = vmul.f32 %v1549, 0.0
    %v1558 = vmul.f32 %v1543, %v1550
    %v1559 = vadd.f32 %v1557, %v1558
    %v1560 = vtanh.pop %v1559
    %v1561 = vmul.f32 %v1556, %v1560
    %v1562 = vxor.u32 %v1534, 2147483648
    %v1563 = vmul.f32 %v1562, 1.442695
    %v1564 = vpow.pop %v1563
    %v1565 = vadd.f32 %v1564, 1.0
    %v1566 = vrcp.pop %v1565
    %v1567 = vmul.f32 1.0, %v1566
    %v1568 = vxor.u32 %v1535, 2147483648
    %v1569 = vmul.f32 %v1568, 1.442695
    %v1570 = vpow.pop %v1569
    %v1571 = vadd.f32 %v1570, 1.0
    %v1572 = vrcp.pop %v1571
    %v1573 = vmul.f32 1.0, %v1572
    %v1574 = vtanh.pop %v1536
    %v1575 = vxor.u32 %v1537, 2147483648
    %v1576 = vmul.f32 %v1575, 1.442695
    %v1577 = vpow.pop %v1576
    %v1578 = vadd.f32 %v1577, 1.0
    %v1579 = vrcp.pop %v1578
    %v1580 = vmul.f32 1.0, %v1579
    %v1581 = vmul.f32 %v1573, 0.0
    %v1582 = vmul.f32 %v1567, %v1574
    %v1583 = vadd.f32 %v1581, %v1582
    %v1584 = vtanh.pop %v1583
    %v1585 = vmul.f32 %v1580, %v1584
    %1586 = vst [vmem:[#allocation4] sm:$0xff] %v1561
    %1587 = vst [vmem:[#allocation4 + $0x8] sm:$0xff] %v1585
    %1588 = vst [vmem:[#allocation3] sm:$0xff] %v1561
    %s1589 = scalar_lea.vmem [#allocation3], 112
    %1590 = vst [vmem:[%s1589 + $0x8] sm:$0xff] %v1585
    %v1591 = vld [vmem:[#allocation4] sm:$0xff]
    %v1592 = vld [vmem:[#allocation4 + $0x8] sm:$0xff]
    %v1593 = vld [vmem:[#allocation11] sm:$0xff]
    %v1594 = vld [vmem:[#allocation11 + $0x8] sm:$0xff]
    %v1595 = vld [vmem:[#allocation11 + $0x10] sm:$0xff]
    %v1596 = vld [vmem:[#allocation11 + $0x18] sm:$0xff]
    %v1597 = vld [vmem:[#allocation11 + $0x20] sm:$0xff]
    %v1598 = vld [vmem:[#allocation11 + $0x28] sm:$0xff]
    %v1599 = vld [vmem:[#allocation11 + $0x30] sm:$0xff]
    %v1600 = vld [vmem:[#allocation11 + $0x38] sm:$0xff]
    %v1601 = vld [vmem:[#allocation11 + $0x40] sm:$0xff]
    %v1602 = vld [vmem:[#allocation11 + $0x48] sm:$0xff]
    %v1603 = vld [vmem:[#allocation11 + $0x50] sm:$0xff]
    %v1604 = vld [vmem:[#allocation11 + $0x58] sm:$0xff]
    %v1605 = vld [vmem:[#allocation11 + $0x60] sm:$0xff]
    %v1606 = vld [vmem:[#allocation11 + $0x68] sm:$0xff]
    %v1607 = vld [vmem:[#allocation11 + $0x70] sm:$0xff]
    %v1608 = vld [vmem:[#allocation11 + $0x78] sm:$0xff]
    %v1609 = vld [vmem:[#allocation11 + $0x80] sm:$0xff]
    %v1610 = vld [vmem:[#allocation11 + $0x88] sm:$0xff]
    %v1611 = vld [vmem:[#allocation11 + $0x90] sm:$0xff]
    %v1612 = vld [vmem:[#allocation11 + $0x98] sm:$0xff]
    %v1613 = vld [vmem:[#allocation11 + $0xa0] sm:$0xff]
    %v1614 = vld [vmem:[#allocation11 + $0xa8] sm:$0xff]
    %v1615 = vld [vmem:[#allocation11 + $0xb0] sm:$0xff]
    %v1616 = vld [vmem:[#allocation11 + $0xb8] sm:$0xff]
    %v1617 = vld [vmem:[#allocation11 + $0xc0] sm:$0xff]
    %v1618 = vld [vmem:[#allocation11 + $0xc8] sm:$0xff]
    %v1619 = vld [vmem:[#allocation11 + $0xd0] sm:$0xff]
    %v1620 = vld [vmem:[#allocation11 + $0xd8] sm:$0xff]
    %v1621 = vld [vmem:[#allocation11 + $0xe0] sm:$0xff]
    %v1622 = vld [vmem:[#allocation11 + $0xe8] sm:$0xff]
    %v1623 = vld [vmem:[#allocation11 + $0xf0] sm:$0xff]
    %v1624 = vld [vmem:[#allocation11 + $0xf8] sm:$0xff]
    %v1625 = vld [vmem:[#allocation11 + $0x100] sm:$0xff]
    %v1626 = vld [vmem:[#allocation11 + $0x108] sm:$0xff]
    %v1627 = vld [vmem:[#allocation11 + $0x110] sm:$0xff]
    %v1628 = vld [vmem:[#allocation11 + $0x118] sm:$0xff]
    %v1629 = vld [vmem:[#allocation11 + $0x120] sm:$0xff]
    %v1630 = vld [vmem:[#allocation11 + $0x128] sm:$0xff]
    %v1631 = vld [vmem:[#allocation11 + $0x130] sm:$0xff]
    %v1632 = vld [vmem:[#allocation11 + $0x138] sm:$0xff]
    %v1633 = vld [vmem:[#allocation11 + $0x140] sm:$0xff]
    %v1634 = vld [vmem:[#allocation11 + $0x148] sm:$0xff]
    %v1635 = vld [vmem:[#allocation11 + $0x150] sm:$0xff]
    %v1636 = vld [vmem:[#allocation11 + $0x158] sm:$0xff]
    %v1637 = vld [vmem:[#allocation11 + $0x160] sm:$0xff]
    %v1638 = vld [vmem:[#allocation11 + $0x168] sm:$0xff]
    %v1639 = vld [vmem:[#allocation11 + $0x170] sm:$0xff]
    %v1640 = vld [vmem:[#allocation11 + $0x178] sm:$0xff]
    %v1641 = vld [vmem:[#allocation11 + $0x180] sm:$0xff]
    %v1642 = vld [vmem:[#allocation11 + $0x188] sm:$0xff]
    %v1643 = vld [vmem:[#allocation11 + $0x190] sm:$0xff]
    %v1644 = vld [vmem:[#allocation11 + $0x198] sm:$0xff]
    %v1645 = vld [vmem:[#allocation11 + $0x1a0] sm:$0xff]
    %v1646 = vld [vmem:[#allocation11 + $0x1a8] sm:$0xff]
    %v1647 = vld [vmem:[#allocation11 + $0x1b0] sm:$0xff]
    %v1648 = vld [vmem:[#allocation11 + $0x1b8] sm:$0xff]
    %v1649 = vld [vmem:[#allocation11 + $0x1c0] sm:$0xff]
    %v1650 = vld [vmem:[#allocation11 + $0x1c8] sm:$0xff]
    %v1651 = vld [vmem:[#allocation11 + $0x1d0] sm:$0xff]
    %v1652 = vld [vmem:[#allocation11 + $0x1d8] sm:$0xff]
    %v1653 = vld [vmem:[#allocation11 + $0x1e0] sm:$0xff]
    %v1654 = vld [vmem:[#allocation11 + $0x1e8] sm:$0xff]
    %v1655 = vld [vmem:[#allocation11 + $0x1f0] sm:$0xff]
    %v1656 = vld [vmem:[#allocation11 + $0x1f8] sm:$0xff]
    %v1657 = vld [vmem:[#allocation11 + $0x200] sm:$0xff]
    %v1658 = vld [vmem:[#allocation11 + $0x208] sm:$0xff]
    %v1659 = vld [vmem:[#allocation11 + $0x210] sm:$0xff]
    %v1660 = vld [vmem:[#allocation11 + $0x218] sm:$0xff]
    %v1661 = vld [vmem:[#allocation11 + $0x220] sm:$0xff]
    %v1662 = vld [vmem:[#allocation11 + $0x228] sm:$0xff]
    %v1663 = vld [vmem:[#allocation11 + $0x230] sm:$0xff]
    %v1664 = vld [vmem:[#allocation11 + $0x238] sm:$0xff]
    %v1665 = vld [vmem:[#allocation11 + $0x240] sm:$0xff]
    %v1666 = vld [vmem:[#allocation11 + $0x248] sm:$0xff]
    %v1667 = vld [vmem:[#allocation11 + $0x250] sm:$0xff]
    %v1668 = vld [vmem:[#allocation11 + $0x258] sm:$0xff]
    %v1669 = vld [vmem:[#allocation11 + $0x260] sm:$0xff]
    %v1670 = vld [vmem:[#allocation11 + $0x268] sm:$0xff]
    %v1671 = vld [vmem:[#allocation11 + $0x270] sm:$0xff]
    %v1672 = vld [vmem:[#allocation11 + $0x278] sm:$0xff]
    %v1673 = vld [vmem:[#allocation11 + $0x280] sm:$0xff]
    %v1674 = vld [vmem:[#allocation11 + $0x288] sm:$0xff]
    %v1675 = vld [vmem:[#allocation11 + $0x290] sm:$0xff]
    %v1676 = vld [vmem:[#allocation11 + $0x298] sm:$0xff]
    %v1677 = vld [vmem:[#allocation11 + $0x2a0] sm:$0xff]
    %v1678 = vld [vmem:[#allocation11 + $0x2a8] sm:$0xff]
    %v1679 = vld [vmem:[#allocation11 + $0x2b0] sm:$0xff]
    %v1680 = vld [vmem:[#allocation11 + $0x2b8] sm:$0xff]
    %v1681 = vld [vmem:[#allocation11 + $0x2c0] sm:$0xff]
    %v1682 = vld [vmem:[#allocation11 + $0x2c8] sm:$0xff]
    %v1683 = vld [vmem:[#allocation11 + $0x2d0] sm:$0xff]
    %v1684 = vld [vmem:[#allocation11 + $0x2d8] sm:$0xff]
    %v1685 = vld [vmem:[#allocation11 + $0x2e0] sm:$0xff]
    %v1686 = vld [vmem:[#allocation11 + $0x2e8] sm:$0xff]
    %v1687 = vld [vmem:[#allocation11 + $0x2f0] sm:$0xff]
    %v1688 = vld [vmem:[#allocation11 + $0x2f8] sm:$0xff]
    %v1689 = vld [vmem:[#allocation11 + $0x300] sm:$0xff]
    %v1690 = vld [vmem:[#allocation11 + $0x308] sm:$0xff]
    %v1691 = vld [vmem:[#allocation11 + $0x310] sm:$0xff]
    %v1692 = vld [vmem:[#allocation11 + $0x318] sm:$0xff]
    %v1693 = vld [vmem:[#allocation11 + $0x320] sm:$0xff]
    %v1694 = vld [vmem:[#allocation11 + $0x328] sm:$0xff]
    %v1695 = vld [vmem:[#allocation11 + $0x330] sm:$0xff]
    %v1696 = vld [vmem:[#allocation11 + $0x338] sm:$0xff]
    %v1697 = vld [vmem:[#allocation11 + $0x340] sm:$0xff]
    %v1698 = vld [vmem:[#allocation11 + $0x348] sm:$0xff]
    %v1699 = vld [vmem:[#allocation11 + $0x350] sm:$0xff]
    %v1700 = vld [vmem:[#allocation11 + $0x358] sm:$0xff]
    %v1701 = vld [vmem:[#allocation11 + $0x360] sm:$0xff]
    %v1702 = vld [vmem:[#allocation11 + $0x368] sm:$0xff]
    %v1703 = vld [vmem:[#allocation11 + $0x370] sm:$0xff]
    %v1704 = vld [vmem:[#allocation11 + $0x378] sm:$0xff]
    %v1705 = vld [vmem:[#allocation11 + $0x380] sm:$0xff]
    %v1706 = vld [vmem:[#allocation11 + $0x388] sm:$0xff]
    %v1707 = vld [vmem:[#allocation11 + $0x390] sm:$0xff]
    %v1708 = vld [vmem:[#allocation11 + $0x398] sm:$0xff]
    %v1709 = vld [vmem:[#allocation11 + $0x3a0] sm:$0xff]
    %v1710 = vld [vmem:[#allocation11 + $0x3a8] sm:$0xff]
    %v1711 = vld [vmem:[#allocation11 + $0x3b0] sm:$0xff]
    %v1712 = vld [vmem:[#allocation11 + $0x3b8] sm:$0xff]
    %v1713 = vld [vmem:[#allocation11 + $0x3c0] sm:$0xff]
    %v1714 = vld [vmem:[#allocation11 + $0x3c8] sm:$0xff]
    %v1715 = vld [vmem:[#allocation11 + $0x3d0] sm:$0xff]
    %v1716 = vld [vmem:[#allocation11 + $0x3d8] sm:$0xff]
    %v1717 = vld [vmem:[#allocation11 + $0x3e0] sm:$0xff]
    %v1718 = vld [vmem:[#allocation11 + $0x3e8] sm:$0xff]
    %v1719 = vld [vmem:[#allocation11 + $0x3f0] sm:$0xff]
    %v1720 = vld [vmem:[#allocation11 + $0x3f8] sm:$0xff]
    %v1721 = vld [vmem:[#allocation11 + $0x400] sm:$0xff]
    %v1722 = vld [vmem:[#allocation11 + $0x408] sm:$0xff]
    %v1723 = vld [vmem:[#allocation11 + $0x410] sm:$0xff]
    %v1724 = vld [vmem:[#allocation11 + $0x418] sm:$0xff]
    %v1725 = vld [vmem:[#allocation11 + $0x420] sm:$0xff]
    %v1726 = vld [vmem:[#allocation11 + $0x428] sm:$0xff]
    %v1727 = vld [vmem:[#allocation11 + $0x430] sm:$0xff]
    %v1728 = vld [vmem:[#allocation11 + $0x438] sm:$0xff]
    %v1729 = vld [vmem:[#allocation11 + $0x440] sm:$0xff]
    %v1730 = vld [vmem:[#allocation11 + $0x448] sm:$0xff]
    %v1731 = vld [vmem:[#allocation11 + $0x450] sm:$0xff]
    %v1732 = vld [vmem:[#allocation11 + $0x458] sm:$0xff]
    %v1733 = vld [vmem:[#allocation11 + $0x460] sm:$0xff]
    %v1734 = vld [vmem:[#allocation11 + $0x468] sm:$0xff]
    %v1735 = vld [vmem:[#allocation11 + $0x470] sm:$0xff]
    %v1736 = vld [vmem:[#allocation11 + $0x478] sm:$0xff]
    %v1737 = vld [vmem:[#allocation11 + $0x480] sm:$0xff]
    %v1738 = vld [vmem:[#allocation11 + $0x488] sm:$0xff]
    %v1739 = vld [vmem:[#allocation11 + $0x490] sm:$0xff]
    %v1740 = vld [vmem:[#allocation11 + $0x498] sm:$0xff]
    %v1741 = vld [vmem:[#allocation11 + $0x4a0] sm:$0xff]
    %v1742 = vld [vmem:[#allocation11 + $0x4a8] sm:$0xff]
    %v1743 = vld [vmem:[#allocation11 + $0x4b0] sm:$0xff]
    %v1744 = vld [vmem:[#allocation11 + $0x4b8] sm:$0xff]
    %v1745 = vld [vmem:[#allocation11 + $0x4c0] sm:$0xff]
    %v1746 = vld [vmem:[#allocation11 + $0x4c8] sm:$0xff]
    %v1747 = vld [vmem:[#allocation11 + $0x4d0] sm:$0xff]
    %v1748 = vld [vmem:[#allocation11 + $0x4d8] sm:$0xff]
    %v1749 = vld [vmem:[#allocation11 + $0x4e0] sm:$0xff]
    %v1750 = vld [vmem:[#allocation11 + $0x4e8] sm:$0xff]
    %v1751 = vld [vmem:[#allocation11 + $0x4f0] sm:$0xff]
    %v1752 = vld [vmem:[#allocation11 + $0x4f8] sm:$0xff]
    %v1753 = vld [vmem:[#allocation11 + $0x500] sm:$0xff]
    %v1754 = vld [vmem:[#allocation11 + $0x508] sm:$0xff]
    %v1755 = vld [vmem:[#allocation11 + $0x510] sm:$0xff]
    %v1756 = vld [vmem:[#allocation11 + $0x518] sm:$0xff]
    %v1757 = vld [vmem:[#allocation11 + $0x520] sm:$0xff]
    %v1758 = vld [vmem:[#allocation11 + $0x528] sm:$0xff]
    %v1759 = vld [vmem:[#allocation11 + $0x530] sm:$0xff]
    %v1760 = vld [vmem:[#allocation11 + $0x538] sm:$0xff]
    %v1761 = vld [vmem:[#allocation11 + $0x540] sm:$0xff]
    %v1762 = vld [vmem:[#allocation11 + $0x548] sm:$0xff]
    %v1763 = vld [vmem:[#allocation11 + $0x550] sm:$0xff]
    %v1764 = vld [vmem:[#allocation11 + $0x558] sm:$0xff]
    %v1765 = vld [vmem:[#allocation11 + $0x560] sm:$0xff]
    %v1766 = vld [vmem:[#allocation11 + $0x568] sm:$0xff]
    %v1767 = vld [vmem:[#allocation11 + $0x570] sm:$0xff]
    %v1768 = vld [vmem:[#allocation11 + $0x578] sm:$0xff]
    %v1769 = vld [vmem:[#allocation11 + $0x580] sm:$0xff]
    %v1770 = vld [vmem:[#allocation11 + $0x588] sm:$0xff]
    %v1771 = vld [vmem:[#allocation11 + $0x590] sm:$0xff]
    %v1772 = vld [vmem:[#allocation11 + $0x598] sm:$0xff]
    %v1773 = vld [vmem:[#allocation11 + $0x5a0] sm:$0xff]
    %v1774 = vld [vmem:[#allocation11 + $0x5a8] sm:$0xff]
    %v1775 = vld [vmem:[#allocation11 + $0x5b0] sm:$0xff]
    %v1776 = vld [vmem:[#allocation11 + $0x5b8] sm:$0xff]
    %v1777 = vld [vmem:[#allocation11 + $0x5c0] sm:$0xff]
    %v1778 = vld [vmem:[#allocation11 + $0x5c8] sm:$0xff]
    %v1779 = vld [vmem:[#allocation11 + $0x5d0] sm:$0xff]
    %v1780 = vld [vmem:[#allocation11 + $0x5d8] sm:$0xff]
    %v1781 = vld [vmem:[#allocation11 + $0x5e0] sm:$0xff]
    %v1782 = vld [vmem:[#allocation11 + $0x5e8] sm:$0xff]
    %v1783 = vld [vmem:[#allocation11 + $0x5f0] sm:$0xff]
    %v1784 = vld [vmem:[#allocation11 + $0x5f8] sm:$0xff]
    %v1785 = vld [vmem:[#allocation11 + $0x600] sm:$0xff]
    %v1786 = vld [vmem:[#allocation11 + $0x608] sm:$0xff]
    %v1787 = vld [vmem:[#allocation11 + $0x610] sm:$0xff]
    %v1788 = vld [vmem:[#allocation11 + $0x618] sm:$0xff]
    %v1789 = vld [vmem:[#allocation11 + $0x620] sm:$0xff]
    %v1790 = vld [vmem:[#allocation11 + $0x628] sm:$0xff]
    %v1791 = vld [vmem:[#allocation11 + $0x630] sm:$0xff]
    %v1792 = vld [vmem:[#allocation11 + $0x638] sm:$0xff]
    %v1793 = vld [vmem:[#allocation11 + $0x640] sm:$0xff]
    %v1794 = vld [vmem:[#allocation11 + $0x648] sm:$0xff]
    %v1795 = vld [vmem:[#allocation11 + $0x650] sm:$0xff]
    %v1796 = vld [vmem:[#allocation11 + $0x658] sm:$0xff]
    %v1797 = vld [vmem:[#allocation11 + $0x660] sm:$0xff]
    %v1798 = vld [vmem:[#allocation11 + $0x668] sm:$0xff]
    %v1799 = vld [vmem:[#allocation11 + $0x670] sm:$0xff]
    %v1800 = vld [vmem:[#allocation11 + $0x678] sm:$0xff]
    %v1801 = vld [vmem:[#allocation11 + $0x680] sm:$0xff]
    %v1802 = vld [vmem:[#allocation11 + $0x688] sm:$0xff]
    %v1803 = vld [vmem:[#allocation11 + $0x690] sm:$0xff]
    %v1804 = vld [vmem:[#allocation11 + $0x698] sm:$0xff]
    %v1805 = vld [vmem:[#allocation11 + $0x6a0] sm:$0xff]
    %v1806 = vld [vmem:[#allocation11 + $0x6a8] sm:$0xff]
    %v1807 = vld [vmem:[#allocation11 + $0x6b0] sm:$0xff]
    %v1808 = vld [vmem:[#allocation11 + $0x6b8] sm:$0xff]
    %v1809 = vld [vmem:[#allocation11 + $0x6c0] sm:$0xff]
    %v1810 = vld [vmem:[#allocation11 + $0x6c8] sm:$0xff]
    %v1811 = vld [vmem:[#allocation11 + $0x6d0] sm:$0xff]
    %v1812 = vld [vmem:[#allocation11 + $0x6d8] sm:$0xff]
    %v1813 = vld [vmem:[#allocation11 + $0x6e0] sm:$0xff]
    %v1814 = vld [vmem:[#allocation11 + $0x6e8] sm:$0xff]
    %v1815 = vld [vmem:[#allocation11 + $0x6f0] sm:$0xff]
    %v1816 = vld [vmem:[#allocation11 + $0x6f8] sm:$0xff]
    %v1817 = vld [vmem:[#allocation11 + $0x700] sm:$0xff]
    %v1818 = vld [vmem:[#allocation11 + $0x708] sm:$0xff]
    %v1819 = vld [vmem:[#allocation11 + $0x710] sm:$0xff]
    %v1820 = vld [vmem:[#allocation11 + $0x718] sm:$0xff]
    %v1821 = vld [vmem:[#allocation11 + $0x720] sm:$0xff]
    %v1822 = vld [vmem:[#allocation11 + $0x728] sm:$0xff]
    %v1823 = vld [vmem:[#allocation11 + $0x730] sm:$0xff]
    %v1824 = vld [vmem:[#allocation11 + $0x738] sm:$0xff]
    %v1825 = vld [vmem:[#allocation11 + $0x740] sm:$0xff]
    %v1826 = vld [vmem:[#allocation11 + $0x748] sm:$0xff]
    %v1827 = vld [vmem:[#allocation11 + $0x750] sm:$0xff]
    %v1828 = vld [vmem:[#allocation11 + $0x758] sm:$0xff]
    %v1829 = vld [vmem:[#allocation11 + $0x760] sm:$0xff]
    %v1830 = vld [vmem:[#allocation11 + $0x768] sm:$0xff]
    %v1831 = vld [vmem:[#allocation11 + $0x770] sm:$0xff]
    %v1832 = vld [vmem:[#allocation11 + $0x778] sm:$0xff]
    %v1833 = vld [vmem:[#allocation11 + $0x780] sm:$0xff]
    %v1834 = vld [vmem:[#allocation11 + $0x788] sm:$0xff]
    %v1835 = vld [vmem:[#allocation11 + $0x790] sm:$0xff]
    %v1836 = vld [vmem:[#allocation11 + $0x798] sm:$0xff]
    %v1837 = vld [vmem:[#allocation11 + $0x7a0] sm:$0xff]
    %v1838 = vld [vmem:[#allocation11 + $0x7a8] sm:$0xff]
    %v1839 = vld [vmem:[#allocation11 + $0x7b0] sm:$0xff]
    %v1840 = vld [vmem:[#allocation11 + $0x7b8] sm:$0xff]
    %v1841 = vld [vmem:[#allocation11 + $0x7c0] sm:$0xff]
    %v1842 = vld [vmem:[#allocation11 + $0x7c8] sm:$0xff]
    %v1843 = vld [vmem:[#allocation11 + $0x7d0] sm:$0xff]
    %v1844 = vld [vmem:[#allocation11 + $0x7d8] sm:$0xff]
    %v1845 = vld [vmem:[#allocation11 + $0x7e0] sm:$0xff]
    %v1846 = vld [vmem:[#allocation11 + $0x7e8] sm:$0xff]
    %v1847 = vld [vmem:[#allocation11 + $0x7f0] sm:$0xff]
    %v1848 = vld [vmem:[#allocation11 + $0x7f8] sm:$0xff]
    %1849 = vmatprep.subr.mxu0 %v1594
    %1850 = vmatpush1.msra.mxu0 %v1593
    %1851 = vmatprep.subr.mxu0 %v1602
    %1852 = vmatpush1.msra.mxu0 %v1601
    %1853 = vmatprep.subr.mxu0 %v1610
    %1854 = vmatpush1.msra.mxu0 %v1609
    %1855 = vmatprep.subr.mxu0 %v1618
    %1856 = vmatpush1.msra.mxu0 %v1617
    %1857 = vmatprep.subr.mxu0 %v1626
    %1858 = vmatpush1.msra.mxu0 %v1625
    %1859 = vmatprep.subr.mxu0 %v1634
    %1860 = vmatpush1.msra.mxu0 %v1633
    %1861 = vmatprep.subr.mxu0 %v1642
    %1862 = vmatpush1.msra.mxu0 %v1641
    %1863 = vmatprep.subr.mxu0 %v1650
    %1864 = vmatpush1.msra.mxu0 %v1649
    %1865 = vmatprep.subr.mxu0 %v1658
    %1866 = vmatpush1.msra.mxu0 %v1657
    %1867 = vmatprep.subr.mxu0 %v1666
    %1868 = vmatpush1.msra.mxu0 %v1665
    %1869 = vmatprep.subr.mxu0 %v1674
    %1870 = vmatpush1.msra.mxu0 %v1673
    %1871 = vmatprep.subr.mxu0 %v1682
    %1872 = vmatpush1.msra.mxu0 %v1681
    %1873 = vmatprep.subr.mxu0 %v1690
    %1874 = vmatpush1.msra.mxu0 %v1689
    %1875 = vmatprep.subr.mxu0 %v1698
    %1876 = vmatpush1.msra.mxu0 %v1697
    %1877 = vmatprep.subr.mxu0 %v1706
    %1878 = vmatpush1.msra.mxu0 %v1705
    %1879 = vmatprep.subr.mxu0 %v1714
    %1880 = vmatpush1.msra.mxu0 %v1713
    %1881 = vmatprep.subr.mxu0 %v1722
    %1882 = vmatpush1.msra.mxu0 %v1721
    %1883 = vmatprep.subr.mxu0 %v1730
    %1884 = vmatpush1.msra.mxu0 %v1729
    %1885 = vmatprep.subr.mxu0 %v1738
    %1886 = vmatpush1.msra.mxu0 %v1737
    %1887 = vmatprep.subr.mxu0 %v1746
    %1888 = vmatpush1.msra.mxu0 %v1745
    %1889 = vmatprep.subr.mxu0 %v1754
    %1890 = vmatpush1.msra.mxu0 %v1753
    %1891 = vmatprep.subr.mxu0 %v1762
    %1892 = vmatpush1.msra.mxu0 %v1761
    %1893 = vmatprep.subr.mxu0 %v1770
    %1894 = vmatpush1.msra.mxu0 %v1769
    %1895 = vmatprep.subr.mxu0 %v1778
    %1896 = vmatpush1.msra.mxu0 %v1777
    %1897 = vmatprep.subr.mxu0 %v1786
    %1898 = vmatpush1.msra.mxu0 %v1785
    %1899 = vmatprep.subr.mxu0 %v1794
    %1900 = vmatpush1.msra.mxu0 %v1793
    %1901 = vmatprep.subr.mxu0 %v1802
    %1902 = vmatpush1.msra.mxu0 %v1801
    %1903 = vmatprep.subr.mxu0 %v1810
    %1904 = vmatpush1.msra.mxu0 %v1809
    %1905 = vmatprep.subr.mxu0 %v1818
    %1906 = vmatpush1.msra.mxu0 %v1817
    %1907 = vmatprep.subr.mxu0 %v1826
    %1908 = vmatpush1.msra.mxu0 %v1825
    %1909 = vmatprep.subr.mxu0 %v1834
    %1910 = vmatpush1.msra.mxu0 %v1833
    %1911 = vmatprep.subr.mxu0 %v1842
    %1912 = vmatpush1.msra.mxu0 %v1841
    %1913 = vmatprep.mubr.f32.mxu0 %v1592
    %1914 = vmatmul.mubr.f32.gmra.mrb[0].mxu0 %v1591
    %v1915 = vpop.f32.mrb[0].mxu0
    %v1916 = vadd.f32 0.0, %v1915
    %v1917 = vpop.f32.mrb[0].mxu0
    %v1918 = vadd.f32 0.0, %v1917
    %1919 = vdwg.mxu0
    %1920 = vmatprep.subr.mxu0 %v1596
    %1921 = vmatpush1.msra.mxu0 %v1595
    %1922 = vmatprep.subr.mxu0 %v1604
    %1923 = vmatpush1.msra.mxu0 %v1603
    %1924 = vmatprep.subr.mxu0 %v1612
    %1925 = vmatpush1.msra.mxu0 %v1611
    %1926 = vmatprep.subr.mxu0 %v1620
    %1927 = vmatpush1.msra.mxu0 %v1619
    %1928 = vmatprep.subr.mxu0 %v1628
    %1929 = vmatpush1.msra.mxu0 %v1627
    %1930 = vmatprep.subr.mxu0 %v1636
    %1931 = vmatpush1.msra.mxu0 %v1635
    %1932 = vmatprep.subr.mxu0 %v1644
    %1933 = vmatpush1.msra.mxu0 %v1643
    %1934 = vmatprep.subr.mxu0 %v1652
    %1935 = vmatpush1.msra.mxu0 %v1651
    %1936 = vmatprep.subr.mxu0 %v1660
    %1937 = vmatpush1.msra.mxu0 %v1659
    %1938 = vmatprep.subr.mxu0 %v1668
    %1939 = vmatpush1.msra.mxu0 %v1667
    %1940 = vmatprep.subr.mxu0 %v1676
    %1941 = vmatpush1.msra.mxu0 %v1675
    %1942 = vmatprep.subr.mxu0 %v1684
    %1943 = vmatpush1.msra.mxu0 %v1683
    %1944 = vmatprep.subr.mxu0 %v1692
    %1945 = vmatpush1.msra.mxu0 %v1691
    %1946 = vmatprep.subr.mxu0 %v1700
    %1947 = vmatpush1.msra.mxu0 %v1699
    %1948 = vmatprep.subr.mxu0 %v1708
    %1949 = vmatpush1.msra.mxu0 %v1707
    %1950 = vmatprep.subr.mxu0 %v1716
    %1951 = vmatpush1.msra.mxu0 %v1715
    %1952 = vmatprep.subr.mxu0 %v1724
    %1953 = vmatpush1.msra.mxu0 %v1723
    %1954 = vmatprep.subr.mxu0 %v1732
    %1955 = vmatpush1.msra.mxu0 %v1731
    %1956 = vmatprep.subr.mxu0 %v1740
    %1957 = vmatpush1.msra.mxu0 %v1739
    %1958 = vmatprep.subr.mxu0 %v1748
    %1959 = vmatpush1.msra.mxu0 %v1747
    %1960 = vmatprep.subr.mxu0 %v1756
    %1961 = vmatpush1.msra.mxu0 %v1755
    %1962 = vmatprep.subr.mxu0 %v1764
    %1963 = vmatpush1.msra.mxu0 %v1763
    %1964 = vmatprep.subr.mxu0 %v1772
    %1965 = vmatpush1.msra.mxu0 %v1771
    %1966 = vmatprep.subr.mxu0 %v1780
    %1967 = vmatpush1.msra.mxu0 %v1779
    %1968 = vmatprep.subr.mxu0 %v1788
    %1969 = vmatpush1.msra.mxu0 %v1787
    %1970 = vmatprep.subr.mxu0 %v1796
    %1971 = vmatpush1.msra.mxu0 %v1795
    %1972 = vmatprep.subr.mxu0 %v1804
    %1973 = vmatpush1.msra.mxu0 %v1803
    %1974 = vmatprep.subr.mxu0 %v1812
    %1975 = vmatpush1.msra.mxu0 %v1811
    %1976 = vmatprep.subr.mxu0 %v1820
    %1977 = vmatpush1.msra.mxu0 %v1819
    %1978 = vmatprep.subr.mxu0 %v1828
    %1979 = vmatpush1.msra.mxu0 %v1827
    %1980 = vmatprep.subr.mxu0 %v1836
    %1981 = vmatpush1.msra.mxu0 %v1835
    %1982 = vmatprep.subr.mxu0 %v1844
    %1983 = vmatpush1.msra.mxu0 %v1843
    %1984 = vmatprep.mubr.f32.mxu0 %v1592
    %1985 = vmatmul.mubr.f32.gmra.mrb[0].mxu0 %v1591
    %v1986 = vpop.f32.mrb[0].mxu0
    %v1987 = vadd.f32 0.0, %v1986
    %v1988 = vpop.f32.mrb[0].mxu0
    %v1989 = vadd.f32 0.0, %v1988
    %1990 = vdwg.mxu0
    %1991 = vmatprep.subr.mxu0 %v1598
    %1992 = vmatpush1.msra.mxu0 %v1597
    %1993 = vmatprep.subr.mxu0 %v1606
    %1994 = vmatpush1.msra.mxu0 %v1605
    %1995 = vmatprep.subr.mxu0 %v1614
    %1996 = vmatpush1.msra.mxu0 %v1613
    %1997 = vmatprep.subr.mxu0 %v1622
    %1998 = vmatpush1.msra.mxu0 %v1621
    %1999 = vmatprep.subr.mxu0 %v1630
    %2000 = vmatpush1.msra.mxu0 %v1629
    %2001 = vmatprep.subr.mxu0 %v1638
    %2002 = vmatpush1.msra.mxu0 %v1637
    %2003 = vmatprep.subr.mxu0 %v1646
    %2004 = vmatpush1.msra.mxu0 %v1645
    %2005 = vmatprep.subr.mxu0 %v1654
    %2006 = vmatpush1.msra.mxu0 %v1653
    %2007 = vmatprep.subr.mxu0 %v1662
    %2008 = vmatpush1.msra.mxu0 %v1661
    %2009 = vmatprep.subr.mxu0 %v1670
    %2010 = vmatpush1.msra.mxu0 %v1669
    %2011 = vmatprep.subr.mxu0 %v1678
    %2012 = vmatpush1.msra.mxu0 %v1677
    %2013 = vmatprep.subr.mxu0 %v1686
    %2014 = vmatpush1.msra.mxu0 %v1685
    %2015 = vmatprep.subr.mxu0 %v1694
    %2016 = vmatpush1.msra.mxu0 %v1693
    %2017 = vmatprep.subr.mxu0 %v1702
    %2018 = vmatpush1.msra.mxu0 %v1701
    %2019 = vmatprep.subr.mxu0 %v1710
    %2020 = vmatpush1.msra.mxu0 %v1709
    %2021 = vmatprep.subr.mxu0 %v1718
    %2022 = vmatpush1.msra.mxu0 %v1717
    %2023 = vmatprep.subr.mxu0 %v1726
    %2024 = vmatpush1.msra.mxu0 %v1725
    %2025 = vmatprep.subr.mxu0 %v1734
    %2026 = vmatpush1.msra.mxu0 %v1733
    %2027 = vmatprep.subr.mxu0 %v1742
    %2028 = vmatpush1.msra.mxu0 %v1741
    %2029 = vmatprep.subr.mxu0 %v1750
    %2030 = vmatpush1.msra.mxu0 %v1749
    %2031 = vmatprep.subr.mxu0 %v1758
    %2032 = vmatpush1.msra.mxu0 %v1757
    %2033 = vmatprep.subr.mxu0 %v1766
    %2034 = vmatpush1.msra.mxu0 %v1765
    %2035 = vmatprep.subr.mxu0 %v1774
    %2036 = vmatpush1.msra.mxu0 %v1773
    %2037 = vmatprep.subr.mxu0 %v1782
    %2038 = vmatpush1.msra.mxu0 %v1781
    %2039 = vmatprep.subr.mxu0 %v1790
    %2040 = vmatpush1.msra.mxu0 %v1789
    %2041 = vmatprep.subr.mxu0 %v1798
    %2042 = vmatpush1.msra.mxu0 %v1797
    %2043 = vmatprep.subr.mxu0 %v1806
    %2044 = vmatpush1.msra.mxu0 %v1805
    %2045 = vmatprep.subr.mxu0 %v1814
    %2046 = vmatpush1.msra.mxu0 %v1813
    %2047 = vmatprep.subr.mxu0 %v1822
    %2048 = vmatpush1.msra.mxu0 %v1821
    %2049 = vmatprep.subr.mxu0 %v1830
    %2050 = vmatpush1.msra.mxu0 %v1829
    %2051 = vmatprep.subr.mxu0 %v1838
    %2052 = vmatpush1.msra.mxu0 %v1837
    %2053 = vmatprep.subr.mxu0 %v1846
    %2054 = vmatpush1.msra.mxu0 %v1845
    %2055 = vmatprep.mubr.f32.mxu0 %v1592
    %2056 = vmatmul.mubr.f32.gmra.mrb[0].mxu0 %v1591
    %v2057 = vpop.f32.mrb[0].mxu0
    %v2058 = vadd.f32 0.0, %v2057
    %v2059 = vpop.f32.mrb[0].mxu0
    %v2060 = vadd.f32 0.0, %v2059
    %2061 = vdwg.mxu0
    %2062 = vmatprep.subr.mxu0 %v1600
    %2063 = vmatpush1.msra.mxu0 %v1599
    %2064 = vmatprep.subr.mxu0 %v1608
    %2065 = vmatpush1.msra.mxu0 %v1607
    %2066 = vmatprep.subr.mxu0 %v1616
    %2067 = vmatpush1.msra.mxu0 %v1615
    %2068 = vmatprep.subr.mxu0 %v1624
    %2069 = vmatpush1.msra.mxu0 %v1623
    %2070 = vmatprep.subr.mxu0 %v1632
    %2071 = vmatpush1.msra.mxu0 %v1631
    %2072 = vmatprep.subr.mxu0 %v1640
    %2073 = vmatpush1.msra.mxu0 %v1639
    %2074 = vmatprep.subr.mxu0 %v1648
    %2075 = vmatpush1.msra.mxu0 %v1647
    %2076 = vmatprep.subr.mxu0 %v1656
    %2077 = vmatpush1.msra.mxu0 %v1655
    %2078 = vmatprep.subr.mxu0 %v1664
    %2079 = vmatpush1.msra.mxu0 %v1663
    %2080 = vmatprep.subr.mxu0 %v1672
    %2081 = vmatpush1.msra.mxu0 %v1671
    %2082 = vmatprep.subr.mxu0 %v1680
    %2083 = vmatpush1.msra.mxu0 %v1679
    %2084 = vmatprep.subr.mxu0 %v1688
    %2085 = vmatpush1.msra.mxu0 %v1687
    %2086 = vmatprep.subr.mxu0 %v1696
    %2087 = vmatpush1.msra.mxu0 %v1695
    %2088 = vmatprep.subr.mxu0 %v1704
    %2089 = vmatpush1.msra.mxu0 %v1703
    %2090 = vmatprep.subr.mxu0 %v1712
    %2091 = vmatpush1.msra.mxu0 %v1711
    %2092 = vmatprep.subr.mxu0 %v1720
    %2093 = vmatpush1.msra.mxu0 %v1719
    %2094 = vmatprep.subr.mxu0 %v1728
    %2095 = vmatpush1.msra.mxu0 %v1727
    %2096 = vmatprep.subr.mxu0 %v1736
    %2097 = vmatpush1.msra.mxu0 %v1735
    %2098 = vmatprep.subr.mxu0 %v1744
    %2099 = vmatpush1.msra.mxu0 %v1743
    %2100 = vmatprep.subr.mxu0 %v1752
    %2101 = vmatpush1.msra.mxu0 %v1751
    %2102 = vmatprep.subr.mxu0 %v1760
    %2103 = vmatpush1.msra.mxu0 %v1759
    %2104 = vmatprep.subr.mxu0 %v1768
    %2105 = vmatpush1.msra.mxu0 %v1767
    %2106 = vmatprep.subr.mxu0 %v1776
    %2107 = vmatpush1.msra.mxu0 %v1775
    %2108 = vmatprep.subr.mxu0 %v1784
    %2109 = vmatpush1.msra.mxu0 %v1783
    %2110 = vmatprep.subr.mxu0 %v1792
    %2111 = vmatpush1.msra.mxu0 %v1791
    %2112 = vmatprep.subr.mxu0 %v1800
    %2113 = vmatpush1.msra.mxu0 %v1799
    %2114 = vmatprep.subr.mxu0 %v1808
    %2115 = vmatpush1.msra.mxu0 %v1807
    %2116 = vmatprep.subr.mxu0 %v1816
    %2117 = vmatpush1.msra.mxu0 %v1815
    %2118 = vmatprep.subr.mxu0 %v1824
    %2119 = vmatpush1.msra.mxu0 %v1823
    %2120 = vmatprep.subr.mxu0 %v1832
    %2121 = vmatpush1.msra.mxu0 %v1831
    %2122 = vmatprep.subr.mxu0 %v1840
    %2123 = vmatpush1.msra.mxu0 %v1839
    %2124 = vmatprep.subr.mxu0 %v1848
    %2125 = vmatpush1.msra.mxu0 %v1847
    %2126 = vmatprep.mubr.f32.mxu0 %v1592
    %2127 = vmatmul.mubr.f32.gmra.mrb[0].mxu0 %v1591
    %v2128 = vpop.f32.mrb[0].mxu0
    %v2129 = vadd.f32 0.0, %v2128
    %v2130 = vpop.f32.mrb[0].mxu0
    %v2131 = vadd.f32 0.0, %v2130
    %2132 = vdwg.mxu0
    %s2133 = scalar_lea.vmem [#allocation2], 64
    %v2134 = vld [vmem:[%s2133] sm:$0xff]
    %v2135 = vld [vmem:[%s2133 + $0x8] sm:$0xff]
    %v2136 = vld [vmem:[%s2133 + $0x10] sm:$0xff]
    %v2137 = vld [vmem:[%s2133 + $0x18] sm:$0xff]
    %v2138 = vadd.f32 %v2134, %v1916
    %v2139 = vadd.f32 %v2135, %v1918
    %v2140 = vadd.f32 %v2136, %v1987
    %v2141 = vadd.f32 %v2137, %v1989
    %s2142 = scalar_lea.vmem [#allocation2], 384
    %v2143 = vld [vmem:[%s2142 + $0x20] sm:$0xff]
    %v2144 = vld [vmem:[%s2142 + $0x28] sm:$0xff]
    %v2145 = vld [vmem:[%s2142 + $0x30] sm:$0xff]
    %v2146 = vld [vmem:[%s2142 + $0x38] sm:$0xff]
    %v2147 = vadd.f32 %v2143, %v2058
    %v2148 = vadd.f32 %v2144, %v2060
    %v2149 = vadd.f32 %v2145, %v2129
    %v2150 = vadd.f32 %v2146, %v2131
    %v2151 = vxor.u32 %v2138, 2147483648
    %v2152 = vmul.f32 %v2151, 1.442695
    %v2153 = vpow.pop %v2152
    %v2154 = vadd.f32 %v2153, 1.0
    %v2155 = vrcp.pop %v2154
    %v2156 = vmul.f32 1.0, %v2155
    %v2157 = vxor.u32 %v2139, 2147483648
    %v2158 = vmul.f32 %v2157, 1.442695
    %v2159 = vpow.pop %v2158
    %v2160 = vadd.f32 %v2159, 1.0
    %v2161 = vrcp.pop %v2160
    %v2162 = vmul.f32 1.0, %v2161
    %v2163 = vtanh.pop %v2140
    %v2164 = vxor.u32 %v2141, 2147483648
    %v2165 = vmul.f32 %v2164, 1.442695
    %v2166 = vpow.pop %v2165
    %v2167 = vadd.f32 %v2166, 1.0
    %v2168 = vrcp.pop %v2167
    %v2169 = vmul.f32 1.0, %v2168
    %v2170 = vmul.f32 %v2162, %v1559
    %v2171 = vmul.f32 %v2156, %v2163
    %v2172 = vadd.f32 %v2170, %v2171
    %v2173 = vtanh.pop %v2172
    %v2174 = vmul.f32 %v2169, %v2173
    %v2175 = vxor.u32 %v2147, 2147483648
    %v2176 = vmul.f32 %v2175, 1.442695
    %v2177 = vpow.pop %v2176
    %v2178 = vadd.f32 %v2177, 1.0
    %v2179 = vrcp.pop %v2178
    %v2180 = vmul.f32 1.0, %v2179
    %v2181 = vxor.u32 %v2148, 2147483648
    %v2182 = vmul.f32 %v2181, 1.442695
    %v2183 = vpow.pop %v2182
    %v2184 = vadd.f32 %v2183, 1.0
    %v2185 = vrcp.pop %v2184
    %v2186 = vmul.f32 1.0, %v2185
    %v2187 = vtanh.pop %v2149
    %v2188 = vxor.u32 %v2150, 2147483648
    %v2189 = vmul.f32 %v2188, 1.442695
    %v2190 = vpow.pop %v2189
    %v2191 = vadd.f32 %v2190, 1.0
    %v2192 = vrcp.pop %v2191
    %v2193 = vmul.f32 1.0, %v2192
    %v2194 = vmul.f32 %v2186, %v1583
    %v2195 = vmul.f32 %v2180, %v2187
    %v2196 = vadd.f32 %v2194, %v2195
    %v2197 = vtanh.pop %v2196
    %v2198 = vmul.f32 %v2193, %v2197
    %2199 = vst [vmem:[#allocation4] sm:$0xff] %v2174
    %2200 = vst [vmem:[#allocation4 + $0x8] sm:$0xff] %v2198
    %s2201 = scalar_lea.vmem [#allocation3], 16
    %2202 = vst [vmem:[%s2201] sm:$0xff] %v2174
    %s2203 = scalar_lea.vmem [#allocation3], 96
    %2204 = vst [vmem:[%s2203 + $0x8] sm:$0xff] %v2198
    %v2205 = vld [vmem:[#allocation4] sm:$0xff]
    %v2206 = vld [vmem:[#allocation4 + $0x8] sm:$0xff]
    %v2207 = vld [vmem:[#allocation11] sm:$0xff]
    %v2208 = vld [vmem:[#allocation11 + $0x8] sm:$0xff]
    %v2209 = vld [vmem:[#allocation11 + $0x10] sm:$0xff]
    %v2210 = vld [vmem:[#allocation11 + $0x18] sm:$0xff]
    %v2211 = vld [vmem:[#allocation11 + $0x20] sm:$0xff]
    %v2212 = vld [vmem:[#allocation11 + $0x28] sm:$0xff]
    %v2213 = vld [vmem:[#allocation11 + $0x30] sm:$0xff]
    %v2214 = vld [vmem:[#allocation11 + $0x38] sm:$0xff]
    %v2215 = vld [vmem:[#allocation11 + $0x40] sm:$0xff]
    %v2216 = vld [vmem:[#allocation11 + $0x48] sm:$0xff]
    %v2217 = vld [vmem:[#allocation11 + $0x50] sm:$0xff]
    %v2218 = vld [vmem:[#allocation11 + $0x58] sm:$0xff]
    %v2219 = vld [vmem:[#allocation11 + $0x60] sm:$0xff]
    %v2220 = vld [vmem:[#allocation11 + $0x68] sm:$0xff]
    %v2221 = vld [vmem:[#allocation11 + $0x70] sm:$0xff]
    %v2222 = vld [vmem:[#allocation11 + $0x78] sm:$0xff]
    %v2223 = vld [vmem:[#allocation11 + $0x80] sm:$0xff]
    %v2224 = vld [vmem:[#allocation11 + $0x88] sm:$0xff]
    %v2225 = vld [vmem:[#allocation11 + $0x90] sm:$0xff]
    %v2226 = vld [vmem:[#allocation11 + $0x98] sm:$0xff]
    %v2227 = vld [vmem:[#allocation11 + $0xa0] sm:$0xff]
    %v2228 = vld [vmem:[#allocation11 + $0xa8] sm:$0xff]
    %v2229 = vld [vmem:[#allocation11 + $0xb0] sm:$0xff]
    %v2230 = vld [vmem:[#allocation11 + $0xb8] sm:$0xff]
    %v2231 = vld [vmem:[#allocation11 + $0xc0] sm:$0xff]
    %v2232 = vld [vmem:[#allocation11 + $0xc8] sm:$0xff]
    %v2233 = vld [vmem:[#allocation11 + $0xd0] sm:$0xff]
    %v2234 = vld [vmem:[#allocation11 + $0xd8] sm:$0xff]
    %v2235 = vld [vmem:[#allocation11 + $0xe0] sm:$0xff]
    %v2236 = vld [vmem:[#allocation11 + $0xe8] sm:$0xff]
    %v2237 = vld [vmem:[#allocation11 + $0xf0] sm:$0xff]
    %v2238 = vld [vmem:[#allocation11 + $0xf8] sm:$0xff]
    %v2239 = vld [vmem:[#allocation11 + $0x100] sm:$0xff]
    %v2240 = vld [vmem:[#allocation11 + $0x108] sm:$0xff]
    %v2241 = vld [vmem:[#allocation11 + $0x110] sm:$0xff]
    %v2242 = vld [vmem:[#allocation11 + $0x118] sm:$0xff]
    %v2243 = vld [vmem:[#allocation11 + $0x120] sm:$0xff]
    %v2244 = vld [vmem:[#allocation11 + $0x128] sm:$0xff]
    %v2245 = vld [vmem:[#allocation11 + $0x130] sm:$0xff]
    %v2246 = vld [vmem:[#allocation11 + $0x138] sm:$0xff]
    %v2247 = vld [vmem:[#allocation11 + $0x140] sm:$0xff]
    %v2248 = vld [vmem:[#allocation11 + $0x148] sm:$0xff]
    %v2249 = vld [vmem:[#allocation11 + $0x150] sm:$0xff]
    %v2250 = vld [vmem:[#allocation11 + $0x158] sm:$0xff]
    %v2251 = vld [vmem:[#allocation11 + $0x160] sm:$0xff]
    %v2252 = vld [vmem:[#allocation11 + $0x168] sm:$0xff]
    %v2253 = vld [vmem:[#allocation11 + $0x170] sm:$0xff]
    %v2254 = vld [vmem:[#allocation11 + $0x178] sm:$0xff]
    %v2255 = vld [vmem:[#allocation11 + $0x180] sm:$0xff]
    %v2256 = vld [vmem:[#allocation11 + $0x188] sm:$0xff]
    %v2257 = vld [vmem:[#allocation11 + $0x190] sm:$0xff]
    %v2258 = vld [vmem:[#allocation11 + $0x198] sm:$0xff]
    %v2259 = vld [vmem:[#allocation11 + $0x1a0] sm:$0xff]
    %v2260 = vld [vmem:[#allocation11 + $0x1a8] sm:$0xff]
    %v2261 = vld [vmem:[#allocation11 + $0x1b0] sm:$0xff]
    %v2262 = vld [vmem:[#allocation11 + $0x1b8] sm:$0xff]
    %v2263 = vld [vmem:[#allocation11 + $0x1c0] sm:$0xff]
    %v2264 = vld [vmem:[#allocation11 + $0x1c8] sm:$0xff]
    %v2265 = vld [vmem:[#allocation11 + $0x1d0] sm:$0xff]
    %v2266 = vld [vmem:[#allocation11 + $0x1d8] sm:$0xff]
    %v2267 = vld [vmem:[#allocation11 + $0x1e0] sm:$0xff]
    %v2268 = vld [vmem:[#allocation11 + $0x1e8] sm:$0xff]
    %v2269 = vld [vmem:[#allocation11 + $0x1f0] sm:$0xff]
    %v2270 = vld [vmem:[#allocation11 + $0x1f8] sm:$0xff]
    %v2271 = vld [vmem:[#allocation11 + $0x200] sm:$0xff]
    %v2272 = vld [vmem:[#allocation11 + $0x208] sm:$0xff]
    %v2273 = vld [vmem:[#allocation11 + $0x210] sm:$0xff]
    %v2274 = vld [vmem:[#allocation11 + $0x218] sm:$0xff]
    %v2275 = vld [vmem:[#allocation11 + $0x220] sm:$0xff]
    %v2276 = vld [vmem:[#allocation11 + $0x228] sm:$0xff]
    %v2277 = vld [vmem:[#allocation11 + $0x230] sm:$0xff]
    %v2278 = vld [vmem:[#allocation11 + $0x238] sm:$0xff]
    %v2279 = vld [vmem:[#allocation11 + $0x240] sm:$0xff]
    %v2280 = vld [vmem:[#allocation11 + $0x248] sm:$0xff]
    %v2281 = vld [vmem:[#allocation11 + $0x250] sm:$0xff]
    %v2282 = vld [vmem:[#allocation11 + $0x258] sm:$0xff]
    %v2283 = vld [vmem:[#allocation11 + $0x260] sm:$0xff]
    %v2284 = vld [vmem:[#allocation11 + $0x268] sm:$0xff]
    %v2285 = vld [vmem:[#allocation11 + $0x270] sm:$0xff]
    %v2286 = vld [vmem:[#allocation11 + $0x278] sm:$0xff]
    %v2287 = vld [vmem:[#allocation11 + $0x280] sm:$0xff]
    %v2288 = vld [vmem:[#allocation11 + $0x288] sm:$0xff]
    %v2289 = vld [vmem:[#allocation11 + $0x290] sm:$0xff]
    %v2290 = vld [vmem:[#allocation11 + $0x298] sm:$0xff]
    %v2291 = vld [vmem:[#allocation11 + $0x2a0] sm:$0xff]
    %v2292 = vld [vmem:[#allocation11 + $0x2a8] sm:$0xff]
    %v2293 = vld [vmem:[#allocation11 + $0x2b0] sm:$0xff]
    %v2294 = vld [vmem:[#allocation11 + $0x2b8] sm:$0xff]
    %v2295 = vld [vmem:[#allocation11 + $0x2c0] sm:$0xff]
    %v2296 = vld [vmem:[#allocation11 + $0x2c8] sm:$0xff]
    %v2297 = vld [vmem:[#allocation11 + $0x2d0] sm:$0xff]
    %v2298 = vld [vmem:[#allocation11 + $0x2d8] sm:$0xff]
    %v2299 = vld [vmem:[#allocation11 + $0x2e0] sm:$0xff]
    %v2300 = vld [vmem:[#allocation11 + $0x2e8] sm:$0xff]
    %v2301 = vld [vmem:[#allocation11 + $0x2f0] sm:$0xff]
    %v2302 = vld [vmem:[#allocation11 + $0x2f8] sm:$0xff]
    %v2303 = vld [vmem:[#allocation11 + $0x300] sm:$0xff]
    %v2304 = vld [vmem:[#allocation11 + $0x308] sm:$0xff]
    %v2305 = vld [vmem:[#allocation11 + $0x310] sm:$0xff]
    %v2306 = vld [vmem:[#allocation11 + $0x318] sm:$0xff]
    %v2307 = vld [vmem:[#allocation11 + $0x320] sm:$0xff]
    %v2308 = vld [vmem:[#allocation11 + $0x328] sm:$0xff]
    %v2309 = vld [vmem:[#allocation11 + $0x330] sm:$0xff]
    %v2310 = vld [vmem:[#allocation11 + $0x338] sm:$0xff]
    %v2311 = vld [vmem:[#allocation11 + $0x340] sm:$0xff]
    %v2312 = vld [vmem:[#allocation11 + $0x348] sm:$0xff]
    %v2313 = vld [vmem:[#allocation11 + $0x350] sm:$0xff]
    %v2314 = vld [vmem:[#allocation11 + $0x358] sm:$0xff]
    %v2315 = vld [vmem:[#allocation11 + $0x360] sm:$0xff]
    %v2316 = vld [vmem:[#allocation11 + $0x368] sm:$0xff]
    %v2317 = vld [vmem:[#allocation11 + $0x370] sm:$0xff]
    %v2318 = vld [vmem:[#allocation11 + $0x378] sm:$0xff]
    %v2319 = vld [vmem:[#allocation11 + $0x380] sm:$0xff]
    %v2320 = vld [vmem:[#allocation11 + $0x388] sm:$0xff]
    %v2321 = vld [vmem:[#allocation11 + $0x390] sm:$0xff]
    %v2322 = vld [vmem:[#allocation11 + $0x398] sm:$0xff]
    %v2323 = vld [vmem:[#allocation11 + $0x3a0] sm:$0xff]
    %v2324 = vld [vmem:[#allocation11 + $0x3a8] sm:$0xff]
    %v2325 = vld [vmem:[#allocation11 + $0x3b0] sm:$0xff]
    %v2326 = vld [vmem:[#allocation11 + $0x3b8] sm:$0xff]
    %v2327 = vld [vmem:[#allocation11 + $0x3c0] sm:$0xff]
    %v2328 = vld [vmem:[#allocation11 + $0x3c8] sm:$0xff]
    %v2329 = vld [vmem:[#allocation11 + $0x3d0] sm:$0xff]
    %v2330 = vld [vmem:[#allocation11 + $0x3d8] sm:$0xff]
    %v2331 = vld [vmem:[#allocation11 + $0x3e0] sm:$0xff]
    %v2332 = vld [vmem:[#allocation11 + $0x3e8] sm:$0xff]
    %v2333 = vld [vmem:[#allocation11 + $0x3f0] sm:$0xff]
    %v2334 = vld [vmem:[#allocation11 + $0x3f8] sm:$0xff]
    %v2335 = vld [vmem:[#allocation11 + $0x400] sm:$0xff]
    %v2336 = vld [vmem:[#allocation11 + $0x408] sm:$0xff]
    %v2337 = vld [vmem:[#allocation11 + $0x410] sm:$0xff]
    %v2338 = vld [vmem:[#allocation11 + $0x418] sm:$0xff]
    %v2339 = vld [vmem:[#allocation11 + $0x420] sm:$0xff]
    %v2340 = vld [vmem:[#allocation11 + $0x428] sm:$0xff]
    %v2341 = vld [vmem:[#allocation11 + $0x430] sm:$0xff]
    %v2342 = vld [vmem:[#allocation11 + $0x438] sm:$0xff]
    %v2343 = vld [vmem:[#allocation11 + $0x440] sm:$0xff]
    %v2344 = vld [vmem:[#allocation11 + $0x448] sm:$0xff]
    %v2345 = vld [vmem:[#allocation11 + $0x450] sm:$0xff]
    %v2346 = vld [vmem:[#allocation11 + $0x458] sm:$0xff]
    %v2347 = vld [vmem:[#allocation11 + $0x460] sm:$0xff]
    %v2348 = vld [vmem:[#allocation11 + $0x468] sm:$0xff]
    %v2349 = vld [vmem:[#allocation11 + $0x470] sm:$0xff]
    %v2350 = vld [vmem:[#allocation11 + $0x478] sm:$0xff]
    %v2351 = vld [vmem:[#allocation11 + $0x480] sm:$0xff]
    %v2352 = vld [vmem:[#allocation11 + $0x488] sm:$0xff]
    %v2353 = vld [vmem:[#allocation11 + $0x490] sm:$0xff]
    %v2354 = vld [vmem:[#allocation11 + $0x498] sm:$0xff]
    %v2355 = vld [vmem:[#allocation11 + $0x4a0] sm:$0xff]
    %v2356 = vld [vmem:[#allocation11 + $0x4a8] sm:$0xff]
    %v2357 = vld [vmem:[#allocation11 + $0x4b0] sm:$0xff]
    %v2358 = vld [vmem:[#allocation11 + $0x4b8] sm:$0xff]
    %v2359 = vld [vmem:[#allocation11 + $0x4c0] sm:$0xff]
    %v2360 = vld [vmem:[#allocation11 + $0x4c8] sm:$0xff]
    %v2361 = vld [vmem:[#allocation11 + $0x4d0] sm:$0xff]
    %v2362 = vld [vmem:[#allocation11 + $0x4d8] sm:$0xff]
    %v2363 = vld [vmem:[#allocation11 + $0x4e0] sm:$0xff]
    %v2364 = vld [vmem:[#allocation11 + $0x4e8] sm:$0xff]
    %v2365 = vld [vmem:[#allocation11 + $0x4f0] sm:$0xff]
    %v2366 = vld [vmem:[#allocation11 + $0x4f8] sm:$0xff]
    %v2367 = vld [vmem:[#allocation11 + $0x500] sm:$0xff]
    %v2368 = vld [vmem:[#allocation11 + $0x508] sm:$0xff]
    %v2369 = vld [vmem:[#allocation11 + $0x510] sm:$0xff]
    %v2370 = vld [vmem:[#allocation11 + $0x518] sm:$0xff]
    %v2371 = vld [vmem:[#allocation11 + $0x520] sm:$0xff]
    %v2372 = vld [vmem:[#allocation11 + $0x528] sm:$0xff]
    %v2373 = vld [vmem:[#allocation11 + $0x530] sm:$0xff]
    %v2374 = vld [vmem:[#allocation11 + $0x538] sm:$0xff]
    %v2375 = vld [vmem:[#allocation11 + $0x540] sm:$0xff]
    %v2376 = vld [vmem:[#allocation11 + $0x548] sm:$0xff]
    %v2377 = vld [vmem:[#allocation11 + $0x550] sm:$0xff]
    %v2378 = vld [vmem:[#allocation11 + $0x558] sm:$0xff]
    %v2379 = vld [vmem:[#allocation11 + $0x560] sm:$0xff]
    %v2380 = vld [vmem:[#allocation11 + $0x568] sm:$0xff]
    %v2381 = vld [vmem:[#allocation11 + $0x570] sm:$0xff]
    %v2382 = vld [vmem:[#allocation11 + $0x578] sm:$0xff]
    %v2383 = vld [vmem:[#allocation11 + $0x580] sm:$0xff]
    %v2384 = vld [vmem:[#allocation11 + $0x588] sm:$0xff]
    %v2385 = vld [vmem:[#allocation11 + $0x590] sm:$0xff]
    %v2386 = vld [vmem:[#allocation11 + $0x598] sm:$0xff]
    %v2387 = vld [vmem:[#allocation11 + $0x5a0] sm:$0xff]
    %v2388 = vld [vmem:[#allocation11 + $0x5a8] sm:$0xff]
    %v2389 = vld [vmem:[#allocation11 + $0x5b0] sm:$0xff]
    %v2390 = vld [vmem:[#allocation11 + $0x5b8] sm:$0xff]
    %v2391 = vld [vmem:[#allocation11 + $0x5c0] sm:$0xff]
    %v2392 = vld [vmem:[#allocation11 + $0x5c8] sm:$0xff]
    %v2393 = vld [vmem:[#allocation11 + $0x5d0] sm:$0xff]
    %v2394 = vld [vmem:[#allocation11 + $0x5d8] sm:$0xff]
    %v2395 = vld [vmem:[#allocation11 + $0x5e0] sm:$0xff]
    %v2396 = vld [vmem:[#allocation11 + $0x5e8] sm:$0xff]
    %v2397 = vld [vmem:[#allocation11 + $0x5f0] sm:$0xff]
    %v2398 = vld [vmem:[#allocation11 + $0x5f8] sm:$0xff]
    %v2399 = vld [vmem:[#allocation11 + $0x600] sm:$0xff]
    %v2400 = vld [vmem:[#allocation11 + $0x608] sm:$0xff]
    %v2401 = vld [vmem:[#allocation11 + $0x610] sm:$0xff]
    %v2402 = vld [vmem:[#allocation11 + $0x618] sm:$0xff]
    %v2403 = vld [vmem:[#allocation11 + $0x620] sm:$0xff]
    %v2404 = vld [vmem:[#allocation11 + $0x628] sm:$0xff]
    %v2405 = vld [vmem:[#allocation11 + $0x630] sm:$0xff]
    %v2406 = vld [vmem:[#allocation11 + $0x638] sm:$0xff]
    %v2407 = vld [vmem:[#allocation11 + $0x640] sm:$0xff]
    %v2408 = vld [vmem:[#allocation11 + $0x648] sm:$0xff]
    %v2409 = vld [vmem:[#allocation11 + $0x650] sm:$0xff]
    %v2410 = vld [vmem:[#allocation11 + $0x658] sm:$0xff]
    %v2411 = vld [vmem:[#allocation11 + $0x660] sm:$0xff]
    %v2412 = vld [vmem:[#allocation11 + $0x668] sm:$0xff]
    %v2413 = vld [vmem:[#allocation11 + $0x670] sm:$0xff]
    %v2414 = vld [vmem:[#allocation11 + $0x678] sm:$0xff]
    %v2415 = vld [vmem:[#allocation11 + $0x680] sm:$0xff]
    %v2416 = vld [vmem:[#allocation11 + $0x688] sm:$0xff]
    %v2417 = vld [vmem:[#allocation11 + $0x690] sm:$0xff]
    %v2418 = vld [vmem:[#allocation11 + $0x698] sm:$0xff]
    %v2419 = vld [vmem:[#allocation11 + $0x6a0] sm:$0xff]
    %v2420 = vld [vmem:[#allocation11 + $0x6a8] sm:$0xff]
    %v2421 = vld [vmem:[#allocation11 + $0x6b0] sm:$0xff]
    %v2422 = vld [vmem:[#allocation11 + $0x6b8] sm:$0xff]
    %v2423 = vld [vmem:[#allocation11 + $0x6c0] sm:$0xff]
    %v2424 = vld [vmem:[#allocation11 + $0x6c8] sm:$0xff]
    %v2425 = vld [vmem:[#allocation11 + $0x6d0] sm:$0xff]
    %v2426 = vld [vmem:[#allocation11 + $0x6d8] sm:$0xff]
    %v2427 = vld [vmem:[#allocation11 + $0x6e0] sm:$0xff]
    %v2428 = vld [vmem:[#allocation11 + $0x6e8] sm:$0xff]
    %v2429 = vld [vmem:[#allocation11 + $0x6f0] sm:$0xff]
    %v2430 = vld [vmem:[#allocation11 + $0x6f8] sm:$0xff]
    %v2431 = vld [vmem:[#allocation11 + $0x700] sm:$0xff]
    %v2432 = vld [vmem:[#allocation11 + $0x708] sm:$0xff]
    %v2433 = vld [vmem:[#allocation11 + $0x710] sm:$0xff]
    %v2434 = vld [vmem:[#allocation11 + $0x718] sm:$0xff]
    %v2435 = vld [vmem:[#allocation11 + $0x720] sm:$0xff]
    %v2436 = vld [vmem:[#allocation11 + $0x728] sm:$0xff]
    %v2437 = vld [vmem:[#allocation11 + $0x730] sm:$0xff]
    %v2438 = vld [vmem:[#allocation11 + $0x738] sm:$0xff]
    %v2439 = vld [vmem:[#allocation11 + $0x740] sm:$0xff]
    %v2440 = vld [vmem:[#allocation11 + $0x748] sm:$0xff]
    %v2441 = vld [vmem:[#allocation11 + $0x750] sm:$0xff]
    %v2442 = vld [vmem:[#allocation11 + $0x758] sm:$0xff]
    %v2443 = vld [vmem:[#allocation11 + $0x760] sm:$0xff]
    %v2444 = vld [vmem:[#allocation11 + $0x768] sm:$0xff]
    %v2445 = vld [vmem:[#allocation11 + $0x770] sm:$0xff]
    %v2446 = vld [vmem:[#allocation11 + $0x778] sm:$0xff]
    %v2447 = vld [vmem:[#allocation11 + $0x780] sm:$0xff]
    %v2448 = vld [vmem:[#allocation11 + $0x788] sm:$0xff]
    %v2449 = vld [vmem:[#allocation11 + $0x790] sm:$0xff]
    %v2450 = vld [vmem:[#allocation11 + $0x798] sm:$0xff]
    %v2451 = vld [vmem:[#allocation11 + $0x7a0] sm:$0xff]
    %v2452 = vld [vmem:[#allocation11 + $0x7a8] sm:$0xff]
    %v2453 = vld [vmem:[#allocation11 + $0x7b0] sm:$0xff]
    %v2454 = vld [vmem:[#allocation11 + $0x7b8] sm:$0xff]
    %v2455 = vld [vmem:[#allocation11 + $0x7c0] sm:$0xff]
    %v2456 = vld [vmem:[#allocation11 + $0x7c8] sm:$0xff]
    %v2457 = vld [vmem:[#allocation11 + $0x7d0] sm:$0xff]
    %v2458 = vld [vmem:[#allocation11 + $0x7d8] sm:$0xff]
    %v2459 = vld [vmem:[#allocation11 + $0x7e0] sm:$0xff]
    %v2460 = vld [vmem:[#allocation11 + $0x7e8] sm:$0xff]
    %v2461 = vld [vmem:[#allocation11 + $0x7f0] sm:$0xff]
    %v2462 = vld [vmem:[#allocation11 + $0x7f8] sm:$0xff]
    %2463 = vmatprep.subr.mxu0 %v2208
    %2464 = vmatpush1.msra.mxu0 %v2207
    %2465 = vmatprep.subr.mxu0 %v2216
    %2466 = vmatpush1.msra.mxu0 %v2215
    %2467 = vmatprep.subr.mxu0 %v2224
    %2468 = vmatpush1.msra.mxu0 %v2223
    %2469 = vmatprep.subr.mxu0 %v2232
    %2470 = vmatpush1.msra.mxu0 %v2231
    %2471 = vmatprep.subr.mxu0 %v2240
    %2472 = vmatpush1.msra.mxu0 %v2239
    %2473 = vmatprep.subr.mxu0 %v2248
    %2474 = vmatpush1.msra.mxu0 %v2247
    %2475 = vmatprep.subr.mxu0 %v2256
    %2476 = vmatpush1.msra.mxu0 %v2255
    %2477 = vmatprep.subr.mxu0 %v2264
    %2478 = vmatpush1.msra.mxu0 %v2263
    %2479 = vmatprep.subr.mxu0 %v2272
    %2480 = vmatpush1.msra.mxu0 %v2271
    %2481 = vmatprep.subr.mxu0 %v2280
    %2482 = vmatpush1.msra.mxu0 %v2279
    %2483 = vmatprep.subr.mxu0 %v2288
    %2484 = vmatpush1.msra.mxu0 %v2287
    %2485 = vmatprep.subr.mxu0 %v2296
    %2486 = vmatpush1.msra.mxu0 %v2295
    %2487 = vmatprep.subr.mxu0 %v2304
    %2488 = vmatpush1.msra.mxu0 %v2303
    %2489 = vmatprep.subr.mxu0 %v2312
    %2490 = vmatpush1.msra.mxu0 %v2311
    %2491 = vmatprep.subr.mxu0 %v2320
    %2492 = vmatpush1.msra.mxu0 %v2319
    %2493 = vmatprep.subr.mxu0 %v2328
    %2494 = vmatpush1.msra.mxu0 %v2327
    %2495 = vmatprep.subr.mxu0 %v2336
    %2496 = vmatpush1.msra.mxu0 %v2335
    %2497 = vmatprep.subr.mxu0 %v2344
    %2498 = vmatpush1.msra.mxu0 %v2343
    %2499 = vmatprep.subr.mxu0 %v2352
    %2500 = vmatpush1.msra.mxu0 %v2351
    %2501 = vmatprep.subr.mxu0 %v2360
    %2502 = vmatpush1.msra.mxu0 %v2359
    %2503 = vmatprep.subr.mxu0 %v2368
    %2504 = vmatpush1.msra.mxu0 %v2367
    %2505 = vmatprep.subr.mxu0 %v2376
    %2506 = vmatpush1.msra.mxu0 %v2375
    %2507 = vmatprep.subr.mxu0 %v2384
    %2508 = vmatpush1.msra.mxu0 %v2383
    %2509 = vmatprep.subr.mxu0 %v2392
    %2510 = vmatpush1.msra.mxu0 %v2391
    %2511 = vmatprep.subr.mxu0 %v2400
    %2512 = vmatpush1.msra.mxu0 %v2399
    %2513 = vmatprep.subr.mxu0 %v2408
    %2514 = vmatpush1.msra.mxu0 %v2407
    %2515 = vmatprep.subr.mxu0 %v2416
    %2516 = vmatpush1.msra.mxu0 %v2415
    %2517 = vmatprep.subr.mxu0 %v2424
    %2518 = vmatpush1.msra.mxu0 %v2423
    %2519 = vmatprep.subr.mxu0 %v2432
    %2520 = vmatpush1.msra.mxu0 %v2431
    %2521 = vmatprep.subr.mxu0 %v2440
    %2522 = vmatpush1.msra.mxu0 %v2439
    %2523 = vmatprep.subr.mxu0 %v2448
    %2524 = vmatpush1.msra.mxu0 %v2447
    %2525 = vmatprep.subr.mxu0 %v2456
    %2526 = vmatpush1.msra.mxu0 %v2455
    %2527 = vmatprep.mubr.f32.mxu0 %v2206
    %2528 = vmatmul.mubr.f32.gmra.mrb[0].mxu0 %v2205
    %v2529 = vpop.f32.mrb[0].mxu0
    %v2530 = vadd.f32 0.0, %v2529
    %v2531 = vpop.f32.mrb[0].mxu0
    %v2532 = vadd.f32 0.0, %v2531
    %2533 = vdwg.mxu0
    %2534 = vmatprep.subr.mxu0 %v2210
    %2535 = vmatpush1.msra.mxu0 %v2209
    %2536 = vmatprep.subr.mxu0 %v2218
    %2537 = vmatpush1.msra.mxu0 %v2217
    %2538 = vmatprep.subr.mxu0 %v2226
    %2539 = vmatpush1.msra.mxu0 %v2225
    %2540 = vmatprep.subr.mxu0 %v2234
    %2541 = vmatpush1.msra.mxu0 %v2233
    %2542 = vmatprep.subr.mxu0 %v2242
    %2543 = vmatpush1.msra.mxu0 %v2241
    %2544 = vmatprep.subr.mxu0 %v2250
    %2545 = vmatpush1.msra.mxu0 %v2249
    %2546 = vmatprep.subr.mxu0 %v2258
    %2547 = vmatpush1.msra.mxu0 %v2257
    %2548 = vmatprep.subr.mxu0 %v2266
    %2549 = vmatpush1.msra.mxu0 %v2265
    %2550 = vmatprep.subr.mxu0 %v2274
    %2551 = vmatpush1.msra.mxu0 %v2273
    %2552 = vmatprep.subr.mxu0 %v2282
    %2553 = vmatpush1.msra.mxu0 %v2281
    %2554 = vmatprep.subr.mxu0 %v2290
    %2555 = vmatpush1.msra.mxu0 %v2289
    %2556 = vmatprep.subr.mxu0 %v2298
    %2557 = vmatpush1.msra.mxu0 %v2297
    %2558 = vmatprep.subr.mxu0 %v2306
    %2559 = vmatpush1.msra.mxu0 %v2305
    %2560 = vmatprep.subr.mxu0 %v2314
    %2561 = vmatpush1.msra.mxu0 %v2313
    %2562 = vmatprep.subr.mxu0 %v2322
    %2563 = vmatpush1.msra.mxu0 %v2321
    %2564 = vmatprep.subr.mxu0 %v2330
    %2565 = vmatpush1.msra.mxu0 %v2329
    %2566 = vmatprep.subr.mxu0 %v2338
    %2567 = vmatpush1.msra.mxu0 %v2337
    %2568 = vmatprep.subr.mxu0 %v2346
    %2569 = vmatpush1.msra.mxu0 %v2345
    %2570 = vmatprep.subr.mxu0 %v2354
    %2571 = vmatpush1.msra.mxu0 %v2353
    %2572 = vmatprep.subr.mxu0 %v2362
    %2573 = vmatpush1.msra.mxu0 %v2361
    %2574 = vmatprep.subr.mxu0 %v2370
    %2575 = vmatpush1.msra.mxu0 %v2369
    %2576 = vmatprep.subr.mxu0 %v2378
    %2577 = vmatpush1.msra.mxu0 %v2377
    %2578 = vmatprep.subr.mxu0 %v2386
    %2579 = vmatpush1.msra.mxu0 %v2385
    %2580 = vmatprep.subr.mxu0 %v2394
    %2581 = vmatpush1.msra.mxu0 %v2393
    %2582 = vmatprep.subr.mxu0 %v2402
    %2583 = vmatpush1.msra.mxu0 %v2401
    %2584 = vmatprep.subr.mxu0 %v2410
    %2585 = vmatpush1.msra.mxu0 %v2409
    %2586 = vmatprep.subr.mxu0 %v2418
    %2587 = vmatpush1.msra.mxu0 %v2417
    %2588 = vmatprep.subr.mxu0 %v2426
    %2589 = vmatpush1.msra.mxu0 %v2425
    %2590 = vmatprep.subr.mxu0 %v2434
    %2591 = vmatpush1.msra.mxu0 %v2433
    %2592 = vmatprep.subr.mxu0 %v2442
    %2593 = vmatpush1.msra.mxu0 %v2441
    %2594 = vmatprep.subr.mxu0 %v2450
    %2595 = vmatpush1.msra.mxu0 %v2449
    %2596 = vmatprep.subr.mxu0 %v2458
    %2597 = vmatpush1.msra.mxu0 %v2457
    %2598 = vmatprep.mubr.f32.mxu0 %v2206
    %2599 = vmatmul.mubr.f32.gmra.mrb[0].mxu0 %v2205
    %v2600 = vpop.f32.mrb[0].mxu0
    %v2601 = vadd.f32 0.0, %v2600
    %v2602 = vpop.f32.mrb[0].mxu0
    %v2603 = vadd.f32 0.0, %v2602
    %2604 = vdwg.mxu0
    %2605 = vmatprep.subr.mxu0 %v2212
    %2606 = vmatpush1.msra.mxu0 %v2211
    %2607 = vmatprep.subr.mxu0 %v2220
    %2608 = vmatpush1.msra.mxu0 %v2219
    %2609 = vmatprep.subr.mxu0 %v2228
    %2610 = vmatpush1.msra.mxu0 %v2227
    %2611 = vmatprep.subr.mxu0 %v2236
    %2612 = vmatpush1.msra.mxu0 %v2235
    %2613 = vmatprep.subr.mxu0 %v2244
    %2614 = vmatpush1.msra.mxu0 %v2243
    %2615 = vmatprep.subr.mxu0 %v2252
    %2616 = vmatpush1.msra.mxu0 %v2251
    %2617 = vmatprep.subr.mxu0 %v2260
    %2618 = vmatpush1.msra.mxu0 %v2259
    %2619 = vmatprep.subr.mxu0 %v2268
    %2620 = vmatpush1.msra.mxu0 %v2267
    %2621 = vmatprep.subr.mxu0 %v2276
    %2622 = vmatpush1.msra.mxu0 %v2275
    %2623 = vmatprep.subr.mxu0 %v2284
    %2624 = vmatpush1.msra.mxu0 %v2283
    %2625 = vmatprep.subr.mxu0 %v2292
    %2626 = vmatpush1.msra.mxu0 %v2291
    %2627 = vmatprep.subr.mxu0 %v2300
    %2628 = vmatpush1.msra.mxu0 %v2299
    %2629 = vmatprep.subr.mxu0 %v2308
    %2630 = vmatpush1.msra.mxu0 %v2307
    %2631 = vmatprep.subr.mxu0 %v2316
    %2632 = vmatpush1.msra.mxu0 %v2315
    %2633 = vmatprep.subr.mxu0 %v2324
    %2634 = vmatpush1.msra.mxu0 %v2323
    %2635 = vmatprep.subr.mxu0 %v2332
    %2636 = vmatpush1.msra.mxu0 %v2331
    %2637 = vmatprep.subr.mxu0 %v2340
    %2638 = vmatpush1.msra.mxu0 %v2339
    %2639 = vmatprep.subr.mxu0 %v2348
    %2640 = vmatpush1.msra.mxu0 %v2347
    %2641 = vmatprep.subr.mxu0 %v2356
    %2642 = vmatpush1.msra.mxu0 %v2355
    %2643 = vmatprep.subr.mxu0 %v2364
    %2644 = vmatpush1.msra.mxu0 %v2363
    %2645 = vmatprep.subr.mxu0 %v2372
    %2646 = vmatpush1.msra.mxu0 %v2371
    %2647 = vmatprep.subr.mxu0 %v2380
    %2648 = vmatpush1.msra.mxu0 %v2379
    %2649 = vmatprep.subr.mxu0 %v2388
    %2650 = vmatpush1.msra.mxu0 %v2387
    %2651 = vmatprep.subr.mxu0 %v2396
    %2652 = vmatpush1.msra.mxu0 %v2395
    %2653 = vmatprep.subr.mxu0 %v2404
    %2654 = vmatpush1.msra.mxu0 %v2403
    %2655 = vmatprep.subr.mxu0 %v2412
    %2656 = vmatpush1.msra.mxu0 %v2411
    %2657 = vmatprep.subr.mxu0 %v2420
    %2658 = vmatpush1.msra.mxu0 %v2419
    %2659 = vmatprep.subr.mxu0 %v2428
    %2660 = vmatpush1.msra.mxu0 %v2427
    %2661 = vmatprep.subr.mxu0 %v2436
    %2662 = vmatpush1.msra.mxu0 %v2435
    %2663 = vmatprep.subr.mxu0 %v2444
    %2664 = vmatpush1.msra.mxu0 %v2443
    %2665 = vmatprep.subr.mxu0 %v2452
    %2666 = vmatpush1.msra.mxu0 %v2451
    %2667 = vmatprep.subr.mxu0 %v2460
    %2668 = vmatpush1.msra.mxu0 %v2459
    %2669 = vmatprep.mubr.f32.mxu0 %v2206
    %2670 = vmatmul.mubr.f32.gmra.mrb[0].mxu0 %v2205
    %v2671 = vpop.f32.mrb[0].mxu0
    %v2672 = vadd.f32 0.0, %v2671
    %v2673 = vpop.f32.mrb[0].mxu0
    %v2674 = vadd.f32 0.0, %v2673
    %2675 = vdwg.mxu0
    %2676 = vmatprep.subr.mxu0 %v2214
    %2677 = vmatpush1.msra.mxu0 %v2213
    %2678 = vmatprep.subr.mxu0 %v2222
    %2679 = vmatpush1.msra.mxu0 %v2221
    %2680 = vmatprep.subr.mxu0 %v2230
    %2681 = vmatpush1.msra.mxu0 %v2229
    %2682 = vmatprep.subr.mxu0 %v2238
    %2683 = vmatpush1.msra.mxu0 %v2237
    %2684 = vmatprep.subr.mxu0 %v2246
    %2685 = vmatpush1.msra.mxu0 %v2245
    %2686 = vmatprep.subr.mxu0 %v2254
    %2687 = vmatpush1.msra.mxu0 %v2253
    %2688 = vmatprep.subr.mxu0 %v2262
    %2689 = vmatpush1.msra.mxu0 %v2261
    %2690 = vmatprep.subr.mxu0 %v2270
    %2691 = vmatpush1.msra.mxu0 %v2269
    %2692 = vmatprep.subr.mxu0 %v2278
    %2693 = vmatpush1.msra.mxu0 %v2277
    %2694 = vmatprep.subr.mxu0 %v2286
    %2695 = vmatpush1.msra.mxu0 %v2285
    %2696 = vmatprep.subr.mxu0 %v2294
    %2697 = vmatpush1.msra.mxu0 %v2293
    %2698 = vmatprep.subr.mxu0 %v2302
    %2699 = vmatpush1.msra.mxu0 %v2301
    %2700 = vmatprep.subr.mxu0 %v2310
    %2701 = vmatpush1.msra.mxu0 %v2309
    %2702 = vmatprep.subr.mxu0 %v2318
    %2703 = vmatpush1.msra.mxu0 %v2317
    %2704 = vmatprep.subr.mxu0 %v2326
    %2705 = vmatpush1.msra.mxu0 %v2325
    %2706 = vmatprep.subr.mxu0 %v2334
    %2707 = vmatpush1.msra.mxu0 %v2333
    %2708 = vmatprep.subr.mxu0 %v2342
    %2709 = vmatpush1.msra.mxu0 %v2341
    %2710 = vmatprep.subr.mxu0 %v2350
    %2711 = vmatpush1.msra.mxu0 %v2349
    %2712 = vmatprep.subr.mxu0 %v2358
    %2713 = vmatpush1.msra.mxu0 %v2357
    %2714 = vmatprep.subr.mxu0 %v2366
    %2715 = vmatpush1.msra.mxu0 %v2365
    %2716 = vmatprep.subr.mxu0 %v2374
    %2717 = vmatpush1.msra.mxu0 %v2373
    %2718 = vmatprep.subr.mxu0 %v2382
    %2719 = vmatpush1.msra.mxu0 %v2381
    %2720 = vmatprep.subr.mxu0 %v2390
    %2721 = vmatpush1.msra.mxu0 %v2389
    %2722 = vmatprep.subr.mxu0 %v2398
    %2723 = vmatpush1.msra.mxu0 %v2397
    %2724 = vmatprep.subr.mxu0 %v2406
    %2725 = vmatpush1.msra.mxu0 %v2405
    %2726 = vmatprep.subr.mxu0 %v2414
    %2727 = vmatpush1.msra.mxu0 %v2413
    %2728 = vmatprep.subr.mxu0 %v2422
    %2729 = vmatpush1.msra.mxu0 %v2421
    %2730 = vmatprep.subr.mxu0 %v2430
    %2731 = vmatpush1.msra.mxu0 %v2429
    %2732 = vmatprep.subr.mxu0 %v2438
    %2733 = vmatpush1.msra.mxu0 %v2437
    %2734 = vmatprep.subr.mxu0 %v2446
    %2735 = vmatpush1.msra.mxu0 %v2445
    %2736 = vmatprep.subr.mxu0 %v2454
    %2737 = vmatpush1.msra.mxu0 %v2453
    %2738 = vmatprep.subr.mxu0 %v2462
    %2739 = vmatpush1.msra.mxu0 %v2461
    %2740 = vmatprep.mubr.f32.mxu0 %v2206
    %2741 = vmatmul.mubr.f32.gmra.mrb[0].mxu0 %v2205
    %v2742 = vpop.f32.mrb[0].mxu0
    %v2743 = vadd.f32 0.0, %v2742
    %v2744 = vpop.f32.mrb[0].mxu0
    %v2745 = vadd.f32 0.0, %v2744
    %2746 = vdwg.mxu0
    %s2747 = scalar_lea.vmem [#allocation2], 128
    %v2748 = vld [vmem:[%s2747] sm:$0xff]
    %v2749 = vld [vmem:[%s2747 + $0x8] sm:$0xff]
    %v2750 = vld [vmem:[%s2747 + $0x10] sm:$0xff]
    %v2751 = vld [vmem:[%s2747 + $0x18] sm:$0xff]
    %v2752 = vadd.f32 %v2748, %v2530
    %v2753 = vadd.f32 %v2749, %v2532
    %v2754 = vadd.f32 %v2750, %v2601
    %v2755 = vadd.f32 %v2751, %v2603
    %s2756 = scalar_lea.vmem [#allocation2], 320
    %v2757 = vld [vmem:[%s2756 + $0x20] sm:$0xff]
    %v2758 = vld [vmem:[%s2756 + $0x28] sm:$0xff]
    %v2759 = vld [vmem:[%s2756 + $0x30] sm:$0xff]
    %v2760 = vld [vmem:[%s2756 + $0x38] sm:$0xff]
    %v2761 = vadd.f32 %v2757, %v2672
    %v2762 = vadd.f32 %v2758, %v2674
    %v2763 = vadd.f32 %v2759, %v2743
    %v2764 = vadd.f32 %v2760, %v2745
    %v2765 = vxor.u32 %v2752, 2147483648
    %v2766 = vmul.f32 %v2765, 1.442695
    %v2767 = vpow.pop %v2766
    %v2768 = vadd.f32 %v2767, 1.0
    %v2769 = vrcp.pop %v2768
    %v2770 = vmul.f32 1.0, %v2769
    %v2771 = vxor.u32 %v2753, 2147483648
    %v2772 = vmul.f32 %v2771, 1.442695
    %v2773 = vpow.pop %v2772
    %v2774 = vadd.f32 %v2773, 1.0
    %v2775 = vrcp.pop %v2774
    %v2776 = vmul.f32 1.0, %v2775
    %v2777 = vtanh.pop %v2754
    %v2778 = vxor.u32 %v2755, 2147483648
    %v2779 = vmul.f32 %v2778, 1.442695
    %v2780 = vpow.pop %v2779
    %v2781 = vadd.f32 %v2780, 1.0
    %v2782 = vrcp.pop %v2781
    %v2783 = vmul.f32 1.0, %v2782
    %v2784 = vmul.f32 %v2776, %v2172
    %v2785 = vmul.f32 %v2770, %v2777
    %v2786 = vadd.f32 %v2784, %v2785
    %v2787 = vtanh.pop %v2786
    %v2788 = vmul.f32 %v2783, %v2787
    %v2789 = vxor.u32 %v2761, 2147483648
    %v2790 = vmul.f32 %v2789, 1.442695
    %v2791 = vpow.pop %v2790
    %v2792 = vadd.f32 %v2791, 1.0
    %v2793 = vrcp.pop %v2792
    %v2794 = vmul.f32 1.0, %v2793
    %v2795 = vxor.u32 %v2762, 2147483648
    %v2796 = vmul.f32 %v2795, 1.442695
    %v2797 = vpow.pop %v2796
    %v2798 = vadd.f32 %v2797, 1.0
    %v2799 = vrcp.pop %v2798
    %v2800 = vmul.f32 1.0, %v2799
    %v2801 = vtanh.pop %v2763
    %v2802 = vxor.u32 %v2764, 2147483648
    %v2803 = vmul.f32 %v2802, 1.442695
    %v2804 = vpow.pop %v2803
    %v2805 = vadd.f32 %v2804, 1.0
    %v2806 = vrcp.pop %v2805
    %v2807 = vmul.f32 1.0, %v2806
    %v2808 = vmul.f32 %v2800, %v2196
    %v2809 = vmul.f32 %v2794, %v2801
    %v2810 = vadd.f32 %v2808, %v2809
    %v2811 = vtanh.pop %v2810
    %v2812 = vmul.f32 %v2807, %v2811
    %2813 = vst [vmem:[#allocation4] sm:$0xff] %v2788
    %2814 = vst [vmem:[#allocation4 + $0x8] sm:$0xff] %v2812
    %s2815 = scalar_lea.vmem [#allocation3], 32
    %2816 = vst [vmem:[%s2815] sm:$0xff] %v2788
    %s2817 = scalar_lea.vmem [#allocation3], 80
    %2818 = vst [vmem:[%s2817 + $0x8] sm:$0xff] %v2812
    %v2819 = vld [vmem:[#allocation4] sm:$0xff]
    %v2820 = vld [vmem:[#allocation4 + $0x8] sm:$0xff]
    %v2821 = vld [vmem:[#allocation11] sm:$0xff]
    %v2822 = vld [vmem:[#allocation11 + $0x8] sm:$0xff]
    %v2823 = vld [vmem:[#allocation11 + $0x10] sm:$0xff]
    %v2824 = vld [vmem:[#allocation11 + $0x18] sm:$0xff]
    %v2825 = vld [vmem:[#allocation11 + $0x20] sm:$0xff]
    %v2826 = vld [vmem:[#allocation11 + $0x28] sm:$0xff]
    %v2827 = vld [vmem:[#allocation11 + $0x30] sm:$0xff]
    %v2828 = vld [vmem:[#allocation11 + $0x38] sm:$0xff]
    %v2829 = vld [vmem:[#allocation11 + $0x40] sm:$0xff]
    %v2830 = vld [vmem:[#allocation11 + $0x48] sm:$0xff]
    %v2831 = vld [vmem:[#allocation11 + $0x50] sm:$0xff]
    %v2832 = vld [vmem:[#allocation11 + $0x58] sm:$0xff]
    %v2833 = vld [vmem:[#allocation11 + $0x60] sm:$0xff]
    %v2834 = vld [vmem:[#allocation11 + $0x68] sm:$0xff]
    %v2835 = vld [vmem:[#allocation11 + $0x70] sm:$0xff]
    %v2836 = vld [vmem:[#allocation11 + $0x78] sm:$0xff]
    %v2837 = vld [vmem:[#allocation11 + $0x80] sm:$0xff]
    %v2838 = vld [vmem:[#allocation11 + $0x88] sm:$0xff]
    %v2839 = vld [vmem:[#allocation11 + $0x90] sm:$0xff]
    %v2840 = vld [vmem:[#allocation11 + $0x98] sm:$0xff]
    %v2841 = vld [vmem:[#allocation11 + $0xa0] sm:$0xff]
    %v2842 = vld [vmem:[#allocation11 + $0xa8] sm:$0xff]
    %v2843 = vld [vmem:[#allocation11 + $0xb0] sm:$0xff]
    %v2844 = vld [vmem:[#allocation11 + $0xb8] sm:$0xff]
    %v2845 = vld [vmem:[#allocation11 + $0xc0] sm:$0xff]
    %v2846 = vld [vmem:[#allocation11 + $0xc8] sm:$0xff]
    %v2847 = vld [vmem:[#allocation11 + $0xd0] sm:$0xff]
    %v2848 = vld [vmem:[#allocation11 + $0xd8] sm:$0xff]
    %v2849 = vld [vmem:[#allocation11 + $0xe0] sm:$0xff]
    %v2850 = vld [vmem:[#allocation11 + $0xe8] sm:$0xff]
    %v2851 = vld [vmem:[#allocation11 + $0xf0] sm:$0xff]
    %v2852 = vld [vmem:[#allocation11 + $0xf8] sm:$0xff]
    %v2853 = vld [vmem:[#allocation11 + $0x100] sm:$0xff]
    %v2854 = vld [vmem:[#allocation11 + $0x108] sm:$0xff]
    %v2855 = vld [vmem:[#allocation11 + $0x110] sm:$0xff]
    %v2856 = vld [vmem:[#allocation11 + $0x118] sm:$0xff]
    %v2857 = vld [vmem:[#allocation11 + $0x120] sm:$0xff]
    %v2858 = vld [vmem:[#allocation11 + $0x128] sm:$0xff]
    %v2859 = vld [vmem:[#allocation11 + $0x130] sm:$0xff]
    %v2860 = vld [vmem:[#allocation11 + $0x138] sm:$0xff]
    %v2861 = vld [vmem:[#allocation11 + $0x140] sm:$0xff]
    %v2862 = vld [vmem:[#allocation11 + $0x148] sm:$0xff]
    %v2863 = vld [vmem:[#allocation11 + $0x150] sm:$0xff]
    %v2864 = vld [vmem:[#allocation11 + $0x158] sm:$0xff]
    %v2865 = vld [vmem:[#allocation11 + $0x160] sm:$0xff]
    %v2866 = vld [vmem:[#allocation11 + $0x168] sm:$0xff]
    %v2867 = vld [vmem:[#allocation11 + $0x170] sm:$0xff]
    %v2868 = vld [vmem:[#allocation11 + $0x178] sm:$0xff]
    %v2869 = vld [vmem:[#allocation11 + $0x180] sm:$0xff]
    %v2870 = vld [vmem:[#allocation11 + $0x188] sm:$0xff]
    %v2871 = vld [vmem:[#allocation11 + $0x190] sm:$0xff]
    %v2872 = vld [vmem:[#allocation11 + $0x198] sm:$0xff]
    %v2873 = vld [vmem:[#allocation11 + $0x1a0] sm:$0xff]
    %v2874 = vld [vmem:[#allocation11 + $0x1a8] sm:$0xff]
    %v2875 = vld [vmem:[#allocation11 + $0x1b0] sm:$0xff]
    %v2876 = vld [vmem:[#allocation11 + $0x1b8] sm:$0xff]
    %v2877 = vld [vmem:[#allocation11 + $0x1c0] sm:$0xff]
    %v2878 = vld [vmem:[#allocation11 + $0x1c8] sm:$0xff]
    %v2879 = vld [vmem:[#allocation11 + $0x1d0] sm:$0xff]
    %v2880 = vld [vmem:[#allocation11 + $0x1d8] sm:$0xff]
    %v2881 = vld [vmem:[#allocation11 + $0x1e0] sm:$0xff]
    %v2882 = vld [vmem:[#allocation11 + $0x1e8] sm:$0xff]
    %v2883 = vld [vmem:[#allocation11 + $0x1f0] sm:$0xff]
    %v2884 = vld [vmem:[#allocation11 + $0x1f8] sm:$0xff]
    %v2885 = vld [vmem:[#allocation11 + $0x200] sm:$0xff]
    %v2886 = vld [vmem:[#allocation11 + $0x208] sm:$0xff]
    %v2887 = vld [vmem:[#allocation11 + $0x210] sm:$0xff]
    %v2888 = vld [vmem:[#allocation11 + $0x218] sm:$0xff]
    %v2889 = vld [vmem:[#allocation11 + $0x220] sm:$0xff]
    %v2890 = vld [vmem:[#allocation11 + $0x228] sm:$0xff]
    %v2891 = vld [vmem:[#allocation11 + $0x230] sm:$0xff]
    %v2892 = vld [vmem:[#allocation11 + $0x238] sm:$0xff]
    %v2893 = vld [vmem:[#allocation11 + $0x240] sm:$0xff]
    %v2894 = vld [vmem:[#allocation11 + $0x248] sm:$0xff]
    %v2895 = vld [vmem:[#allocation11 + $0x250] sm:$0xff]
    %v2896 = vld [vmem:[#allocation11 + $0x258] sm:$0xff]
    %v2897 = vld [vmem:[#allocation11 + $0x260] sm:$0xff]
    %v2898 = vld [vmem:[#allocation11 + $0x268] sm:$0xff]
    %v2899 = vld [vmem:[#allocation11 + $0x270] sm:$0xff]
    %v2900 = vld [vmem:[#allocation11 + $0x278] sm:$0xff]
    %v2901 = vld [vmem:[#allocation11 + $0x280] sm:$0xff]
    %v2902 = vld [vmem:[#allocation11 + $0x288] sm:$0xff]
    %v2903 = vld [vmem:[#allocation11 + $0x290] sm:$0xff]
    %v2904 = vld [vmem:[#allocation11 + $0x298] sm:$0xff]
    %v2905 = vld [vmem:[#allocation11 + $0x2a0] sm:$0xff]
    %v2906 = vld [vmem:[#allocation11 + $0x2a8] sm:$0xff]
    %v2907 = vld [vmem:[#allocation11 + $0x2b0] sm:$0xff]
    %v2908 = vld [vmem:[#allocation11 + $0x2b8] sm:$0xff]
    %v2909 = vld [vmem:[#allocation11 + $0x2c0] sm:$0xff]
    %v2910 = vld [vmem:[#allocation11 + $0x2c8] sm:$0xff]
    %v2911 = vld [vmem:[#allocation11 + $0x2d0] sm:$0xff]
    %v2912 = vld [vmem:[#allocation11 + $0x2d8] sm:$0xff]
    %v2913 = vld [vmem:[#allocation11 + $0x2e0] sm:$0xff]
    %v2914 = vld [vmem:[#allocation11 + $0x2e8] sm:$0xff]
    %v2915 = vld [vmem:[#allocation11 + $0x2f0] sm:$0xff]
    %v2916 = vld [vmem:[#allocation11 + $0x2f8] sm:$0xff]
    %v2917 = vld [vmem:[#allocation11 + $0x300] sm:$0xff]
    %v2918 = vld [vmem:[#allocation11 + $0x308] sm:$0xff]
    %v2919 = vld [vmem:[#allocation11 + $0x310] sm:$0xff]
    %v2920 = vld [vmem:[#allocation11 + $0x318] sm:$0xff]
    %v2921 = vld [vmem:[#allocation11 + $0x320] sm:$0xff]
    %v2922 = vld [vmem:[#allocation11 + $0x328] sm:$0xff]
    %v2923 = vld [vmem:[#allocation11 + $0x330] sm:$0xff]
    %v2924 = vld [vmem:[#allocation11 + $0x338] sm:$0xff]
    %v2925 = vld [vmem:[#allocation11 + $0x340] sm:$0xff]
    %v2926 = vld [vmem:[#allocation11 + $0x348] sm:$0xff]
    %v2927 = vld [vmem:[#allocation11 + $0x350] sm:$0xff]
    %v2928 = vld [vmem:[#allocation11 + $0x358] sm:$0xff]
    %v2929 = vld [vmem:[#allocation11 + $0x360] sm:$0xff]
    %v2930 = vld [vmem:[#allocation11 + $0x368] sm:$0xff]
    %v2931 = vld [vmem:[#allocation11 + $0x370] sm:$0xff]
    %v2932 = vld [vmem:[#allocation11 + $0x378] sm:$0xff]
    %v2933 = vld [vmem:[#allocation11 + $0x380] sm:$0xff]
    %v2934 = vld [vmem:[#allocation11 + $0x388] sm:$0xff]
    %v2935 = vld [vmem:[#allocation11 + $0x390] sm:$0xff]
    %v2936 = vld [vmem:[#allocation11 + $0x398] sm:$0xff]
    %v2937 = vld [vmem:[#allocation11 + $0x3a0] sm:$0xff]
    %v2938 = vld [vmem:[#allocation11 + $0x3a8] sm:$0xff]
    %v2939 = vld [vmem:[#allocation11 + $0x3b0] sm:$0xff]
    %v2940 = vld [vmem:[#allocation11 + $0x3b8] sm:$0xff]
    %v2941 = vld [vmem:[#allocation11 + $0x3c0] sm:$0xff]
    %v2942 = vld [vmem:[#allocation11 + $0x3c8] sm:$0xff]
    %v2943 = vld [vmem:[#allocation11 + $0x3d0] sm:$0xff]
    %v2944 = vld [vmem:[#allocation11 + $0x3d8] sm:$0xff]
    %v2945 = vld [vmem:[#allocation11 + $0x3e0] sm:$0xff]
    %v2946 = vld [vmem:[#allocation11 + $0x3e8] sm:$0xff]
    %v2947 = vld [vmem:[#allocation11 + $0x3f0] sm:$0xff]
    %v2948 = vld [vmem:[#allocation11 + $0x3f8] sm:$0xff]
    %v2949 = vld [vmem:[#allocation11 + $0x400] sm:$0xff]
    %v2950 = vld [vmem:[#allocation11 + $0x408] sm:$0xff]
    %v2951 = vld [vmem:[#allocation11 + $0x410] sm:$0xff]
    %v2952 = vld [vmem:[#allocation11 + $0x418] sm:$0xff]
    %v2953 = vld [vmem:[#allocation11 + $0x420] sm:$0xff]
    %v2954 = vld [vmem:[#allocation11 + $0x428] sm:$0xff]
    %v2955 = vld [vmem:[#allocation11 + $0x430] sm:$0xff]
    %v2956 = vld [vmem:[#allocation11 + $0x438] sm:$0xff]
    %v2957 = vld [vmem:[#allocation11 + $0x440] sm:$0xff]
    %v2958 = vld [vmem:[#allocation11 + $0x448] sm:$0xff]
    %v2959 = vld [vmem:[#allocation11 + $0x450] sm:$0xff]
    %v2960 = vld [vmem:[#allocation11 + $0x458] sm:$0xff]
    %v2961 = vld [vmem:[#allocation11 + $0x460] sm:$0xff]
    %v2962 = vld [vmem:[#allocation11 + $0x468] sm:$0xff]
    %v2963 = vld [vmem:[#allocation11 + $0x470] sm:$0xff]
    %v2964 = vld [vmem:[#allocation11 + $0x478] sm:$0xff]
    %v2965 = vld [vmem:[#allocation11 + $0x480] sm:$0xff]
    %v2966 = vld [vmem:[#allocation11 + $0x488] sm:$0xff]
    %v2967 = vld [vmem:[#allocation11 + $0x490] sm:$0xff]
    %v2968 = vld [vmem:[#allocation11 + $0x498] sm:$0xff]
    %v2969 = vld [vmem:[#allocation11 + $0x4a0] sm:$0xff]
    %v2970 = vld [vmem:[#allocation11 + $0x4a8] sm:$0xff]
    %v2971 = vld [vmem:[#allocation11 + $0x4b0] sm:$0xff]
    %v2972 = vld [vmem:[#allocation11 + $0x4b8] sm:$0xff]
    %v2973 = vld [vmem:[#allocation11 + $0x4c0] sm:$0xff]
    %v2974 = vld [vmem:[#allocation11 + $0x4c8] sm:$0xff]
    %v2975 = vld [vmem:[#allocation11 + $0x4d0] sm:$0xff]
    %v2976 = vld [vmem:[#allocation11 + $0x4d8] sm:$0xff]
    %v2977 = vld [vmem:[#allocation11 + $0x4e0] sm:$0xff]
    %v2978 = vld [vmem:[#allocation11 + $0x4e8] sm:$0xff]
    %v2979 = vld [vmem:[#allocation11 + $0x4f0] sm:$0xff]
    %v2980 = vld [vmem:[#allocation11 + $0x4f8] sm:$0xff]
    %v2981 = vld [vmem:[#allocation11 + $0x500] sm:$0xff]
    %v2982 = vld [vmem:[#allocation11 + $0x508] sm:$0xff]
    %v2983 = vld [vmem:[#allocation11 + $0x510] sm:$0xff]
    %v2984 = vld [vmem:[#allocation11 + $0x518] sm:$0xff]
    %v2985 = vld [vmem:[#allocation11 + $0x520] sm:$0xff]
    %v2986 = vld [vmem:[#allocation11 + $0x528] sm:$0xff]
    %v2987 = vld [vmem:[#allocation11 + $0x530] sm:$0xff]
    %v2988 = vld [vmem:[#allocation11 + $0x538] sm:$0xff]
    %v2989 = vld [vmem:[#allocation11 + $0x540] sm:$0xff]
    %v2990 = vld [vmem:[#allocation11 + $0x548] sm:$0xff]
    %v2991 = vld [vmem:[#allocation11 + $0x550] sm:$0xff]
    %v2992 = vld [vmem:[#allocation11 + $0x558] sm:$0xff]
    %v2993 = vld [vmem:[#allocation11 + $0x560] sm:$0xff]
    %v2994 = vld [vmem:[#allocation11 + $0x568] sm:$0xff]
    %v2995 = vld [vmem:[#allocation11 + $0x570] sm:$0xff]
    %v2996 = vld [vmem:[#allocation11 + $0x578] sm:$0xff]
    %v2997 = vld [vmem:[#allocation11 + $0x580] sm:$0xff]
    %v2998 = vld [vmem:[#allocation11 + $0x588] sm:$0xff]
    %v2999 = vld [vmem:[#allocation11 + $0x590] sm:$0xff]
    %v3000 = vld [vmem:[#allocation11 + $0x598] sm:$0xff]
    %v3001 = vld [vmem:[#allocation11 + $0x5a0] sm:$0xff]
    %v3002 = vld [vmem:[#allocation11 + $0x5a8] sm:$0xff]
    %v3003 = vld [vmem:[#allocation11 + $0x5b0] sm:$0xff]
    %v3004 = vld [vmem:[#allocation11 + $0x5b8] sm:$0xff]
    %v3005 = vld [vmem:[#allocation11 + $0x5c0] sm:$0xff]
    %v3006 = vld [vmem:[#allocation11 + $0x5c8] sm:$0xff]
    %v3007 = vld [vmem:[#allocation11 + $0x5d0] sm:$0xff]
    %v3008 = vld [vmem:[#allocation11 + $0x5d8] sm:$0xff]
    %v3009 = vld [vmem:[#allocation11 + $0x5e0] sm:$0xff]
    %v3010 = vld [vmem:[#allocation11 + $0x5e8] sm:$0xff]
    %v3011 = vld [vmem:[#allocation11 + $0x5f0] sm:$0xff]
    %v3012 = vld [vmem:[#allocation11 + $0x5f8] sm:$0xff]
    %v3013 = vld [vmem:[#allocation11 + $0x600] sm:$0xff]
    %v3014 = vld [vmem:[#allocation11 + $0x608] sm:$0xff]
    %v3015 = vld [vmem:[#allocation11 + $0x610] sm:$0xff]
    %v3016 = vld [vmem:[#allocation11 + $0x618] sm:$0xff]
    %v3017 = vld [vmem:[#allocation11 + $0x620] sm:$0xff]
    %v3018 = vld [vmem:[#allocation11 + $0x628] sm:$0xff]
    %v3019 = vld [vmem:[#allocation11 + $0x630] sm:$0xff]
    %v3020 = vld [vmem:[#allocation11 + $0x638] sm:$0xff]
    %v3021 = vld [vmem:[#allocation11 + $0x640] sm:$0xff]
    %v3022 = vld [vmem:[#allocation11 + $0x648] sm:$0xff]
    %v3023 = vld [vmem:[#allocation11 + $0x650] sm:$0xff]
    %v3024 = vld [vmem:[#allocation11 + $0x658] sm:$0xff]
    %v3025 = vld [vmem:[#allocation11 + $0x660] sm:$0xff]
    %v3026 = vld [vmem:[#allocation11 + $0x668] sm:$0xff]
    %v3027 = vld [vmem:[#allocation11 + $0x670] sm:$0xff]
    %v3028 = vld [vmem:[#allocation11 + $0x678] sm:$0xff]
    %v3029 = vld [vmem:[#allocation11 + $0x680] sm:$0xff]
    %v3030 = vld [vmem:[#allocation11 + $0x688] sm:$0xff]
    %v3031 = vld [vmem:[#allocation11 + $0x690] sm:$0xff]
    %v3032 = vld [vmem:[#allocation11 + $0x698] sm:$0xff]
    %v3033 = vld [vmem:[#allocation11 + $0x6a0] sm:$0xff]
    %v3034 = vld [vmem:[#allocation11 + $0x6a8] sm:$0xff]
    %v3035 = vld [vmem:[#allocation11 + $0x6b0] sm:$0xff]
    %v3036 = vld [vmem:[#allocation11 + $0x6b8] sm:$0xff]
    %v3037 = vld [vmem:[#allocation11 + $0x6c0] sm:$0xff]
    %v3038 = vld [vmem:[#allocation11 + $0x6c8] sm:$0xff]
    %v3039 = vld [vmem:[#allocation11 + $0x6d0] sm:$0xff]
    %v3040 = vld [vmem:[#allocation11 + $0x6d8] sm:$0xff]
    %v3041 = vld [vmem:[#allocation11 + $0x6e0] sm:$0xff]
    %v3042 = vld [vmem:[#allocation11 + $0x6e8] sm:$0xff]
    %v3043 = vld [vmem:[#allocation11 + $0x6f0] sm:$0xff]
    %v3044 = vld [vmem:[#allocation11 + $0x6f8] sm:$0xff]
    %v3045 = vld [vmem:[#allocation11 + $0x700] sm:$0xff]
    %v3046 = vld [vmem:[#allocation11 + $0x708] sm:$0xff]
    %v3047 = vld [vmem:[#allocation11 + $0x710] sm:$0xff]
    %v3048 = vld [vmem:[#allocation11 + $0x718] sm:$0xff]
    %v3049 = vld [vmem:[#allocation11 + $0x720] sm:$0xff]
    %v3050 = vld [vmem:[#allocation11 + $0x728] sm:$0xff]
    %v3051 = vld [vmem:[#allocation11 + $0x730] sm:$0xff]
    %v3052 = vld [vmem:[#allocation11 + $0x738] sm:$0xff]
    %v3053 = vld [vmem:[#allocation11 + $0x740] sm:$0xff]
    %v3054 = vld [vmem:[#allocation11 + $0x748] sm:$0xff]
    %v3055 = vld [vmem:[#allocation11 + $0x750] sm:$0xff]
    %v3056 = vld [vmem:[#allocation11 + $0x758] sm:$0xff]
    %v3057 = vld [vmem:[#allocation11 + $0x760] sm:$0xff]
    %v3058 = vld [vmem:[#allocation11 + $0x768] sm:$0xff]
    %v3059 = vld [vmem:[#allocation11 + $0x770] sm:$0xff]
    %v3060 = vld [vmem:[#allocation11 + $0x778] sm:$0xff]
    %v3061 = vld [vmem:[#allocation11 + $0x780] sm:$0xff]
    %v3062 = vld [vmem:[#allocation11 + $0x788] sm:$0xff]
    %v3063 = vld [vmem:[#allocation11 + $0x790] sm:$0xff]
    %v3064 = vld [vmem:[#allocation11 + $0x798] sm:$0xff]
    %v3065 = vld [vmem:[#allocation11 + $0x7a0] sm:$0xff]
    %v3066 = vld [vmem:[#allocation11 + $0x7a8] sm:$0xff]
    %v3067 = vld [vmem:[#allocation11 + $0x7b0] sm:$0xff]
    %v3068 = vld [vmem:[#allocation11 + $0x7b8] sm:$0xff]
    %v3069 = vld [vmem:[#allocation11 + $0x7c0] sm:$0xff]
    %v3070 = vld [vmem:[#allocation11 + $0x7c8] sm:$0xff]
    %v3071 = vld [vmem:[#allocation11 + $0x7d0] sm:$0xff]
    %v3072 = vld [vmem:[#allocation11 + $0x7d8] sm:$0xff]
    %v3073 = vld [vmem:[#allocation11 + $0x7e0] sm:$0xff]
    %v3074 = vld [vmem:[#allocation11 + $0x7e8] sm:$0xff]
    %v3075 = vld [vmem:[#allocation11 + $0x7f0] sm:$0xff]
    %v3076 = vld [vmem:[#allocation11 + $0x7f8] sm:$0xff]
    %3077 = vmatprep.subr.mxu0 %v2822
    %3078 = vmatpush1.msra.mxu0 %v2821
    %3079 = vmatprep.subr.mxu0 %v2830
    %3080 = vmatpush1.msra.mxu0 %v2829
    %3081 = vmatprep.subr.mxu0 %v2838
    %3082 = vmatpush1.msra.mxu0 %v2837
    %3083 = vmatprep.subr.mxu0 %v2846
    %3084 = vmatpush1.msra.mxu0 %v2845
    %3085 = vmatprep.subr.mxu0 %v2854
    %3086 = vmatpush1.msra.mxu0 %v2853
    %3087 = vmatprep.subr.mxu0 %v2862
    %3088 = vmatpush1.msra.mxu0 %v2861
    %3089 = vmatprep.subr.mxu0 %v2870
    %3090 = vmatpush1.msra.mxu0 %v2869
    %3091 = vmatprep.subr.mxu0 %v2878
    %3092 = vmatpush1.msra.mxu0 %v2877
    %3093 = vmatprep.subr.mxu0 %v2886
    %3094 = vmatpush1.msra.mxu0 %v2885
    %3095 = vmatprep.subr.mxu0 %v2894
    %3096 = vmatpush1.msra.mxu0 %v2893
    %3097 = vmatprep.subr.mxu0 %v2902
    %3098 = vmatpush1.msra.mxu0 %v2901
    %3099 = vmatprep.subr.mxu0 %v2910
    %3100 = vmatpush1.msra.mxu0 %v2909
    %3101 = vmatprep.subr.mxu0 %v2918
    %3102 = vmatpush1.msra.mxu0 %v2917
    %3103 = vmatprep.subr.mxu0 %v2926
    %3104 = vmatpush1.msra.mxu0 %v2925
    %3105 = vmatprep.subr.mxu0 %v2934
    %3106 = vmatpush1.msra.mxu0 %v2933
    %3107 = vmatprep.subr.mxu0 %v2942
    %3108 = vmatpush1.msra.mxu0 %v2941
    %3109 = vmatprep.subr.mxu0 %v2950
    %3110 = vmatpush1.msra.mxu0 %v2949
    %3111 = vmatprep.subr.mxu0 %v2958
    %3112 = vmatpush1.msra.mxu0 %v2957
    %3113 = vmatprep.subr.mxu0 %v2966
    %3114 = vmatpush1.msra.mxu0 %v2965
    %3115 = vmatprep.subr.mxu0 %v2974
    %3116 = vmatpush1.msra.mxu0 %v2973
    %3117 = vmatprep.subr.mxu0 %v2982
    %3118 = vmatpush1.msra.mxu0 %v2981
    %3119 = vmatprep.subr.mxu0 %v2990
    %3120 = vmatpush1.msra.mxu0 %v2989
    %3121 = vmatprep.subr.mxu0 %v2998
    %3122 = vmatpush1.msra.mxu0 %v2997
    %3123 = vmatprep.subr.mxu0 %v3006
    %3124 = vmatpush1.msra.mxu0 %v3005
    %3125 = vmatprep.subr.mxu0 %v3014
    %3126 = vmatpush1.msra.mxu0 %v3013
    %3127 = vmatprep.subr.mxu0 %v3022
    %3128 = vmatpush1.msra.mxu0 %v3021
    %3129 = vmatprep.subr.mxu0 %v3030
    %3130 = vmatpush1.msra.mxu0 %v3029
    %3131 = vmatprep.subr.mxu0 %v3038
    %3132 = vmatpush1.msra.mxu0 %v3037
    %3133 = vmatprep.subr.mxu0 %v3046
    %3134 = vmatpush1.msra.mxu0 %v3045
    %3135 = vmatprep.subr.mxu0 %v3054
    %3136 = vmatpush1.msra.mxu0 %v3053
    %3137 = vmatprep.subr.mxu0 %v3062
    %3138 = vmatpush1.msra.mxu0 %v3061
    %3139 = vmatprep.subr.mxu0 %v3070
    %3140 = vmatpush1.msra.mxu0 %v3069
    %3141 = vmatprep.mubr.f32.mxu0 %v2820
    %3142 = vmatmul.mubr.f32.gmra.mrb[0].mxu0 %v2819
    %v3143 = vpop.f32.mrb[0].mxu0
    %v3144 = vadd.f32 0.0, %v3143
    %v3145 = vpop.f32.mrb[0].mxu0
    %v3146 = vadd.f32 0.0, %v3145
    %3147 = vdwg.mxu0
    %3148 = vmatprep.subr.mxu0 %v2824
    %3149 = vmatpush1.msra.mxu0 %v2823
    %3150 = vmatprep.subr.mxu0 %v2832
    %3151 = vmatpush1.msra.mxu0 %v2831
    %3152 = vmatprep.subr.mxu0 %v2840
    %3153 = vmatpush1.msra.mxu0 %v2839
    %3154 = vmatprep.subr.mxu0 %v2848
    %3155 = vmatpush1.msra.mxu0 %v2847
    %3156 = vmatprep.subr.mxu0 %v2856
    %3157 = vmatpush1.msra.mxu0 %v2855
    %3158 = vmatprep.subr.mxu0 %v2864
    %3159 = vmatpush1.msra.mxu0 %v2863
    %3160 = vmatprep.subr.mxu0 %v2872
    %3161 = vmatpush1.msra.mxu0 %v2871
    %3162 = vmatprep.subr.mxu0 %v2880
    %3163 = vmatpush1.msra.mxu0 %v2879
    %3164 = vmatprep.subr.mxu0 %v2888
    %3165 = vmatpush1.msra.mxu0 %v2887
    %3166 = vmatprep.subr.mxu0 %v2896
    %3167 = vmatpush1.msra.mxu0 %v2895
    %3168 = vmatprep.subr.mxu0 %v2904
    %3169 = vmatpush1.msra.mxu0 %v2903
    %3170 = vmatprep.subr.mxu0 %v2912
    %3171 = vmatpush1.msra.mxu0 %v2911
    %3172 = vmatprep.subr.mxu0 %v2920
    %3173 = vmatpush1.msra.mxu0 %v2919
    %3174 = vmatprep.subr.mxu0 %v2928
    %3175 = vmatpush1.msra.mxu0 %v2927
    %3176 = vmatprep.subr.mxu0 %v2936
    %3177 = vmatpush1.msra.mxu0 %v2935
    %3178 = vmatprep.subr.mxu0 %v2944
    %3179 = vmatpush1.msra.mxu0 %v2943
    %3180 = vmatprep.subr.mxu0 %v2952
    %3181 = vmatpush1.msra.mxu0 %v2951
    %3182 = vmatprep.subr.mxu0 %v2960
    %3183 = vmatpush1.msra.mxu0 %v2959
    %3184 = vmatprep.subr.mxu0 %v2968
    %3185 = vmatpush1.msra.mxu0 %v2967
    %3186 = vmatprep.subr.mxu0 %v2976
    %3187 = vmatpush1.msra.mxu0 %v2975
    %3188 = vmatprep.subr.mxu0 %v2984
    %3189 = vmatpush1.msra.mxu0 %v2983
    %3190 = vmatprep.subr.mxu0 %v2992
    %3191 = vmatpush1.msra.mxu0 %v2991
    %3192 = vmatprep.subr.mxu0 %v3000
    %3193 = vmatpush1.msra.mxu0 %v2999
    %3194 = vmatprep.subr.mxu0 %v3008
    %3195 = vmatpush1.msra.mxu0 %v3007
    %3196 = vmatprep.subr.mxu0 %v3016
    %3197 = vmatpush1.msra.mxu0 %v3015
    %3198 = vmatprep.subr.mxu0 %v3024
    %3199 = vmatpush1.msra.mxu0 %v3023
    %3200 = vmatprep.subr.mxu0 %v3032
    %3201 = vmatpush1.msra.mxu0 %v3031
    %3202 = vmatprep.subr.mxu0 %v3040
    %3203 = vmatpush1.msra.mxu0 %v3039
    %3204 = vmatprep.subr.mxu0 %v3048
    %3205 = vmatpush1.msra.mxu0 %v3047
    %3206 = vmatprep.subr.mxu0 %v3056
    %3207 = vmatpush1.msra.mxu0 %v3055
    %3208 = vmatprep.subr.mxu0 %v3064
    %3209 = vmatpush1.msra.mxu0 %v3063
    %3210 = vmatprep.subr.mxu0 %v3072
    %3211 = vmatpush1.msra.mxu0 %v3071
    %3212 = vmatprep.mubr.f32.mxu0 %v2820
    %3213 = vmatmul.mubr.f32.gmra.mrb[0].mxu0 %v2819
    %v3214 = vpop.f32.mrb[0].mxu0
    %v3215 = vadd.f32 0.0, %v3214
    %v3216 = vpop.f32.mrb[0].mxu0
    %v3217 = vadd.f32 0.0, %v3216
    %3218 = vdwg.mxu0
    %3219 = vmatprep.subr.mxu0 %v2826
    %3220 = vmatpush1.msra.mxu0 %v2825
    %3221 = vmatprep.subr.mxu0 %v2834
    %3222 = vmatpush1.msra.mxu0 %v2833
    %3223 = vmatprep.subr.mxu0 %v2842
    %3224 = vmatpush1.msra.mxu0 %v2841
    %3225 = vmatprep.subr.mxu0 %v2850
    %3226 = vmatpush1.msra.mxu0 %v2849
    %3227 = vmatprep.subr.mxu0 %v2858
    %3228 = vmatpush1.msra.mxu0 %v2857
    %3229 = vmatprep.subr.mxu0 %v2866
    %3230 = vmatpush1.msra.mxu0 %v2865
    %3231 = vmatprep.subr.mxu0 %v2874
    %3232 = vmatpush1.msra.mxu0 %v2873
    %3233 = vmatprep.subr.mxu0 %v2882
    %3234 = vmatpush1.msra.mxu0 %v2881
    %3235 = vmatprep.subr.mxu0 %v2890
    %3236 = vmatpush1.msra.mxu0 %v2889
    %3237 = vmatprep.subr.mxu0 %v2898
    %3238 = vmatpush1.msra.mxu0 %v2897
    %3239 = vmatprep.subr.mxu0 %v2906
    %3240 = vmatpush1.msra.mxu0 %v2905
    %3241 = vmatprep.subr.mxu0 %v2914
    %3242 = vmatpush1.msra.mxu0 %v2913
    %3243 = vmatprep.subr.mxu0 %v2922
    %3244 = vmatpush1.msra.mxu0 %v2921
    %3245 = vmatprep.subr.mxu0 %v2930
    %3246 = vmatpush1.msra.mxu0 %v2929
    %3247 = vmatprep.subr.mxu0 %v2938
    %3248 = vmatpush1.msra.mxu0 %v2937
    %3249 = vmatprep.subr.mxu0 %v2946
    %3250 = vmatpush1.msra.mxu0 %v2945
    %3251 = vmatprep.subr.mxu0 %v2954
    %3252 = vmatpush1.msra.mxu0 %v2953
    %3253 = vmatprep.subr.mxu0 %v2962
    %3254 = vmatpush1.msra.mxu0 %v2961
    %3255 = vmatprep.subr.mxu0 %v2970
    %3256 = vmatpush1.msra.mxu0 %v2969
    %3257 = vmatprep.subr.mxu0 %v2978
    %3258 = vmatpush1.msra.mxu0 %v2977
    %3259 = vmatprep.subr.mxu0 %v2986
    %3260 = vmatpush1.msra.mxu0 %v2985
    %3261 = vmatprep.subr.mxu0 %v2994
    %3262 = vmatpush1.msra.mxu0 %v2993
    %3263 = vmatprep.subr.mxu0 %v3002
    %3264 = vmatpush1.msra.mxu0 %v3001
    %3265 = vmatprep.subr.mxu0 %v3010
    %3266 = vmatpush1.msra.mxu0 %v3009
    %3267 = vmatprep.subr.mxu0 %v3018
    %3268 = vmatpush1.msra.mxu0 %v3017
    %3269 = vmatprep.subr.mxu0 %v3026
    %3270 = vmatpush1.msra.mxu0 %v3025
    %3271 = vmatprep.subr.mxu0 %v3034
    %3272 = vmatpush1.msra.mxu0 %v3033
    %3273 = vmatprep.subr.mxu0 %v3042
    %3274 = vmatpush1.msra.mxu0 %v3041
    %3275 = vmatprep.subr.mxu0 %v3050
    %3276 = vmatpush1.msra.mxu0 %v3049
    %3277 = vmatprep.subr.mxu0 %v3058
    %3278 = vmatpush1.msra.mxu0 %v3057
    %3279 = vmatprep.subr.mxu0 %v3066
    %3280 = vmatpush1.msra.mxu0 %v3065
    %3281 = vmatprep.subr.mxu0 %v3074
    %3282 = vmatpush1.msra.mxu0 %v3073
    %3283 = vmatprep.mubr.f32.mxu0 %v2820
    %3284 = vmatmul.mubr.f32.gmra.mrb[0].mxu0 %v2819
    %v3285 = vpop.f32.mrb[0].mxu0
    %v3286 = vadd.f32 0.0, %v3285
    %v3287 = vpop.f32.mrb[0].mxu0
    %v3288 = vadd.f32 0.0, %v3287
    %3289 = vdwg.mxu0
    %3290 = vmatprep.subr.mxu0 %v2828
    %3291 = vmatpush1.msra.mxu0 %v2827
    %3292 = vmatprep.subr.mxu0 %v2836
    %3293 = vmatpush1.msra.mxu0 %v2835
    %3294 = vmatprep.subr.mxu0 %v2844
    %3295 = vmatpush1.msra.mxu0 %v2843
    %3296 = vmatprep.subr.mxu0 %v2852
    %3297 = vmatpush1.msra.mxu0 %v2851
    %3298 = vmatprep.subr.mxu0 %v2860
    %3299 = vmatpush1.msra.mxu0 %v2859
    %3300 = vmatprep.subr.mxu0 %v2868
    %3301 = vmatpush1.msra.mxu0 %v2867
    %3302 = vmatprep.subr.mxu0 %v2876
    %3303 = vmatpush1.msra.mxu0 %v2875
    %3304 = vmatprep.subr.mxu0 %v2884
    %3305 = vmatpush1.msra.mxu0 %v2883
    %3306 = vmatprep.subr.mxu0 %v2892
    %3307 = vmatpush1.msra.mxu0 %v2891
    %3308 = vmatprep.subr.mxu0 %v2900
    %3309 = vmatpush1.msra.mxu0 %v2899
    %3310 = vmatprep.subr.mxu0 %v2908
    %3311 = vmatpush1.msra.mxu0 %v2907
    %3312 = vmatprep.subr.mxu0 %v2916
    %3313 = vmatpush1.msra.mxu0 %v2915
    %3314 = vmatprep.subr.mxu0 %v2924
    %3315 = vmatpush1.msra.mxu0 %v2923
    %3316 = vmatprep.subr.mxu0 %v2932
    %3317 = vmatpush1.msra.mxu0 %v2931
    %3318 = vmatprep.subr.mxu0 %v2940
    %3319 = vmatpush1.msra.mxu0 %v2939
    %3320 = vmatprep.subr.mxu0 %v2948
    %3321 = vmatpush1.msra.mxu0 %v2947
    %3322 = vmatprep.subr.mxu0 %v2956
    %3323 = vmatpush1.msra.mxu0 %v2955
    %3324 = vmatprep.subr.mxu0 %v2964
    %3325 = vmatpush1.msra.mxu0 %v2963
    %3326 = vmatprep.subr.mxu0 %v2972
    %3327 = vmatpush1.msra.mxu0 %v2971
    %3328 = vmatprep.subr.mxu0 %v2980
    %3329 = vmatpush1.msra.mxu0 %v2979
    %3330 = vmatprep.subr.mxu0 %v2988
    %3331 = vmatpush1.msra.mxu0 %v2987
    %3332 = vmatprep.subr.mxu0 %v2996
    %3333 = vmatpush1.msra.mxu0 %v2995
    %3334 = vmatprep.subr.mxu0 %v3004
    %3335 = vmatpush1.msra.mxu0 %v3003
    %3336 = vmatprep.subr.mxu0 %v3012
    %3337 = vmatpush1.msra.mxu0 %v3011
    %3338 = vmatprep.subr.mxu0 %v3020
    %3339 = vmatpush1.msra.mxu0 %v3019
    %3340 = vmatprep.subr.mxu0 %v3028
    %3341 = vmatpush1.msra.mxu0 %v3027
    %3342 = vmatprep.subr.mxu0 %v3036
    %3343 = vmatpush1.msra.mxu0 %v3035
    %3344 = vmatprep.subr.mxu0 %v3044
    %3345 = vmatpush1.msra.mxu0 %v3043
    %3346 = vmatprep.subr.mxu0 %v3052
    %3347 = vmatpush1.msra.mxu0 %v3051
    %3348 = vmatprep.subr.mxu0 %v3060
    %3349 = vmatpush1.msra.mxu0 %v3059
    %3350 = vmatprep.subr.mxu0 %v3068
    %3351 = vmatpush1.msra.mxu0 %v3067
    %3352 = vmatprep.subr.mxu0 %v3076
    %3353 = vmatpush1.msra.mxu0 %v3075
    %3354 = vmatprep.mubr.f32.mxu0 %v2820
    %3355 = vmatmul.mubr.f32.gmra.mrb[0].mxu0 %v2819
    %v3356 = vpop.f32.mrb[0].mxu0
    %v3357 = vadd.f32 0.0, %v3356
    %v3358 = vpop.f32.mrb[0].mxu0
    %v3359 = vadd.f32 0.0, %v3358
    %3360 = vdwg.mxu0
    %s3361 = scalar_lea.vmem [#allocation2], 192
    %v3362 = vld [vmem:[%s3361] sm:$0xff]
    %v3363 = vld [vmem:[%s3361 + $0x8] sm:$0xff]
    %v3364 = vld [vmem:[%s3361 + $0x10] sm:$0xff]
    %v3365 = vld [vmem:[%s3361 + $0x18] sm:$0xff]
    %v3366 = vadd.f32 %v3362, %v3144
    %v3367 = vadd.f32 %v3363, %v3146
    %v3368 = vadd.f32 %v3364, %v3215
    %v3369 = vadd.f32 %v3365, %v3217
    %s3370 = scalar_lea.vmem [#allocation2], 256
    %v3371 = vld [vmem:[%s3370 + $0x20] sm:$0xff]
    %v3372 = vld [vmem:[%s3370 + $0x28] sm:$0xff]
    %v3373 = vld [vmem:[%s3370 + $0x30] sm:$0xff]
    %v3374 = vld [vmem:[%s3370 + $0x38] sm:$0xff]
    %v3375 = vadd.f32 %v3371, %v3286
    %v3376 = vadd.f32 %v3372, %v3288
    %v3377 = vadd.f32 %v3373, %v3357
    %v3378 = vadd.f32 %v3374, %v3359
    %v3379 = vxor.u32 %v3366, 2147483648
    %v3380 = vmul.f32 %v3379, 1.442695
    %v3381 = vpow.pop %v3380
    %v3382 = vadd.f32 %v3381, 1.0
    %v3383 = vrcp.pop %v3382
    %v3384 = vmul.f32 1.0, %v3383
    %v3385 = vxor.u32 %v3367, 2147483648
    %v3386 = vmul.f32 %v3385, 1.442695
    %v3387 = vpow.pop %v3386
    %v3388 = vadd.f32 %v3387, 1.0
    %v3389 = vrcp.pop %v3388
    %v3390 = vmul.f32 1.0, %v3389
    %v3391 = vtanh.pop %v3368
    %v3392 = vxor.u32 %v3369, 2147483648
    %v3393 = vmul.f32 %v3392, 1.442695
    %v3394 = vpow.pop %v3393
    %v3395 = vadd.f32 %v3394, 1.0
    %v3396 = vrcp.pop %v3395
    %v3397 = vmul.f32 1.0, %v3396
    %v3398 = vmul.f32 %v3390, %v2786
    %v3399 = vmul.f32 %v3384, %v3391
    %v3400 = vadd.f32 %v3398, %v3399
    %v3401 = vtanh.pop %v3400
    %v3402 = vmul.f32 %v3397, %v3401
    %v3403 = vxor.u32 %v3375, 2147483648
    %v3404 = vmul.f32 %v3403, 1.442695
    %v3405 = vpow.pop %v3404
    %v3406 = vadd.f32 %v3405, 1.0
    %v3407 = vrcp.pop %v3406
    %v3408 = vmul.f32 1.0, %v3407
    %v3409 = vxor.u32 %v3376, 2147483648
    %v3410 = vmul.f32 %v3409, 1.442695
    %v3411 = vpow.pop %v3410
    %v3412 = vadd.f32 %v3411, 1.0
    %v3413 = vrcp.pop %v3412
    %v3414 = vmul.f32 1.0, %v3413
    %v3415 = vtanh.pop %v3377
    %v3416 = vxor.u32 %v3378, 2147483648
    %v3417 = vmul.f32 %v3416, 1.442695
    %v3418 = vpow.pop %v3417
    %v3419 = vadd.f32 %v3418, 1.0
    %v3420 = vrcp.pop %v3419
    %v3421 = vmul.f32 1.0, %v3420
    %v3422 = vmul.f32 %v3414, %v2810
    %v3423 = vmul.f32 %v3408, %v3415
    %v3424 = vadd.f32 %v3422, %v3423
    %v3425 = vtanh.pop %v3424
    %v3426 = vmul.f32 %v3421, %v3425
    %3427 = vst [vmem:[#allocation4] sm:$0xff] %v3402
    %3428 = vst [vmem:[#allocation4 + $0x8] sm:$0xff] %v3426
    %s3429 = scalar_lea.vmem [#allocation3], 48
    %3430 = vst [vmem:[%s3429] sm:$0xff] %v3402
    %s3431 = scalar_lea.vmem [#allocation3], 64
    %3432 = vst [vmem:[%s3431 + $0x8] sm:$0xff] %v3426
    %v3433 = vld [vmem:[#allocation4] sm:$0xff]
    %v3434 = vld [vmem:[#allocation4 + $0x8] sm:$0xff]
    %v3435 = vld [vmem:[#allocation11] sm:$0xff]
    %v3436 = vld [vmem:[#allocation11 + $0x8] sm:$0xff]
    %v3437 = vld [vmem:[#allocation11 + $0x10] sm:$0xff]
    %v3438 = vld [vmem:[#allocation11 + $0x18] sm:$0xff]
    %v3439 = vld [vmem:[#allocation11 + $0x20] sm:$0xff]
    %v3440 = vld [vmem:[#allocation11 + $0x28] sm:$0xff]
    %v3441 = vld [vmem:[#allocation11 + $0x30] sm:$0xff]
    %v3442 = vld [vmem:[#allocation11 + $0x38] sm:$0xff]
    %v3443 = vld [vmem:[#allocation11 + $0x40] sm:$0xff]
    %v3444 = vld [vmem:[#allocation11 + $0x48] sm:$0xff]
    %v3445 = vld [vmem:[#allocation11 + $0x50] sm:$0xff]
    %v3446 = vld [vmem:[#allocation11 + $0x58] sm:$0xff]
    %v3447 = vld [vmem:[#allocation11 + $0x60] sm:$0xff]
    %v3448 = vld [vmem:[#allocation11 + $0x68] sm:$0xff]
    %v3449 = vld [vmem:[#allocation11 + $0x70] sm:$0xff]
    %v3450 = vld [vmem:[#allocation11 + $0x78] sm:$0xff]
    %v3451 = vld [vmem:[#allocation11 + $0x80] sm:$0xff]
    %v3452 = vld [vmem:[#allocation11 + $0x88] sm:$0xff]
    %v3453 = vld [vmem:[#allocation11 + $0x90] sm:$0xff]
    %v3454 = vld [vmem:[#allocation11 + $0x98] sm:$0xff]
    %v3455 = vld [vmem:[#allocation11 + $0xa0] sm:$0xff]
    %v3456 = vld [vmem:[#allocation11 + $0xa8] sm:$0xff]
    %v3457 = vld [vmem:[#allocation11 + $0xb0] sm:$0xff]
    %v3458 = vld [vmem:[#allocation11 + $0xb8] sm:$0xff]
    %v3459 = vld [vmem:[#allocation11 + $0xc0] sm:$0xff]
    %v3460 = vld [vmem:[#allocation11 + $0xc8] sm:$0xff]
    %v3461 = vld [vmem:[#allocation11 + $0xd0] sm:$0xff]
    %v3462 = vld [vmem:[#allocation11 + $0xd8] sm:$0xff]
    %v3463 = vld [vmem:[#allocation11 + $0xe0] sm:$0xff]
    %v3464 = vld [vmem:[#allocation11 + $0xe8] sm:$0xff]
    %v3465 = vld [vmem:[#allocation11 + $0xf0] sm:$0xff]
    %v3466 = vld [vmem:[#allocation11 + $0xf8] sm:$0xff]
    %v3467 = vld [vmem:[#allocation11 + $0x100] sm:$0xff]
    %v3468 = vld [vmem:[#allocation11 + $0x108] sm:$0xff]
    %v3469 = vld [vmem:[#allocation11 + $0x110] sm:$0xff]
    %v3470 = vld [vmem:[#allocation11 + $0x118] sm:$0xff]
    %v3471 = vld [vmem:[#allocation11 + $0x120] sm:$0xff]
    %v3472 = vld [vmem:[#allocation11 + $0x128] sm:$0xff]
    %v3473 = vld [vmem:[#allocation11 + $0x130] sm:$0xff]
    %v3474 = vld [vmem:[#allocation11 + $0x138] sm:$0xff]
    %v3475 = vld [vmem:[#allocation11 + $0x140] sm:$0xff]
    %v3476 = vld [vmem:[#allocation11 + $0x148] sm:$0xff]
    %v3477 = vld [vmem:[#allocation11 + $0x150] sm:$0xff]
    %v3478 = vld [vmem:[#allocation11 + $0x158] sm:$0xff]
    %v3479 = vld [vmem:[#allocation11 + $0x160] sm:$0xff]
    %v3480 = vld [vmem:[#allocation11 + $0x168] sm:$0xff]
    %v3481 = vld [vmem:[#allocation11 + $0x170] sm:$0xff]
    %v3482 = vld [vmem:[#allocation11 + $0x178] sm:$0xff]
    %v3483 = vld [vmem:[#allocation11 + $0x180] sm:$0xff]
    %v3484 = vld [vmem:[#allocation11 + $0x188] sm:$0xff]
    %v3485 = vld [vmem:[#allocation11 + $0x190] sm:$0xff]
    %v3486 = vld [vmem:[#allocation11 + $0x198] sm:$0xff]
    %v3487 = vld [vmem:[#allocation11 + $0x1a0] sm:$0xff]
    %v3488 = vld [vmem:[#allocation11 + $0x1a8] sm:$0xff]
    %v3489 = vld [vmem:[#allocation11 + $0x1b0] sm:$0xff]
    %v3490 = vld [vmem:[#allocation11 + $0x1b8] sm:$0xff]
    %v3491 = vld [vmem:[#allocation11 + $0x1c0] sm:$0xff]
    %v3492 = vld [vmem:[#allocation11 + $0x1c8] sm:$0xff]
    %v3493 = vld [vmem:[#allocation11 + $0x1d0] sm:$0xff]
    %v3494 = vld [vmem:[#allocation11 + $0x1d8] sm:$0xff]
    %v3495 = vld [vmem:[#allocation11 + $0x1e0] sm:$0xff]
    %v3496 = vld [vmem:[#allocation11 + $0x1e8] sm:$0xff]
    %v3497 = vld [vmem:[#allocation11 + $0x1f0] sm:$0xff]
    %v3498 = vld [vmem:[#allocation11 + $0x1f8] sm:$0xff]
    %v3499 = vld [vmem:[#allocation11 + $0x200] sm:$0xff]
    %v3500 = vld [vmem:[#allocation11 + $0x208] sm:$0xff]
    %v3501 = vld [vmem:[#allocation11 + $0x210] sm:$0xff]
    %v3502 = vld [vmem:[#allocation11 + $0x218] sm:$0xff]
    %v3503 = vld [vmem:[#allocation11 + $0x220] sm:$0xff]
    %v3504 = vld [vmem:[#allocation11 + $0x228] sm:$0xff]
    %v3505 = vld [vmem:[#allocation11 + $0x230] sm:$0xff]
    %v3506 = vld [vmem:[#allocation11 + $0x238] sm:$0xff]
    %v3507 = vld [vmem:[#allocation11 + $0x240] sm:$0xff]
    %v3508 = vld [vmem:[#allocation11 + $0x248] sm:$0xff]
    %v3509 = vld [vmem:[#allocation11 + $0x250] sm:$0xff]
    %v3510 = vld [vmem:[#allocation11 + $0x258] sm:$0xff]
    %v3511 = vld [vmem:[#allocation11 + $0x260] sm:$0xff]
    %v3512 = vld [vmem:[#allocation11 + $0x268] sm:$0xff]
    %v3513 = vld [vmem:[#allocation11 + $0x270] sm:$0xff]
    %v3514 = vld [vmem:[#allocation11 + $0x278] sm:$0xff]
    %v3515 = vld [vmem:[#allocation11 + $0x280] sm:$0xff]
    %v3516 = vld [vmem:[#allocation11 + $0x288] sm:$0xff]
    %v3517 = vld [vmem:[#allocation11 + $0x290] sm:$0xff]
    %v3518 = vld [vmem:[#allocation11 + $0x298] sm:$0xff]
    %v3519 = vld [vmem:[#allocation11 + $0x2a0] sm:$0xff]
    %v3520 = vld [vmem:[#allocation11 + $0x2a8] sm:$0xff]
    %v3521 = vld [vmem:[#allocation11 + $0x2b0] sm:$0xff]
    %v3522 = vld [vmem:[#allocation11 + $0x2b8] sm:$0xff]
    %v3523 = vld [vmem:[#allocation11 + $0x2c0] sm:$0xff]
    %v3524 = vld [vmem:[#allocation11 + $0x2c8] sm:$0xff]
    %v3525 = vld [vmem:[#allocation11 + $0x2d0] sm:$0xff]
    %v3526 = vld [vmem:[#allocation11 + $0x2d8] sm:$0xff]
    %v3527 = vld [vmem:[#allocation11 + $0x2e0] sm:$0xff]
    %v3528 = vld [vmem:[#allocation11 + $0x2e8] sm:$0xff]
    %v3529 = vld [vmem:[#allocation11 + $0x2f0] sm:$0xff]
    %v3530 = vld [vmem:[#allocation11 + $0x2f8] sm:$0xff]
    %v3531 = vld [vmem:[#allocation11 + $0x300] sm:$0xff]
    %v3532 = vld [vmem:[#allocation11 + $0x308] sm:$0xff]
    %v3533 = vld [vmem:[#allocation11 + $0x310] sm:$0xff]
    %v3534 = vld [vmem:[#allocation11 + $0x318] sm:$0xff]
    %v3535 = vld [vmem:[#allocation11 + $0x320] sm:$0xff]
    %v3536 = vld [vmem:[#allocation11 + $0x328] sm:$0xff]
    %v3537 = vld [vmem:[#allocation11 + $0x330] sm:$0xff]
    %v3538 = vld [vmem:[#allocation11 + $0x338] sm:$0xff]
    %v3539 = vld [vmem:[#allocation11 + $0x340] sm:$0xff]
    %v3540 = vld [vmem:[#allocation11 + $0x348] sm:$0xff]
    %v3541 = vld [vmem:[#allocation11 + $0x350] sm:$0xff]
    %v3542 = vld [vmem:[#allocation11 + $0x358] sm:$0xff]
    %v3543 = vld [vmem:[#allocation11 + $0x360] sm:$0xff]
    %v3544 = vld [vmem:[#allocation11 + $0x368] sm:$0xff]
    %v3545 = vld [vmem:[#allocation11 + $0x370] sm:$0xff]
    %v3546 = vld [vmem:[#allocation11 + $0x378] sm:$0xff]
    %v3547 = vld [vmem:[#allocation11 + $0x380] sm:$0xff]
    %v3548 = vld [vmem:[#allocation11 + $0x388] sm:$0xff]
    %v3549 = vld [vmem:[#allocation11 + $0x390] sm:$0xff]
    %v3550 = vld [vmem:[#allocation11 + $0x398] sm:$0xff]
    %v3551 = vld [vmem:[#allocation11 + $0x3a0] sm:$0xff]
    %v3552 = vld [vmem:[#allocation11 + $0x3a8] sm:$0xff]
    %v3553 = vld [vmem:[#allocation11 + $0x3b0] sm:$0xff]
    %v3554 = vld [vmem:[#allocation11 + $0x3b8] sm:$0xff]
    %v3555 = vld [vmem:[#allocation11 + $0x3c0] sm:$0xff]
    %v3556 = vld [vmem:[#allocation11 + $0x3c8] sm:$0xff]
    %v3557 = vld [vmem:[#allocation11 + $0x3d0] sm:$0xff]
    %v3558 = vld [vmem:[#allocation11 + $0x3d8] sm:$0xff]
    %v3559 = vld [vmem:[#allocation11 + $0x3e0] sm:$0xff]
    %v3560 = vld [vmem:[#allocation11 + $0x3e8] sm:$0xff]
    %v3561 = vld [vmem:[#allocation11 + $0x3f0] sm:$0xff]
    %v3562 = vld [vmem:[#allocation11 + $0x3f8] sm:$0xff]
    %v3563 = vld [vmem:[#allocation11 + $0x400] sm:$0xff]
    %v3564 = vld [vmem:[#allocation11 + $0x408] sm:$0xff]
    %v3565 = vld [vmem:[#allocation11 + $0x410] sm:$0xff]
    %v3566 = vld [vmem:[#allocation11 + $0x418] sm:$0xff]
    %v3567 = vld [vmem:[#allocation11 + $0x420] sm:$0xff]
    %v3568 = vld [vmem:[#allocation11 + $0x428] sm:$0xff]
    %v3569 = vld [vmem:[#allocation11 + $0x430] sm:$0xff]
    %v3570 = vld [vmem:[#allocation11 + $0x438] sm:$0xff]
    %v3571 = vld [vmem:[#allocation11 + $0x440] sm:$0xff]
    %v3572 = vld [vmem:[#allocation11 + $0x448] sm:$0xff]
    %v3573 = vld [vmem:[#allocation11 + $0x450] sm:$0xff]
    %v3574 = vld [vmem:[#allocation11 + $0x458] sm:$0xff]
    %v3575 = vld [vmem:[#allocation11 + $0x460] sm:$0xff]
    %v3576 = vld [vmem:[#allocation11 + $0x468] sm:$0xff]
    %v3577 = vld [vmem:[#allocation11 + $0x470] sm:$0xff]
    %v3578 = vld [vmem:[#allocation11 + $0x478] sm:$0xff]
    %v3579 = vld [vmem:[#allocation11 + $0x480] sm:$0xff]
    %v3580 = vld [vmem:[#allocation11 + $0x488] sm:$0xff]
    %v3581 = vld [vmem:[#allocation11 + $0x490] sm:$0xff]
    %v3582 = vld [vmem:[#allocation11 + $0x498] sm:$0xff]
    %v3583 = vld [vmem:[#allocation11 + $0x4a0] sm:$0xff]
    %v3584 = vld [vmem:[#allocation11 + $0x4a8] sm:$0xff]
    %v3585 = vld [vmem:[#allocation11 + $0x4b0] sm:$0xff]
    %v3586 = vld [vmem:[#allocation11 + $0x4b8] sm:$0xff]
    %v3587 = vld [vmem:[#allocation11 + $0x4c0] sm:$0xff]
    %v3588 = vld [vmem:[#allocation11 + $0x4c8] sm:$0xff]
    %v3589 = vld [vmem:[#allocation11 + $0x4d0] sm:$0xff]
    %v3590 = vld [vmem:[#allocation11 + $0x4d8] sm:$0xff]
    %v3591 = vld [vmem:[#allocation11 + $0x4e0] sm:$0xff]
    %v3592 = vld [vmem:[#allocation11 + $0x4e8] sm:$0xff]
    %v3593 = vld [vmem:[#allocation11 + $0x4f0] sm:$0xff]
    %v3594 = vld [vmem:[#allocation11 + $0x4f8] sm:$0xff]
    %v3595 = vld [vmem:[#allocation11 + $0x500] sm:$0xff]
    %v3596 = vld [vmem:[#allocation11 + $0x508] sm:$0xff]
    %v3597 = vld [vmem:[#allocation11 + $0x510] sm:$0xff]
    %v3598 = vld [vmem:[#allocation11 + $0x518] sm:$0xff]
    %v3599 = vld [vmem:[#allocation11 + $0x520] sm:$0xff]
    %v3600 = vld [vmem:[#allocation11 + $0x528] sm:$0xff]
    %v3601 = vld [vmem:[#allocation11 + $0x530] sm:$0xff]
    %v3602 = vld [vmem:[#allocation11 + $0x538] sm:$0xff]
    %v3603 = vld [vmem:[#allocation11 + $0x540] sm:$0xff]
    %v3604 = vld [vmem:[#allocation11 + $0x548] sm:$0xff]
    %v3605 = vld [vmem:[#allocation11 + $0x550] sm:$0xff]
    %v3606 = vld [vmem:[#allocation11 + $0x558] sm:$0xff]
    %v3607 = vld [vmem:[#allocation11 + $0x560] sm:$0xff]
    %v3608 = vld [vmem:[#allocation11 + $0x568] sm:$0xff]
    %v3609 = vld [vmem:[#allocation11 + $0x570] sm:$0xff]
    %v3610 = vld [vmem:[#allocation11 + $0x578] sm:$0xff]
    %v3611 = vld [vmem:[#allocation11 + $0x580] sm:$0xff]
    %v3612 = vld [vmem:[#allocation11 + $0x588] sm:$0xff]
    %v3613 = vld [vmem:[#allocation11 + $0x590] sm:$0xff]
    %v3614 = vld [vmem:[#allocation11 + $0x598] sm:$0xff]
    %v3615 = vld [vmem:[#allocation11 + $0x5a0] sm:$0xff]
    %v3616 = vld [vmem:[#allocation11 + $0x5a8] sm:$0xff]
    %v3617 = vld [vmem:[#allocation11 + $0x5b0] sm:$0xff]
    %v3618 = vld [vmem:[#allocation11 + $0x5b8] sm:$0xff]
    %v3619 = vld [vmem:[#allocation11 + $0x5c0] sm:$0xff]
    %v3620 = vld [vmem:[#allocation11 + $0x5c8] sm:$0xff]
    %v3621 = vld [vmem:[#allocation11 + $0x5d0] sm:$0xff]
    %v3622 = vld [vmem:[#allocation11 + $0x5d8] sm:$0xff]
    %v3623 = vld [vmem:[#allocation11 + $0x5e0] sm:$0xff]
    %v3624 = vld [vmem:[#allocation11 + $0x5e8] sm:$0xff]
    %v3625 = vld [vmem:[#allocation11 + $0x5f0] sm:$0xff]
    %v3626 = vld [vmem:[#allocation11 + $0x5f8] sm:$0xff]
    %v3627 = vld [vmem:[#allocation11 + $0x600] sm:$0xff]
    %v3628 = vld [vmem:[#allocation11 + $0x608] sm:$0xff]
    %v3629 = vld [vmem:[#allocation11 + $0x610] sm:$0xff]
    %v3630 = vld [vmem:[#allocation11 + $0x618] sm:$0xff]
    %v3631 = vld [vmem:[#allocation11 + $0x620] sm:$0xff]
    %v3632 = vld [vmem:[#allocation11 + $0x628] sm:$0xff]
    %v3633 = vld [vmem:[#allocation11 + $0x630] sm:$0xff]
    %v3634 = vld [vmem:[#allocation11 + $0x638] sm:$0xff]
    %v3635 = vld [vmem:[#allocation11 + $0x640] sm:$0xff]
    %v3636 = vld [vmem:[#allocation11 + $0x648] sm:$0xff]
    %v3637 = vld [vmem:[#allocation11 + $0x650] sm:$0xff]
    %v3638 = vld [vmem:[#allocation11 + $0x658] sm:$0xff]
    %v3639 = vld [vmem:[#allocation11 + $0x660] sm:$0xff]
    %v3640 = vld [vmem:[#allocation11 + $0x668] sm:$0xff]
    %v3641 = vld [vmem:[#allocation11 + $0x670] sm:$0xff]
    %v3642 = vld [vmem:[#allocation11 + $0x678] sm:$0xff]
    %v3643 = vld [vmem:[#allocation11 + $0x680] sm:$0xff]
    %v3644 = vld [vmem:[#allocation11 + $0x688] sm:$0xff]
    %v3645 = vld [vmem:[#allocation11 + $0x690] sm:$0xff]
    %v3646 = vld [vmem:[#allocation11 + $0x698] sm:$0xff]
    %v3647 = vld [vmem:[#allocation11 + $0x6a0] sm:$0xff]
    %v3648 = vld [vmem:[#allocation11 + $0x6a8] sm:$0xff]
    %v3649 = vld [vmem:[#allocation11 + $0x6b0] sm:$0xff]
    %v3650 = vld [vmem:[#allocation11 + $0x6b8] sm:$0xff]
    %v3651 = vld [vmem:[#allocation11 + $0x6c0] sm:$0xff]
    %v3652 = vld [vmem:[#allocation11 + $0x6c8] sm:$0xff]
    %v3653 = vld [vmem:[#allocation11 + $0x6d0] sm:$0xff]
    %v3654 = vld [vmem:[#allocation11 + $0x6d8] sm:$0xff]
    %v3655 = vld [vmem:[#allocation11 + $0x6e0] sm:$0xff]
    %v3656 = vld [vmem:[#allocation11 + $0x6e8] sm:$0xff]
    %v3657 = vld [vmem:[#allocation11 + $0x6f0] sm:$0xff]
    %v3658 = vld [vmem:[#allocation11 + $0x6f8] sm:$0xff]
    %v3659 = vld [vmem:[#allocation11 + $0x700] sm:$0xff]
    %v3660 = vld [vmem:[#allocation11 + $0x708] sm:$0xff]
    %v3661 = vld [vmem:[#allocation11 + $0x710] sm:$0xff]
    %v3662 = vld [vmem:[#allocation11 + $0x718] sm:$0xff]
    %v3663 = vld [vmem:[#allocation11 + $0x720] sm:$0xff]
    %v3664 = vld [vmem:[#allocation11 + $0x728] sm:$0xff]
    %v3665 = vld [vmem:[#allocation11 + $0x730] sm:$0xff]
    %v3666 = vld [vmem:[#allocation11 + $0x738] sm:$0xff]
    %v3667 = vld [vmem:[#allocation11 + $0x740] sm:$0xff]
    %v3668 = vld [vmem:[#allocation11 + $0x748] sm:$0xff]
    %v3669 = vld [vmem:[#allocation11 + $0x750] sm:$0xff]
    %v3670 = vld [vmem:[#allocation11 + $0x758] sm:$0xff]
    %v3671 = vld [vmem:[#allocation11 + $0x760] sm:$0xff]
    %v3672 = vld [vmem:[#allocation11 + $0x768] sm:$0xff]
    %v3673 = vld [vmem:[#allocation11 + $0x770] sm:$0xff]
    %v3674 = vld [vmem:[#allocation11 + $0x778] sm:$0xff]
    %v3675 = vld [vmem:[#allocation11 + $0x780] sm:$0xff]
    %v3676 = vld [vmem:[#allocation11 + $0x788] sm:$0xff]
    %v3677 = vld [vmem:[#allocation11 + $0x790] sm:$0xff]
    %v3678 = vld [vmem:[#allocation11 + $0x798] sm:$0xff]
    %v3679 = vld [vmem:[#allocation11 + $0x7a0] sm:$0xff]
    %v3680 = vld [vmem:[#allocation11 + $0x7a8] sm:$0xff]
    %v3681 = vld [vmem:[#allocation11 + $0x7b0] sm:$0xff]
    %v3682 = vld [vmem:[#allocation11 + $0x7b8] sm:$0xff]
    %v3683 = vld [vmem:[#allocation11 + $0x7c0] sm:$0xff]
    %v3684 = vld [vmem:[#allocation11 + $0x7c8] sm:$0xff]
    %v3685 = vld [vmem:[#allocation11 + $0x7d0] sm:$0xff]
    %v3686 = vld [vmem:[#allocation11 + $0x7d8] sm:$0xff]
    %v3687 = vld [vmem:[#allocation11 + $0x7e0] sm:$0xff]
    %v3688 = vld [vmem:[#allocation11 + $0x7e8] sm:$0xff]
    %v3689 = vld [vmem:[#allocation11 + $0x7f0] sm:$0xff]
    %v3690 = vld [vmem:[#allocation11 + $0x7f8] sm:$0xff]
    %3691 = vmatprep.subr.mxu0 %v3436
    %3692 = vmatpush1.msra.mxu0 %v3435
    %3693 = vmatprep.subr.mxu0 %v3444
    %3694 = vmatpush1.msra.mxu0 %v3443
    %3695 = vmatprep.subr.mxu0 %v3452
    %3696 = vmatpush1.msra.mxu0 %v3451
    %3697 = vmatprep.subr.mxu0 %v3460
    %3698 = vmatpush1.msra.mxu0 %v3459
    %3699 = vmatprep.subr.mxu0 %v3468
    %3700 = vmatpush1.msra.mxu0 %v3467
    %3701 = vmatprep.subr.mxu0 %v3476
    %3702 = vmatpush1.msra.mxu0 %v3475
    %3703 = vmatprep.subr.mxu0 %v3484
    %3704 = vmatpush1.msra.mxu0 %v3483
    %3705 = vmatprep.subr.mxu0 %v3492
    %3706 = vmatpush1.msra.mxu0 %v3491
    %3707 = vmatprep.subr.mxu0 %v3500
    %3708 = vmatpush1.msra.mxu0 %v3499
    %3709 = vmatprep.subr.mxu0 %v3508
    %3710 = vmatpush1.msra.mxu0 %v3507
    %3711 = vmatprep.subr.mxu0 %v3516
    %3712 = vmatpush1.msra.mxu0 %v3515
    %3713 = vmatprep.subr.mxu0 %v3524
    %3714 = vmatpush1.msra.mxu0 %v3523
    %3715 = vmatprep.subr.mxu0 %v3532
    %3716 = vmatpush1.msra.mxu0 %v3531
    %3717 = vmatprep.subr.mxu0 %v3540
    %3718 = vmatpush1.msra.mxu0 %v3539
    %3719 = vmatprep.subr.mxu0 %v3548
    %3720 = vmatpush1.msra.mxu0 %v3547
    %3721 = vmatprep.subr.mxu0 %v3556
    %3722 = vmatpush1.msra.mxu0 %v3555
    %3723 = vmatprep.subr.mxu0 %v3564
    %3724 = vmatpush1.msra.mxu0 %v3563
    %3725 = vmatprep.subr.mxu0 %v3572
    %3726 = vmatpush1.msra.mxu0 %v3571
    %3727 = vmatprep.subr.mxu0 %v3580
    %3728 = vmatpush1.msra.mxu0 %v3579
    %3729 = vmatprep.subr.mxu0 %v3588
    %3730 = vmatpush1.msra.mxu0 %v3587
    %3731 = vmatprep.subr.mxu0 %v3596
    %3732 = vmatpush1.msra.mxu0 %v3595
    %3733 = vmatprep.subr.mxu0 %v3604
    %3734 = vmatpush1.msra.mxu0 %v3603
    %3735 = vmatprep.subr.mxu0 %v3612
    %3736 = vmatpush1.msra.mxu0 %v3611
    %3737 = vmatprep.subr.mxu0 %v3620
    %3738 = vmatpush1.msra.mxu0 %v3619
    %3739 = vmatprep.subr.mxu0 %v3628
    %3740 = vmatpush1.msra.mxu0 %v3627
    %3741 = vmatprep.subr.mxu0 %v3636
    %3742 = vmatpush1.msra.mxu0 %v3635
    %3743 = vmatprep.subr.mxu0 %v3644
    %3744 = vmatpush1.msra.mxu0 %v3643
    %3745 = vmatprep.subr.mxu0 %v3652
    %3746 = vmatpush1.msra.mxu0 %v3651
    %3747 = vmatprep.subr.mxu0 %v3660
    %3748 = vmatpush1.msra.mxu0 %v3659
    %3749 = vmatprep.subr.mxu0 %v3668
    %3750 = vmatpush1.msra.mxu0 %v3667
    %3751 = vmatprep.subr.mxu0 %v3676
    %3752 = vmatpush1.msra.mxu0 %v3675
    %3753 = vmatprep.subr.mxu0 %v3684
    %3754 = vmatpush1.msra.mxu0 %v3683
    %3755 = vmatprep.mubr.f32.mxu0 %v3434
    %3756 = vmatmul.mubr.f32.gmra.mrb[0].mxu0 %v3433
    %v3757 = vpop.f32.mrb[0].mxu0
    %v3758 = vadd.f32 0.0, %v3757
    %v3759 = vpop.f32.mrb[0].mxu0
    %v3760 = vadd.f32 0.0, %v3759
    %3761 = vdwg.mxu0
    %3762 = vmatprep.subr.mxu0 %v3438
    %3763 = vmatpush1.msra.mxu0 %v3437
    %3764 = vmatprep.subr.mxu0 %v3446
    %3765 = vmatpush1.msra.mxu0 %v3445
    %3766 = vmatprep.subr.mxu0 %v3454
    %3767 = vmatpush1.msra.mxu0 %v3453
    %3768 = vmatprep.subr.mxu0 %v3462
    %3769 = vmatpush1.msra.mxu0 %v3461
    %3770 = vmatprep.subr.mxu0 %v3470
    %3771 = vmatpush1.msra.mxu0 %v3469
    %3772 = vmatprep.subr.mxu0 %v3478
    %3773 = vmatpush1.msra.mxu0 %v3477
    %3774 = vmatprep.subr.mxu0 %v3486
    %3775 = vmatpush1.msra.mxu0 %v3485
    %3776 = vmatprep.subr.mxu0 %v3494
    %3777 = vmatpush1.msra.mxu0 %v3493
    %3778 = vmatprep.subr.mxu0 %v3502
    %3779 = vmatpush1.msra.mxu0 %v3501
    %3780 = vmatprep.subr.mxu0 %v3510
    %3781 = vmatpush1.msra.mxu0 %v3509
    %3782 = vmatprep.subr.mxu0 %v3518
    %3783 = vmatpush1.msra.mxu0 %v3517
    %3784 = vmatprep.subr.mxu0 %v3526
    %3785 = vmatpush1.msra.mxu0 %v3525
    %3786 = vmatprep.subr.mxu0 %v3534
    %3787 = vmatpush1.msra.mxu0 %v3533
    %3788 = vmatprep.subr.mxu0 %v3542
    %3789 = vmatpush1.msra.mxu0 %v3541
    %3790 = vmatprep.subr.mxu0 %v3550
    %3791 = vmatpush1.msra.mxu0 %v3549
    %3792 = vmatprep.subr.mxu0 %v3558
    %3793 = vmatpush1.msra.mxu0 %v3557
    %3794 = vmatprep.subr.mxu0 %v3566
    %3795 = vmatpush1.msra.mxu0 %v3565
    %3796 = vmatprep.subr.mxu0 %v3574
    %3797 = vmatpush1.msra.mxu0 %v3573
    %3798 = vmatprep.subr.mxu0 %v3582
    %3799 = vmatpush1.msra.mxu0 %v3581
    %3800 = vmatprep.subr.mxu0 %v3590
    %3801 = vmatpush1.msra.mxu0 %v3589
    %3802 = vmatprep.subr.mxu0 %v3598
    %3803 = vmatpush1.msra.mxu0 %v3597
    %3804 = vmatprep.subr.mxu0 %v3606
    %3805 = vmatpush1.msra.mxu0 %v3605
    %3806 = vmatprep.subr.mxu0 %v3614
    %3807 = vmatpush1.msra.mxu0 %v3613
    %3808 = vmatprep.subr.mxu0 %v3622
    %3809 = vmatpush1.msra.mxu0 %v3621
    %3810 = vmatprep.subr.mxu0 %v3630
    %3811 = vmatpush1.msra.mxu0 %v3629
    %3812 = vmatprep.subr.mxu0 %v3638
    %3813 = vmatpush1.msra.mxu0 %v3637
    %3814 = vmatprep.subr.mxu0 %v3646
    %3815 = vmatpush1.msra.mxu0 %v3645
    %3816 = vmatprep.subr.mxu0 %v3654
    %3817 = vmatpush1.msra.mxu0 %v3653
    %3818 = vmatprep.subr.mxu0 %v3662
    %3819 = vmatpush1.msra.mxu0 %v3661
    %3820 = vmatprep.subr.mxu0 %v3670
    %3821 = vmatpush1.msra.mxu0 %v3669
    %3822 = vmatprep.subr.mxu0 %v3678
    %3823 = vmatpush1.msra.mxu0 %v3677
    %3824 = vmatprep.subr.mxu0 %v3686
    %3825 = vmatpush1.msra.mxu0 %v3685
    %3826 = vmatprep.mubr.f32.mxu0 %v3434
    %3827 = vmatmul.mubr.f32.gmra.mrb[0].mxu0 %v3433
    %v3828 = vpop.f32.mrb[0].mxu0
    %v3829 = vadd.f32 0.0, %v3828
    %v3830 = vpop.f32.mrb[0].mxu0
    %v3831 = vadd.f32 0.0, %v3830
    %3832 = vdwg.mxu0
    %3833 = vmatprep.subr.mxu0 %v3440
    %3834 = vmatpush1.msra.mxu0 %v3439
    %3835 = vmatprep.subr.mxu0 %v3448
    %3836 = vmatpush1.msra.mxu0 %v3447
    %3837 = vmatprep.subr.mxu0 %v3456
    %3838 = vmatpush1.msra.mxu0 %v3455
    %3839 = vmatprep.subr.mxu0 %v3464
    %3840 = vmatpush1.msra.mxu0 %v3463
    %3841 = vmatprep.subr.mxu0 %v3472
    %3842 = vmatpush1.msra.mxu0 %v3471
    %3843 = vmatprep.subr.mxu0 %v3480
    %3844 = vmatpush1.msra.mxu0 %v3479
    %3845 = vmatprep.subr.mxu0 %v3488
    %3846 = vmatpush1.msra.mxu0 %v3487
    %3847 = vmatprep.subr.mxu0 %v3496
    %3848 = vmatpush1.msra.mxu0 %v3495
    %3849 = vmatprep.subr.mxu0 %v3504
    %3850 = vmatpush1.msra.mxu0 %v3503
    %3851 = vmatprep.subr.mxu0 %v3512
    %3852 = vmatpush1.msra.mxu0 %v3511
    %3853 = vmatprep.subr.mxu0 %v3520
    %3854 = vmatpush1.msra.mxu0 %v3519
    %3855 = vmatprep.subr.mxu0 %v3528
    %3856 = vmatpush1.msra.mxu0 %v3527
    %3857 = vmatprep.subr.mxu0 %v3536
    %3858 = vmatpush1.msra.mxu0 %v3535
    %3859 = vmatprep.subr.mxu0 %v3544
    %3860 = vmatpush1.msra.mxu0 %v3543
    %3861 = vmatprep.subr.mxu0 %v3552
    %3862 = vmatpush1.msra.mxu0 %v3551
    %3863 = vmatprep.subr.mxu0 %v3560
    %3864 = vmatpush1.msra.mxu0 %v3559
    %3865 = vmatprep.subr.mxu0 %v3568
    %3866 = vmatpush1.msra.mxu0 %v3567
    %3867 = vmatprep.subr.mxu0 %v3576
    %3868 = vmatpush1.msra.mxu0 %v3575
    %3869 = vmatprep.subr.mxu0 %v3584
    %3870 = vmatpush1.msra.mxu0 %v3583
    %3871 = vmatprep.subr.mxu0 %v3592
    %3872 = vmatpush1.msra.mxu0 %v3591
    %3873 = vmatprep.subr.mxu0 %v3600
    %3874 = vmatpush1.msra.mxu0 %v3599
    %3875 = vmatprep.subr.mxu0 %v3608
    %3876 = vmatpush1.msra.mxu0 %v3607
    %3877 = vmatprep.subr.mxu0 %v3616
    %3878 = vmatpush1.msra.mxu0 %v3615
    %3879 = vmatprep.subr.mxu0 %v3624
    %3880 = vmatpush1.msra.mxu0 %v3623
    %3881 = vmatprep.subr.mxu0 %v3632
    %3882 = vmatpush1.msra.mxu0 %v3631
    %3883 = vmatprep.subr.mxu0 %v3640
    %3884 = vmatpush1.msra.mxu0 %v3639
    %3885 = vmatprep.subr.mxu0 %v3648
    %3886 = vmatpush1.msra.mxu0 %v3647
    %3887 = vmatprep.subr.mxu0 %v3656
    %3888 = vmatpush1.msra.mxu0 %v3655
    %3889 = vmatprep.subr.mxu0 %v3664
    %3890 = vmatpush1.msra.mxu0 %v3663
    %3891 = vmatprep.subr.mxu0 %v3672
    %3892 = vmatpush1.msra.mxu0 %v3671
    %3893 = vmatprep.subr.mxu0 %v3680
    %3894 = vmatpush1.msra.mxu0 %v3679
    %3895 = vmatprep.subr.mxu0 %v3688
    %3896 = vmatpush1.msra.mxu0 %v3687
    %3897 = vmatprep.mubr.f32.mxu0 %v3434
    %3898 = vmatmul.mubr.f32.gmra.mrb[0].mxu0 %v3433
    %v3899 = vpop.f32.mrb[0].mxu0
    %v3900 = vadd.f32 0.0, %v3899
    %v3901 = vpop.f32.mrb[0].mxu0
    %v3902 = vadd.f32 0.0, %v3901
    %3903 = vdwg.mxu0
    %3904 = vmatprep.subr.mxu0 %v3442
    %3905 = vmatpush1.msra.mxu0 %v3441
    %3906 = vmatprep.subr.mxu0 %v3450
    %3907 = vmatpush1.msra.mxu0 %v3449
    %3908 = vmatprep.subr.mxu0 %v3458
    %3909 = vmatpush1.msra.mxu0 %v3457
    %3910 = vmatprep.subr.mxu0 %v3466
    %3911 = vmatpush1.msra.mxu0 %v3465
    %3912 = vmatprep.subr.mxu0 %v3474
    %3913 = vmatpush1.msra.mxu0 %v3473
    %3914 = vmatprep.subr.mxu0 %v3482
    %3915 = vmatpush1.msra.mxu0 %v3481
    %3916 = vmatprep.subr.mxu0 %v3490
    %3917 = vmatpush1.msra.mxu0 %v3489
    %3918 = vmatprep.subr.mxu0 %v3498
    %3919 = vmatpush1.msra.mxu0 %v3497
    %3920 = vmatprep.subr.mxu0 %v3506
    %3921 = vmatpush1.msra.mxu0 %v3505
    %3922 = vmatprep.subr.mxu0 %v3514
    %3923 = vmatpush1.msra.mxu0 %v3513
    %3924 = vmatprep.subr.mxu0 %v3522
    %3925 = vmatpush1.msra.mxu0 %v3521
    %3926 = vmatprep.subr.mxu0 %v3530
    %3927 = vmatpush1.msra.mxu0 %v3529
    %3928 = vmatprep.subr.mxu0 %v3538
    %3929 = vmatpush1.msra.mxu0 %v3537
    %3930 = vmatprep.subr.mxu0 %v3546
    %3931 = vmatpush1.msra.mxu0 %v3545
    %3932 = vmatprep.subr.mxu0 %v3554
    %3933 = vmatpush1.msra.mxu0 %v3553
    %3934 = vmatprep.subr.mxu0 %v3562
    %3935 = vmatpush1.msra.mxu0 %v3561
    %3936 = vmatprep.subr.mxu0 %v3570
    %3937 = vmatpush1.msra.mxu0 %v3569
    %3938 = vmatprep.subr.mxu0 %v3578
    %3939 = vmatpush1.msra.mxu0 %v3577
    %3940 = vmatprep.subr.mxu0 %v3586
    %3941 = vmatpush1.msra.mxu0 %v3585
    %3942 = vmatprep.subr.mxu0 %v3594
    %3943 = vmatpush1.msra.mxu0 %v3593
    %3944 = vmatprep.subr.mxu0 %v3602
    %3945 = vmatpush1.msra.mxu0 %v3601
    %3946 = vmatprep.subr.mxu0 %v3610
    %3947 = vmatpush1.msra.mxu0 %v3609
    %3948 = vmatprep.subr.mxu0 %v3618
    %3949 = vmatpush1.msra.mxu0 %v3617
    %3950 = vmatprep.subr.mxu0 %v3626
    %3951 = vmatpush1.msra.mxu0 %v3625
    %3952 = vmatprep.subr.mxu0 %v3634
    %3953 = vmatpush1.msra.mxu0 %v3633
    %3954 = vmatprep.subr.mxu0 %v3642
    %3955 = vmatpush1.msra.mxu0 %v3641
    %3956 = vmatprep.subr.mxu0 %v3650
    %3957 = vmatpush1.msra.mxu0 %v3649
    %3958 = vmatprep.subr.mxu0 %v3658
    %3959 = vmatpush1.msra.mxu0 %v3657
    %3960 = vmatprep.subr.mxu0 %v3666
    %3961 = vmatpush1.msra.mxu0 %v3665
    %3962 = vmatprep.subr.mxu0 %v3674
    %3963 = vmatpush1.msra.mxu0 %v3673
    %3964 = vmatprep.subr.mxu0 %v3682
    %3965 = vmatpush1.msra.mxu0 %v3681
    %3966 = vmatprep.subr.mxu0 %v3690
    %3967 = vmatpush1.msra.mxu0 %v3689
    %3968 = vmatprep.mubr.f32.mxu0 %v3434
    %3969 = vmatmul.mubr.f32.gmra.mrb[0].mxu0 %v3433
    %v3970 = vpop.f32.mrb[0].mxu0
    %v3971 = vadd.f32 0.0, %v3970
    %v3972 = vpop.f32.mrb[0].mxu0
    %v3973 = vadd.f32 0.0, %v3972
    %3974 = vdwg.mxu0
    %v3975 = vld [vmem:[%s3370] sm:$0xff]
    %v3976 = vld [vmem:[%s3370 + $0x8] sm:$0xff]
    %v3977 = vld [vmem:[%s3370 + $0x10] sm:$0xff]
    %v3978 = vld [vmem:[%s3370 + $0x18] sm:$0xff]
    %v3979 = vadd.f32 %v3975, %v3758
    %v3980 = vadd.f32 %v3976, %v3760
    %v3981 = vadd.f32 %v3977, %v3829
    %v3982 = vadd.f32 %v3978, %v3831
    %v3983 = vld [vmem:[%s3361 + $0x20] sm:$0xff]
    %v3984 = vld [vmem:[%s3361 + $0x28] sm:$0xff]
    %v3985 = vld [vmem:[%s3361 + $0x30] sm:$0xff]
    %v3986 = vld [vmem:[%s3361 + $0x38] sm:$0xff]
    %v3987 = vadd.f32 %v3983, %v3900
    %v3988 = vadd.f32 %v3984, %v3902
    %v3989 = vadd.f32 %v3985, %v3971
    %v3990 = vadd.f32 %v3986, %v3973
    %v3991 = vxor.u32 %v3979, 2147483648
    %v3992 = vmul.f32 %v3991, 1.442695
    %v3993 = vpow.pop %v3992
    %v3994 = vadd.f32 %v3993, 1.0
    %v3995 = vrcp.pop %v3994
    %v3996 = vmul.f32 1.0, %v3995
    %v3997 = vxor.u32 %v3980, 2147483648
    %v3998 = vmul.f32 %v3997, 1.442695
    %v3999 = vpow.pop %v3998
    %v4000 = vadd.f32 %v3999, 1.0
    %v4001 = vrcp.pop %v4000
    %v4002 = vmul.f32 1.0, %v4001
    %v4003 = vtanh.pop %v3981
    %v4004 = vxor.u32 %v3982, 2147483648
    %v4005 = vmul.f32 %v4004, 1.442695
    %v4006 = vpow.pop %v4005
    %v4007 = vadd.f32 %v4006, 1.0
    %v4008 = vrcp.pop %v4007
    %v4009 = vmul.f32 1.0, %v4008
    %v4010 = vmul.f32 %v4002, %v3400
    %v4011 = vmul.f32 %v3996, %v4003
    %v4012 = vadd.f32 %v4010, %v4011
    %v4013 = vtanh.pop %v4012
    %v4014 = vmul.f32 %v4009, %v4013
    %v4015 = vxor.u32 %v3987, 2147483648
    %v4016 = vmul.f32 %v4015, 1.442695
    %v4017 = vpow.pop %v4016
    %v4018 = vadd.f32 %v4017, 1.0
    %v4019 = vrcp.pop %v4018
    %v4020 = vmul.f32 1.0, %v4019
    %v4021 = vxor.u32 %v3988, 2147483648
    %v4022 = vmul.f32 %v4021, 1.442695
    %v4023 = vpow.pop %v4022
    %v4024 = vadd.f32 %v4023, 1.0
    %v4025 = vrcp.pop %v4024
    %v4026 = vmul.f32 1.0, %v4025
    %v4027 = vtanh.pop %v3989
    %v4028 = vxor.u32 %v3990, 2147483648
    %v4029 = vmul.f32 %v4028, 1.442695
    %v4030 = vpow.pop %v4029
    %v4031 = vadd.f32 %v4030, 1.0
    %v4032 = vrcp.pop %v4031
    %v4033 = vmul.f32 1.0, %v4032
    %v4034 = vmul.f32 %v4026, %v3424
    %v4035 = vmul.f32 %v4020, %v4027
    %v4036 = vadd.f32 %v4034, %v4035
    %v4037 = vtanh.pop %v4036
    %v4038 = vmul.f32 %v4033, %v4037
    %4039 = vst [vmem:[#allocation4] sm:$0xff] %v4014
    %4040 = vst [vmem:[#allocation4 + $0x8] sm:$0xff] %v4038
    %4041 = vst [vmem:[%s3431] sm:$0xff] %v4014
    %4042 = vst [vmem:[%s3429 + $0x8] sm:$0xff] %v4038
    %v4043 = vld [vmem:[#allocation4] sm:$0xff]
    %v4044 = vld [vmem:[#allocation4 + $0x8] sm:$0xff]
    %v4045 = vld [vmem:[#allocation11] sm:$0xff]
    %v4046 = vld [vmem:[#allocation11 + $0x8] sm:$0xff]
    %v4047 = vld [vmem:[#allocation11 + $0x10] sm:$0xff]
    %v4048 = vld [vmem:[#allocation11 + $0x18] sm:$0xff]
    %v4049 = vld [vmem:[#allocation11 + $0x20] sm:$0xff]
    %v4050 = vld [vmem:[#allocation11 + $0x28] sm:$0xff]
    %v4051 = vld [vmem:[#allocation11 + $0x30] sm:$0xff]
    %v4052 = vld [vmem:[#allocation11 + $0x38] sm:$0xff]
    %v4053 = vld [vmem:[#allocation11 + $0x40] sm:$0xff]
    %v4054 = vld [vmem:[#allocation11 + $0x48] sm:$0xff]
    %v4055 = vld [vmem:[#allocation11 + $0x50] sm:$0xff]
    %v4056 = vld [vmem:[#allocation11 + $0x58] sm:$0xff]
    %v4057 = vld [vmem:[#allocation11 + $0x60] sm:$0xff]
    %v4058 = vld [vmem:[#allocation11 + $0x68] sm:$0xff]
    %v4059 = vld [vmem:[#allocation11 + $0x70] sm:$0xff]
    %v4060 = vld [vmem:[#allocation11 + $0x78] sm:$0xff]
    %v4061 = vld [vmem:[#allocation11 + $0x80] sm:$0xff]
    %v4062 = vld [vmem:[#allocation11 + $0x88] sm:$0xff]
    %v4063 = vld [vmem:[#allocation11 + $0x90] sm:$0xff]
    %v4064 = vld [vmem:[#allocation11 + $0x98] sm:$0xff]
    %v4065 = vld [vmem:[#allocation11 + $0xa0] sm:$0xff]
    %v4066 = vld [vmem:[#allocation11 + $0xa8] sm:$0xff]
    %v4067 = vld [vmem:[#allocation11 + $0xb0] sm:$0xff]
    %v4068 = vld [vmem:[#allocation11 + $0xb8] sm:$0xff]
    %v4069 = vld [vmem:[#allocation11 + $0xc0] sm:$0xff]
    %v4070 = vld [vmem:[#allocation11 + $0xc8] sm:$0xff]
    %v4071 = vld [vmem:[#allocation11 + $0xd0] sm:$0xff]
    %v4072 = vld [vmem:[#allocation11 + $0xd8] sm:$0xff]
    %v4073 = vld [vmem:[#allocation11 + $0xe0] sm:$0xff]
    %v4074 = vld [vmem:[#allocation11 + $0xe8] sm:$0xff]
    %v4075 = vld [vmem:[#allocation11 + $0xf0] sm:$0xff]
    %v4076 = vld [vmem:[#allocation11 + $0xf8] sm:$0xff]
    %v4077 = vld [vmem:[#allocation11 + $0x100] sm:$0xff]
    %v4078 = vld [vmem:[#allocation11 + $0x108] sm:$0xff]
    %v4079 = vld [vmem:[#allocation11 + $0x110] sm:$0xff]
    %v4080 = vld [vmem:[#allocation11 + $0x118] sm:$0xff]
    %v4081 = vld [vmem:[#allocation11 + $0x120] sm:$0xff]
    %v4082 = vld [vmem:[#allocation11 + $0x128] sm:$0xff]
    %v4083 = vld [vmem:[#allocation11 + $0x130] sm:$0xff]
    %v4084 = vld [vmem:[#allocation11 + $0x138] sm:$0xff]
    %v4085 = vld [vmem:[#allocation11 + $0x140] sm:$0xff]
    %v4086 = vld [vmem:[#allocation11 + $0x148] sm:$0xff]
    %v4087 = vld [vmem:[#allocation11 + $0x150] sm:$0xff]
    %v4088 = vld [vmem:[#allocation11 + $0x158] sm:$0xff]
    %v4089 = vld [vmem:[#allocation11 + $0x160] sm:$0xff]
    %v4090 = vld [vmem:[#allocation11 + $0x168] sm:$0xff]
    %v4091 = vld [vmem:[#allocation11 + $0x170] sm:$0xff]
    %v4092 = vld [vmem:[#allocation11 + $0x178] sm:$0xff]
    %v4093 = vld [vmem:[#allocation11 + $0x180] sm:$0xff]
    %v4094 = vld [vmem:[#allocation11 + $0x188] sm:$0xff]
    %v4095 = vld [vmem:[#allocation11 + $0x190] sm:$0xff]
    %v4096 = vld [vmem:[#allocation11 + $0x198] sm:$0xff]
    %v4097 = vld [vmem:[#allocation11 + $0x1a0] sm:$0xff]
    %v4098 = vld [vmem:[#allocation11 + $0x1a8] sm:$0xff]
    %v4099 = vld [vmem:[#allocation11 + $0x1b0] sm:$0xff]
    %v4100 = vld [vmem:[#allocation11 + $0x1b8] sm:$0xff]
    %v4101 = vld [vmem:[#allocation11 + $0x1c0] sm:$0xff]
    %v4102 = vld [vmem:[#allocation11 + $0x1c8] sm:$0xff]
    %v4103 = vld [vmem:[#allocation11 + $0x1d0] sm:$0xff]
    %v4104 = vld [vmem:[#allocation11 + $0x1d8] sm:$0xff]
    %v4105 = vld [vmem:[#allocation11 + $0x1e0] sm:$0xff]
    %v4106 = vld [vmem:[#allocation11 + $0x1e8] sm:$0xff]
    %v4107 = vld [vmem:[#allocation11 + $0x1f0] sm:$0xff]
    %v4108 = vld [vmem:[#allocation11 + $0x1f8] sm:$0xff]
    %v4109 = vld [vmem:[#allocation11 + $0x200] sm:$0xff]
    %v4110 = vld [vmem:[#allocation11 + $0x208] sm:$0xff]
    %v4111 = vld [vmem:[#allocation11 + $0x210] sm:$0xff]
    %v4112 = vld [vmem:[#allocation11 + $0x218] sm:$0xff]
    %v4113 = vld [vmem:[#allocation11 + $0x220] sm:$0xff]
    %v4114 = vld [vmem:[#allocation11 + $0x228] sm:$0xff]
    %v4115 = vld [vmem:[#allocation11 + $0x230] sm:$0xff]
    %v4116 = vld [vmem:[#allocation11 + $0x238] sm:$0xff]
    %v4117 = vld [vmem:[#allocation11 + $0x240] sm:$0xff]
    %v4118 = vld [vmem:[#allocation11 + $0x248] sm:$0xff]
    %v4119 = vld [vmem:[#allocation11 + $0x250] sm:$0xff]
    %v4120 = vld [vmem:[#allocation11 + $0x258] sm:$0xff]
    %v4121 = vld [vmem:[#allocation11 + $0x260] sm:$0xff]
    %v4122 = vld [vmem:[#allocation11 + $0x268] sm:$0xff]
    %v4123 = vld [vmem:[#allocation11 + $0x270] sm:$0xff]
    %v4124 = vld [vmem:[#allocation11 + $0x278] sm:$0xff]
    %v4125 = vld [vmem:[#allocation11 + $0x280] sm:$0xff]
    %v4126 = vld [vmem:[#allocation11 + $0x288] sm:$0xff]
    %v4127 = vld [vmem:[#allocation11 + $0x290] sm:$0xff]
    %v4128 = vld [vmem:[#allocation11 + $0x298] sm:$0xff]
    %v4129 = vld [vmem:[#allocation11 + $0x2a0] sm:$0xff]
    %v4130 = vld [vmem:[#allocation11 + $0x2a8] sm:$0xff]
    %v4131 = vld [vmem:[#allocation11 + $0x2b0] sm:$0xff]
    %v4132 = vld [vmem:[#allocation11 + $0x2b8] sm:$0xff]
    %v4133 = vld [vmem:[#allocation11 + $0x2c0] sm:$0xff]
    %v4134 = vld [vmem:[#allocation11 + $0x2c8] sm:$0xff]
    %v4135 = vld [vmem:[#allocation11 + $0x2d0] sm:$0xff]
    %v4136 = vld [vmem:[#allocation11 + $0x2d8] sm:$0xff]
    %v4137 = vld [vmem:[#allocation11 + $0x2e0] sm:$0xff]
    %v4138 = vld [vmem:[#allocation11 + $0x2e8] sm:$0xff]
    %v4139 = vld [vmem:[#allocation11 + $0x2f0] sm:$0xff]
    %v4140 = vld [vmem:[#allocation11 + $0x2f8] sm:$0xff]
    %v4141 = vld [vmem:[#allocation11 + $0x300] sm:$0xff]
    %v4142 = vld [vmem:[#allocation11 + $0x308] sm:$0xff]
    %v4143 = vld [vmem:[#allocation11 + $0x310] sm:$0xff]
    %v4144 = vld [vmem:[#allocation11 + $0x318] sm:$0xff]
    %v4145 = vld [vmem:[#allocation11 + $0x320] sm:$0xff]
    %v4146 = vld [vmem:[#allocation11 + $0x328] sm:$0xff]
    %v4147 = vld [vmem:[#allocation11 + $0x330] sm:$0xff]
    %v4148 = vld [vmem:[#allocation11 + $0x338] sm:$0xff]
    %v4149 = vld [vmem:[#allocation11 + $0x340] sm:$0xff]
    %v4150 = vld [vmem:[#allocation11 + $0x348] sm:$0xff]
    %v4151 = vld [vmem:[#allocation11 + $0x350] sm:$0xff]
    %v4152 = vld [vmem:[#allocation11 + $0x358] sm:$0xff]
    %v4153 = vld [vmem:[#allocation11 + $0x360] sm:$0xff]
    %v4154 = vld [vmem:[#allocation11 + $0x368] sm:$0xff]
    %v4155 = vld [vmem:[#allocation11 + $0x370] sm:$0xff]
    %v4156 = vld [vmem:[#allocation11 + $0x378] sm:$0xff]
    %v4157 = vld [vmem:[#allocation11 + $0x380] sm:$0xff]
    %v4158 = vld [vmem:[#allocation11 + $0x388] sm:$0xff]
    %v4159 = vld [vmem:[#allocation11 + $0x390] sm:$0xff]
    %v4160 = vld [vmem:[#allocation11 + $0x398] sm:$0xff]
    %v4161 = vld [vmem:[#allocation11 + $0x3a0] sm:$0xff]
    %v4162 = vld [vmem:[#allocation11 + $0x3a8] sm:$0xff]
    %v4163 = vld [vmem:[#allocation11 + $0x3b0] sm:$0xff]
    %v4164 = vld [vmem:[#allocation11 + $0x3b8] sm:$0xff]
    %v4165 = vld [vmem:[#allocation11 + $0x3c0] sm:$0xff]
    %v4166 = vld [vmem:[#allocation11 + $0x3c8] sm:$0xff]
    %v4167 = vld [vmem:[#allocation11 + $0x3d0] sm:$0xff]
    %v4168 = vld [vmem:[#allocation11 + $0x3d8] sm:$0xff]
    %v4169 = vld [vmem:[#allocation11 + $0x3e0] sm:$0xff]
    %v4170 = vld [vmem:[#allocation11 + $0x3e8] sm:$0xff]
    %v4171 = vld [vmem:[#allocation11 + $0x3f0] sm:$0xff]
    %v4172 = vld [vmem:[#allocation11 + $0x3f8] sm:$0xff]
    %v4173 = vld [vmem:[#allocation11 + $0x400] sm:$0xff]
    %v4174 = vld [vmem:[#allocation11 + $0x408] sm:$0xff]
    %v4175 = vld [vmem:[#allocation11 + $0x410] sm:$0xff]
    %v4176 = vld [vmem:[#allocation11 + $0x418] sm:$0xff]
    %v4177 = vld [vmem:[#allocation11 + $0x420] sm:$0xff]
    %v4178 = vld [vmem:[#allocation11 + $0x428] sm:$0xff]
    %v4179 = vld [vmem:[#allocation11 + $0x430] sm:$0xff]
    %v4180 = vld [vmem:[#allocation11 + $0x438] sm:$0xff]
    %v4181 = vld [vmem:[#allocation11 + $0x440] sm:$0xff]
    %v4182 = vld [vmem:[#allocation11 + $0x448] sm:$0xff]
    %v4183 = vld [vmem:[#allocation11 + $0x450] sm:$0xff]
    %v4184 = vld [vmem:[#allocation11 + $0x458] sm:$0xff]
    %v4185 = vld [vmem:[#allocation11 + $0x460] sm:$0xff]
    %v4186 = vld [vmem:[#allocation11 + $0x468] sm:$0xff]
    %v4187 = vld [vmem:[#allocation11 + $0x470] sm:$0xff]
    %v4188 = vld [vmem:[#allocation11 + $0x478] sm:$0xff]
    %v4189 = vld [vmem:[#allocation11 + $0x480] sm:$0xff]
    %v4190 = vld [vmem:[#allocation11 + $0x488] sm:$0xff]
    %v4191 = vld [vmem:[#allocation11 + $0x490] sm:$0xff]
    %v4192 = vld [vmem:[#allocation11 + $0x498] sm:$0xff]
    %v4193 = vld [vmem:[#allocation11 + $0x4a0] sm:$0xff]
    %v4194 = vld [vmem:[#allocation11 + $0x4a8] sm:$0xff]
    %v4195 = vld [vmem:[#allocation11 + $0x4b0] sm:$0xff]
    %v4196 = vld [vmem:[#allocation11 + $0x4b8] sm:$0xff]
    %v4197 = vld [vmem:[#allocation11 + $0x4c0] sm:$0xff]
    %v4198 = vld [vmem:[#allocation11 + $0x4c8] sm:$0xff]
    %v4199 = vld [vmem:[#allocation11 + $0x4d0] sm:$0xff]
    %v4200 = vld [vmem:[#allocation11 + $0x4d8] sm:$0xff]
    %v4201 = vld [vmem:[#allocation11 + $0x4e0] sm:$0xff]
    %v4202 = vld [vmem:[#allocation11 + $0x4e8] sm:$0xff]
    %v4203 = vld [vmem:[#allocation11 + $0x4f0] sm:$0xff]
    %v4204 = vld [vmem:[#allocation11 + $0x4f8] sm:$0xff]
    %v4205 = vld [vmem:[#allocation11 + $0x500] sm:$0xff]
    %v4206 = vld [vmem:[#allocation11 + $0x508] sm:$0xff]
    %v4207 = vld [vmem:[#allocation11 + $0x510] sm:$0xff]
    %v4208 = vld [vmem:[#allocation11 + $0x518] sm:$0xff]
    %v4209 = vld [vmem:[#allocation11 + $0x520] sm:$0xff]
    %v4210 = vld [vmem:[#allocation11 + $0x528] sm:$0xff]
    %v4211 = vld [vmem:[#allocation11 + $0x530] sm:$0xff]
    %v4212 = vld [vmem:[#allocation11 + $0x538] sm:$0xff]
    %v4213 = vld [vmem:[#allocation11 + $0x540] sm:$0xff]
    %v4214 = vld [vmem:[#allocation11 + $0x548] sm:$0xff]
    %v4215 = vld [vmem:[#allocation11 + $0x550] sm:$0xff]
    %v4216 = vld [vmem:[#allocation11 + $0x558] sm:$0xff]
    %v4217 = vld [vmem:[#allocation11 + $0x560] sm:$0xff]
    %v4218 = vld [vmem:[#allocation11 + $0x568] sm:$0xff]
    %v4219 = vld [vmem:[#allocation11 + $0x570] sm:$0xff]
    %v4220 = vld [vmem:[#allocation11 + $0x578] sm:$0xff]
    %v4221 = vld [vmem:[#allocation11 + $0x580] sm:$0xff]
    %v4222 = vld [vmem:[#allocation11 + $0x588] sm:$0xff]
    %v4223 = vld [vmem:[#allocation11 + $0x590] sm:$0xff]
    %v4224 = vld [vmem:[#allocation11 + $0x598] sm:$0xff]
    %v4225 = vld [vmem:[#allocation11 + $0x5a0] sm:$0xff]
    %v4226 = vld [vmem:[#allocation11 + $0x5a8] sm:$0xff]
    %v4227 = vld [vmem:[#allocation11 + $0x5b0] sm:$0xff]
    %v4228 = vld [vmem:[#allocation11 + $0x5b8] sm:$0xff]
    %v4229 = vld [vmem:[#allocation11 + $0x5c0] sm:$0xff]
    %v4230 = vld [vmem:[#allocation11 + $0x5c8] sm:$0xff]
    %v4231 = vld [vmem:[#allocation11 + $0x5d0] sm:$0xff]
    %v4232 = vld [vmem:[#allocation11 + $0x5d8] sm:$0xff]
    %v4233 = vld [vmem:[#allocation11 + $0x5e0] sm:$0xff]
    %v4234 = vld [vmem:[#allocation11 + $0x5e8] sm:$0xff]
    %v4235 = vld [vmem:[#allocation11 + $0x5f0] sm:$0xff]
    %v4236 = vld [vmem:[#allocation11 + $0x5f8] sm:$0xff]
    %v4237 = vld [vmem:[#allocation11 + $0x600] sm:$0xff]
    %v4238 = vld [vmem:[#allocation11 + $0x608] sm:$0xff]
    %v4239 = vld [vmem:[#allocation11 + $0x610] sm:$0xff]
    %v4240 = vld [vmem:[#allocation11 + $0x618] sm:$0xff]
    %v4241 = vld [vmem:[#allocation11 + $0x620] sm:$0xff]
    %v4242 = vld [vmem:[#allocation11 + $0x628] sm:$0xff]
    %v4243 = vld [vmem:[#allocation11 + $0x630] sm:$0xff]
    %v4244 = vld [vmem:[#allocation11 + $0x638] sm:$0xff]
    %v4245 = vld [vmem:[#allocation11 + $0x640] sm:$0xff]
    %v4246 = vld [vmem:[#allocation11 + $0x648] sm:$0xff]
    %v4247 = vld [vmem:[#allocation11 + $0x650] sm:$0xff]
    %v4248 = vld [vmem:[#allocation11 + $0x658] sm:$0xff]
    %v4249 = vld [vmem:[#allocation11 + $0x660] sm:$0xff]
    %v4250 = vld [vmem:[#allocation11 + $0x668] sm:$0xff]
    %v4251 = vld [vmem:[#allocation11 + $0x670] sm:$0xff]
    %v4252 = vld [vmem:[#allocation11 + $0x678] sm:$0xff]
    %v4253 = vld [vmem:[#allocation11 + $0x680] sm:$0xff]
    %v4254 = vld [vmem:[#allocation11 + $0x688] sm:$0xff]
    %v4255 = vld [vmem:[#allocation11 + $0x690] sm:$0xff]
    %v4256 = vld [vmem:[#allocation11 + $0x698] sm:$0xff]
    %v4257 = vld [vmem:[#allocation11 + $0x6a0] sm:$0xff]
    %v4258 = vld [vmem:[#allocation11 + $0x6a8] sm:$0xff]
    %v4259 = vld [vmem:[#allocation11 + $0x6b0] sm:$0xff]
    %v4260 = vld [vmem:[#allocation11 + $0x6b8] sm:$0xff]
    %v4261 = vld [vmem:[#allocation11 + $0x6c0] sm:$0xff]
    %v4262 = vld [vmem:[#allocation11 + $0x6c8] sm:$0xff]
    %v4263 = vld [vmem:[#allocation11 + $0x6d0] sm:$0xff]
    %v4264 = vld [vmem:[#allocation11 + $0x6d8] sm:$0xff]
    %v4265 = vld [vmem:[#allocation11 + $0x6e0] sm:$0xff]
    %v4266 = vld [vmem:[#allocation11 + $0x6e8] sm:$0xff]
    %v4267 = vld [vmem:[#allocation11 + $0x6f0] sm:$0xff]
    %v4268 = vld [vmem:[#allocation11 + $0x6f8] sm:$0xff]
    %v4269 = vld [vmem:[#allocation11 + $0x700] sm:$0xff]
    %v4270 = vld [vmem:[#allocation11 + $0x708] sm:$0xff]
    %v4271 = vld [vmem:[#allocation11 + $0x710] sm:$0xff]
    %v4272 = vld [vmem:[#allocation11 + $0x718] sm:$0xff]
    %v4273 = vld [vmem:[#allocation11 + $0x720] sm:$0xff]
    %v4274 = vld [vmem:[#allocation11 + $0x728] sm:$0xff]
    %v4275 = vld [vmem:[#allocation11 + $0x730] sm:$0xff]
    %v4276 = vld [vmem:[#allocation11 + $0x738] sm:$0xff]
    %v4277 = vld [vmem:[#allocation11 + $0x740] sm:$0xff]
    %v4278 = vld [vmem:[#allocation11 + $0x748] sm:$0xff]
    %v4279 = vld [vmem:[#allocation11 + $0x750] sm:$0xff]
    %v4280 = vld [vmem:[#allocation11 + $0x758] sm:$0xff]
    %v4281 = vld [vmem:[#allocation11 + $0x760] sm:$0xff]
    %v4282 = vld [vmem:[#allocation11 + $0x768] sm:$0xff]
    %v4283 = vld [vmem:[#allocation11 + $0x770] sm:$0xff]
    %v4284 = vld [vmem:[#allocation11 + $0x778] sm:$0xff]
    %v4285 = vld [vmem:[#allocation11 + $0x780] sm:$0xff]
    %v4286 = vld [vmem:[#allocation11 + $0x788] sm:$0xff]
    %v4287 = vld [vmem:[#allocation11 + $0x790] sm:$0xff]
    %v4288 = vld [vmem:[#allocation11 + $0x798] sm:$0xff]
    %v4289 = vld [vmem:[#allocation11 + $0x7a0] sm:$0xff]
    %v4290 = vld [vmem:[#allocation11 + $0x7a8] sm:$0xff]
    %v4291 = vld [vmem:[#allocation11 + $0x7b0] sm:$0xff]
    %v4292 = vld [vmem:[#allocation11 + $0x7b8] sm:$0xff]
    %v4293 = vld [vmem:[#allocation11 + $0x7c0] sm:$0xff]
    %v4294 = vld [vmem:[#allocation11 + $0x7c8] sm:$0xff]
    %v4295 = vld [vmem:[#allocation11 + $0x7d0] sm:$0xff]
    %v4296 = vld [vmem:[#allocation11 + $0x7d8] sm:$0xff]
    %v4297 = vld [vmem:[#allocation11 + $0x7e0] sm:$0xff]
    %v4298 = vld [vmem:[#allocation11 + $0x7e8] sm:$0xff]
    %v4299 = vld [vmem:[#allocation11 + $0x7f0] sm:$0xff]
    %v4300 = vld [vmem:[#allocation11 + $0x7f8] sm:$0xff]
    %4301 = vmatprep.subr.mxu0 %v4046
    %4302 = vmatpush1.msra.mxu0 %v4045
    %4303 = vmatprep.subr.mxu0 %v4054
    %4304 = vmatpush1.msra.mxu0 %v4053
    %4305 = vmatprep.subr.mxu0 %v4062
    %4306 = vmatpush1.msra.mxu0 %v4061
    %4307 = vmatprep.subr.mxu0 %v4070
    %4308 = vmatpush1.msra.mxu0 %v4069
    %4309 = vmatprep.subr.mxu0 %v4078
    %4310 = vmatpush1.msra.mxu0 %v4077
    %4311 = vmatprep.subr.mxu0 %v4086
    %4312 = vmatpush1.msra.mxu0 %v4085
    %4313 = vmatprep.subr.mxu0 %v4094
    %4314 = vmatpush1.msra.mxu0 %v4093
    %4315 = vmatprep.subr.mxu0 %v4102
    %4316 = vmatpush1.msra.mxu0 %v4101
    %4317 = vmatprep.subr.mxu0 %v4110
    %4318 = vmatpush1.msra.mxu0 %v4109
    %4319 = vmatprep.subr.mxu0 %v4118
    %4320 = vmatpush1.msra.mxu0 %v4117
    %4321 = vmatprep.subr.mxu0 %v4126
    %4322 = vmatpush1.msra.mxu0 %v4125
    %4323 = vmatprep.subr.mxu0 %v4134
    %4324 = vmatpush1.msra.mxu0 %v4133
    %4325 = vmatprep.subr.mxu0 %v4142
    %4326 = vmatpush1.msra.mxu0 %v4141
    %4327 = vmatprep.subr.mxu0 %v4150
    %4328 = vmatpush1.msra.mxu0 %v4149
    %4329 = vmatprep.subr.mxu0 %v4158
    %4330 = vmatpush1.msra.mxu0 %v4157
    %4331 = vmatprep.subr.mxu0 %v4166
    %4332 = vmatpush1.msra.mxu0 %v4165
    %4333 = vmatprep.subr.mxu0 %v4174
    %4334 = vmatpush1.msra.mxu0 %v4173
    %4335 = vmatprep.subr.mxu0 %v4182
    %4336 = vmatpush1.msra.mxu0 %v4181
    %4337 = vmatprep.subr.mxu0 %v4190
    %4338 = vmatpush1.msra.mxu0 %v4189
    %4339 = vmatprep.subr.mxu0 %v4198
    %4340 = vmatpush1.msra.mxu0 %v4197
    %4341 = vmatprep.subr.mxu0 %v4206
    %4342 = vmatpush1.msra.mxu0 %v4205
    %4343 = vmatprep.subr.mxu0 %v4214
    %4344 = vmatpush1.msra.mxu0 %v4213
    %4345 = vmatprep.subr.mxu0 %v4222
    %4346 = vmatpush1.msra.mxu0 %v4221
    %4347 = vmatprep.subr.mxu0 %v4230
    %4348 = vmatpush1.msra.mxu0 %v4229
    %4349 = vmatprep.subr.mxu0 %v4238
    %4350 = vmatpush1.msra.mxu0 %v4237
    %4351 = vmatprep.subr.mxu0 %v4246
    %4352 = vmatpush1.msra.mxu0 %v4245
    %4353 = vmatprep.subr.mxu0 %v4254
    %4354 = vmatpush1.msra.mxu0 %v4253
    %4355 = vmatprep.subr.mxu0 %v4262
    %4356 = vmatpush1.msra.mxu0 %v4261
    %4357 = vmatprep.subr.mxu0 %v4270
    %4358 = vmatpush1.msra.mxu0 %v4269
    %4359 = vmatprep.subr.mxu0 %v4278
    %4360 = vmatpush1.msra.mxu0 %v4277
    %4361 = vmatprep.subr.mxu0 %v4286
    %4362 = vmatpush1.msra.mxu0 %v4285
    %4363 = vmatprep.subr.mxu0 %v4294
    %4364 = vmatpush1.msra.mxu0 %v4293
    %4365 = vmatprep.mubr.f32.mxu0 %v4044
    %4366 = vmatmul.mubr.f32.gmra.mrb[0].mxu0 %v4043
    %v4367 = vpop.f32.mrb[0].mxu0
    %v4368 = vadd.f32 0.0, %v4367
    %v4369 = vpop.f32.mrb[0].mxu0
    %v4370 = vadd.f32 0.0, %v4369
    %4371 = vdwg.mxu0
    %4372 = vmatprep.subr.mxu0 %v4048
    %4373 = vmatpush1.msra.mxu0 %v4047
    %4374 = vmatprep.subr.mxu0 %v4056
    %4375 = vmatpush1.msra.mxu0 %v4055
    %4376 = vmatprep.subr.mxu0 %v4064
    %4377 = vmatpush1.msra.mxu0 %v4063
    %4378 = vmatprep.subr.mxu0 %v4072
    %4379 = vmatpush1.msra.mxu0 %v4071
    %4380 = vmatprep.subr.mxu0 %v4080
    %4381 = vmatpush1.msra.mxu0 %v4079
    %4382 = vmatprep.subr.mxu0 %v4088
    %4383 = vmatpush1.msra.mxu0 %v4087
    %4384 = vmatprep.subr.mxu0 %v4096
    %4385 = vmatpush1.msra.mxu0 %v4095
    %4386 = vmatprep.subr.mxu0 %v4104
    %4387 = vmatpush1.msra.mxu0 %v4103
    %4388 = vmatprep.subr.mxu0 %v4112
    %4389 = vmatpush1.msra.mxu0 %v4111
    %4390 = vmatprep.subr.mxu0 %v4120
    %4391 = vmatpush1.msra.mxu0 %v4119
    %4392 = vmatprep.subr.mxu0 %v4128
    %4393 = vmatpush1.msra.mxu0 %v4127
    %4394 = vmatprep.subr.mxu0 %v4136
    %4395 = vmatpush1.msra.mxu0 %v4135
    %4396 = vmatprep.subr.mxu0 %v4144
    %4397 = vmatpush1.msra.mxu0 %v4143
    %4398 = vmatprep.subr.mxu0 %v4152
    %4399 = vmatpush1.msra.mxu0 %v4151
    %4400 = vmatprep.subr.mxu0 %v4160
    %4401 = vmatpush1.msra.mxu0 %v4159
    %4402 = vmatprep.subr.mxu0 %v4168
    %4403 = vmatpush1.msra.mxu0 %v4167
    %4404 = vmatprep.subr.mxu0 %v4176
    %4405 = vmatpush1.msra.mxu0 %v4175
    %4406 = vmatprep.subr.mxu0 %v4184
    %4407 = vmatpush1.msra.mxu0 %v4183
    %4408 = vmatprep.subr.mxu0 %v4192
    %4409 = vmatpush1.msra.mxu0 %v4191
    %4410 = vmatprep.subr.mxu0 %v4200
    %4411 = vmatpush1.msra.mxu0 %v4199
    %4412 = vmatprep.subr.mxu0 %v4208
    %4413 = vmatpush1.msra.mxu0 %v4207
    %4414 = vmatprep.subr.mxu0 %v4216
    %4415 = vmatpush1.msra.mxu0 %v4215
    %4416 = vmatprep.subr.mxu0 %v4224
    %4417 = vmatpush1.msra.mxu0 %v4223
    %4418 = vmatprep.subr.mxu0 %v4232
    %4419 = vmatpush1.msra.mxu0 %v4231
    %4420 = vmatprep.subr.mxu0 %v4240
    %4421 = vmatpush1.msra.mxu0 %v4239
    %4422 = vmatprep.subr.mxu0 %v4248
    %4423 = vmatpush1.msra.mxu0 %v4247
    %4424 = vmatprep.subr.mxu0 %v4256
    %4425 = vmatpush1.msra.mxu0 %v4255
    %4426 = vmatprep.subr.mxu0 %v4264
    %4427 = vmatpush1.msra.mxu0 %v4263
    %4428 = vmatprep.subr.mxu0 %v4272
    %4429 = vmatpush1.msra.mxu0 %v4271
    %4430 = vmatprep.subr.mxu0 %v4280
    %4431 = vmatpush1.msra.mxu0 %v4279
    %4432 = vmatprep.subr.mxu0 %v4288
    %4433 = vmatpush1.msra.mxu0 %v4287
    %4434 = vmatprep.subr.mxu0 %v4296
    %4435 = vmatpush1.msra.mxu0 %v4295
    %4436 = vmatprep.mubr.f32.mxu0 %v4044
    %4437 = vmatmul.mubr.f32.gmra.mrb[0].mxu0 %v4043
    %v4438 = vpop.f32.mrb[0].mxu0
    %v4439 = vadd.f32 0.0, %v4438
    %v4440 = vpop.f32.mrb[0].mxu0
    %v4441 = vadd.f32 0.0, %v4440
    %4442 = vdwg.mxu0
    %4443 = vmatprep.subr.mxu0 %v4050
    %4444 = vmatpush1.msra.mxu0 %v4049
    %4445 = vmatprep.subr.mxu0 %v4058
    %4446 = vmatpush1.msra.mxu0 %v4057
    %4447 = vmatprep.subr.mxu0 %v4066
    %4448 = vmatpush1.msra.mxu0 %v4065
    %4449 = vmatprep.subr.mxu0 %v4074
    %4450 = vmatpush1.msra.mxu0 %v4073
    %4451 = vmatprep.subr.mxu0 %v4082
    %4452 = vmatpush1.msra.mxu0 %v4081
    %4453 = vmatprep.subr.mxu0 %v4090
    %4454 = vmatpush1.msra.mxu0 %v4089
    %4455 = vmatprep.subr.mxu0 %v4098
    %4456 = vmatpush1.msra.mxu0 %v4097
    %4457 = vmatprep.subr.mxu0 %v4106
    %4458 = vmatpush1.msra.mxu0 %v4105
    %4459 = vmatprep.subr.mxu0 %v4114
    %4460 = vmatpush1.msra.mxu0 %v4113
    %4461 = vmatprep.subr.mxu0 %v4122
    %4462 = vmatpush1.msra.mxu0 %v4121
    %4463 = vmatprep.subr.mxu0 %v4130
    %4464 = vmatpush1.msra.mxu0 %v4129
    %4465 = vmatprep.subr.mxu0 %v4138
    %4466 = vmatpush1.msra.mxu0 %v4137
    %4467 = vmatprep.subr.mxu0 %v4146
    %4468 = vmatpush1.msra.mxu0 %v4145
    %4469 = vmatprep.subr.mxu0 %v4154
    %4470 = vmatpush1.msra.mxu0 %v4153
    %4471 = vmatprep.subr.mxu0 %v4162
    %4472 = vmatpush1.msra.mxu0 %v4161
    %4473 = vmatprep.subr.mxu0 %v4170
    %4474 = vmatpush1.msra.mxu0 %v4169
    %4475 = vmatprep.subr.mxu0 %v4178
    %4476 = vmatpush1.msra.mxu0 %v4177
    %4477 = vmatprep.subr.mxu0 %v4186
    %4478 = vmatpush1.msra.mxu0 %v4185
    %4479 = vmatprep.subr.mxu0 %v4194
    %4480 = vmatpush1.msra.mxu0 %v4193
    %4481 = vmatprep.subr.mxu0 %v4202
    %4482 = vmatpush1.msra.mxu0 %v4201
    %4483 = vmatprep.subr.mxu0 %v4210
    %4484 = vmatpush1.msra.mxu0 %v4209
    %4485 = vmatprep.subr.mxu0 %v4218
    %4486 = vmatpush1.msra.mxu0 %v4217
    %4487 = vmatprep.subr.mxu0 %v4226
    %4488 = vmatpush1.msra.mxu0 %v4225
    %4489 = vmatprep.subr.mxu0 %v4234
    %4490 = vmatpush1.msra.mxu0 %v4233
    %4491 = vmatprep.subr.mxu0 %v4242
    %4492 = vmatpush1.msra.mxu0 %v4241
    %4493 = vmatprep.subr.mxu0 %v4250
    %4494 = vmatpush1.msra.mxu0 %v4249
    %4495 = vmatprep.subr.mxu0 %v4258
    %4496 = vmatpush1.msra.mxu0 %v4257
    %4497 = vmatprep.subr.mxu0 %v4266
    %4498 = vmatpush1.msra.mxu0 %v4265
    %4499 = vmatprep.subr.mxu0 %v4274
    %4500 = vmatpush1.msra.mxu0 %v4273
    %4501 = vmatprep.subr.mxu0 %v4282
    %4502 = vmatpush1.msra.mxu0 %v4281
    %4503 = vmatprep.subr.mxu0 %v4290
    %4504 = vmatpush1.msra.mxu0 %v4289
    %4505 = vmatprep.subr.mxu0 %v4298
    %4506 = vmatpush1.msra.mxu0 %v4297
    %4507 = vmatprep.mubr.f32.mxu0 %v4044
    %4508 = vmatmul.mubr.f32.gmra.mrb[0].mxu0 %v4043
    %v4509 = vpop.f32.mrb[0].mxu0
    %v4510 = vadd.f32 0.0, %v4509
    %v4511 = vpop.f32.mrb[0].mxu0
    %v4512 = vadd.f32 0.0, %v4511
    %4513 = vdwg.mxu0
    %4514 = vmatprep.subr.mxu0 %v4052
    %4515 = vmatpush1.msra.mxu0 %v4051
    %4516 = vmatprep.subr.mxu0 %v4060
    %4517 = vmatpush1.msra.mxu0 %v4059
    %4518 = vmatprep.subr.mxu0 %v4068
    %4519 = vmatpush1.msra.mxu0 %v4067
    %4520 = vmatprep.subr.mxu0 %v4076
    %4521 = vmatpush1.msra.mxu0 %v4075
    %4522 = vmatprep.subr.mxu0 %v4084
    %4523 = vmatpush1.msra.mxu0 %v4083
    %4524 = vmatprep.subr.mxu0 %v4092
    %4525 = vmatpush1.msra.mxu0 %v4091
    %4526 = vmatprep.subr.mxu0 %v4100
    %4527 = vmatpush1.msra.mxu0 %v4099
    %4528 = vmatprep.subr.mxu0 %v4108
    %4529 = vmatpush1.msra.mxu0 %v4107
    %4530 = vmatprep.subr.mxu0 %v4116
    %4531 = vmatpush1.msra.mxu0 %v4115
    %4532 = vmatprep.subr.mxu0 %v4124
    %4533 = vmatpush1.msra.mxu0 %v4123
    %4534 = vmatprep.subr.mxu0 %v4132
    %4535 = vmatpush1.msra.mxu0 %v4131
    %4536 = vmatprep.subr.mxu0 %v4140
    %4537 = vmatpush1.msra.mxu0 %v4139
    %4538 = vmatprep.subr.mxu0 %v4148
    %4539 = vmatpush1.msra.mxu0 %v4147
    %4540 = vmatprep.subr.mxu0 %v4156
    %4541 = vmatpush1.msra.mxu0 %v4155
    %4542 = vmatprep.subr.mxu0 %v4164
    %4543 = vmatpush1.msra.mxu0 %v4163
    %4544 = vmatprep.subr.mxu0 %v4172
    %4545 = vmatpush1.msra.mxu0 %v4171
    %4546 = vmatprep.subr.mxu0 %v4180
    %4547 = vmatpush1.msra.mxu0 %v4179
    %4548 = vmatprep.subr.mxu0 %v4188
    %4549 = vmatpush1.msra.mxu0 %v4187
    %4550 = vmatprep.subr.mxu0 %v4196
    %4551 = vmatpush1.msra.mxu0 %v4195
    %4552 = vmatprep.subr.mxu0 %v4204
    %4553 = vmatpush1.msra.mxu0 %v4203
    %4554 = vmatprep.subr.mxu0 %v4212
    %4555 = vmatpush1.msra.mxu0 %v4211
    %4556 = vmatprep.subr.mxu0 %v4220
    %4557 = vmatpush1.msra.mxu0 %v4219
    %4558 = vmatprep.subr.mxu0 %v4228
    %4559 = vmatpush1.msra.mxu0 %v4227
    %4560 = vmatprep.subr.mxu0 %v4236
    %4561 = vmatpush1.msra.mxu0 %v4235
    %4562 = vmatprep.subr.mxu0 %v4244
    %4563 = vmatpush1.msra.mxu0 %v4243
    %4564 = vmatprep.subr.mxu0 %v4252
    %4565 = vmatpush1.msra.mxu0 %v4251
    %4566 = vmatprep.subr.mxu0 %v4260
    %4567 = vmatpush1.msra.mxu0 %v4259
    %4568 = vmatprep.subr.mxu0 %v4268
    %4569 = vmatpush1.msra.mxu0 %v4267
    %4570 = vmatprep.subr.mxu0 %v4276
    %4571 = vmatpush1.msra.mxu0 %v4275
    %4572 = vmatprep.subr.mxu0 %v4284
    %4573 = vmatpush1.msra.mxu0 %v4283
    %4574 = vmatprep.subr.mxu0 %v4292
    %4575 = vmatpush1.msra.mxu0 %v4291
    %4576 = vmatprep.subr.mxu0 %v4300
    %4577 = vmatpush1.msra.mxu0 %v4299
    %4578 = vmatprep.mubr.f32.mxu0 %v4044
    %4579 = vmatmul.mubr.f32.gmra.mrb[0].mxu0 %v4043
    %v4580 = vpop.f32.mrb[0].mxu0
    %v4581 = vadd.f32 0.0, %v4580
    %v4582 = vpop.f32.mrb[0].mxu0
    %v4583 = vadd.f32 0.0, %v4582
    %4584 = vdwg.mxu0
    %v4585 = vld [vmem:[%s2756] sm:$0xff]
    %v4586 = vld [vmem:[%s2756 + $0x8] sm:$0xff]
    %v4587 = vld [vmem:[%s2756 + $0x10] sm:$0xff]
    %v4588 = vld [vmem:[%s2756 + $0x18] sm:$0xff]
    %v4589 = vadd.f32 %v4585, %v4368
    %v4590 = vadd.f32 %v4586, %v4370
    %v4591 = vadd.f32 %v4587, %v4439
    %v4592 = vadd.f32 %v4588, %v4441
    %v4593 = vld [vmem:[%s2747 + $0x20] sm:$0xff]
    %v4594 = vld [vmem:[%s2747 + $0x28] sm:$0xff]
    %v4595 = vld [vmem:[%s2747 + $0x30] sm:$0xff]
    %v4596 = vld [vmem:[%s2747 + $0x38] sm:$0xff]
    %v4597 = vadd.f32 %v4593, %v4510
    %v4598 = vadd.f32 %v4594, %v4512
    %v4599 = vadd.f32 %v4595, %v4581
    %v4600 = vadd.f32 %v4596, %v4583
    %v4601 = vxor.u32 %v4589, 2147483648
    %v4602 = vmul.f32 %v4601, 1.442695
    %v4603 = vpow.pop %v4602
    %v4604 = vadd.f32 %v4603, 1.0
    %v4605 = vrcp.pop %v4604
    %v4606 = vmul.f32 1.0, %v4605
    %v4607 = vxor.u32 %v4590, 2147483648
    %v4608 = vmul.f32 %v4607, 1.442695
    %v4609 = vpow.pop %v4608
    %v4610 = vadd.f32 %v4609, 1.0
    %v4611 = vrcp.pop %v4610
    %v4612 = vmul.f32 1.0, %v4611
    %v4613 = vtanh.pop %v4591
    %v4614 = vxor.u32 %v4592, 2147483648
    %v4615 = vmul.f32 %v4614, 1.442695
    %v4616 = vpow.pop %v4615
    %v4617 = vadd.f32 %v4616, 1.0
    %v4618 = vrcp.pop %v4617
    %v4619 = vmul.f32 1.0, %v4618
    %v4620 = vmul.f32 %v4612, %v4012
    %v4621 = vmul.f32 %v4606, %v4613
    %v4622 = vadd.f32 %v4620, %v4621
    %v4623 = vtanh.pop %v4622
    %v4624 = vmul.f32 %v4619, %v4623
    %v4625 = vxor.u32 %v4597, 2147483648
    %v4626 = vmul.f32 %v4625, 1.442695
    %v4627 = vpow.pop %v4626
    %v4628 = vadd.f32 %v4627, 1.0
    %v4629 = vrcp.pop %v4628
    %v4630 = vmul.f32 1.0, %v4629
    %v4631 = vxor.u32 %v4598, 2147483648
    %v4632 = vmul.f32 %v4631, 1.442695
    %v4633 = vpow.pop %v4632
    %v4634 = vadd.f32 %v4633, 1.0
    %v4635 = vrcp.pop %v4634
    %v4636 = vmul.f32 1.0, %v4635
    %v4637 = vtanh.pop %v4599
    %v4638 = vxor.u32 %v4600, 2147483648
    %v4639 = vmul.f32 %v4638, 1.442695
    %v4640 = vpow.pop %v4639
    %v4641 = vadd.f32 %v4640, 1.0
    %v4642 = vrcp.pop %v4641
    %v4643 = vmul.f32 1.0, %v4642
    %v4644 = vmul.f32 %v4636, %v4036
    %v4645 = vmul.f32 %v4630, %v4637
    %v4646 = vadd.f32 %v4644, %v4645
    %v4647 = vtanh.pop %v4646
    %v4648 = vmul.f32 %v4643, %v4647
    %4649 = vst [vmem:[#allocation4] sm:$0xff] %v4624
    %4650 = vst [vmem:[#allocation4 + $0x8] sm:$0xff] %v4648
    %4651 = vst [vmem:[%s2817] sm:$0xff] %v4624
    %4652 = vst [vmem:[%s2815 + $0x8] sm:$0xff] %v4648
    %v4653 = vld [vmem:[#allocation4] sm:$0xff]
    %v4654 = vld [vmem:[#allocation4 + $0x8] sm:$0xff]
    %v4655 = vld [vmem:[#allocation11] sm:$0xff]
    %v4656 = vld [vmem:[#allocation11 + $0x8] sm:$0xff]
    %v4657 = vld [vmem:[#allocation11 + $0x10] sm:$0xff]
    %v4658 = vld [vmem:[#allocation11 + $0x18] sm:$0xff]
    %v4659 = vld [vmem:[#allocation11 + $0x20] sm:$0xff]
    %v4660 = vld [vmem:[#allocation11 + $0x28] sm:$0xff]
    %v4661 = vld [vmem:[#allocation11 + $0x30] sm:$0xff]
    %v4662 = vld [vmem:[#allocation11 + $0x38] sm:$0xff]
    %v4663 = vld [vmem:[#allocation11 + $0x40] sm:$0xff]
    %v4664 = vld [vmem:[#allocation11 + $0x48] sm:$0xff]
    %v4665 = vld [vmem:[#allocation11 + $0x50] sm:$0xff]
    %v4666 = vld [vmem:[#allocation11 + $0x58] sm:$0xff]
    %v4667 = vld [vmem:[#allocation11 + $0x60] sm:$0xff]
    %v4668 = vld [vmem:[#allocation11 + $0x68] sm:$0xff]
    %v4669 = vld [vmem:[#allocation11 + $0x70] sm:$0xff]
    %v4670 = vld [vmem:[#allocation11 + $0x78] sm:$0xff]
    %v4671 = vld [vmem:[#allocation11 + $0x80] sm:$0xff]
    %v4672 = vld [vmem:[#allocation11 + $0x88] sm:$0xff]
    %v4673 = vld [vmem:[#allocation11 + $0x90] sm:$0xff]
    %v4674 = vld [vmem:[#allocation11 + $0x98] sm:$0xff]
    %v4675 = vld [vmem:[#allocation11 + $0xa0] sm:$0xff]
    %v4676 = vld [vmem:[#allocation11 + $0xa8] sm:$0xff]
    %v4677 = vld [vmem:[#allocation11 + $0xb0] sm:$0xff]
    %v4678 = vld [vmem:[#allocation11 + $0xb8] sm:$0xff]
    %v4679 = vld [vmem:[#allocation11 + $0xc0] sm:$0xff]
    %v4680 = vld [vmem:[#allocation11 + $0xc8] sm:$0xff]
    %v4681 = vld [vmem:[#allocation11 + $0xd0] sm:$0xff]
    %v4682 = vld [vmem:[#allocation11 + $0xd8] sm:$0xff]
    %v4683 = vld [vmem:[#allocation11 + $0xe0] sm:$0xff]
    %v4684 = vld [vmem:[#allocation11 + $0xe8] sm:$0xff]
    %v4685 = vld [vmem:[#allocation11 + $0xf0] sm:$0xff]
    %v4686 = vld [vmem:[#allocation11 + $0xf8] sm:$0xff]
    %v4687 = vld [vmem:[#allocation11 + $0x100] sm:$0xff]
    %v4688 = vld [vmem:[#allocation11 + $0x108] sm:$0xff]
    %v4689 = vld [vmem:[#allocation11 + $0x110] sm:$0xff]
    %v4690 = vld [vmem:[#allocation11 + $0x118] sm:$0xff]
    %v4691 = vld [vmem:[#allocation11 + $0x120] sm:$0xff]
    %v4692 = vld [vmem:[#allocation11 + $0x128] sm:$0xff]
    %v4693 = vld [vmem:[#allocation11 + $0x130] sm:$0xff]
    %v4694 = vld [vmem:[#allocation11 + $0x138] sm:$0xff]
    %v4695 = vld [vmem:[#allocation11 + $0x140] sm:$0xff]
    %v4696 = vld [vmem:[#allocation11 + $0x148] sm:$0xff]
    %v4697 = vld [vmem:[#allocation11 + $0x150] sm:$0xff]
    %v4698 = vld [vmem:[#allocation11 + $0x158] sm:$0xff]
    %v4699 = vld [vmem:[#allocation11 + $0x160] sm:$0xff]
    %v4700 = vld [vmem:[#allocation11 + $0x168] sm:$0xff]
    %v4701 = vld [vmem:[#allocation11 + $0x170] sm:$0xff]
    %v4702 = vld [vmem:[#allocation11 + $0x178] sm:$0xff]
    %v4703 = vld [vmem:[#allocation11 + $0x180] sm:$0xff]
    %v4704 = vld [vmem:[#allocation11 + $0x188] sm:$0xff]
    %v4705 = vld [vmem:[#allocation11 + $0x190] sm:$0xff]
    %v4706 = vld [vmem:[#allocation11 + $0x198] sm:$0xff]
    %v4707 = vld [vmem:[#allocation11 + $0x1a0] sm:$0xff]
    %v4708 = vld [vmem:[#allocation11 + $0x1a8] sm:$0xff]
    %v4709 = vld [vmem:[#allocation11 + $0x1b0] sm:$0xff]
    %v4710 = vld [vmem:[#allocation11 + $0x1b8] sm:$0xff]
    %v4711 = vld [vmem:[#allocation11 + $0x1c0] sm:$0xff]
    %v4712 = vld [vmem:[#allocation11 + $0x1c8] sm:$0xff]
    %v4713 = vld [vmem:[#allocation11 + $0x1d0] sm:$0xff]
    %v4714 = vld [vmem:[#allocation11 + $0x1d8] sm:$0xff]
    %v4715 = vld [vmem:[#allocation11 + $0x1e0] sm:$0xff]
    %v4716 = vld [vmem:[#allocation11 + $0x1e8] sm:$0xff]
    %v4717 = vld [vmem:[#allocation11 + $0x1f0] sm:$0xff]
    %v4718 = vld [vmem:[#allocation11 + $0x1f8] sm:$0xff]
    %v4719 = vld [vmem:[#allocation11 + $0x200] sm:$0xff]
    %v4720 = vld [vmem:[#allocation11 + $0x208] sm:$0xff]
    %v4721 = vld [vmem:[#allocation11 + $0x210] sm:$0xff]
    %v4722 = vld [vmem:[#allocation11 + $0x218] sm:$0xff]
    %v4723 = vld [vmem:[#allocation11 + $0x220] sm:$0xff]
    %v4724 = vld [vmem:[#allocation11 + $0x228] sm:$0xff]
    %v4725 = vld [vmem:[#allocation11 + $0x230] sm:$0xff]
    %v4726 = vld [vmem:[#allocation11 + $0x238] sm:$0xff]
    %v4727 = vld [vmem:[#allocation11 + $0x240] sm:$0xff]
    %v4728 = vld [vmem:[#allocation11 + $0x248] sm:$0xff]
    %v4729 = vld [vmem:[#allocation11 + $0x250] sm:$0xff]
    %v4730 = vld [vmem:[#allocation11 + $0x258] sm:$0xff]
    %v4731 = vld [vmem:[#allocation11 + $0x260] sm:$0xff]
    %v4732 = vld [vmem:[#allocation11 + $0x268] sm:$0xff]
    %v4733 = vld [vmem:[#allocation11 + $0x270] sm:$0xff]
    %v4734 = vld [vmem:[#allocation11 + $0x278] sm:$0xff]
    %v4735 = vld [vmem:[#allocation11 + $0x280] sm:$0xff]
    %v4736 = vld [vmem:[#allocation11 + $0x288] sm:$0xff]
    %v4737 = vld [vmem:[#allocation11 + $0x290] sm:$0xff]
    %v4738 = vld [vmem:[#allocation11 + $0x298] sm:$0xff]
    %v4739 = vld [vmem:[#allocation11 + $0x2a0] sm:$0xff]
    %v4740 = vld [vmem:[#allocation11 + $0x2a8] sm:$0xff]
    %v4741 = vld [vmem:[#allocation11 + $0x2b0] sm:$0xff]
    %v4742 = vld [vmem:[#allocation11 + $0x2b8] sm:$0xff]
    %v4743 = vld [vmem:[#allocation11 + $0x2c0] sm:$0xff]
    %v4744 = vld [vmem:[#allocation11 + $0x2c8] sm:$0xff]
    %v4745 = vld [vmem:[#allocation11 + $0x2d0] sm:$0xff]
    %v4746 = vld [vmem:[#allocation11 + $0x2d8] sm:$0xff]
    %v4747 = vld [vmem:[#allocation11 + $0x2e0] sm:$0xff]
    %v4748 = vld [vmem:[#allocation11 + $0x2e8] sm:$0xff]
    %v4749 = vld [vmem:[#allocation11 + $0x2f0] sm:$0xff]
    %v4750 = vld [vmem:[#allocation11 + $0x2f8] sm:$0xff]
    %v4751 = vld [vmem:[#allocation11 + $0x300] sm:$0xff]
    %v4752 = vld [vmem:[#allocation11 + $0x308] sm:$0xff]
    %v4753 = vld [vmem:[#allocation11 + $0x310] sm:$0xff]
    %v4754 = vld [vmem:[#allocation11 + $0x318] sm:$0xff]
    %v4755 = vld [vmem:[#allocation11 + $0x320] sm:$0xff]
    %v4756 = vld [vmem:[#allocation11 + $0x328] sm:$0xff]
    %v4757 = vld [vmem:[#allocation11 + $0x330] sm:$0xff]
    %v4758 = vld [vmem:[#allocation11 + $0x338] sm:$0xff]
    %v4759 = vld [vmem:[#allocation11 + $0x340] sm:$0xff]
    %v4760 = vld [vmem:[#allocation11 + $0x348] sm:$0xff]
    %v4761 = vld [vmem:[#allocation11 + $0x350] sm:$0xff]
    %v4762 = vld [vmem:[#allocation11 + $0x358] sm:$0xff]
    %v4763 = vld [vmem:[#allocation11 + $0x360] sm:$0xff]
    %v4764 = vld [vmem:[#allocation11 + $0x368] sm:$0xff]
    %v4765 = vld [vmem:[#allocation11 + $0x370] sm:$0xff]
    %v4766 = vld [vmem:[#allocation11 + $0x378] sm:$0xff]
    %v4767 = vld [vmem:[#allocation11 + $0x380] sm:$0xff]
    %v4768 = vld [vmem:[#allocation11 + $0x388] sm:$0xff]
    %v4769 = vld [vmem:[#allocation11 + $0x390] sm:$0xff]
    %v4770 = vld [vmem:[#allocation11 + $0x398] sm:$0xff]
    %v4771 = vld [vmem:[#allocation11 + $0x3a0] sm:$0xff]
    %v4772 = vld [vmem:[#allocation11 + $0x3a8] sm:$0xff]
    %v4773 = vld [vmem:[#allocation11 + $0x3b0] sm:$0xff]
    %v4774 = vld [vmem:[#allocation11 + $0x3b8] sm:$0xff]
    %v4775 = vld [vmem:[#allocation11 + $0x3c0] sm:$0xff]
    %v4776 = vld [vmem:[#allocation11 + $0x3c8] sm:$0xff]
    %v4777 = vld [vmem:[#allocation11 + $0x3d0] sm:$0xff]
    %v4778 = vld [vmem:[#allocation11 + $0x3d8] sm:$0xff]
    %v4779 = vld [vmem:[#allocation11 + $0x3e0] sm:$0xff]
    %v4780 = vld [vmem:[#allocation11 + $0x3e8] sm:$0xff]
    %v4781 = vld [vmem:[#allocation11 + $0x3f0] sm:$0xff]
    %v4782 = vld [vmem:[#allocation11 + $0x3f8] sm:$0xff]
    %v4783 = vld [vmem:[#allocation11 + $0x400] sm:$0xff]
    %v4784 = vld [vmem:[#allocation11 + $0x408] sm:$0xff]
    %v4785 = vld [vmem:[#allocation11 + $0x410] sm:$0xff]
    %v4786 = vld [vmem:[#allocation11 + $0x418] sm:$0xff]
    %v4787 = vld [vmem:[#allocation11 + $0x420] sm:$0xff]
    %v4788 = vld [vmem:[#allocation11 + $0x428] sm:$0xff]
    %v4789 = vld [vmem:[#allocation11 + $0x430] sm:$0xff]
    %v4790 = vld [vmem:[#allocation11 + $0x438] sm:$0xff]
    %v4791 = vld [vmem:[#allocation11 + $0x440] sm:$0xff]
    %v4792 = vld [vmem:[#allocation11 + $0x448] sm:$0xff]
    %v4793 = vld [vmem:[#allocation11 + $0x450] sm:$0xff]
    %v4794 = vld [vmem:[#allocation11 + $0x458] sm:$0xff]
    %v4795 = vld [vmem:[#allocation11 + $0x460] sm:$0xff]
    %v4796 = vld [vmem:[#allocation11 + $0x468] sm:$0xff]
    %v4797 = vld [vmem:[#allocation11 + $0x470] sm:$0xff]
    %v4798 = vld [vmem:[#allocation11 + $0x478] sm:$0xff]
    %v4799 = vld [vmem:[#allocation11 + $0x480] sm:$0xff]
    %v4800 = vld [vmem:[#allocation11 + $0x488] sm:$0xff]
    %v4801 = vld [vmem:[#allocation11 + $0x490] sm:$0xff]
    %v4802 = vld [vmem:[#allocation11 + $0x498] sm:$0xff]
    %v4803 = vld [vmem:[#allocation11 + $0x4a0] sm:$0xff]
    %v4804 = vld [vmem:[#allocation11 + $0x4a8] sm:$0xff]
    %v4805 = vld [vmem:[#allocation11 + $0x4b0] sm:$0xff]
    %v4806 = vld [vmem:[#allocation11 + $0x4b8] sm:$0xff]
    %v4807 = vld [vmem:[#allocation11 + $0x4c0] sm:$0xff]
    %v4808 = vld [vmem:[#allocation11 + $0x4c8] sm:$0xff]
    %v4809 = vld [vmem:[#allocation11 + $0x4d0] sm:$0xff]
    %v4810 = vld [vmem:[#allocation11 + $0x4d8] sm:$0xff]
    %v4811 = vld [vmem:[#allocation11 + $0x4e0] sm:$0xff]
    %v4812 = vld [vmem:[#allocation11 + $0x4e8] sm:$0xff]
    %v4813 = vld [vmem:[#allocation11 + $0x4f0] sm:$0xff]
    %v4814 = vld [vmem:[#allocation11 + $0x4f8] sm:$0xff]
    %v4815 = vld [vmem:[#allocation11 + $0x500] sm:$0xff]
    %v4816 = vld [vmem:[#allocation11 + $0x508] sm:$0xff]
    %v4817 = vld [vmem:[#allocation11 + $0x510] sm:$0xff]
    %v4818 = vld [vmem:[#allocation11 + $0x518] sm:$0xff]
    %v4819 = vld [vmem:[#allocation11 + $0x520] sm:$0xff]
    %v4820 = vld [vmem:[#allocation11 + $0x528] sm:$0xff]
    %v4821 = vld [vmem:[#allocation11 + $0x530] sm:$0xff]
    %v4822 = vld [vmem:[#allocation11 + $0x538] sm:$0xff]
    %v4823 = vld [vmem:[#allocation11 + $0x540] sm:$0xff]
    %v4824 = vld [vmem:[#allocation11 + $0x548] sm:$0xff]
    %v4825 = vld [vmem:[#allocation11 + $0x550] sm:$0xff]
    %v4826 = vld [vmem:[#allocation11 + $0x558] sm:$0xff]
    %v4827 = vld [vmem:[#allocation11 + $0x560] sm:$0xff]
    %v4828 = vld [vmem:[#allocation11 + $0x568] sm:$0xff]
    %v4829 = vld [vmem:[#allocation11 + $0x570] sm:$0xff]
    %v4830 = vld [vmem:[#allocation11 + $0x578] sm:$0xff]
    %v4831 = vld [vmem:[#allocation11 + $0x580] sm:$0xff]
    %v4832 = vld [vmem:[#allocation11 + $0x588] sm:$0xff]
    %v4833 = vld [vmem:[#allocation11 + $0x590] sm:$0xff]
    %v4834 = vld [vmem:[#allocation11 + $0x598] sm:$0xff]
    %v4835 = vld [vmem:[#allocation11 + $0x5a0] sm:$0xff]
    %v4836 = vld [vmem:[#allocation11 + $0x5a8] sm:$0xff]
    %v4837 = vld [vmem:[#allocation11 + $0x5b0] sm:$0xff]
    %v4838 = vld [vmem:[#allocation11 + $0x5b8] sm:$0xff]
    %v4839 = vld [vmem:[#allocation11 + $0x5c0] sm:$0xff]
    %v4840 = vld [vmem:[#allocation11 + $0x5c8] sm:$0xff]
    %v4841 = vld [vmem:[#allocation11 + $0x5d0] sm:$0xff]
    %v4842 = vld [vmem:[#allocation11 + $0x5d8] sm:$0xff]
    %v4843 = vld [vmem:[#allocation11 + $0x5e0] sm:$0xff]
    %v4844 = vld [vmem:[#allocation11 + $0x5e8] sm:$0xff]
    %v4845 = vld [vmem:[#allocation11 + $0x5f0] sm:$0xff]
    %v4846 = vld [vmem:[#allocation11 + $0x5f8] sm:$0xff]
    %v4847 = vld [vmem:[#allocation11 + $0x600] sm:$0xff]
    %v4848 = vld [vmem:[#allocation11 + $0x608] sm:$0xff]
    %v4849 = vld [vmem:[#allocation11 + $0x610] sm:$0xff]
    %v4850 = vld [vmem:[#allocation11 + $0x618] sm:$0xff]
    %v4851 = vld [vmem:[#allocation11 + $0x620] sm:$0xff]
    %v4852 = vld [vmem:[#allocation11 + $0x628] sm:$0xff]
    %v4853 = vld [vmem:[#allocation11 + $0x630] sm:$0xff]
    %v4854 = vld [vmem:[#allocation11 + $0x638] sm:$0xff]
    %v4855 = vld [vmem:[#allocation11 + $0x640] sm:$0xff]
    %v4856 = vld [vmem:[#allocation11 + $0x648] sm:$0xff]
    %v4857 = vld [vmem:[#allocation11 + $0x650] sm:$0xff]
    %v4858 = vld [vmem:[#allocation11 + $0x658] sm:$0xff]
    %v4859 = vld [vmem:[#allocation11 + $0x660] sm:$0xff]
    %v4860 = vld [vmem:[#allocation11 + $0x668] sm:$0xff]
    %v4861 = vld [vmem:[#allocation11 + $0x670] sm:$0xff]
    %v4862 = vld [vmem:[#allocation11 + $0x678] sm:$0xff]
    %v4863 = vld [vmem:[#allocation11 + $0x680] sm:$0xff]
    %v4864 = vld [vmem:[#allocation11 + $0x688] sm:$0xff]
    %v4865 = vld [vmem:[#allocation11 + $0x690] sm:$0xff]
    %v4866 = vld [vmem:[#allocation11 + $0x698] sm:$0xff]
    %v4867 = vld [vmem:[#allocation11 + $0x6a0] sm:$0xff]
    %v4868 = vld [vmem:[#allocation11 + $0x6a8] sm:$0xff]
    %v4869 = vld [vmem:[#allocation11 + $0x6b0] sm:$0xff]
    %v4870 = vld [vmem:[#allocation11 + $0x6b8] sm:$0xff]
    %v4871 = vld [vmem:[#allocation11 + $0x6c0] sm:$0xff]
    %v4872 = vld [vmem:[#allocation11 + $0x6c8] sm:$0xff]
    %v4873 = vld [vmem:[#allocation11 + $0x6d0] sm:$0xff]
    %v4874 = vld [vmem:[#allocation11 + $0x6d8] sm:$0xff]
    %v4875 = vld [vmem:[#allocation11 + $0x6e0] sm:$0xff]
    %v4876 = vld [vmem:[#allocation11 + $0x6e8] sm:$0xff]
    %v4877 = vld [vmem:[#allocation11 + $0x6f0] sm:$0xff]
    %v4878 = vld [vmem:[#allocation11 + $0x6f8] sm:$0xff]
    %v4879 = vld [vmem:[#allocation11 + $0x700] sm:$0xff]
    %v4880 = vld [vmem:[#allocation11 + $0x708] sm:$0xff]
    %v4881 = vld [vmem:[#allocation11 + $0x710] sm:$0xff]
    %v4882 = vld [vmem:[#allocation11 + $0x718] sm:$0xff]
    %v4883 = vld [vmem:[#allocation11 + $0x720] sm:$0xff]
    %v4884 = vld [vmem:[#allocation11 + $0x728] sm:$0xff]
    %v4885 = vld [vmem:[#allocation11 + $0x730] sm:$0xff]
    %v4886 = vld [vmem:[#allocation11 + $0x738] sm:$0xff]
    %v4887 = vld [vmem:[#allocation11 + $0x740] sm:$0xff]
    %v4888 = vld [vmem:[#allocation11 + $0x748] sm:$0xff]
    %v4889 = vld [vmem:[#allocation11 + $0x750] sm:$0xff]
    %v4890 = vld [vmem:[#allocation11 + $0x758] sm:$0xff]
    %v4891 = vld [vmem:[#allocation11 + $0x760] sm:$0xff]
    %v4892 = vld [vmem:[#allocation11 + $0x768] sm:$0xff]
    %v4893 = vld [vmem:[#allocation11 + $0x770] sm:$0xff]
    %v4894 = vld [vmem:[#allocation11 + $0x778] sm:$0xff]
    %v4895 = vld [vmem:[#allocation11 + $0x780] sm:$0xff]
    %v4896 = vld [vmem:[#allocation11 + $0x788] sm:$0xff]
    %v4897 = vld [vmem:[#allocation11 + $0x790] sm:$0xff]
    %v4898 = vld [vmem:[#allocation11 + $0x798] sm:$0xff]
    %v4899 = vld [vmem:[#allocation11 + $0x7a0] sm:$0xff]
    %v4900 = vld [vmem:[#allocation11 + $0x7a8] sm:$0xff]
    %v4901 = vld [vmem:[#allocation11 + $0x7b0] sm:$0xff]
    %v4902 = vld [vmem:[#allocation11 + $0x7b8] sm:$0xff]
    %v4903 = vld [vmem:[#allocation11 + $0x7c0] sm:$0xff]
    %v4904 = vld [vmem:[#allocation11 + $0x7c8] sm:$0xff]
    %v4905 = vld [vmem:[#allocation11 + $0x7d0] sm:$0xff]
    %v4906 = vld [vmem:[#allocation11 + $0x7d8] sm:$0xff]
    %v4907 = vld [vmem:[#allocation11 + $0x7e0] sm:$0xff]
    %v4908 = vld [vmem:[#allocation11 + $0x7e8] sm:$0xff]
    %v4909 = vld [vmem:[#allocation11 + $0x7f0] sm:$0xff]
    %v4910 = vld [vmem:[#allocation11 + $0x7f8] sm:$0xff]
    %4911 = vmatprep.subr.mxu0 %v4656
    %4912 = vmatpush1.msra.mxu0 %v4655
    %4913 = vmatprep.subr.mxu0 %v4664
    %4914 = vmatpush1.msra.mxu0 %v4663
    %4915 = vmatprep.subr.mxu0 %v4672
    %4916 = vmatpush1.msra.mxu0 %v4671
    %4917 = vmatprep.subr.mxu0 %v4680
    %4918 = vmatpush1.msra.mxu0 %v4679
    %4919 = vmatprep.subr.mxu0 %v4688
    %4920 = vmatpush1.msra.mxu0 %v4687
    %4921 = vmatprep.subr.mxu0 %v4696
    %4922 = vmatpush1.msra.mxu0 %v4695
    %4923 = vmatprep.subr.mxu0 %v4704
    %4924 = vmatpush1.msra.mxu0 %v4703
    %4925 = vmatprep.subr.mxu0 %v4712
    %4926 = vmatpush1.msra.mxu0 %v4711
    %4927 = vmatprep.subr.mxu0 %v4720
    %4928 = vmatpush1.msra.mxu0 %v4719
    %4929 = vmatprep.subr.mxu0 %v4728
    %4930 = vmatpush1.msra.mxu0 %v4727
    %4931 = vmatprep.subr.mxu0 %v4736
    %4932 = vmatpush1.msra.mxu0 %v4735
    %4933 = vmatprep.subr.mxu0 %v4744
    %4934 = vmatpush1.msra.mxu0 %v4743
    %4935 = vmatprep.subr.mxu0 %v4752
    %4936 = vmatpush1.msra.mxu0 %v4751
    %4937 = vmatprep.subr.mxu0 %v4760
    %4938 = vmatpush1.msra.mxu0 %v4759
    %4939 = vmatprep.subr.mxu0 %v4768
    %4940 = vmatpush1.msra.mxu0 %v4767
    %4941 = vmatprep.subr.mxu0 %v4776
    %4942 = vmatpush1.msra.mxu0 %v4775
    %4943 = vmatprep.subr.mxu0 %v4784
    %4944 = vmatpush1.msra.mxu0 %v4783
    %4945 = vmatprep.subr.mxu0 %v4792
    %4946 = vmatpush1.msra.mxu0 %v4791
    %4947 = vmatprep.subr.mxu0 %v4800
    %4948 = vmatpush1.msra.mxu0 %v4799
    %4949 = vmatprep.subr.mxu0 %v4808
    %4950 = vmatpush1.msra.mxu0 %v4807
    %4951 = vmatprep.subr.mxu0 %v4816
    %4952 = vmatpush1.msra.mxu0 %v4815
    %4953 = vmatprep.subr.mxu0 %v4824
    %4954 = vmatpush1.msra.mxu0 %v4823
    %4955 = vmatprep.subr.mxu0 %v4832
    %4956 = vmatpush1.msra.mxu0 %v4831
    %4957 = vmatprep.subr.mxu0 %v4840
    %4958 = vmatpush1.msra.mxu0 %v4839
    %4959 = vmatprep.subr.mxu0 %v4848
    %4960 = vmatpush1.msra.mxu0 %v4847
    %4961 = vmatprep.subr.mxu0 %v4856
    %4962 = vmatpush1.msra.mxu0 %v4855
    %4963 = vmatprep.subr.mxu0 %v4864
    %4964 = vmatpush1.msra.mxu0 %v4863
    %4965 = vmatprep.subr.mxu0 %v4872
    %4966 = vmatpush1.msra.mxu0 %v4871
    %4967 = vmatprep.subr.mxu0 %v4880
    %4968 = vmatpush1.msra.mxu0 %v4879
    %4969 = vmatprep.subr.mxu0 %v4888
    %4970 = vmatpush1.msra.mxu0 %v4887
    %4971 = vmatprep.subr.mxu0 %v4896
    %4972 = vmatpush1.msra.mxu0 %v4895
    %4973 = vmatprep.subr.mxu0 %v4904
    %4974 = vmatpush1.msra.mxu0 %v4903
    %4975 = vmatprep.mubr.f32.mxu0 %v4654
    %4976 = vmatmul.mubr.f32.gmra.mrb[0].mxu0 %v4653
    %v4977 = vpop.f32.mrb[0].mxu0
    %v4978 = vadd.f32 0.0, %v4977
    %v4979 = vpop.f32.mrb[0].mxu0
    %v4980 = vadd.f32 0.0, %v4979
    %4981 = vdwg.mxu0
    %4982 = vmatprep.subr.mxu0 %v4658
    %4983 = vmatpush1.msra.mxu0 %v4657
    %4984 = vmatprep.subr.mxu0 %v4666
    %4985 = vmatpush1.msra.mxu0 %v4665
    %4986 = vmatprep.subr.mxu0 %v4674
    %4987 = vmatpush1.msra.mxu0 %v4673
    %4988 = vmatprep.subr.mxu0 %v4682
    %4989 = vmatpush1.msra.mxu0 %v4681
    %4990 = vmatprep.subr.mxu0 %v4690
    %4991 = vmatpush1.msra.mxu0 %v4689
    %4992 = vmatprep.subr.mxu0 %v4698
    %4993 = vmatpush1.msra.mxu0 %v4697
    %4994 = vmatprep.subr.mxu0 %v4706
    %4995 = vmatpush1.msra.mxu0 %v4705
    %4996 = vmatprep.subr.mxu0 %v4714
    %4997 = vmatpush1.msra.mxu0 %v4713
    %4998 = vmatprep.subr.mxu0 %v4722
    %4999 = vmatpush1.msra.mxu0 %v4721
    %5000 = vmatprep.subr.mxu0 %v4730
    %5001 = vmatpush1.msra.mxu0 %v4729
    %5002 = vmatprep.subr.mxu0 %v4738
    %5003 = vmatpush1.msra.mxu0 %v4737
    %5004 = vmatprep.subr.mxu0 %v4746
    %5005 = vmatpush1.msra.mxu0 %v4745
    %5006 = vmatprep.subr.mxu0 %v4754
    %5007 = vmatpush1.msra.mxu0 %v4753
    %5008 = vmatprep.subr.mxu0 %v4762
    %5009 = vmatpush1.msra.mxu0 %v4761
    %5010 = vmatprep.subr.mxu0 %v4770
    %5011 = vmatpush1.msra.mxu0 %v4769
    %5012 = vmatprep.subr.mxu0 %v4778
    %5013 = vmatpush1.msra.mxu0 %v4777
    %5014 = vmatprep.subr.mxu0 %v4786
    %5015 = vmatpush1.msra.mxu0 %v4785
    %5016 = vmatprep.subr.mxu0 %v4794
    %5017 = vmatpush1.msra.mxu0 %v4793
    %5018 = vmatprep.subr.mxu0 %v4802
    %5019 = vmatpush1.msra.mxu0 %v4801
    %5020 = vmatprep.subr.mxu0 %v4810
    %5021 = vmatpush1.msra.mxu0 %v4809
    %5022 = vmatprep.subr.mxu0 %v4818
    %5023 = vmatpush1.msra.mxu0 %v4817
    %5024 = vmatprep.subr.mxu0 %v4826
    %5025 = vmatpush1.msra.mxu0 %v4825
    %5026 = vmatprep.subr.mxu0 %v4834
    %5027 = vmatpush1.msra.mxu0 %v4833
    %5028 = vmatprep.subr.mxu0 %v4842
    %5029 = vmatpush1.msra.mxu0 %v4841
    %5030 = vmatprep.subr.mxu0 %v4850
    %5031 = vmatpush1.msra.mxu0 %v4849
    %5032 = vmatprep.subr.mxu0 %v4858
    %5033 = vmatpush1.msra.mxu0 %v4857
    %5034 = vmatprep.subr.mxu0 %v4866
    %5035 = vmatpush1.msra.mxu0 %v4865
    %5036 = vmatprep.subr.mxu0 %v4874
    %5037 = vmatpush1.msra.mxu0 %v4873
    %5038 = vmatprep.subr.mxu0 %v4882
    %5039 = vmatpush1.msra.mxu0 %v4881
    %5040 = vmatprep.subr.mxu0 %v4890
    %5041 = vmatpush1.msra.mxu0 %v4889
    %5042 = vmatprep.subr.mxu0 %v4898
    %5043 = vmatpush1.msra.mxu0 %v4897
    %5044 = vmatprep.subr.mxu0 %v4906
    %5045 = vmatpush1.msra.mxu0 %v4905
    %5046 = vmatprep.mubr.f32.mxu0 %v4654
    %5047 = vmatmul.mubr.f32.gmra.mrb[0].mxu0 %v4653
    %v5048 = vpop.f32.mrb[0].mxu0
    %v5049 = vadd.f32 0.0, %v5048
    %v5050 = vpop.f32.mrb[0].mxu0
    %v5051 = vadd.f32 0.0, %v5050
    %5052 = vdwg.mxu0
    %5053 = vmatprep.subr.mxu0 %v4660
    %5054 = vmatpush1.msra.mxu0 %v4659
    %5055 = vmatprep.subr.mxu0 %v4668
    %5056 = vmatpush1.msra.mxu0 %v4667
    %5057 = vmatprep.subr.mxu0 %v4676
    %5058 = vmatpush1.msra.mxu0 %v4675
    %5059 = vmatprep.subr.mxu0 %v4684
    %5060 = vmatpush1.msra.mxu0 %v4683
    %5061 = vmatprep.subr.mxu0 %v4692
    %5062 = vmatpush1.msra.mxu0 %v4691
    %5063 = vmatprep.subr.mxu0 %v4700
    %5064 = vmatpush1.msra.mxu0 %v4699
    %5065 = vmatprep.subr.mxu0 %v4708
    %5066 = vmatpush1.msra.mxu0 %v4707
    %5067 = vmatprep.subr.mxu0 %v4716
    %5068 = vmatpush1.msra.mxu0 %v4715
    %5069 = vmatprep.subr.mxu0 %v4724
    %5070 = vmatpush1.msra.mxu0 %v4723
    %5071 = vmatprep.subr.mxu0 %v4732
    %5072 = vmatpush1.msra.mxu0 %v4731
    %5073 = vmatprep.subr.mxu0 %v4740
    %5074 = vmatpush1.msra.mxu0 %v4739
    %5075 = vmatprep.subr.mxu0 %v4748
    %5076 = vmatpush1.msra.mxu0 %v4747
    %5077 = vmatprep.subr.mxu0 %v4756
    %5078 = vmatpush1.msra.mxu0 %v4755
    %5079 = vmatprep.subr.mxu0 %v4764
    %5080 = vmatpush1.msra.mxu0 %v4763
    %5081 = vmatprep.subr.mxu0 %v4772
    %5082 = vmatpush1.msra.mxu0 %v4771
    %5083 = vmatprep.subr.mxu0 %v4780
    %5084 = vmatpush1.msra.mxu0 %v4779
    %5085 = vmatprep.subr.mxu0 %v4788
    %5086 = vmatpush1.msra.mxu0 %v4787
    %5087 = vmatprep.subr.mxu0 %v4796
    %5088 = vmatpush1.msra.mxu0 %v4795
    %5089 = vmatprep.subr.mxu0 %v4804
    %5090 = vmatpush1.msra.mxu0 %v4803
    %5091 = vmatprep.subr.mxu0 %v4812
    %5092 = vmatpush1.msra.mxu0 %v4811
    %5093 = vmatprep.subr.mxu0 %v4820
    %5094 = vmatpush1.msra.mxu0 %v4819
    %5095 = vmatprep.subr.mxu0 %v4828
    %5096 = vmatpush1.msra.mxu0 %v4827
    %5097 = vmatprep.subr.mxu0 %v4836
    %5098 = vmatpush1.msra.mxu0 %v4835
    %5099 = vmatprep.subr.mxu0 %v4844
    %5100 = vmatpush1.msra.mxu0 %v4843
    %5101 = vmatprep.subr.mxu0 %v4852
    %5102 = vmatpush1.msra.mxu0 %v4851
    %5103 = vmatprep.subr.mxu0 %v4860
    %5104 = vmatpush1.msra.mxu0 %v4859
    %5105 = vmatprep.subr.mxu0 %v4868
    %5106 = vmatpush1.msra.mxu0 %v4867
    %5107 = vmatprep.subr.mxu0 %v4876
    %5108 = vmatpush1.msra.mxu0 %v4875
    %5109 = vmatprep.subr.mxu0 %v4884
    %5110 = vmatpush1.msra.mxu0 %v4883
    %5111 = vmatprep.subr.mxu0 %v4892
    %5112 = vmatpush1.msra.mxu0 %v4891
    %5113 = vmatprep.subr.mxu0 %v4900
    %5114 = vmatpush1.msra.mxu0 %v4899
    %5115 = vmatprep.subr.mxu0 %v4908
    %5116 = vmatpush1.msra.mxu0 %v4907
    %5117 = vmatprep.mubr.f32.mxu0 %v4654
    %5118 = vmatmul.mubr.f32.gmra.mrb[0].mxu0 %v4653
    %v5119 = vpop.f32.mrb[0].mxu0
    %v5120 = vadd.f32 0.0, %v5119
    %v5121 = vpop.f32.mrb[0].mxu0
    %v5122 = vadd.f32 0.0, %v5121
    %5123 = vdwg.mxu0
    %5124 = vmatprep.subr.mxu0 %v4662
    %5125 = vmatpush1.msra.mxu0 %v4661
    %5126 = vmatprep.subr.mxu0 %v4670
    %5127 = vmatpush1.msra.mxu0 %v4669
    %5128 = vmatprep.subr.mxu0 %v4678
    %5129 = vmatpush1.msra.mxu0 %v4677
    %5130 = vmatprep.subr.mxu0 %v4686
    %5131 = vmatpush1.msra.mxu0 %v4685
    %5132 = vmatprep.subr.mxu0 %v4694
    %5133 = vmatpush1.msra.mxu0 %v4693
    %5134 = vmatprep.subr.mxu0 %v4702
    %5135 = vmatpush1.msra.mxu0 %v4701
    %5136 = vmatprep.subr.mxu0 %v4710
    %5137 = vmatpush1.msra.mxu0 %v4709
    %5138 = vmatprep.subr.mxu0 %v4718
    %5139 = vmatpush1.msra.mxu0 %v4717
    %5140 = vmatprep.subr.mxu0 %v4726
    %5141 = vmatpush1.msra.mxu0 %v4725
    %5142 = vmatprep.subr.mxu0 %v4734
    %5143 = vmatpush1.msra.mxu0 %v4733
    %5144 = vmatprep.subr.mxu0 %v4742
    %5145 = vmatpush1.msra.mxu0 %v4741
    %5146 = vmatprep.subr.mxu0 %v4750
    %5147 = vmatpush1.msra.mxu0 %v4749
    %5148 = vmatprep.subr.mxu0 %v4758
    %5149 = vmatpush1.msra.mxu0 %v4757
    %5150 = vmatprep.subr.mxu0 %v4766
    %5151 = vmatpush1.msra.mxu0 %v4765
    %5152 = vmatprep.subr.mxu0 %v4774
    %5153 = vmatpush1.msra.mxu0 %v4773
    %5154 = vmatprep.subr.mxu0 %v4782
    %5155 = vmatpush1.msra.mxu0 %v4781
    %5156 = vmatprep.subr.mxu0 %v4790
    %5157 = vmatpush1.msra.mxu0 %v4789
    %5158 = vmatprep.subr.mxu0 %v4798
    %5159 = vmatpush1.msra.mxu0 %v4797
    %5160 = vmatprep.subr.mxu0 %v4806
    %5161 = vmatpush1.msra.mxu0 %v4805
    %5162 = vmatprep.subr.mxu0 %v4814
    %5163 = vmatpush1.msra.mxu0 %v4813
    %5164 = vmatprep.subr.mxu0 %v4822
    %5165 = vmatpush1.msra.mxu0 %v4821
    %5166 = vmatprep.subr.mxu0 %v4830
    %5167 = vmatpush1.msra.mxu0 %v4829
    %5168 = vmatprep.subr.mxu0 %v4838
    %5169 = vmatpush1.msra.mxu0 %v4837
    %5170 = vmatprep.subr.mxu0 %v4846
    %5171 = vmatpush1.msra.mxu0 %v4845
    %5172 = vmatprep.subr.mxu0 %v4854
    %5173 = vmatpush1.msra.mxu0 %v4853
    %5174 = vmatprep.subr.mxu0 %v4862
    %5175 = vmatpush1.msra.mxu0 %v4861
    %5176 = vmatprep.subr.mxu0 %v4870
    %5177 = vmatpush1.msra.mxu0 %v4869
    %5178 = vmatprep.subr.mxu0 %v4878
    %5179 = vmatpush1.msra.mxu0 %v4877
    %5180 = vmatprep.subr.mxu0 %v4886
    %5181 = vmatpush1.msra.mxu0 %v4885
    %5182 = vmatprep.subr.mxu0 %v4894
    %5183 = vmatpush1.msra.mxu0 %v4893
    %5184 = vmatprep.subr.mxu0 %v4902
    %5185 = vmatpush1.msra.mxu0 %v4901
    %5186 = vmatprep.subr.mxu0 %v4910
    %5187 = vmatpush1.msra.mxu0 %v4909
    %5188 = vmatprep.mubr.f32.mxu0 %v4654
    %5189 = vmatmul.mubr.f32.gmra.mrb[0].mxu0 %v4653
    %v5190 = vpop.f32.mrb[0].mxu0
    %v5191 = vadd.f32 0.0, %v5190
    %v5192 = vpop.f32.mrb[0].mxu0
    %v5193 = vadd.f32 0.0, %v5192
    %5194 = vdwg.mxu0
    %v5195 = vld [vmem:[%s2142] sm:$0xff]
    %v5196 = vld [vmem:[%s2142 + $0x8] sm:$0xff]
    %v5197 = vld [vmem:[%s2142 + $0x10] sm:$0xff]
    %v5198 = vld [vmem:[%s2142 + $0x18] sm:$0xff]
    %v5199 = vadd.f32 %v5195, %v4978
    %v5200 = vadd.f32 %v5196, %v4980
    %v5201 = vadd.f32 %v5197, %v5049
    %v5202 = vadd.f32 %v5198, %v5051
    %v5203 = vld [vmem:[%s2133 + $0x20] sm:$0xff]
    %v5204 = vld [vmem:[%s2133 + $0x28] sm:$0xff]
    %v5205 = vld [vmem:[%s2133 + $0x30] sm:$0xff]
    %v5206 = vld [vmem:[%s2133 + $0x38] sm:$0xff]
    %v5207 = vadd.f32 %v5203, %v5120
    %v5208 = vadd.f32 %v5204, %v5122
    %v5209 = vadd.f32 %v5205, %v5191
    %v5210 = vadd.f32 %v5206, %v5193
    %v5211 = vxor.u32 %v5199, 2147483648
    %v5212 = vmul.f32 %v5211, 1.442695
    %v5213 = vpow.pop %v5212
    %v5214 = vadd.f32 %v5213, 1.0
    %v5215 = vrcp.pop %v5214
    %v5216 = vmul.f32 1.0, %v5215
    %v5217 = vxor.u32 %v5200, 2147483648
    %v5218 = vmul.f32 %v5217, 1.442695
    %v5219 = vpow.pop %v5218
    %v5220 = vadd.f32 %v5219, 1.0
    %v5221 = vrcp.pop %v5220
    %v5222 = vmul.f32 1.0, %v5221
    %v5223 = vtanh.pop %v5201
    %v5224 = vxor.u32 %v5202, 2147483648
    %v5225 = vmul.f32 %v5224, 1.442695
    %v5226 = vpow.pop %v5225
    %v5227 = vadd.f32 %v5226, 1.0
    %v5228 = vrcp.pop %v5227
    %v5229 = vmul.f32 1.0, %v5228
    %v5230 = vmul.f32 %v5222, %v4622
    %v5231 = vmul.f32 %v5216, %v5223
    %v5232 = vadd.f32 %v5230, %v5231
    %v5233 = vtanh.pop %v5232
    %v5234 = vmul.f32 %v5229, %v5233
    %v5235 = vxor.u32 %v5207, 2147483648
    %v5236 = vmul.f32 %v5235, 1.442695
    %v5237 = vpow.pop %v5236
    %v5238 = vadd.f32 %v5237, 1.0
    %v5239 = vrcp.pop %v5238
    %v5240 = vmul.f32 1.0, %v5239
    %v5241 = vxor.u32 %v5208, 2147483648
    %v5242 = vmul.f32 %v5241, 1.442695
    %v5243 = vpow.pop %v5242
    %v5244 = vadd.f32 %v5243, 1.0
    %v5245 = vrcp.pop %v5244
    %v5246 = vmul.f32 1.0, %v5245
    %v5247 = vtanh.pop %v5209
    %v5248 = vxor.u32 %v5210, 2147483648
    %v5249 = vmul.f32 %v5248, 1.442695
    %v5250 = vpow.pop %v5249
    %v5251 = vadd.f32 %v5250, 1.0
    %v5252 = vrcp.pop %v5251
    %v5253 = vmul.f32 1.0, %v5252
    %v5254 = vmul.f32 %v5246, %v4646
    %v5255 = vmul.f32 %v5240, %v5247
    %v5256 = vadd.f32 %v5254, %v5255
    %v5257 = vtanh.pop %v5256
    %v5258 = vmul.f32 %v5253, %v5257
    %5259 = vst [vmem:[#allocation4] sm:$0xff] %v5234
    %5260 = vst [vmem:[#allocation4 + $0x8] sm:$0xff] %v5258
    %5261 = vst [vmem:[%s2203] sm:$0xff] %v5234
    %5262 = vst [vmem:[%s2201 + $0x8] sm:$0xff] %v5258
    %v5263 = vld [vmem:[#allocation4] sm:$0xff]
    %v5264 = vld [vmem:[#allocation4 + $0x8] sm:$0xff]
    %v5265 = vld [vmem:[#allocation11] sm:$0xff]
    %v5266 = vld [vmem:[#allocation11 + $0x8] sm:$0xff]
    %v5267 = vld [vmem:[#allocation11 + $0x10] sm:$0xff]
    %v5268 = vld [vmem:[#allocation11 + $0x18] sm:$0xff]
    %v5269 = vld [vmem:[#allocation11 + $0x20] sm:$0xff]
    %v5270 = vld [vmem:[#allocation11 + $0x28] sm:$0xff]
    %v5271 = vld [vmem:[#allocation11 + $0x30] sm:$0xff]
    %v5272 = vld [vmem:[#allocation11 + $0x38] sm:$0xff]
    %v5273 = vld [vmem:[#allocation11 + $0x40] sm:$0xff]
    %v5274 = vld [vmem:[#allocation11 + $0x48] sm:$0xff]
    %v5275 = vld [vmem:[#allocation11 + $0x50] sm:$0xff]
    %v5276 = vld [vmem:[#allocation11 + $0x58] sm:$0xff]
    %v5277 = vld [vmem:[#allocation11 + $0x60] sm:$0xff]
    %v5278 = vld [vmem:[#allocation11 + $0x68] sm:$0xff]
    %v5279 = vld [vmem:[#allocation11 + $0x70] sm:$0xff]
    %v5280 = vld [vmem:[#allocation11 + $0x78] sm:$0xff]
    %v5281 = vld [vmem:[#allocation11 + $0x80] sm:$0xff]
    %v5282 = vld [vmem:[#allocation11 + $0x88] sm:$0xff]
    %v5283 = vld [vmem:[#allocation11 + $0x90] sm:$0xff]
    %v5284 = vld [vmem:[#allocation11 + $0x98] sm:$0xff]
    %v5285 = vld [vmem:[#allocation11 + $0xa0] sm:$0xff]
    %v5286 = vld [vmem:[#allocation11 + $0xa8] sm:$0xff]
    %v5287 = vld [vmem:[#allocation11 + $0xb0] sm:$0xff]
    %v5288 = vld [vmem:[#allocation11 + $0xb8] sm:$0xff]
    %v5289 = vld [vmem:[#allocation11 + $0xc0] sm:$0xff]
    %v5290 = vld [vmem:[#allocation11 + $0xc8] sm:$0xff]
    %v5291 = vld [vmem:[#allocation11 + $0xd0] sm:$0xff]
    %v5292 = vld [vmem:[#allocation11 + $0xd8] sm:$0xff]
    %v5293 = vld [vmem:[#allocation11 + $0xe0] sm:$0xff]
    %v5294 = vld [vmem:[#allocation11 + $0xe8] sm:$0xff]
    %v5295 = vld [vmem:[#allocation11 + $0xf0] sm:$0xff]
    %v5296 = vld [vmem:[#allocation11 + $0xf8] sm:$0xff]
    %v5297 = vld [vmem:[#allocation11 + $0x100] sm:$0xff]
    %v5298 = vld [vmem:[#allocation11 + $0x108] sm:$0xff]
    %v5299 = vld [vmem:[#allocation11 + $0x110] sm:$0xff]
    %v5300 = vld [vmem:[#allocation11 + $0x118] sm:$0xff]
    %v5301 = vld [vmem:[#allocation11 + $0x120] sm:$0xff]
    %v5302 = vld [vmem:[#allocation11 + $0x128] sm:$0xff]
    %v5303 = vld [vmem:[#allocation11 + $0x130] sm:$0xff]
    %v5304 = vld [vmem:[#allocation11 + $0x138] sm:$0xff]
    %v5305 = vld [vmem:[#allocation11 + $0x140] sm:$0xff]
    %v5306 = vld [vmem:[#allocation11 + $0x148] sm:$0xff]
    %v5307 = vld [vmem:[#allocation11 + $0x150] sm:$0xff]
    %v5308 = vld [vmem:[#allocation11 + $0x158] sm:$0xff]
    %v5309 = vld [vmem:[#allocation11 + $0x160] sm:$0xff]
    %v5310 = vld [vmem:[#allocation11 + $0x168] sm:$0xff]
    %v5311 = vld [vmem:[#allocation11 + $0x170] sm:$0xff]
    %v5312 = vld [vmem:[#allocation11 + $0x178] sm:$0xff]
    %v5313 = vld [vmem:[#allocation11 + $0x180] sm:$0xff]
    %v5314 = vld [vmem:[#allocation11 + $0x188] sm:$0xff]
    %v5315 = vld [vmem:[#allocation11 + $0x190] sm:$0xff]
    %v5316 = vld [vmem:[#allocation11 + $0x198] sm:$0xff]
    %v5317 = vld [vmem:[#allocation11 + $0x1a0] sm:$0xff]
    %v5318 = vld [vmem:[#allocation11 + $0x1a8] sm:$0xff]
    %v5319 = vld [vmem:[#allocation11 + $0x1b0] sm:$0xff]
    %v5320 = vld [vmem:[#allocation11 + $0x1b8] sm:$0xff]
    %v5321 = vld [vmem:[#allocation11 + $0x1c0] sm:$0xff]
    %v5322 = vld [vmem:[#allocation11 + $0x1c8] sm:$0xff]
    %v5323 = vld [vmem:[#allocation11 + $0x1d0] sm:$0xff]
    %v5324 = vld [vmem:[#allocation11 + $0x1d8] sm:$0xff]
    %v5325 = vld [vmem:[#allocation11 + $0x1e0] sm:$0xff]
    %v5326 = vld [vmem:[#allocation11 + $0x1e8] sm:$0xff]
    %v5327 = vld [vmem:[#allocation11 + $0x1f0] sm:$0xff]
    %v5328 = vld [vmem:[#allocation11 + $0x1f8] sm:$0xff]
    %v5329 = vld [vmem:[#allocation11 + $0x200] sm:$0xff]
    %v5330 = vld [vmem:[#allocation11 + $0x208] sm:$0xff]
    %v5331 = vld [vmem:[#allocation11 + $0x210] sm:$0xff]
    %v5332 = vld [vmem:[#allocation11 + $0x218] sm:$0xff]
    %v5333 = vld [vmem:[#allocation11 + $0x220] sm:$0xff]
    %v5334 = vld [vmem:[#allocation11 + $0x228] sm:$0xff]
    %v5335 = vld [vmem:[#allocation11 + $0x230] sm:$0xff]
    %v5336 = vld [vmem:[#allocation11 + $0x238] sm:$0xff]
    %v5337 = vld [vmem:[#allocation11 + $0x240] sm:$0xff]
    %v5338 = vld [vmem:[#allocation11 + $0x248] sm:$0xff]
    %v5339 = vld [vmem:[#allocation11 + $0x250] sm:$0xff]
    %v5340 = vld [vmem:[#allocation11 + $0x258] sm:$0xff]
    %v5341 = vld [vmem:[#allocation11 + $0x260] sm:$0xff]
    %v5342 = vld [vmem:[#allocation11 + $0x268] sm:$0xff]
    %v5343 = vld [vmem:[#allocation11 + $0x270] sm:$0xff]
    %v5344 = vld [vmem:[#allocation11 + $0x278] sm:$0xff]
    %v5345 = vld [vmem:[#allocation11 + $0x280] sm:$0xff]
    %v5346 = vld [vmem:[#allocation11 + $0x288] sm:$0xff]
    %v5347 = vld [vmem:[#allocation11 + $0x290] sm:$0xff]
    %v5348 = vld [vmem:[#allocation11 + $0x298] sm:$0xff]
    %v5349 = vld [vmem:[#allocation11 + $0x2a0] sm:$0xff]
    %v5350 = vld [vmem:[#allocation11 + $0x2a8] sm:$0xff]
    %v5351 = vld [vmem:[#allocation11 + $0x2b0] sm:$0xff]
    %v5352 = vld [vmem:[#allocation11 + $0x2b8] sm:$0xff]
    %v5353 = vld [vmem:[#allocation11 + $0x2c0] sm:$0xff]
    %v5354 = vld [vmem:[#allocation11 + $0x2c8] sm:$0xff]
    %v5355 = vld [vmem:[#allocation11 + $0x2d0] sm:$0xff]
    %v5356 = vld [vmem:[#allocation11 + $0x2d8] sm:$0xff]
    %v5357 = vld [vmem:[#allocation11 + $0x2e0] sm:$0xff]
    %v5358 = vld [vmem:[#allocation11 + $0x2e8] sm:$0xff]
    %v5359 = vld [vmem:[#allocation11 + $0x2f0] sm:$0xff]
    %v5360 = vld [vmem:[#allocation11 + $0x2f8] sm:$0xff]
    %v5361 = vld [vmem:[#allocation11 + $0x300] sm:$0xff]
    %v5362 = vld [vmem:[#allocation11 + $0x308] sm:$0xff]
    %v5363 = vld [vmem:[#allocation11 + $0x310] sm:$0xff]
    %v5364 = vld [vmem:[#allocation11 + $0x318] sm:$0xff]
    %v5365 = vld [vmem:[#allocation11 + $0x320] sm:$0xff]
    %v5366 = vld [vmem:[#allocation11 + $0x328] sm:$0xff]
    %v5367 = vld [vmem:[#allocation11 + $0x330] sm:$0xff]
    %v5368 = vld [vmem:[#allocation11 + $0x338] sm:$0xff]
    %v5369 = vld [vmem:[#allocation11 + $0x340] sm:$0xff]
    %v5370 = vld [vmem:[#allocation11 + $0x348] sm:$0xff]
    %v5371 = vld [vmem:[#allocation11 + $0x350] sm:$0xff]
    %v5372 = vld [vmem:[#allocation11 + $0x358] sm:$0xff]
    %v5373 = vld [vmem:[#allocation11 + $0x360] sm:$0xff]
    %v5374 = vld [vmem:[#allocation11 + $0x368] sm:$0xff]
    %v5375 = vld [vmem:[#allocation11 + $0x370] sm:$0xff]
    %v5376 = vld [vmem:[#allocation11 + $0x378] sm:$0xff]
    %v5377 = vld [vmem:[#allocation11 + $0x380] sm:$0xff]
    %v5378 = vld [vmem:[#allocation11 + $0x388] sm:$0xff]
    %v5379 = vld [vmem:[#allocation11 + $0x390] sm:$0xff]
    %v5380 = vld [vmem:[#allocation11 + $0x398] sm:$0xff]
    %v5381 = vld [vmem:[#allocation11 + $0x3a0] sm:$0xff]
    %v5382 = vld [vmem:[#allocation11 + $0x3a8] sm:$0xff]
    %v5383 = vld [vmem:[#allocation11 + $0x3b0] sm:$0xff]
    %v5384 = vld [vmem:[#allocation11 + $0x3b8] sm:$0xff]
    %v5385 = vld [vmem:[#allocation11 + $0x3c0] sm:$0xff]
    %v5386 = vld [vmem:[#allocation11 + $0x3c8] sm:$0xff]
    %v5387 = vld [vmem:[#allocation11 + $0x3d0] sm:$0xff]
    %v5388 = vld [vmem:[#allocation11 + $0x3d8] sm:$0xff]
    %v5389 = vld [vmem:[#allocation11 + $0x3e0] sm:$0xff]
    %v5390 = vld [vmem:[#allocation11 + $0x3e8] sm:$0xff]
    %v5391 = vld [vmem:[#allocation11 + $0x3f0] sm:$0xff]
    %v5392 = vld [vmem:[#allocation11 + $0x3f8] sm:$0xff]
    %v5393 = vld [vmem:[#allocation11 + $0x400] sm:$0xff]
    %v5394 = vld [vmem:[#allocation11 + $0x408] sm:$0xff]
    %v5395 = vld [vmem:[#allocation11 + $0x410] sm:$0xff]
    %v5396 = vld [vmem:[#allocation11 + $0x418] sm:$0xff]
    %v5397 = vld [vmem:[#allocation11 + $0x420] sm:$0xff]
    %v5398 = vld [vmem:[#allocation11 + $0x428] sm:$0xff]
    %v5399 = vld [vmem:[#allocation11 + $0x430] sm:$0xff]
    %v5400 = vld [vmem:[#allocation11 + $0x438] sm:$0xff]
    %v5401 = vld [vmem:[#allocation11 + $0x440] sm:$0xff]
    %v5402 = vld [vmem:[#allocation11 + $0x448] sm:$0xff]
    %v5403 = vld [vmem:[#allocation11 + $0x450] sm:$0xff]
    %v5404 = vld [vmem:[#allocation11 + $0x458] sm:$0xff]
    %v5405 = vld [vmem:[#allocation11 + $0x460] sm:$0xff]
    %v5406 = vld [vmem:[#allocation11 + $0x468] sm:$0xff]
    %v5407 = vld [vmem:[#allocation11 + $0x470] sm:$0xff]
    %v5408 = vld [vmem:[#allocation11 + $0x478] sm:$0xff]
    %v5409 = vld [vmem:[#allocation11 + $0x480] sm:$0xff]
    %v5410 = vld [vmem:[#allocation11 + $0x488] sm:$0xff]
    %v5411 = vld [vmem:[#allocation11 + $0x490] sm:$0xff]
    %v5412 = vld [vmem:[#allocation11 + $0x498] sm:$0xff]
    %v5413 = vld [vmem:[#allocation11 + $0x4a0] sm:$0xff]
    %v5414 = vld [vmem:[#allocation11 + $0x4a8] sm:$0xff]
    %v5415 = vld [vmem:[#allocation11 + $0x4b0] sm:$0xff]
    %v5416 = vld [vmem:[#allocation11 + $0x4b8] sm:$0xff]
    %v5417 = vld [vmem:[#allocation11 + $0x4c0] sm:$0xff]
    %v5418 = vld [vmem:[#allocation11 + $0x4c8] sm:$0xff]
    %v5419 = vld [vmem:[#allocation11 + $0x4d0] sm:$0xff]
    %v5420 = vld [vmem:[#allocation11 + $0x4d8] sm:$0xff]
    %v5421 = vld [vmem:[#allocation11 + $0x4e0] sm:$0xff]
    %v5422 = vld [vmem:[#allocation11 + $0x4e8] sm:$0xff]
    %v5423 = vld [vmem:[#allocation11 + $0x4f0] sm:$0xff]
    %v5424 = vld [vmem:[#allocation11 + $0x4f8] sm:$0xff]
    %v5425 = vld [vmem:[#allocation11 + $0x500] sm:$0xff]
    %v5426 = vld [vmem:[#allocation11 + $0x508] sm:$0xff]
    %v5427 = vld [vmem:[#allocation11 + $0x510] sm:$0xff]
    %v5428 = vld [vmem:[#allocation11 + $0x518] sm:$0xff]
    %v5429 = vld [vmem:[#allocation11 + $0x520] sm:$0xff]
    %v5430 = vld [vmem:[#allocation11 + $0x528] sm:$0xff]
    %v5431 = vld [vmem:[#allocation11 + $0x530] sm:$0xff]
    %v5432 = vld [vmem:[#allocation11 + $0x538] sm:$0xff]
    %v5433 = vld [vmem:[#allocation11 + $0x540] sm:$0xff]
    %v5434 = vld [vmem:[#allocation11 + $0x548] sm:$0xff]
    %v5435 = vld [vmem:[#allocation11 + $0x550] sm:$0xff]
    %v5436 = vld [vmem:[#allocation11 + $0x558] sm:$0xff]
    %v5437 = vld [vmem:[#allocation11 + $0x560] sm:$0xff]
    %v5438 = vld [vmem:[#allocation11 + $0x568] sm:$0xff]
    %v5439 = vld [vmem:[#allocation11 + $0x570] sm:$0xff]
    %v5440 = vld [vmem:[#allocation11 + $0x578] sm:$0xff]
    %v5441 = vld [vmem:[#allocation11 + $0x580] sm:$0xff]
    %v5442 = vld [vmem:[#allocation11 + $0x588] sm:$0xff]
    %v5443 = vld [vmem:[#allocation11 + $0x590] sm:$0xff]
    %v5444 = vld [vmem:[#allocation11 + $0x598] sm:$0xff]
    %v5445 = vld [vmem:[#allocation11 + $0x5a0] sm:$0xff]
    %v5446 = vld [vmem:[#allocation11 + $0x5a8] sm:$0xff]
    %v5447 = vld [vmem:[#allocation11 + $0x5b0] sm:$0xff]
    %v5448 = vld [vmem:[#allocation11 + $0x5b8] sm:$0xff]
    %v5449 = vld [vmem:[#allocation11 + $0x5c0] sm:$0xff]
    %v5450 = vld [vmem:[#allocation11 + $0x5c8] sm:$0xff]
    %v5451 = vld [vmem:[#allocation11 + $0x5d0] sm:$0xff]
    %v5452 = vld [vmem:[#allocation11 + $0x5d8] sm:$0xff]
    %v5453 = vld [vmem:[#allocation11 + $0x5e0] sm:$0xff]
    %v5454 = vld [vmem:[#allocation11 + $0x5e8] sm:$0xff]
    %v5455 = vld [vmem:[#allocation11 + $0x5f0] sm:$0xff]
    %v5456 = vld [vmem:[#allocation11 + $0x5f8] sm:$0xff]
    %v5457 = vld [vmem:[#allocation11 + $0x600] sm:$0xff]
    %v5458 = vld [vmem:[#allocation11 + $0x608] sm:$0xff]
    %v5459 = vld [vmem:[#allocation11 + $0x610] sm:$0xff]
    %v5460 = vld [vmem:[#allocation11 + $0x618] sm:$0xff]
    %v5461 = vld [vmem:[#allocation11 + $0x620] sm:$0xff]
    %v5462 = vld [vmem:[#allocation11 + $0x628] sm:$0xff]
    %v5463 = vld [vmem:[#allocation11 + $0x630] sm:$0xff]
    %v5464 = vld [vmem:[#allocation11 + $0x638] sm:$0xff]
    %v5465 = vld [vmem:[#allocation11 + $0x640] sm:$0xff]
    %v5466 = vld [vmem:[#allocation11 + $0x648] sm:$0xff]
    %v5467 = vld [vmem:[#allocation11 + $0x650] sm:$0xff]
    %v5468 = vld [vmem:[#allocation11 + $0x658] sm:$0xff]
    %v5469 = vld [vmem:[#allocation11 + $0x660] sm:$0xff]
    %v5470 = vld [vmem:[#allocation11 + $0x668] sm:$0xff]
    %v5471 = vld [vmem:[#allocation11 + $0x670] sm:$0xff]
    %v5472 = vld [vmem:[#allocation11 + $0x678] sm:$0xff]
    %v5473 = vld [vmem:[#allocation11 + $0x680] sm:$0xff]
    %v5474 = vld [vmem:[#allocation11 + $0x688] sm:$0xff]
    %v5475 = vld [vmem:[#allocation11 + $0x690] sm:$0xff]
    %v5476 = vld [vmem:[#allocation11 + $0x698] sm:$0xff]
    %v5477 = vld [vmem:[#allocation11 + $0x6a0] sm:$0xff]
    %v5478 = vld [vmem:[#allocation11 + $0x6a8] sm:$0xff]
    %v5479 = vld [vmem:[#allocation11 + $0x6b0] sm:$0xff]
    %v5480 = vld [vmem:[#allocation11 + $0x6b8] sm:$0xff]
    %v5481 = vld [vmem:[#allocation11 + $0x6c0] sm:$0xff]
    %v5482 = vld [vmem:[#allocation11 + $0x6c8] sm:$0xff]
    %v5483 = vld [vmem:[#allocation11 + $0x6d0] sm:$0xff]
    %v5484 = vld [vmem:[#allocation11 + $0x6d8] sm:$0xff]
    %v5485 = vld [vmem:[#allocation11 + $0x6e0] sm:$0xff]
    %v5486 = vld [vmem:[#allocation11 + $0x6e8] sm:$0xff]
    %v5487 = vld [vmem:[#allocation11 + $0x6f0] sm:$0xff]
    %v5488 = vld [vmem:[#allocation11 + $0x6f8] sm:$0xff]
    %v5489 = vld [vmem:[#allocation11 + $0x700] sm:$0xff]
    %v5490 = vld [vmem:[#allocation11 + $0x708] sm:$0xff]
    %v5491 = vld [vmem:[#allocation11 + $0x710] sm:$0xff]
    %v5492 = vld [vmem:[#allocation11 + $0x718] sm:$0xff]
    %v5493 = vld [vmem:[#allocation11 + $0x720] sm:$0xff]
    %v5494 = vld [vmem:[#allocation11 + $0x728] sm:$0xff]
    %v5495 = vld [vmem:[#allocation11 + $0x730] sm:$0xff]
    %v5496 = vld [vmem:[#allocation11 + $0x738] sm:$0xff]
    %v5497 = vld [vmem:[#allocation11 + $0x740] sm:$0xff]
    %v5498 = vld [vmem:[#allocation11 + $0x748] sm:$0xff]
    %v5499 = vld [vmem:[#allocation11 + $0x750] sm:$0xff]
    %v5500 = vld [vmem:[#allocation11 + $0x758] sm:$0xff]
    %v5501 = vld [vmem:[#allocation11 + $0x760] sm:$0xff]
    %v5502 = vld [vmem:[#allocation11 + $0x768] sm:$0xff]
    %v5503 = vld [vmem:[#allocation11 + $0x770] sm:$0xff]
    %v5504 = vld [vmem:[#allocation11 + $0x778] sm:$0xff]
    %v5505 = vld [vmem:[#allocation11 + $0x780] sm:$0xff]
    %v5506 = vld [vmem:[#allocation11 + $0x788] sm:$0xff]
    %v5507 = vld [vmem:[#allocation11 + $0x790] sm:$0xff]
    %v5508 = vld [vmem:[#allocation11 + $0x798] sm:$0xff]
    %v5509 = vld [vmem:[#allocation11 + $0x7a0] sm:$0xff]
    %v5510 = vld [vmem:[#allocation11 + $0x7a8] sm:$0xff]
    %v5511 = vld [vmem:[#allocation11 + $0x7b0] sm:$0xff]
    %v5512 = vld [vmem:[#allocation11 + $0x7b8] sm:$0xff]
    %v5513 = vld [vmem:[#allocation11 + $0x7c0] sm:$0xff]
    %v5514 = vld [vmem:[#allocation11 + $0x7c8] sm:$0xff]
    %v5515 = vld [vmem:[#allocation11 + $0x7d0] sm:$0xff]
    %v5516 = vld [vmem:[#allocation11 + $0x7d8] sm:$0xff]
    %v5517 = vld [vmem:[#allocation11 + $0x7e0] sm:$0xff]
    %v5518 = vld [vmem:[#allocation11 + $0x7e8] sm:$0xff]
    %v5519 = vld [vmem:[#allocation11 + $0x7f0] sm:$0xff]
    %v5520 = vld [vmem:[#allocation11 + $0x7f8] sm:$0xff]
    %5521 = vmatprep.subr.mxu0 %v5266
    %5522 = vmatpush1.msra.mxu0 %v5265
    %5523 = vmatprep.subr.mxu0 %v5274
    %5524 = vmatpush1.msra.mxu0 %v5273
    %5525 = vmatprep.subr.mxu0 %v5282
    %5526 = vmatpush1.msra.mxu0 %v5281
    %5527 = vmatprep.subr.mxu0 %v5290
    %5528 = vmatpush1.msra.mxu0 %v5289
    %5529 = vmatprep.subr.mxu0 %v5298
    %5530 = vmatpush1.msra.mxu0 %v5297
    %5531 = vmatprep.subr.mxu0 %v5306
    %5532 = vmatpush1.msra.mxu0 %v5305
    %5533 = vmatprep.subr.mxu0 %v5314
    %5534 = vmatpush1.msra.mxu0 %v5313
    %5535 = vmatprep.subr.mxu0 %v5322
    %5536 = vmatpush1.msra.mxu0 %v5321
    %5537 = vmatprep.subr.mxu0 %v5330
    %5538 = vmatpush1.msra.mxu0 %v5329
    %5539 = vmatprep.subr.mxu0 %v5338
    %5540 = vmatpush1.msra.mxu0 %v5337
    %5541 = vmatprep.subr.mxu0 %v5346
    %5542 = vmatpush1.msra.mxu0 %v5345
    %5543 = vmatprep.subr.mxu0 %v5354
    %5544 = vmatpush1.msra.mxu0 %v5353
    %5545 = vmatprep.subr.mxu0 %v5362
    %5546 = vmatpush1.msra.mxu0 %v5361
    %5547 = vmatprep.subr.mxu0 %v5370
    %5548 = vmatpush1.msra.mxu0 %v5369
    %5549 = vmatprep.subr.mxu0 %v5378
    %5550 = vmatpush1.msra.mxu0 %v5377
    %5551 = vmatprep.subr.mxu0 %v5386
    %5552 = vmatpush1.msra.mxu0 %v5385
    %5553 = vmatprep.subr.mxu0 %v5394
    %5554 = vmatpush1.msra.mxu0 %v5393
    %5555 = vmatprep.subr.mxu0 %v5402
    %5556 = vmatpush1.msra.mxu0 %v5401
    %5557 = vmatprep.subr.mxu0 %v5410
    %5558 = vmatpush1.msra.mxu0 %v5409
    %5559 = vmatprep.subr.mxu0 %v5418
    %5560 = vmatpush1.msra.mxu0 %v5417
    %5561 = vmatprep.subr.mxu0 %v5426
    %5562 = vmatpush1.msra.mxu0 %v5425
    %5563 = vmatprep.subr.mxu0 %v5434
    %5564 = vmatpush1.msra.mxu0 %v5433
    %5565 = vmatprep.subr.mxu0 %v5442
    %5566 = vmatpush1.msra.mxu0 %v5441
    %5567 = vmatprep.subr.mxu0 %v5450
    %5568 = vmatpush1.msra.mxu0 %v5449
    %5569 = vmatprep.subr.mxu0 %v5458
    %5570 = vmatpush1.msra.mxu0 %v5457
    %5571 = vmatprep.subr.mxu0 %v5466
    %5572 = vmatpush1.msra.mxu0 %v5465
    %5573 = vmatprep.subr.mxu0 %v5474
    %5574 = vmatpush1.msra.mxu0 %v5473
    %5575 = vmatprep.subr.mxu0 %v5482
    %5576 = vmatpush1.msra.mxu0 %v5481
    %5577 = vmatprep.subr.mxu0 %v5490
    %5578 = vmatpush1.msra.mxu0 %v5489
    %5579 = vmatprep.subr.mxu0 %v5498
    %5580 = vmatpush1.msra.mxu0 %v5497
    %5581 = vmatprep.subr.mxu0 %v5506
    %5582 = vmatpush1.msra.mxu0 %v5505
    %5583 = vmatprep.subr.mxu0 %v5514
    %5584 = vmatpush1.msra.mxu0 %v5513
    %5585 = vmatprep.mubr.f32.mxu0 %v5264
    %5586 = vmatmul.mubr.f32.gmra.mrb[0].mxu0 %v5263
    %v5587 = vpop.f32.mrb[0].mxu0
    %v5588 = vadd.f32 0.0, %v5587
    %v5589 = vpop.f32.mrb[0].mxu0
    %v5590 = vadd.f32 0.0, %v5589
    %5591 = vdwg.mxu0
    %5592 = vmatprep.subr.mxu0 %v5268
    %5593 = vmatpush1.msra.mxu0 %v5267
    %5594 = vmatprep.subr.mxu0 %v5276
    %5595 = vmatpush1.msra.mxu0 %v5275
    %5596 = vmatprep.subr.mxu0 %v5284
    %5597 = vmatpush1.msra.mxu0 %v5283
    %5598 = vmatprep.subr.mxu0 %v5292
    %5599 = vmatpush1.msra.mxu0 %v5291
    %5600 = vmatprep.subr.mxu0 %v5300
    %5601 = vmatpush1.msra.mxu0 %v5299
    %5602 = vmatprep.subr.mxu0 %v5308
    %5603 = vmatpush1.msra.mxu0 %v5307
    %5604 = vmatprep.subr.mxu0 %v5316
    %5605 = vmatpush1.msra.mxu0 %v5315
    %5606 = vmatprep.subr.mxu0 %v5324
    %5607 = vmatpush1.msra.mxu0 %v5323
    %5608 = vmatprep.subr.mxu0 %v5332
    %5609 = vmatpush1.msra.mxu0 %v5331
    %5610 = vmatprep.subr.mxu0 %v5340
    %5611 = vmatpush1.msra.mxu0 %v5339
    %5612 = vmatprep.subr.mxu0 %v5348
    %5613 = vmatpush1.msra.mxu0 %v5347
    %5614 = vmatprep.subr.mxu0 %v5356
    %5615 = vmatpush1.msra.mxu0 %v5355
    %5616 = vmatprep.subr.mxu0 %v5364
    %5617 = vmatpush1.msra.mxu0 %v5363
    %5618 = vmatprep.subr.mxu0 %v5372
    %5619 = vmatpush1.msra.mxu0 %v5371
    %5620 = vmatprep.subr.mxu0 %v5380
    %5621 = vmatpush1.msra.mxu0 %v5379
    %5622 = vmatprep.subr.mxu0 %v5388
    %5623 = vmatpush1.msra.mxu0 %v5387
    %5624 = vmatprep.subr.mxu0 %v5396
    %5625 = vmatpush1.msra.mxu0 %v5395
    %5626 = vmatprep.subr.mxu0 %v5404
    %5627 = vmatpush1.msra.mxu0 %v5403
    %5628 = vmatprep.subr.mxu0 %v5412
    %5629 = vmatpush1.msra.mxu0 %v5411
    %5630 = vmatprep.subr.mxu0 %v5420
    %5631 = vmatpush1.msra.mxu0 %v5419
    %5632 = vmatprep.subr.mxu0 %v5428
    %5633 = vmatpush1.msra.mxu0 %v5427
    %5634 = vmatprep.subr.mxu0 %v5436
    %5635 = vmatpush1.msra.mxu0 %v5435
    %5636 = vmatprep.subr.mxu0 %v5444
    %5637 = vmatpush1.msra.mxu0 %v5443
    %5638 = vmatprep.subr.mxu0 %v5452
    %5639 = vmatpush1.msra.mxu0 %v5451
    %5640 = vmatprep.subr.mxu0 %v5460
    %5641 = vmatpush1.msra.mxu0 %v5459
    %5642 = vmatprep.subr.mxu0 %v5468
    %5643 = vmatpush1.msra.mxu0 %v5467
    %5644 = vmatprep.subr.mxu0 %v5476
    %5645 = vmatpush1.msra.mxu0 %v5475
    %5646 = vmatprep.subr.mxu0 %v5484
    %5647 = vmatpush1.msra.mxu0 %v5483
    %5648 = vmatprep.subr.mxu0 %v5492
    %5649 = vmatpush1.msra.mxu0 %v5491
    %5650 = vmatprep.subr.mxu0 %v5500
    %5651 = vmatpush1.msra.mxu0 %v5499
    %5652 = vmatprep.subr.mxu0 %v5508
    %5653 = vmatpush1.msra.mxu0 %v5507
    %5654 = vmatprep.subr.mxu0 %v5516
    %5655 = vmatpush1.msra.mxu0 %v5515
    %5656 = vmatprep.mubr.f32.mxu0 %v5264
    %5657 = vmatmul.mubr.f32.gmra.mrb[0].mxu0 %v5263
    %v5658 = vpop.f32.mrb[0].mxu0
    %v5659 = vadd.f32 0.0, %v5658
    %v5660 = vpop.f32.mrb[0].mxu0
    %v5661 = vadd.f32 0.0, %v5660
    %5662 = vdwg.mxu0
    %5663 = vmatprep.subr.mxu0 %v5270
    %5664 = vmatpush1.msra.mxu0 %v5269
    %5665 = vmatprep.subr.mxu0 %v5278
    %5666 = vmatpush1.msra.mxu0 %v5277
    %5667 = vmatprep.subr.mxu0 %v5286
    %5668 = vmatpush1.msra.mxu0 %v5285
    %5669 = vmatprep.subr.mxu0 %v5294
    %5670 = vmatpush1.msra.mxu0 %v5293
    %5671 = vmatprep.subr.mxu0 %v5302
    %5672 = vmatpush1.msra.mxu0 %v5301
    %5673 = vmatprep.subr.mxu0 %v5310
    %5674 = vmatpush1.msra.mxu0 %v5309
    %5675 = vmatprep.subr.mxu0 %v5318
    %5676 = vmatpush1.msra.mxu0 %v5317
    %5677 = vmatprep.subr.mxu0 %v5326
    %5678 = vmatpush1.msra.mxu0 %v5325
    %5679 = vmatprep.subr.mxu0 %v5334
    %5680 = vmatpush1.msra.mxu0 %v5333
    %5681 = vmatprep.subr.mxu0 %v5342
    %5682 = vmatpush1.msra.mxu0 %v5341
    %5683 = vmatprep.subr.mxu0 %v5350
    %5684 = vmatpush1.msra.mxu0 %v5349
    %5685 = vmatprep.subr.mxu0 %v5358
    %5686 = vmatpush1.msra.mxu0 %v5357
    %5687 = vmatprep.subr.mxu0 %v5366
    %5688 = vmatpush1.msra.mxu0 %v5365
    %5689 = vmatprep.subr.mxu0 %v5374
    %5690 = vmatpush1.msra.mxu0 %v5373
    %5691 = vmatprep.subr.mxu0 %v5382
    %5692 = vmatpush1.msra.mxu0 %v5381
    %5693 = vmatprep.subr.mxu0 %v5390
    %5694 = vmatpush1.msra.mxu0 %v5389
    %5695 = vmatprep.subr.mxu0 %v5398
    %5696 = vmatpush1.msra.mxu0 %v5397
    %5697 = vmatprep.subr.mxu0 %v5406
    %5698 = vmatpush1.msra.mxu0 %v5405
    %5699 = vmatprep.subr.mxu0 %v5414
    %5700 = vmatpush1.msra.mxu0 %v5413
    %5701 = vmatprep.subr.mxu0 %v5422
    %5702 = vmatpush1.msra.mxu0 %v5421
    %5703 = vmatprep.subr.mxu0 %v5430
    %5704 = vmatpush1.msra.mxu0 %v5429
    %5705 = vmatprep.subr.mxu0 %v5438
    %5706 = vmatpush1.msra.mxu0 %v5437
    %5707 = vmatprep.subr.mxu0 %v5446
    %5708 = vmatpush1.msra.mxu0 %v5445
    %5709 = vmatprep.subr.mxu0 %v5454
    %5710 = vmatpush1.msra.mxu0 %v5453
    %5711 = vmatprep.subr.mxu0 %v5462
    %5712 = vmatpush1.msra.mxu0 %v5461
    %5713 = vmatprep.subr.mxu0 %v5470
    %5714 = vmatpush1.msra.mxu0 %v5469
    %5715 = vmatprep.subr.mxu0 %v5478
    %5716 = vmatpush1.msra.mxu0 %v5477
    %5717 = vmatprep.subr.mxu0 %v5486
    %5718 = vmatpush1.msra.mxu0 %v5485
    %5719 = vmatprep.subr.mxu0 %v5494
    %5720 = vmatpush1.msra.mxu0 %v5493
    %5721 = vmatprep.subr.mxu0 %v5502
    %5722 = vmatpush1.msra.mxu0 %v5501
    %5723 = vmatprep.subr.mxu0 %v5510
    %5724 = vmatpush1.msra.mxu0 %v5509
    %5725 = vmatprep.subr.mxu0 %v5518
    %5726 = vmatpush1.msra.mxu0 %v5517
    %5727 = vmatprep.mubr.f32.mxu0 %v5264
    %5728 = vmatmul.mubr.f32.gmra.mrb[0].mxu0 %v5263
    %v5729 = vpop.f32.mrb[0].mxu0
    %v5730 = vadd.f32 0.0, %v5729
    %v5731 = vpop.f32.mrb[0].mxu0
    %v5732 = vadd.f32 0.0, %v5731
    %5733 = vdwg.mxu0
    %5734 = vmatprep.subr.mxu0 %v5272
    %5735 = vmatpush1.msra.mxu0 %v5271
    %5736 = vmatprep.subr.mxu0 %v5280
    %5737 = vmatpush1.msra.mxu0 %v5279
    %5738 = vmatprep.subr.mxu0 %v5288
    %5739 = vmatpush1.msra.mxu0 %v5287
    %5740 = vmatprep.subr.mxu0 %v5296
    %5741 = vmatpush1.msra.mxu0 %v5295
    %5742 = vmatprep.subr.mxu0 %v5304
    %5743 = vmatpush1.msra.mxu0 %v5303
    %5744 = vmatprep.subr.mxu0 %v5312
    %5745 = vmatpush1.msra.mxu0 %v5311
    %5746 = vmatprep.subr.mxu0 %v5320
    %5747 = vmatpush1.msra.mxu0 %v5319
    %5748 = vmatprep.subr.mxu0 %v5328
    %5749 = vmatpush1.msra.mxu0 %v5327
    %5750 = vmatprep.subr.mxu0 %v5336
    %5751 = vmatpush1.msra.mxu0 %v5335
    %5752 = vmatprep.subr.mxu0 %v5344
    %5753 = vmatpush1.msra.mxu0 %v5343
    %5754 = vmatprep.subr.mxu0 %v5352
    %5755 = vmatpush1.msra.mxu0 %v5351
    %5756 = vmatprep.subr.mxu0 %v5360
    %5757 = vmatpush1.msra.mxu0 %v5359
    %5758 = vmatprep.subr.mxu0 %v5368
    %5759 = vmatpush1.msra.mxu0 %v5367
    %5760 = vmatprep.subr.mxu0 %v5376
    %5761 = vmatpush1.msra.mxu0 %v5375
    %5762 = vmatprep.subr.mxu0 %v5384
    %5763 = vmatpush1.msra.mxu0 %v5383
    %5764 = vmatprep.subr.mxu0 %v5392
    %5765 = vmatpush1.msra.mxu0 %v5391
    %5766 = vmatprep.subr.mxu0 %v5400
    %5767 = vmatpush1.msra.mxu0 %v5399
    %5768 = vmatprep.subr.mxu0 %v5408
    %5769 = vmatpush1.msra.mxu0 %v5407
    %5770 = vmatprep.subr.mxu0 %v5416
    %5771 = vmatpush1.msra.mxu0 %v5415
    %5772 = vmatprep.subr.mxu0 %v5424
    %5773 = vmatpush1.msra.mxu0 %v5423
    %5774 = vmatprep.subr.mxu0 %v5432
    %5775 = vmatpush1.msra.mxu0 %v5431
    %5776 = vmatprep.subr.mxu0 %v5440
    %5777 = vmatpush1.msra.mxu0 %v5439
    %5778 = vmatprep.subr.mxu0 %v5448
    %5779 = vmatpush1.msra.mxu0 %v5447
    %5780 = vmatprep.subr.mxu0 %v5456
    %5781 = vmatpush1.msra.mxu0 %v5455
    %5782 = vmatprep.subr.mxu0 %v5464
    %5783 = vmatpush1.msra.mxu0 %v5463
    %5784 = vmatprep.subr.mxu0 %v5472
    %5785 = vmatpush1.msra.mxu0 %v5471
    %5786 = vmatprep.subr.mxu0 %v5480
    %5787 = vmatpush1.msra.mxu0 %v5479
    %5788 = vmatprep.subr.mxu0 %v5488
    %5789 = vmatpush1.msra.mxu0 %v5487
    %5790 = vmatprep.subr.mxu0 %v5496
    %5791 = vmatpush1.msra.mxu0 %v5495
    %5792 = vmatprep.subr.mxu0 %v5504
    %5793 = vmatpush1.msra.mxu0 %v5503
    %5794 = vmatprep.subr.mxu0 %v5512
    %5795 = vmatpush1.msra.mxu0 %v5511
    %5796 = vmatprep.subr.mxu0 %v5520
    %5797 = vmatpush1.msra.mxu0 %v5519
    %5798 = vmatprep.mubr.f32.mxu0 %v5264
    %5799 = vmatmul.mubr.f32.gmra.mrb[0].mxu0 %v5263
    %v5800 = vpop.f32.mrb[0].mxu0
    %v5801 = vadd.f32 0.0, %v5800
    %v5802 = vpop.f32.mrb[0].mxu0
    %v5803 = vadd.f32 0.0, %v5802
    %5804 = vdwg.mxu0
    %v5805 = vld [vmem:[%s1529] sm:$0xff]
    %v5806 = vld [vmem:[%s1529 + $0x8] sm:$0xff]
    %v5807 = vld [vmem:[%s1529 + $0x10] sm:$0xff]
    %v5808 = vld [vmem:[%s1529 + $0x18] sm:$0xff]
    %v5809 = vadd.f32 %v5805, %v5588
    %v5810 = vadd.f32 %v5806, %v5590
    %v5811 = vadd.f32 %v5807, %v5659
    %v5812 = vadd.f32 %v5808, %v5661
    %v5813 = vld [vmem:[#allocation2 + $0x20] sm:$0xff]
    %v5814 = vld [vmem:[#allocation2 + $0x28] sm:$0xff]
    %v5815 = vld [vmem:[#allocation2 + $0x30] sm:$0xff]
    %v5816 = vld [vmem:[#allocation2 + $0x38] sm:$0xff]
    %v5817 = vadd.f32 %v5813, %v5730
    %v5818 = vadd.f32 %v5814, %v5732
    %v5819 = vadd.f32 %v5815, %v5801
    %v5820 = vadd.f32 %v5816, %v5803
    %v5821 = vxor.u32 %v5809, 2147483648
    %v5822 = vmul.f32 %v5821, 1.442695
    %v5823 = vpow.pop %v5822
    %v5824 = vadd.f32 %v5823, 1.0
    %v5825 = vrcp.pop %v5824
    %v5826 = vmul.f32 1.0, %v5825
    %v5827 = vxor.u32 %v5810, 2147483648
    %v5828 = vmul.f32 %v5827, 1.442695
    %v5829 = vpow.pop %v5828
    %v5830 = vadd.f32 %v5829, 1.0
    %v5831 = vrcp.pop %v5830
    %v5832 = vmul.f32 1.0, %v5831
    %v5833 = vtanh.pop %v5811
    %v5834 = vxor.u32 %v5812, 2147483648
    %v5835 = vmul.f32 %v5834, 1.442695
    %v5836 = vpow.pop %v5835
    %v5837 = vadd.f32 %v5836, 1.0
    %v5838 = vrcp.pop %v5837
    %v5839 = vmul.f32 1.0, %v5838
    %v5840 = vmul.f32 %v5832, %v5232
    %v5841 = vmul.f32 %v5826, %v5833
    %v5842 = vadd.f32 %v5840, %v5841
    %v5843 = vtanh.pop %v5842
    %v5844 = vmul.f32 %v5839, %v5843
    %v5845 = vxor.u32 %v5817, 2147483648
    %v5846 = vmul.f32 %v5845, 1.442695
    %v5847 = vpow.pop %v5846
    %v5848 = vadd.f32 %v5847, 1.0
    %v5849 = vrcp.pop %v5848
    %v5850 = vmul.f32 1.0, %v5849
    %v5851 = vxor.u32 %v5818, 2147483648
    %v5852 = vmul.f32 %v5851, 1.442695
    %v5853 = vpow.pop %v5852
    %v5854 = vadd.f32 %v5853, 1.0
    %v5855 = vrcp.pop %v5854
    %v5856 = vmul.f32 1.0, %v5855
    %v5857 = vtanh.pop %v5819
    %v5858 = vxor.u32 %v5820, 2147483648
    %v5859 = vmul.f32 %v5858, 1.442695
    %v5860 = vpow.pop %v5859
    %v5861 = vadd.f32 %v5860, 1.0
    %v5862 = vrcp.pop %v5861
    %v5863 = vmul.f32 1.0, %v5862
    %v5864 = vmul.f32 %v5856, %v5256
    %v5865 = vmul.f32 %v5850, %v5857
    %v5866 = vadd.f32 %v5864, %v5865
    %v5867 = vtanh.pop %v5866
    %v5868 = vmul.f32 %v5863, %v5867
    %5869 = vst [vmem:[#allocation4] sm:$0xff] %v5844
    %5870 = vst [vmem:[#allocation4 + $0x8] sm:$0xff] %v5868
    %5871 = vst [vmem:[%s1589] sm:$0xff] %v5844
    %5872 = vst [vmem:[#allocation3 + $0x8] sm:$0xff] %v5868
    %v5873 = vld [vmem:[#allocation3] sm:$0xff]
    %v5874 = vld [vmem:[#allocation3 + $0x8] sm:$0xff]
    %v5875 = vld [vmem:[#allocation3 + $0x10] sm:$0xff]
    %v5876 = vld [vmem:[#allocation3 + $0x18] sm:$0xff]
    %v5877 = vld [vmem:[#allocation3 + $0x20] sm:$0xff]
    %v5878 = vld [vmem:[#allocation3 + $0x28] sm:$0xff]
    %v5879 = vld [vmem:[#allocation3 + $0x30] sm:$0xff]
    %v5880 = vld [vmem:[#allocation3 + $0x38] sm:$0xff]
    %v5881 = vld [vmem:[#allocation3 + $0x40] sm:$0xff]
    %v5882 = vld [vmem:[#allocation3 + $0x48] sm:$0xff]
    %v5883 = vld [vmem:[#allocation3 + $0x50] sm:$0xff]
    %v5884 = vld [vmem:[#allocation3 + $0x58] sm:$0xff]
    %v5885 = vld [vmem:[#allocation3 + $0x60] sm:$0xff]
    %v5886 = vld [vmem:[#allocation3 + $0x68] sm:$0xff]
    %v5887 = vld [vmem:[#allocation3 + $0x70] sm:$0xff]
    %v5888 = vld [vmem:[#allocation3 + $0x78] sm:$0xff]
    %v5889 = vpack.c.bf16 %v5875, %v5873
    %v5890 = vpack.c.bf16 %v5876, %v5874
    %v5891 = vpack.c.bf16 %v5879, %v5877
    %v5892 = vpack.c.bf16 %v5880, %v5878
    %v5893 = vpack.c.bf16 %v5883, %v5881
    %v5894 = vpack.c.bf16 %v5884, %v5882
    %v5895 = vpack.c.bf16 %v5887, %v5885
    %v5896 = vpack.c.bf16 %v5888, %v5886
    %v5897 = vld [vmem:[#allocation13] sm:$0xff]
    %v5898 = vld [vmem:[#allocation13 + $0x8] sm:$0xff]
    %v5899 = vld [vmem:[#allocation13 + $0x10] sm:$0xff]
    %v5900 = vld [vmem:[#allocation13 + $0x18] sm:$0xff]
    %v5901 = vld [vmem:[#allocation13 + $0x20] sm:$0xff]
    %v5902 = vld [vmem:[#allocation13 + $0x28] sm:$0xff]
    %v5903 = vld [vmem:[#allocation13 + $0x30] sm:$0xff]
    %v5904 = vld [vmem:[#allocation13 + $0x38] sm:$0xff]
    %v5905 = vld [vmem:[#allocation13 + $0x40] sm:$0xff]
    %v5906 = vld [vmem:[#allocation13 + $0x48] sm:$0xff]
    %v5907 = vld [vmem:[#allocation13 + $0x50] sm:$0xff]
    %v5908 = vld [vmem:[#allocation13 + $0x58] sm:$0xff]
    %v5909 = vld [vmem:[#allocation13 + $0x60] sm:$0xff]
    %v5910 = vld [vmem:[#allocation13 + $0x68] sm:$0xff]
    %v5911 = vld [vmem:[#allocation13 + $0x70] sm:$0xff]
    %v5912 = vld [vmem:[#allocation13 + $0x78] sm:$0xff]
    %v5913 = vld [vmem:[#allocation13 + $0x80] sm:$0xff]
    %v5914 = vld [vmem:[#allocation13 + $0x88] sm:$0xff]
    %v5915 = vld [vmem:[#allocation13 + $0x90] sm:$0xff]
    %v5916 = vld [vmem:[#allocation13 + $0x98] sm:$0xff]
    %v5917 = vld [vmem:[#allocation13 + $0xa0] sm:$0xff]
    %v5918 = vld [vmem:[#allocation13 + $0xa8] sm:$0xff]
    %v5919 = vld [vmem:[#allocation13 + $0xb0] sm:$0xff]
    %v5920 = vld [vmem:[#allocation13 + $0xb8] sm:$0xff]
    %v5921 = vld [vmem:[#allocation13 + $0xc0] sm:$0xff]
    %v5922 = vld [vmem:[#allocation13 + $0xc8] sm:$0xff]
    %v5923 = vld [vmem:[#allocation13 + $0xd0] sm:$0xff]
    %v5924 = vld [vmem:[#allocation13 + $0xd8] sm:$0xff]
    %v5925 = vld [vmem:[#allocation13 + $0xe0] sm:$0xff]
    %v5926 = vld [vmem:[#allocation13 + $0xe8] sm:$0xff]
    %v5927 = vld [vmem:[#allocation13 + $0xf0] sm:$0xff]
    %v5928 = vld [vmem:[#allocation13 + $0xf8] sm:$0xff]
    %v5929 = vld [vmem:[#allocation13 + $0x100] sm:$0xff]
    %v5930 = vld [vmem:[#allocation13 + $0x108] sm:$0xff]
    %v5931 = vld [vmem:[#allocation13 + $0x110] sm:$0xff]
    %v5932 = vld [vmem:[#allocation13 + $0x118] sm:$0xff]
    %v5933 = vld [vmem:[#allocation13 + $0x120] sm:$0xff]
    %v5934 = vld [vmem:[#allocation13 + $0x128] sm:$0xff]
    %v5935 = vld [vmem:[#allocation13 + $0x130] sm:$0xff]
    %v5936 = vld [vmem:[#allocation13 + $0x138] sm:$0xff]
    %v5937 = vld [vmem:[#allocation13 + $0x140] sm:$0xff]
    %v5938 = vld [vmem:[#allocation13 + $0x148] sm:$0xff]
    %v5939 = vld [vmem:[#allocation13 + $0x150] sm:$0xff]
    %v5940 = vld [vmem:[#allocation13 + $0x158] sm:$0xff]
    %v5941 = vld [vmem:[#allocation13 + $0x160] sm:$0xff]
    %v5942 = vld [vmem:[#allocation13 + $0x168] sm:$0xff]
    %v5943 = vld [vmem:[#allocation13 + $0x170] sm:$0xff]
    %v5944 = vld [vmem:[#allocation13 + $0x178] sm:$0xff]
    %v5945 = vld [vmem:[#allocation13 + $0x180] sm:$0xff]
    %v5946 = vld [vmem:[#allocation13 + $0x188] sm:$0xff]
    %v5947 = vld [vmem:[#allocation13 + $0x190] sm:$0xff]
    %v5948 = vld [vmem:[#allocation13 + $0x198] sm:$0xff]
    %v5949 = vld [vmem:[#allocation13 + $0x1a0] sm:$0xff]
    %v5950 = vld [vmem:[#allocation13 + $0x1a8] sm:$0xff]
    %v5951 = vld [vmem:[#allocation13 + $0x1b0] sm:$0xff]
    %v5952 = vld [vmem:[#allocation13 + $0x1b8] sm:$0xff]
    %v5953 = vld [vmem:[#allocation13 + $0x1c0] sm:$0xff]
    %v5954 = vld [vmem:[#allocation13 + $0x1c8] sm:$0xff]
    %v5955 = vld [vmem:[#allocation13 + $0x1d0] sm:$0xff]
    %v5956 = vld [vmem:[#allocation13 + $0x1d8] sm:$0xff]
    %v5957 = vld [vmem:[#allocation13 + $0x1e0] sm:$0xff]
    %v5958 = vld [vmem:[#allocation13 + $0x1e8] sm:$0xff]
    %v5959 = vld [vmem:[#allocation13 + $0x1f0] sm:$0xff]
    %v5960 = vld [vmem:[#allocation13 + $0x1f8] sm:$0xff]
    %v5961 = vld [vmem:[%s5] sm:$0xf]
    %v5963 = vlaneseq
    %v5964 = vshrl.u32 %v5963, 7
    %v5965 = vsub.s32 0, %v5964
    %v5966 = vrot.slane %v5961, %v5965
    %v5967 = vlaneseq
    %v5968 = vshrl.u32 %v5967, 7
    %v5969 = vsub.s32 1, %v5968
    %v5970 = vrot.slane %v5961, %v5969
    %v5971 = vlaneseq
    %v5972 = vshrl.u32 %v5971, 7
    %v5973 = vsub.s32 2, %v5972
    %v5974 = vrot.slane %v5961, %v5973
    %v5975 = vlaneseq
    %v5976 = vshrl.u32 %v5975, 7
    %v5977 = vsub.s32 3, %v5976
    %v5978 = vrot.slane %v5961, %v5977
    %v6047 = vunpack.c.l.b16 %v5897
    %v6048 = vunpack.c.h.b16 %v5897
    %v6049 = vunpack.c.l.b16 %v5898
    %v6050 = vunpack.c.h.b16 %v5898
    %v6051 = vunpack.c.l.b16 %v5899
    %v6052 = vunpack.c.h.b16 %v5899
    %v6053 = vunpack.c.l.b16 %v5900
    %v6054 = vunpack.c.h.b16 %v5900
    %v6055 = vunpack.c.l.b16 %v5901
    %v6056 = vunpack.c.h.b16 %v5901
    %v6057 = vunpack.c.l.b16 %v5902
    %v6058 = vunpack.c.h.b16 %v5902
    %v6059 = vunpack.c.l.b16 %v5903
    %v6060 = vunpack.c.h.b16 %v5903
    %v6061 = vunpack.c.l.b16 %v5904
    %v6062 = vunpack.c.h.b16 %v5904
    %v6063 = vunpack.c.l.b16 %v5905
    %v6064 = vunpack.c.h.b16 %v5905
    %v6065 = vunpack.c.l.b16 %v5906
    %v6066 = vunpack.c.h.b16 %v5906
    %v6067 = vunpack.c.l.b16 %v5907
    %v6068 = vunpack.c.h.b16 %v5907
    %v6069 = vunpack.c.l.b16 %v5908
    %v6070 = vunpack.c.h.b16 %v5908
    %v6071 = vunpack.c.l.b16 %v5909
    %v6072 = vunpack.c.h.b16 %v5909
    %v6073 = vunpack.c.l.b16 %v5910
    %v6074 = vunpack.c.h.b16 %v5910
    %v6075 = vunpack.c.l.b16 %v5911
    %v6076 = vunpack.c.h.b16 %v5911
    %v6077 = vunpack.c.l.b16 %v5912
    %v6078 = vunpack.c.h.b16 %v5912
    %v6079 = vunpack.c.l.b16 %v5913
    %v6080 = vunpack.c.h.b16 %v5913
    %v6081 = vunpack.c.l.b16 %v5914
    %v6082 = vunpack.c.h.b16 %v5914
    %v6083 = vunpack.c.l.b16 %v5915
    %v6084 = vunpack.c.h.b16 %v5915
    %v6085 = vunpack.c.l.b16 %v5916
    %v6086 = vunpack.c.h.b16 %v5916
    %v6087 = vunpack.c.l.b16 %v5917
    %v6088 = vunpack.c.h.b16 %v5917
    %v6089 = vunpack.c.l.b16 %v5918
    %v6090 = vunpack.c.h.b16 %v5918
    %v6091 = vunpack.c.l.b16 %v5919
    %v6092 = vunpack.c.h.b16 %v5919
    %v6093 = vunpack.c.l.b16 %v5920
    %v6094 = vunpack.c.h.b16 %v5920
    %v6095 = vunpack.c.l.b16 %v5921
    %v6096 = vunpack.c.h.b16 %v5921
    %v6097 = vunpack.c.l.b16 %v5922
    %v6098 = vunpack.c.h.b16 %v5922
    %v6099 = vunpack.c.l.b16 %v5923
    %v6100 = vunpack.c.h.b16 %v5923
    %v6101 = vunpack.c.l.b16 %v5924
    %v6102 = vunpack.c.h.b16 %v5924
    %v6103 = vunpack.c.l.b16 %v5925
    %v6104 = vunpack.c.h.b16 %v5925
    %v6105 = vunpack.c.l.b16 %v5926
    %v6106 = vunpack.c.h.b16 %v5926
    %v6107 = vunpack.c.l.b16 %v5927
    %v6108 = vunpack.c.h.b16 %v5927
    %v6109 = vunpack.c.l.b16 %v5928
    %v6110 = vunpack.c.h.b16 %v5928
    %v6111 = vunpack.c.l.b16 %v5929
    %v6112 = vunpack.c.h.b16 %v5929
    %v6113 = vunpack.c.l.b16 %v5930
    %v6114 = vunpack.c.h.b16 %v5930
    %v6115 = vunpack.c.l.b16 %v5931
    %v6116 = vunpack.c.h.b16 %v5931
    %v6117 = vunpack.c.l.b16 %v5932
    %v6118 = vunpack.c.h.b16 %v5932
    %v6119 = vunpack.c.l.b16 %v5933
    %v6120 = vunpack.c.h.b16 %v5933
    %v6121 = vunpack.c.l.b16 %v5934
    %v6122 = vunpack.c.h.b16 %v5934
    %v6123 = vunpack.c.l.b16 %v5935
    %v6124 = vunpack.c.h.b16 %v5935
    %v6125 = vunpack.c.l.b16 %v5936
    %v6126 = vunpack.c.h.b16 %v5936
    %v6127 = vunpack.c.l.b16 %v5937
    %v6128 = vunpack.c.h.b16 %v5937
    %v6129 = vunpack.c.l.b16 %v5938
    %v6130 = vunpack.c.h.b16 %v5938
    %v6131 = vunpack.c.l.b16 %v5939
    %v6132 = vunpack.c.h.b16 %v5939
    %v6133 = vunpack.c.l.b16 %v5940
    %v6134 = vunpack.c.h.b16 %v5940
    %v6135 = vunpack.c.l.b16 %v5941
    %v6136 = vunpack.c.h.b16 %v5941
    %v6137 = vunpack.c.l.b16 %v5942
    %v6138 = vunpack.c.h.b16 %v5942
    %v6139 = vunpack.c.l.b16 %v5943
    %v6140 = vunpack.c.h.b16 %v5943
    %v6141 = vunpack.c.l.b16 %v5944
    %v6142 = vunpack.c.h.b16 %v5944
    %v6143 = vunpack.c.l.b16 %v5945
    %v6144 = vunpack.c.h.b16 %v5945
    %v6145 = vunpack.c.l.b16 %v5946
    %v6146 = vunpack.c.h.b16 %v5946
    %v6147 = vunpack.c.l.b16 %v5947
    %v6148 = vunpack.c.h.b16 %v5947
    %v6149 = vunpack.c.l.b16 %v5948
    %v6150 = vunpack.c.h.b16 %v5948
    %v6151 = vunpack.c.l.b16 %v5949
    %v6152 = vunpack.c.h.b16 %v5949
    %v6153 = vunpack.c.l.b16 %v5950
    %v6154 = vunpack.c.h.b16 %v5950
    %v6155 = vunpack.c.l.b16 %v5951
    %v6156 = vunpack.c.h.b16 %v5951
    %v6157 = vunpack.c.l.b16 %v5952
    %v6158 = vunpack.c.h.b16 %v5952
    %v6159 = vunpack.c.l.b16 %v5953
    %v6160 = vunpack.c.h.b16 %v5953
    %v6161 = vunpack.c.l.b16 %v5954
    %v6162 = vunpack.c.h.b16 %v5954
    %v6163 = vunpack.c.l.b16 %v5955
    %v6164 = vunpack.c.h.b16 %v5955
    %v6165 = vunpack.c.l.b16 %v5956
    %v6166 = vunpack.c.h.b16 %v5956
    %v6167 = vunpack.c.l.b16 %v5957
    %v6168 = vunpack.c.h.b16 %v5957
    %v6169 = vunpack.c.l.b16 %v5958
    %v6170 = vunpack.c.h.b16 %v5958
    %v6171 = vunpack.c.l.b16 %v5959
    %v6172 = vunpack.c.h.b16 %v5959
    %v6173 = vunpack.c.l.b16 %v5960
    %v6174 = vunpack.c.h.b16 %v5960
    %v6175 = vpack.c.b16 %v6051, %v6047
    %v6176 = vpack.c.b16 %v6052, %v6048
    %v6177 = vpack.c.b16 %v6053, %v6049
    %v6178 = vpack.c.b16 %v6054, %v6050
    %v6179 = vpack.c.b16 %v6059, %v6055
    %v6180 = vpack.c.b16 %v6060, %v6056
    %v6181 = vpack.c.b16 %v6061, %v6057
    %v6182 = vpack.c.b16 %v6062, %v6058
    %v6183 = vpack.c.b16 %v6067, %v6063
    %v6184 = vpack.c.b16 %v6068, %v6064
    %v6185 = vpack.c.b16 %v6069, %v6065
    %v6186 = vpack.c.b16 %v6070, %v6066
    %v6187 = vpack.c.b16 %v6075, %v6071
    %v6188 = vpack.c.b16 %v6076, %v6072
    %v6189 = vpack.c.b16 %v6077, %v6073
    %v6190 = vpack.c.b16 %v6078, %v6074
    %v6191 = vpack.c.b16 %v6083, %v6079
    %v6192 = vpack.c.b16 %v6084, %v6080
    %v6193 = vpack.c.b16 %v6085, %v6081
    %v6194 = vpack.c.b16 %v6086, %v6082
    %v6195 = vpack.c.b16 %v6091, %v6087
    %v6196 = vpack.c.b16 %v6092, %v6088
    %v6197 = vpack.c.b16 %v6093, %v6089
    %v6198 = vpack.c.b16 %v6094, %v6090
    %v6199 = vpack.c.b16 %v6099, %v6095
    %v6200 = vpack.c.b16 %v6100, %v6096
    %v6201 = vpack.c.b16 %v6101, %v6097
    %v6202 = vpack.c.b16 %v6102, %v6098
    %v6203 = vpack.c.b16 %v6107, %v6103
    %v6204 = vpack.c.b16 %v6108, %v6104
    %v6205 = vpack.c.b16 %v6109, %v6105
    %v6206 = vpack.c.b16 %v6110, %v6106
    %v6207 = vpack.c.b16 %v6115, %v6111
    %v6208 = vpack.c.b16 %v6116, %v6112
    %v6209 = vpack.c.b16 %v6117, %v6113
    %v6210 = vpack.c.b16 %v6118, %v6114
    %v6211 = vpack.c.b16 %v6123, %v6119
    %v6212 = vpack.c.b16 %v6124, %v6120
    %v6213 = vpack.c.b16 %v6125, %v6121
    %v6214 = vpack.c.b16 %v6126, %v6122
    %v6215 = vpack.c.b16 %v6131, %v6127
    %v6216 = vpack.c.b16 %v6132, %v6128
    %v6217 = vpack.c.b16 %v6133, %v6129
    %v6218 = vpack.c.b16 %v6134, %v6130
    %v6219 = vpack.c.b16 %v6139, %v6135
    %v6220 = vpack.c.b16 %v6140, %v6136
    %v6221 = vpack.c.b16 %v6141, %v6137
    %v6222 = vpack.c.b16 %v6142, %v6138
    %v6223 = vpack.c.b16 %v6147, %v6143
    %v6224 = vpack.c.b16 %v6148, %v6144
    %v6225 = vpack.c.b16 %v6149, %v6145
    %v6226 = vpack.c.b16 %v6150, %v6146
    %v6227 = vpack.c.b16 %v6155, %v6151
    %v6228 = vpack.c.b16 %v6156, %v6152
    %v6229 = vpack.c.b16 %v6157, %v6153
    %v6230 = vpack.c.b16 %v6158, %v6154
    %v6231 = vpack.c.b16 %v6163, %v6159
    %v6232 = vpack.c.b16 %v6164, %v6160
    %v6233 = vpack.c.b16 %v6165, %v6161
    %v6234 = vpack.c.b16 %v6166, %v6162
    %v6235 = vpack.c.b16 %v6171, %v6167
    %v6236 = vpack.c.b16 %v6172, %v6168
    %v6237 = vpack.c.b16 %v6173, %v6169
    %v6238 = vpack.c.b16 %v6174, %v6170
    %6303 = vmatprep.subr.bf16.mxu0 %v6176
    %6304 = vmatpush1.bf16.msra.mxu0 %v6175
    %6305 = vmatprep.subr.bf16.mxu0 %v6180
    %6306 = vmatpush1.bf16.msra.mxu0 %v6179
    %6307 = vmatprep.subr.bf16.mxu0 %v6184
    %6308 = vmatpush1.bf16.msra.mxu0 %v6183
    %6309 = vmatprep.subr.bf16.mxu0 %v6188
    %6310 = vmatpush1.bf16.msra.mxu0 %v6187
    %6311 = vmatprep.subr.bf16.mxu0 %v6192
    %6312 = vmatpush1.bf16.msra.mxu0 %v6191
    %6313 = vmatprep.subr.bf16.mxu0 %v6196
    %6314 = vmatpush1.bf16.msra.mxu0 %v6195
    %6315 = vmatprep.subr.bf16.mxu0 %v6200
    %6316 = vmatpush1.bf16.msra.mxu0 %v6199
    %6317 = vmatprep.subr.bf16.mxu0 %v6204
    %6318 = vmatpush1.bf16.msra.mxu0 %v6203
    %6319 = vmatprep.subr.bf16.mxu0 %v6208
    %6320 = vmatpush1.bf16.msra.mxu0 %v6207
    %6321 = vmatprep.subr.bf16.mxu0 %v6212
    %6322 = vmatpush1.bf16.msra.mxu0 %v6211
    %6323 = vmatprep.subr.bf16.mxu0 %v6216
    %6324 = vmatpush1.bf16.msra.mxu0 %v6215
    %6325 = vmatprep.subr.bf16.mxu0 %v6220
    %6326 = vmatpush1.bf16.msra.mxu0 %v6219
    %6327 = vmatprep.subr.bf16.mxu0 %v6224
    %6328 = vmatpush1.bf16.msra.mxu0 %v6223
    %6329 = vmatprep.subr.bf16.mxu0 %v6228
    %6330 = vmatpush1.bf16.msra.mxu0 %v6227
    %6331 = vmatprep.subr.bf16.mxu0 %v6232
    %6332 = vmatpush1.bf16.msra.mxu0 %v6231
    %6333 = vmatprep.subr.bf16.mxu0 %v6236
    %6334 = vmatpush1.bf16.msra.mxu0 %v6235
    %6335 = vmatprep.mubr.bf16.mxu0 %v5890
    %6336 = vmatmul.mubr.bf16.gmra.mrb[0].mxu0 %v5889
    %v6337 = vpop.f32.mrb[0].mxu0
    %v6338 = vadd.f32 %v5966, %v6337
    %v6339 = vpop.f32.mrb[0].mxu0
    %v6340 = vadd.f32 %v5970, %v6339
    %v6341 = vpop.f32.mrb[0].mxu0
    %v6342 = vadd.f32 %v5966, %v6341
    %v6343 = vpop.f32.mrb[0].mxu0
    %v6344 = vadd.f32 %v5970, %v6343
    %6345 = vmatprep.mubr.bf16.mxu0 %v5892
    %6346 = vmatmul.mubr.bf16.gmra.mrb[0].mxu0 %v5891
    %v6347 = vpop.f32.mrb[0].mxu0
    %v6348 = vadd.f32 %v5966, %v6347
    %v6349 = vpop.f32.mrb[0].mxu0
    %v6350 = vadd.f32 %v5970, %v6349
    %v6351 = vpop.f32.mrb[0].mxu0
    %v6352 = vadd.f32 %v5966, %v6351
    %v6353 = vpop.f32.mrb[0].mxu0
    %v6354 = vadd.f32 %v5970, %v6353
    %6355 = vmatprep.mubr.bf16.mxu0 %v5894
    %6356 = vmatmul.mubr.bf16.gmra.mrb[0].mxu0 %v5893
    %v6357 = vpop.f32.mrb[0].mxu0
    %v6358 = vadd.f32 %v5966, %v6357
    %v6359 = vpop.f32.mrb[0].mxu0
    %v6360 = vadd.f32 %v5970, %v6359
    %v6361 = vpop.f32.mrb[0].mxu0
    %v6362 = vadd.f32 %v5966, %v6361
    %v6363 = vpop.f32.mrb[0].mxu0
    %v6364 = vadd.f32 %v5970, %v6363
    %6365 = vmatprep.mubr.bf16.mxu0 %v5896
    %6366 = vmatmul.mubr.bf16.gmra.mrb[0].mxu0 %v5895
    %v6367 = vpop.f32.mrb[0].mxu0
    %v6368 = vadd.f32 %v5966, %v6367
    %v6369 = vpop.f32.mrb[0].mxu0
    %v6370 = vadd.f32 %v5970, %v6369
    %v6371 = vpop.f32.mrb[0].mxu0
    %v6372 = vadd.f32 %v5966, %v6371
    %v6373 = vpop.f32.mrb[0].mxu0
    %v6374 = vadd.f32 %v5970, %v6373
    %6375 = vdwg.mxu0
    %6376 = vmatprep.subr.bf16.mxu0 %v6178
    %6377 = vmatpush1.bf16.msra.mxu0 %v6177
    %6378 = vmatprep.subr.bf16.mxu0 %v6182
    %6379 = vmatpush1.bf16.msra.mxu0 %v6181
    %6380 = vmatprep.subr.bf16.mxu0 %v6186
    %6381 = vmatpush1.bf16.msra.mxu0 %v6185
    %6382 = vmatprep.subr.bf16.mxu0 %v6190
    %6383 = vmatpush1.bf16.msra.mxu0 %v6189
    %6384 = vmatprep.subr.bf16.mxu0 %v6194
    %6385 = vmatpush1.bf16.msra.mxu0 %v6193
    %6386 = vmatprep.subr.bf16.mxu0 %v6198
    %6387 = vmatpush1.bf16.msra.mxu0 %v6197
    %6388 = vmatprep.subr.bf16.mxu0 %v6202
    %6389 = vmatpush1.bf16.msra.mxu0 %v6201
    %6390 = vmatprep.subr.bf16.mxu0 %v6206
    %6391 = vmatpush1.bf16.msra.mxu0 %v6205
    %6392 = vmatprep.subr.bf16.mxu0 %v6210
    %6393 = vmatpush1.bf16.msra.mxu0 %v6209
    %6394 = vmatprep.subr.bf16.mxu0 %v6214
    %6395 = vmatpush1.bf16.msra.mxu0 %v6213
    %6396 = vmatprep.subr.bf16.mxu0 %v6218
    %6397 = vmatpush1.bf16.msra.mxu0 %v6217
    %6398 = vmatprep.subr.bf16.mxu0 %v6222
    %6399 = vmatpush1.bf16.msra.mxu0 %v6221
    %6400 = vmatprep.subr.bf16.mxu0 %v6226
    %6401 = vmatpush1.bf16.msra.mxu0 %v6225
    %6402 = vmatprep.subr.bf16.mxu0 %v6230
    %6403 = vmatpush1.bf16.msra.mxu0 %v6229
    %6404 = vmatprep.subr.bf16.mxu0 %v6234
    %6405 = vmatpush1.bf16.msra.mxu0 %v6233
    %6406 = vmatprep.subr.bf16.mxu0 %v6238
    %6407 = vmatpush1.bf16.msra.mxu0 %v6237
    %6408 = vmatprep.mubr.bf16.mxu0 %v5890
    %6409 = vmatmul.mubr.bf16.gmra.mrb[0].mxu0 %v5889
    %v6410 = vpop.f32.mrb[0].mxu0
    %v6411 = vadd.f32 %v5974, %v6410
    %v6412 = vpop.f32.mrb[0].mxu0
    %v6413 = vadd.f32 %v5978, %v6412
    %v6414 = vpop.f32.mrb[0].mxu0
    %v6415 = vadd.f32 %v5974, %v6414
    %v6416 = vpop.f32.mrb[0].mxu0
    %v6417 = vadd.f32 %v5978, %v6416
    %6418 = vmatprep.mubr.bf16.mxu0 %v5892
    %6419 = vmatmul.mubr.bf16.gmra.mrb[0].mxu0 %v5891
    %v6420 = vpop.f32.mrb[0].mxu0
    %v6421 = vadd.f32 %v5974, %v6420
    %v6422 = vpop.f32.mrb[0].mxu0
    %v6423 = vadd.f32 %v5978, %v6422
    %v6424 = vpop.f32.mrb[0].mxu0
    %v6425 = vadd.f32 %v5974, %v6424
    %v6426 = vpop.f32.mrb[0].mxu0
    %v6427 = vadd.f32 %v5978, %v6426
    %6428 = vmatprep.mubr.bf16.mxu0 %v5894
    %6429 = vmatmul.mubr.bf16.gmra.mrb[0].mxu0 %v5893
    %v6430 = vpop.f32.mrb[0].mxu0
    %v6431 = vadd.f32 %v5974, %v6430
    %v6432 = vpop.f32.mrb[0].mxu0
    %v6433 = vadd.f32 %v5978, %v6432
    %v6434 = vpop.f32.mrb[0].mxu0
    %v6435 = vadd.f32 %v5974, %v6434
    %v6436 = vpop.f32.mrb[0].mxu0
    %v6437 = vadd.f32 %v5978, %v6436
    %6438 = vmatprep.mubr.bf16.mxu0 %v5896
    %6439 = vmatmul.mubr.bf16.gmra.mrb[0].mxu0 %v5895
    %v6440 = vpop.f32.mrb[0].mxu0
    %v6441 = vadd.f32 %v5974, %v6440
    %v6442 = vpop.f32.mrb[0].mxu0
    %v6443 = vadd.f32 %v5978, %v6442
    %v6444 = vpop.f32.mrb[0].mxu0
    %v6445 = vadd.f32 %v5974, %v6444
    %v6446 = vpop.f32.mrb[0].mxu0
    %v6447 = vadd.f32 %v5978, %v6446
    %6448 = vdwg.mxu0
    %6449 = vst [vmem:[#allocation2] sm:$0xff] %v6338
    %6450 = vst [vmem:[#allocation2 + $0x8] sm:$0xff] %v6340
    %6451 = vst [vmem:[#allocation2 + $0x10] sm:$0xff] %v6411
    %6452 = vst [vmem:[#allocation2 + $0x18] sm:$0xff] %v6413
    %6453 = vst [vmem:[#allocation2 + $0x40] sm:$0xff] %v6342
    %6454 = vst [vmem:[#allocation2 + $0x48] sm:$0xff] %v6344
    %6455 = vst [vmem:[#allocation2 + $0x50] sm:$0xff] %v6415
    %6456 = vst [vmem:[#allocation2 + $0x58] sm:$0xff] %v6417
    %6457 = vst [vmem:[#allocation2 + $0x80] sm:$0xff] %v6348
    %6458 = vst [vmem:[#allocation2 + $0x88] sm:$0xff] %v6350
    %6459 = vst [vmem:[#allocation2 + $0x90] sm:$0xff] %v6421
    %6460 = vst [vmem:[#allocation2 + $0x98] sm:$0xff] %v6423
    %6461 = vst [vmem:[#allocation2 + $0xc0] sm:$0xff] %v6352
    %6462 = vst [vmem:[#allocation2 + $0xc8] sm:$0xff] %v6354
    %6463 = vst [vmem:[#allocation2 + $0xd0] sm:$0xff] %v6425
    %6464 = vst [vmem:[#allocation2 + $0xd8] sm:$0xff] %v6427
    %6465 = vst [vmem:[#allocation2 + $0x100] sm:$0xff] %v6358
    %6466 = vst [vmem:[#allocation2 + $0x108] sm:$0xff] %v6360
    %6467 = vst [vmem:[#allocation2 + $0x110] sm:$0xff] %v6431
    %6468 = vst [vmem:[#allocation2 + $0x118] sm:$0xff] %v6433
    %6469 = vst [vmem:[#allocation2 + $0x140] sm:$0xff] %v6362
    %6470 = vst [vmem:[#allocation2 + $0x148] sm:$0xff] %v6364
    %6471 = vst [vmem:[#allocation2 + $0x150] sm:$0xff] %v6435
    %6472 = vst [vmem:[#allocation2 + $0x158] sm:$0xff] %v6437
    %6473 = vst [vmem:[#allocation2 + $0x180] sm:$0xff] %v6368
    %6474 = vst [vmem:[#allocation2 + $0x188] sm:$0xff] %v6370
    %6475 = vst [vmem:[#allocation2 + $0x190] sm:$0xff] %v6441
    %6476 = vst [vmem:[#allocation2 + $0x198] sm:$0xff] %v6443
    %6477 = vst [vmem:[#allocation2 + $0x1c0] sm:$0xff] %v6372
    %6478 = vst [vmem:[#allocation2 + $0x1c8] sm:$0xff] %v6374
    %6479 = vst [vmem:[#allocation2 + $0x1d0] sm:$0xff] %v6445
    %6480 = vst [vmem:[#allocation2 + $0x1d8] sm:$0xff] %v6447
    %v6481 = vld [vmem:[#allocation2] sm:$0xff]
    %v6482 = vld [vmem:[#allocation2 + $0x8] sm:$0xff]
    %v6483 = vld [vmem:[#allocation2 + $0x10] sm:$0xff]
    %v6484 = vld [vmem:[#allocation2 + $0x18] sm:$0xff]
    %v6485 = vld [vmem:[#allocation14] sm:$0xff]
    %v6486 = vld [vmem:[#allocation14 + $0x8] sm:$0xff]
    %v6487 = vld [vmem:[#allocation14 + $0x10] sm:$0xff]
    %v6488 = vld [vmem:[#allocation14 + $0x18] sm:$0xff]
    %v6489 = vld [vmem:[#allocation14 + $0x20] sm:$0xff]
    %v6490 = vld [vmem:[#allocation14 + $0x28] sm:$0xff]
    %v6491 = vld [vmem:[#allocation14 + $0x30] sm:$0xff]
    %v6492 = vld [vmem:[#allocation14 + $0x38] sm:$0xff]
    %v6493 = vld [vmem:[#allocation14 + $0x40] sm:$0xff]
    %v6494 = vld [vmem:[#allocation14 + $0x48] sm:$0xff]
    %v6495 = vld [vmem:[#allocation14 + $0x50] sm:$0xff]
    %v6496 = vld [vmem:[#allocation14 + $0x58] sm:$0xff]
    %v6497 = vld [vmem:[#allocation14 + $0x60] sm:$0xff]
    %v6498 = vld [vmem:[#allocation14 + $0x68] sm:$0xff]
    %v6499 = vld [vmem:[#allocation14 + $0x70] sm:$0xff]
    %v6500 = vld [vmem:[#allocation14 + $0x78] sm:$0xff]
    %v6501 = vld [vmem:[#allocation14 + $0x80] sm:$0xff]
    %v6502 = vld [vmem:[#allocation14 + $0x88] sm:$0xff]
    %v6503 = vld [vmem:[#allocation14 + $0x90] sm:$0xff]
    %v6504 = vld [vmem:[#allocation14 + $0x98] sm:$0xff]
    %v6505 = vld [vmem:[#allocation14 + $0xa0] sm:$0xff]
    %v6506 = vld [vmem:[#allocation14 + $0xa8] sm:$0xff]
    %v6507 = vld [vmem:[#allocation14 + $0xb0] sm:$0xff]
    %v6508 = vld [vmem:[#allocation14 + $0xb8] sm:$0xff]
    %v6509 = vld [vmem:[#allocation14 + $0xc0] sm:$0xff]
    %v6510 = vld [vmem:[#allocation14 + $0xc8] sm:$0xff]
    %v6511 = vld [vmem:[#allocation14 + $0xd0] sm:$0xff]
    %v6512 = vld [vmem:[#allocation14 + $0xd8] sm:$0xff]
    %v6513 = vld [vmem:[#allocation14 + $0xe0] sm:$0xff]
    %v6514 = vld [vmem:[#allocation14 + $0xe8] sm:$0xff]
    %v6515 = vld [vmem:[#allocation14 + $0xf0] sm:$0xff]
    %v6516 = vld [vmem:[#allocation14 + $0xf8] sm:$0xff]
    %v6517 = vld [vmem:[#allocation14 + $0x100] sm:$0xff]
    %v6518 = vld [vmem:[#allocation14 + $0x108] sm:$0xff]
    %v6519 = vld [vmem:[#allocation14 + $0x110] sm:$0xff]
    %v6520 = vld [vmem:[#allocation14 + $0x118] sm:$0xff]
    %v6521 = vld [vmem:[#allocation14 + $0x120] sm:$0xff]
    %v6522 = vld [vmem:[#allocation14 + $0x128] sm:$0xff]
    %v6523 = vld [vmem:[#allocation14 + $0x130] sm:$0xff]
    %v6524 = vld [vmem:[#allocation14 + $0x138] sm:$0xff]
    %v6525 = vld [vmem:[#allocation14 + $0x140] sm:$0xff]
    %v6526 = vld [vmem:[#allocation14 + $0x148] sm:$0xff]
    %v6527 = vld [vmem:[#allocation14 + $0x150] sm:$0xff]
    %v6528 = vld [vmem:[#allocation14 + $0x158] sm:$0xff]
    %v6529 = vld [vmem:[#allocation14 + $0x160] sm:$0xff]
    %v6530 = vld [vmem:[#allocation14 + $0x168] sm:$0xff]
    %v6531 = vld [vmem:[#allocation14 + $0x170] sm:$0xff]
    %v6532 = vld [vmem:[#allocation14 + $0x178] sm:$0xff]
    %v6533 = vld [vmem:[#allocation14 + $0x180] sm:$0xff]
    %v6534 = vld [vmem:[#allocation14 + $0x188] sm:$0xff]
    %v6535 = vld [vmem:[#allocation14 + $0x190] sm:$0xff]
    %v6536 = vld [vmem:[#allocation14 + $0x198] sm:$0xff]
    %v6537 = vld [vmem:[#allocation14 + $0x1a0] sm:$0xff]
    %v6538 = vld [vmem:[#allocation14 + $0x1a8] sm:$0xff]
    %v6539 = vld [vmem:[#allocation14 + $0x1b0] sm:$0xff]
    %v6540 = vld [vmem:[#allocation14 + $0x1b8] sm:$0xff]
    %v6541 = vld [vmem:[#allocation14 + $0x1c0] sm:$0xff]
    %v6542 = vld [vmem:[#allocation14 + $0x1c8] sm:$0xff]
    %v6543 = vld [vmem:[#allocation14 + $0x1d0] sm:$0xff]
    %v6544 = vld [vmem:[#allocation14 + $0x1d8] sm:$0xff]
    %v6545 = vld [vmem:[#allocation14 + $0x1e0] sm:$0xff]
    %v6546 = vld [vmem:[#allocation14 + $0x1e8] sm:$0xff]
    %v6547 = vld [vmem:[#allocation14 + $0x1f0] sm:$0xff]
    %v6548 = vld [vmem:[#allocation14 + $0x1f8] sm:$0xff]
    %6549 = vmatprep.subr.mxu0 %v6486
    %6550 = vmatpush1.msra.mxu0 %v6485
    %6551 = vmatprep.subr.mxu0 %v6490
    %6552 = vmatpush1.msra.mxu0 %v6489
    %6553 = vmatprep.subr.mxu0 %v6494
    %6554 = vmatpush1.msra.mxu0 %v6493
    %6555 = vmatprep.subr.mxu0 %v6498
    %6556 = vmatpush1.msra.mxu0 %v6497
    %6557 = vmatprep.subr.mxu0 %v6502
    %6558 = vmatpush1.msra.mxu0 %v6501
    %6559 = vmatprep.subr.mxu0 %v6506
    %6560 = vmatpush1.msra.mxu0 %v6505
    %6561 = vmatprep.subr.mxu0 %v6510
    %6562 = vmatpush1.msra.mxu0 %v6509
    %6563 = vmatprep.subr.mxu0 %v6514
    %6564 = vmatpush1.msra.mxu0 %v6513
    %6565 = vmatprep.subr.mxu0 %v6518
    %6566 = vmatpush1.msra.mxu0 %v6517
    %6567 = vmatprep.subr.mxu0 %v6522
    %6568 = vmatpush1.msra.mxu0 %v6521
    %6569 = vmatprep.subr.mxu0 %v6526
    %6570 = vmatpush1.msra.mxu0 %v6525
    %6571 = vmatprep.subr.mxu0 %v6530
    %6572 = vmatpush1.msra.mxu0 %v6529
    %6573 = vmatprep.subr.mxu0 %v6534
    %6574 = vmatpush1.msra.mxu0 %v6533
    %6575 = vmatprep.subr.mxu0 %v6538
    %6576 = vmatpush1.msra.mxu0 %v6537
    %6577 = vmatprep.subr.mxu0 %v6542
    %6578 = vmatpush1.msra.mxu0 %v6541
    %6579 = vmatprep.subr.mxu0 %v6546
    %6580 = vmatpush1.msra.mxu0 %v6545
    %6581 = vmatprep.subr.mxu0 0.0
    %6582 = vmatpush1.msra.mxu0 0.0
    %6583 = vmatprep.subr.mxu0 0.0
    %6584 = vmatpush1.msra.mxu0 0.0
    %6585 = vmatprep.subr.mxu0 0.0
    %6586 = vmatpush1.msra.mxu0 0.0
    %6587 = vmatprep.subr.mxu0 0.0
    %6588 = vmatpush1.msra.mxu0 0.0
    %6589 = vmatprep.subr.mxu0 0.0
    %6590 = vmatpush1.msra.mxu0 0.0
    %6591 = vmatprep.subr.mxu0 0.0
    %6592 = vmatpush1.msra.mxu0 0.0
    %6593 = vmatprep.subr.mxu0 0.0
    %6594 = vmatpush1.msra.mxu0 0.0
    %6595 = vmatprep.subr.mxu0 0.0
    %6596 = vmatpush1.msra.mxu0 0.0
    %6597 = vmatprep.subr.mxu0 0.0
    %6598 = vmatpush1.msra.mxu0 0.0
    %6599 = vmatprep.subr.mxu0 0.0
    %6600 = vmatpush1.msra.mxu0 0.0
    %6601 = vmatprep.subr.mxu0 0.0
    %6602 = vmatpush1.msra.mxu0 0.0
    %6603 = vmatprep.subr.mxu0 0.0
    %6604 = vmatpush1.msra.mxu0 0.0
    %6605 = vmatprep.subr.mxu0 0.0
    %6606 = vmatpush1.msra.mxu0 0.0
    %6607 = vmatprep.subr.mxu0 0.0
    %6608 = vmatpush1.msra.mxu0 0.0
    %6609 = vmatprep.subr.mxu0 0.0
    %6610 = vmatpush1.msra.mxu0 0.0
    %6611 = vmatprep.subr.mxu0 0.0
    %6612 = vmatpush1.msra.mxu0 0.0
    %6613 = vmatprep.mubr.f32.mxu0 0.0
    %6614 = vmatmul.mubr.f32.gmra.mrb[0].mxu0 0.0
    %v6615 = vpop.f32.mrb[0].mxu0
    %v6616 = vadd.f32 0.0, %v6615
    %v6617 = vpop.f32.mrb[0].mxu0
    %v6618 = vadd.f32 0.0, %v6617
    %6619 = vdwg.mxu0
    %6620 = vmatprep.subr.mxu0 %v6488
    %6621 = vmatpush1.msra.mxu0 %v6487
    %6622 = vmatprep.subr.mxu0 %v6492
    %6623 = vmatpush1.msra.mxu0 %v6491
    %6624 = vmatprep.subr.mxu0 %v6496
    %6625 = vmatpush1.msra.mxu0 %v6495
    %6626 = vmatprep.subr.mxu0 %v6500
    %6627 = vmatpush1.msra.mxu0 %v6499
    %6628 = vmatprep.subr.mxu0 %v6504
    %6629 = vmatpush1.msra.mxu0 %v6503
    %6630 = vmatprep.subr.mxu0 %v6508
    %6631 = vmatpush1.msra.mxu0 %v6507
    %6632 = vmatprep.subr.mxu0 %v6512
    %6633 = vmatpush1.msra.mxu0 %v6511
    %6634 = vmatprep.subr.mxu0 %v6516
    %6635 = vmatpush1.msra.mxu0 %v6515
    %6636 = vmatprep.subr.mxu0 %v6520
    %6637 = vmatpush1.msra.mxu0 %v6519
    %6638 = vmatprep.subr.mxu0 %v6524
    %6639 = vmatpush1.msra.mxu0 %v6523
    %6640 = vmatprep.subr.mxu0 %v6528
    %6641 = vmatpush1.msra.mxu0 %v6527
    %6642 = vmatprep.subr.mxu0 %v6532
    %6643 = vmatpush1.msra.mxu0 %v6531
    %6644 = vmatprep.subr.mxu0 %v6536
    %6645 = vmatpush1.msra.mxu0 %v6535
    %6646 = vmatprep.subr.mxu0 %v6540
    %6647 = vmatpush1.msra.mxu0 %v6539
    %6648 = vmatprep.subr.mxu0 %v6544
    %6649 = vmatpush1.msra.mxu0 %v6543
    %6650 = vmatprep.subr.mxu0 %v6548
    %6651 = vmatpush1.msra.mxu0 %v6547
    %6652 = vmatprep.subr.mxu0 0.0
    %6653 = vmatpush1.msra.mxu0 0.0
    %6654 = vmatprep.subr.mxu0 0.0
    %6655 = vmatpush1.msra.mxu0 0.0
    %6656 = vmatprep.subr.mxu0 0.0
    %6657 = vmatpush1.msra.mxu0 0.0
    %6658 = vmatprep.subr.mxu0 0.0
    %6659 = vmatpush1.msra.mxu0 0.0
    %6660 = vmatprep.subr.mxu0 0.0
    %6661 = vmatpush1.msra.mxu0 0.0
    %6662 = vmatprep.subr.mxu0 0.0
    %6663 = vmatpush1.msra.mxu0 0.0
    %6664 = vmatprep.subr.mxu0 0.0
    %6665 = vmatpush1.msra.mxu0 0.0
    %6666 = vmatprep.subr.mxu0 0.0
    %6667 = vmatpush1.msra.mxu0 0.0
    %6668 = vmatprep.subr.mxu0 0.0
    %6669 = vmatpush1.msra.mxu0 0.0
    %6670 = vmatprep.subr.mxu0 0.0
    %6671 = vmatpush1.msra.mxu0 0.0
    %6672 = vmatprep.subr.mxu0 0.0
    %6673 = vmatpush1.msra.mxu0 0.0
    %6674 = vmatprep.subr.mxu0 0.0
    %6675 = vmatpush1.msra.mxu0 0.0
    %6676 = vmatprep.subr.mxu0 0.0
    %6677 = vmatpush1.msra.mxu0 0.0
    %6678 = vmatprep.subr.mxu0 0.0
    %6679 = vmatpush1.msra.mxu0 0.0
    %6680 = vmatprep.subr.mxu0 0.0
    %6681 = vmatpush1.msra.mxu0 0.0
    %6682 = vmatprep.subr.mxu0 0.0
    %6683 = vmatpush1.msra.mxu0 0.0
    %6684 = vmatprep.mubr.f32.mxu0 0.0
    %6685 = vmatmul.mubr.f32.gmra.mrb[0].mxu0 0.0
    %v6686 = vpop.f32.mrb[0].mxu0
    %v6687 = vadd.f32 0.0, %v6686
    %v6688 = vpop.f32.mrb[0].mxu0
    %v6689 = vadd.f32 0.0, %v6688
    %6690 = vdwg.mxu0
    %v6691 = vadd.f32 %v6481, %v6616
    %v6692 = vadd.f32 %v6482, %v6618
    %v6693 = vadd.f32 %v6483, %v6687
    %v6694 = vadd.f32 %v6484, %v6689
    %v6695 = vxor.u32 %v6691, 2147483648
    %v6696 = vmul.f32 %v6695, 1.442695
    %v6697 = vpow.pop %v6696
    %v6698 = vadd.f32 %v6697, 1.0
    %v6699 = vrcp.pop %v6698
    %v6700 = vmul.f32 1.0, %v6699
    %v6701 = vxor.u32 %v6692, 2147483648
    %v6702 = vmul.f32 %v6701, 1.442695
    %v6703 = vpow.pop %v6702
    %v6704 = vadd.f32 %v6703, 1.0
    %v6705 = vrcp.pop %v6704
    %v6706 = vmul.f32 1.0, %v6705
    %v6707 = vtanh.pop %v6693
    %v6708 = vxor.u32 %v6694, 2147483648
    %v6709 = vmul.f32 %v6708, 1.442695
    %v6710 = vpow.pop %v6709
    %v6711 = vadd.f32 %v6710, 1.0
    %v6712 = vrcp.pop %v6711
    %v6713 = vmul.f32 1.0, %v6712
    %v6714 = vmul.f32 %v6706, 0.0
    %v6715 = vmul.f32 %v6700, %v6707
    %v6716 = vadd.f32 %v6714, %v6715
    %v6717 = vtanh.pop %v6716
    %v6718 = vmul.f32 %v6713, %v6717
    %v6719 = vld [vmem:[%s2133] sm:$0xff]
    %v6720 = vld [vmem:[%s2133 + $0x8] sm:$0xff]
    %v6721 = vld [vmem:[%s2133 + $0x10] sm:$0xff]
    %v6722 = vld [vmem:[%s2133 + $0x18] sm:$0xff]
    %6723 = vmatprep.subr.mxu0 %v6486
    %6724 = vmatpush1.msra.mxu0 %v6485
    %6725 = vmatprep.subr.mxu0 %v6490
    %6726 = vmatpush1.msra.mxu0 %v6489
    %6727 = vmatprep.subr.mxu0 %v6494
    %6728 = vmatpush1.msra.mxu0 %v6493
    %6729 = vmatprep.subr.mxu0 %v6498
    %6730 = vmatpush1.msra.mxu0 %v6497
    %6731 = vmatprep.subr.mxu0 %v6502
    %6732 = vmatpush1.msra.mxu0 %v6501
    %6733 = vmatprep.subr.mxu0 %v6506
    %6734 = vmatpush1.msra.mxu0 %v6505
    %6735 = vmatprep.subr.mxu0 %v6510
    %6736 = vmatpush1.msra.mxu0 %v6509
    %6737 = vmatprep.subr.mxu0 %v6514
    %6738 = vmatpush1.msra.mxu0 %v6513
    %6739 = vmatprep.subr.mxu0 %v6518
    %6740 = vmatpush1.msra.mxu0 %v6517
    %6741 = vmatprep.subr.mxu0 %v6522
    %6742 = vmatpush1.msra.mxu0 %v6521
    %6743 = vmatprep.subr.mxu0 %v6526
    %6744 = vmatpush1.msra.mxu0 %v6525
    %6745 = vmatprep.subr.mxu0 %v6530
    %6746 = vmatpush1.msra.mxu0 %v6529
    %6747 = vmatprep.subr.mxu0 %v6534
    %6748 = vmatpush1.msra.mxu0 %v6533
    %6749 = vmatprep.subr.mxu0 %v6538
    %6750 = vmatpush1.msra.mxu0 %v6537
    %6751 = vmatprep.subr.mxu0 %v6542
    %6752 = vmatpush1.msra.mxu0 %v6541
    %6753 = vmatprep.subr.mxu0 %v6546
    %6754 = vmatpush1.msra.mxu0 %v6545
    %6755 = vmatprep.subr.mxu0 0.0
    %6756 = vmatpush1.msra.mxu0 0.0
    %6757 = vmatprep.subr.mxu0 0.0
    %6758 = vmatpush1.msra.mxu0 0.0
    %6759 = vmatprep.subr.mxu0 0.0
    %6760 = vmatpush1.msra.mxu0 0.0
    %6761 = vmatprep.subr.mxu0 0.0
    %6762 = vmatpush1.msra.mxu0 0.0
    %6763 = vmatprep.subr.mxu0 0.0
    %6764 = vmatpush1.msra.mxu0 0.0
    %6765 = vmatprep.subr.mxu0 0.0
    %6766 = vmatpush1.msra.mxu0 0.0
    %6767 = vmatprep.subr.mxu0 0.0
    %6768 = vmatpush1.msra.mxu0 0.0
    %6769 = vmatprep.subr.mxu0 0.0
    %6770 = vmatpush1.msra.mxu0 0.0
    %6771 = vmatprep.subr.mxu0 0.0
    %6772 = vmatpush1.msra.mxu0 0.0
    %6773 = vmatprep.subr.mxu0 0.0
    %6774 = vmatpush1.msra.mxu0 0.0
    %6775 = vmatprep.subr.mxu0 0.0
    %6776 = vmatpush1.msra.mxu0 0.0
    %6777 = vmatprep.subr.mxu0 0.0
    %6778 = vmatpush1.msra.mxu0 0.0
    %6779 = vmatprep.subr.mxu0 0.0
    %6780 = vmatpush1.msra.mxu0 0.0
    %6781 = vmatprep.subr.mxu0 0.0
    %6782 = vmatpush1.msra.mxu0 0.0
    %6783 = vmatprep.subr.mxu0 0.0
    %6784 = vmatpush1.msra.mxu0 0.0
    %6785 = vmatprep.subr.mxu0 0.0
    %6786 = vmatpush1.msra.mxu0 0.0
    %6787 = vmatprep.mubr.f32.mxu0 0.0
    %6788 = vmatmul.mubr.f32.gmra.mrb[0].mxu0 %v6718
    %v6789 = vpop.f32.mrb[0].mxu0
    %v6790 = vadd.f32 0.0, %v6789
    %v6791 = vpop.f32.mrb[0].mxu0
    %v6792 = vadd.f32 0.0, %v6791
    %6793 = vdwg.mxu0
    %6794 = vmatprep.subr.mxu0 %v6488
    %6795 = vmatpush1.msra.mxu0 %v6487
    %6796 = vmatprep.subr.mxu0 %v6492
    %6797 = vmatpush1.msra.mxu0 %v6491
    %6798 = vmatprep.subr.mxu0 %v6496
    %6799 = vmatpush1.msra.mxu0 %v6495
    %6800 = vmatprep.subr.mxu0 %v6500
    %6801 = vmatpush1.msra.mxu0 %v6499
    %6802 = vmatprep.subr.mxu0 %v6504
    %6803 = vmatpush1.msra.mxu0 %v6503
    %6804 = vmatprep.subr.mxu0 %v6508
    %6805 = vmatpush1.msra.mxu0 %v6507
    %6806 = vmatprep.subr.mxu0 %v6512
    %6807 = vmatpush1.msra.mxu0 %v6511
    %6808 = vmatprep.subr.mxu0 %v6516
    %6809 = vmatpush1.msra.mxu0 %v6515
    %6810 = vmatprep.subr.mxu0 %v6520
    %6811 = vmatpush1.msra.mxu0 %v6519
    %6812 = vmatprep.subr.mxu0 %v6524
    %6813 = vmatpush1.msra.mxu0 %v6523
    %6814 = vmatprep.subr.mxu0 %v6528
    %6815 = vmatpush1.msra.mxu0 %v6527
    %6816 = vmatprep.subr.mxu0 %v6532
    %6817 = vmatpush1.msra.mxu0 %v6531
    %6818 = vmatprep.subr.mxu0 %v6536
    %6819 = vmatpush1.msra.mxu0 %v6535
    %6820 = vmatprep.subr.mxu0 %v6540
    %6821 = vmatpush1.msra.mxu0 %v6539
    %6822 = vmatprep.subr.mxu0 %v6544
    %6823 = vmatpush1.msra.mxu0 %v6543
    %6824 = vmatprep.subr.mxu0 %v6548
    %6825 = vmatpush1.msra.mxu0 %v6547
    %6826 = vmatprep.subr.mxu0 0.0
    %6827 = vmatpush1.msra.mxu0 0.0
    %6828 = vmatprep.subr.mxu0 0.0
    %6829 = vmatpush1.msra.mxu0 0.0
    %6830 = vmatprep.subr.mxu0 0.0
    %6831 = vmatpush1.msra.mxu0 0.0
    %6832 = vmatprep.subr.mxu0 0.0
    %6833 = vmatpush1.msra.mxu0 0.0
    %6834 = vmatprep.subr.mxu0 0.0
    %6835 = vmatpush1.msra.mxu0 0.0
    %6836 = vmatprep.subr.mxu0 0.0
    %6837 = vmatpush1.msra.mxu0 0.0
    %6838 = vmatprep.subr.mxu0 0.0
    %6839 = vmatpush1.msra.mxu0 0.0
    %6840 = vmatprep.subr.mxu0 0.0
    %6841 = vmatpush1.msra.mxu0 0.0
    %6842 = vmatprep.subr.mxu0 0.0
    %6843 = vmatpush1.msra.mxu0 0.0
    %6844 = vmatprep.subr.mxu0 0.0
    %6845 = vmatpush1.msra.mxu0 0.0
    %6846 = vmatprep.subr.mxu0 0.0
    %6847 = vmatpush1.msra.mxu0 0.0
    %6848 = vmatprep.subr.mxu0 0.0
    %6849 = vmatpush1.msra.mxu0 0.0
    %6850 = vmatprep.subr.mxu0 0.0
    %6851 = vmatpush1.msra.mxu0 0.0
    %6852 = vmatprep.subr.mxu0 0.0
    %6853 = vmatpush1.msra.mxu0 0.0
    %6854 = vmatprep.subr.mxu0 0.0
    %6855 = vmatpush1.msra.mxu0 0.0
    %6856 = vmatprep.subr.mxu0 0.0
    %6857 = vmatpush1.msra.mxu0 0.0
    %6858 = vmatprep.mubr.f32.mxu0 0.0
    %6859 = vmatmul.mubr.f32.gmra.mrb[0].mxu0 %v6718
    %v6860 = vpop.f32.mrb[0].mxu0
    %v6861 = vadd.f32 0.0, %v6860
    %v6862 = vpop.f32.mrb[0].mxu0
    %v6863 = vadd.f32 0.0, %v6862
    %6864 = vdwg.mxu0
    %v6865 = vadd.f32 %v6719, %v6790
    %v6866 = vadd.f32 %v6720, %v6792
    %v6867 = vadd.f32 %v6721, %v6861
    %v6868 = vadd.f32 %v6722, %v6863
    %v6869 = vxor.u32 %v6865, 2147483648
    %v6870 = vmul.f32 %v6869, 1.442695
    %v6871 = vpow.pop %v6870
    %v6872 = vadd.f32 %v6871, 1.0
    %v6873 = vrcp.pop %v6872
    %v6874 = vmul.f32 1.0, %v6873
    %v6875 = vxor.u32 %v6866, 2147483648
    %v6876 = vmul.f32 %v6875, 1.442695
    %v6877 = vpow.pop %v6876
    %v6878 = vadd.f32 %v6877, 1.0
    %v6879 = vrcp.pop %v6878
    %v6880 = vmul.f32 1.0, %v6879
    %v6881 = vtanh.pop %v6867
    %v6882 = vxor.u32 %v6868, 2147483648
    %v6883 = vmul.f32 %v6882, 1.442695
    %v6884 = vpow.pop %v6883
    %v6885 = vadd.f32 %v6884, 1.0
    %v6886 = vrcp.pop %v6885
    %v6887 = vmul.f32 1.0, %v6886
    %v6888 = vmul.f32 %v6880, %v6716
    %v6889 = vmul.f32 %v6874, %v6881
    %v6890 = vadd.f32 %v6888, %v6889
    %v6891 = vtanh.pop %v6890
    %v6892 = vmul.f32 %v6887, %v6891
    %v6893 = vld [vmem:[%s2747] sm:$0xff]
    %v6894 = vld [vmem:[%s2747 + $0x8] sm:$0xff]
    %v6895 = vld [vmem:[%s2747 + $0x10] sm:$0xff]
    %v6896 = vld [vmem:[%s2747 + $0x18] sm:$0xff]
    %6897 = vmatprep.subr.mxu0 %v6486
    %6898 = vmatpush1.msra.mxu0 %v6485
    %6899 = vmatprep.subr.mxu0 %v6490
    %6900 = vmatpush1.msra.mxu0 %v6489
    %6901 = vmatprep.subr.mxu0 %v6494
    %6902 = vmatpush1.msra.mxu0 %v6493
    %6903 = vmatprep.subr.mxu0 %v6498
    %6904 = vmatpush1.msra.mxu0 %v6497
    %6905 = vmatprep.subr.mxu0 %v6502
    %6906 = vmatpush1.msra.mxu0 %v6501
    %6907 = vmatprep.subr.mxu0 %v6506
    %6908 = vmatpush1.msra.mxu0 %v6505
    %6909 = vmatprep.subr.mxu0 %v6510
    %6910 = vmatpush1.msra.mxu0 %v6509
    %6911 = vmatprep.subr.mxu0 %v6514
    %6912 = vmatpush1.msra.mxu0 %v6513
    %6913 = vmatprep.subr.mxu0 %v6518
    %6914 = vmatpush1.msra.mxu0 %v6517
    %6915 = vmatprep.subr.mxu0 %v6522
    %6916 = vmatpush1.msra.mxu0 %v6521
    %6917 = vmatprep.subr.mxu0 %v6526
    %6918 = vmatpush1.msra.mxu0 %v6525
    %6919 = vmatprep.subr.mxu0 %v6530
    %6920 = vmatpush1.msra.mxu0 %v6529
    %6921 = vmatprep.subr.mxu0 %v6534
    %6922 = vmatpush1.msra.mxu0 %v6533
    %6923 = vmatprep.subr.mxu0 %v6538
    %6924 = vmatpush1.msra.mxu0 %v6537
    %6925 = vmatprep.subr.mxu0 %v6542
    %6926 = vmatpush1.msra.mxu0 %v6541
    %6927 = vmatprep.subr.mxu0 %v6546
    %6928 = vmatpush1.msra.mxu0 %v6545
    %6929 = vmatprep.subr.mxu0 0.0
    %6930 = vmatpush1.msra.mxu0 0.0
    %6931 = vmatprep.subr.mxu0 0.0
    %6932 = vmatpush1.msra.mxu0 0.0
    %6933 = vmatprep.subr.mxu0 0.0
    %6934 = vmatpush1.msra.mxu0 0.0
    %6935 = vmatprep.subr.mxu0 0.0
    %6936 = vmatpush1.msra.mxu0 0.0
    %6937 = vmatprep.subr.mxu0 0.0
    %6938 = vmatpush1.msra.mxu0 0.0
    %6939 = vmatprep.subr.mxu0 0.0
    %6940 = vmatpush1.msra.mxu0 0.0
    %6941 = vmatprep.subr.mxu0 0.0
    %6942 = vmatpush1.msra.mxu0 0.0
    %6943 = vmatprep.subr.mxu0 0.0
    %6944 = vmatpush1.msra.mxu0 0.0
    %6945 = vmatprep.subr.mxu0 0.0
    %6946 = vmatpush1.msra.mxu0 0.0
    %6947 = vmatprep.subr.mxu0 0.0
    %6948 = vmatpush1.msra.mxu0 0.0
    %6949 = vmatprep.subr.mxu0 0.0
    %6950 = vmatpush1.msra.mxu0 0.0
    %6951 = vmatprep.subr.mxu0 0.0
    %6952 = vmatpush1.msra.mxu0 0.0
    %6953 = vmatprep.subr.mxu0 0.0
    %6954 = vmatpush1.msra.mxu0 0.0
    %6955 = vmatprep.subr.mxu0 0.0
    %6956 = vmatpush1.msra.mxu0 0.0
    %6957 = vmatprep.subr.mxu0 0.0
    %6958 = vmatpush1.msra.mxu0 0.0
    %6959 = vmatprep.subr.mxu0 0.0
    %6960 = vmatpush1.msra.mxu0 0.0
    %6961 = vmatprep.mubr.f32.mxu0 0.0
    %6962 = vmatmul.mubr.f32.gmra.mrb[0].mxu0 %v6892
    %v6963 = vpop.f32.mrb[0].mxu0
    %v6964 = vadd.f32 0.0, %v6963
    %v6965 = vpop.f32.mrb[0].mxu0
    %v6966 = vadd.f32 0.0, %v6965
    %6967 = vdwg.mxu0
    %6968 = vmatprep.subr.mxu0 %v6488
    %6969 = vmatpush1.msra.mxu0 %v6487
    %6970 = vmatprep.subr.mxu0 %v6492
    %6971 = vmatpush1.msra.mxu0 %v6491
    %6972 = vmatprep.subr.mxu0 %v6496
    %6973 = vmatpush1.msra.mxu0 %v6495
    %6974 = vmatprep.subr.mxu0 %v6500
    %6975 = vmatpush1.msra.mxu0 %v6499
    %6976 = vmatprep.subr.mxu0 %v6504
    %6977 = vmatpush1.msra.mxu0 %v6503
    %6978 = vmatprep.subr.mxu0 %v6508
    %6979 = vmatpush1.msra.mxu0 %v6507
    %6980 = vmatprep.subr.mxu0 %v6512
    %6981 = vmatpush1.msra.mxu0 %v6511
    %6982 = vmatprep.subr.mxu0 %v6516
    %6983 = vmatpush1.msra.mxu0 %v6515
    %6984 = vmatprep.subr.mxu0 %v6520
    %6985 = vmatpush1.msra.mxu0 %v6519
    %6986 = vmatprep.subr.mxu0 %v6524
    %6987 = vmatpush1.msra.mxu0 %v6523
    %6988 = vmatprep.subr.mxu0 %v6528
    %6989 = vmatpush1.msra.mxu0 %v6527
    %6990 = vmatprep.subr.mxu0 %v6532
    %6991 = vmatpush1.msra.mxu0 %v6531
    %6992 = vmatprep.subr.mxu0 %v6536
    %6993 = vmatpush1.msra.mxu0 %v6535
    %6994 = vmatprep.subr.mxu0 %v6540
    %6995 = vmatpush1.msra.mxu0 %v6539
    %6996 = vmatprep.subr.mxu0 %v6544
    %6997 = vmatpush1.msra.mxu0 %v6543
    %6998 = vmatprep.subr.mxu0 %v6548
    %6999 = vmatpush1.msra.mxu0 %v6547
    %7000 = vmatprep.subr.mxu0 0.0
    %7001 = vmatpush1.msra.mxu0 0.0
    %7002 = vmatprep.subr.mxu0 0.0
    %7003 = vmatpush1.msra.mxu0 0.0
    %7004 = vmatprep.subr.mxu0 0.0
    %7005 = vmatpush1.msra.mxu0 0.0
    %7006 = vmatprep.subr.mxu0 0.0
    %7007 = vmatpush1.msra.mxu0 0.0
    %7008 = vmatprep.subr.mxu0 0.0
    %7009 = vmatpush1.msra.mxu0 0.0
    %7010 = vmatprep.subr.mxu0 0.0
    %7011 = vmatpush1.msra.mxu0 0.0
    %7012 = vmatprep.subr.mxu0 0.0
    %7013 = vmatpush1.msra.mxu0 0.0
    %7014 = vmatprep.subr.mxu0 0.0
    %7015 = vmatpush1.msra.mxu0 0.0
    %7016 = vmatprep.subr.mxu0 0.0
    %7017 = vmatpush1.msra.mxu0 0.0
    %7018 = vmatprep.subr.mxu0 0.0
    %7019 = vmatpush1.msra.mxu0 0.0
    %7020 = vmatprep.subr.mxu0 0.0
    %7021 = vmatpush1.msra.mxu0 0.0
    %7022 = vmatprep.subr.mxu0 0.0
    %7023 = vmatpush1.msra.mxu0 0.0
    %7024 = vmatprep.subr.mxu0 0.0
    %7025 = vmatpush1.msra.mxu0 0.0
    %7026 = vmatprep.subr.mxu0 0.0
    %7027 = vmatpush1.msra.mxu0 0.0
    %7028 = vmatprep.subr.mxu0 0.0
    %7029 = vmatpush1.msra.mxu0 0.0
    %7030 = vmatprep.subr.mxu0 0.0
    %7031 = vmatpush1.msra.mxu0 0.0
    %7032 = vmatprep.mubr.f32.mxu0 0.0
    %7033 = vmatmul.mubr.f32.gmra.mrb[0].mxu0 %v6892
    %v7034 = vpop.f32.mrb[0].mxu0
    %v7035 = vadd.f32 0.0, %v7034
    %v7036 = vpop.f32.mrb[0].mxu0
    %v7037 = vadd.f32 0.0, %v7036
    %7038 = vdwg.mxu0
    %v7039 = vadd.f32 %v6893, %v6964
    %v7040 = vadd.f32 %v6894, %v6966
    %v7041 = vadd.f32 %v6895, %v7035
    %v7042 = vadd.f32 %v6896, %v7037
    %v7043 = vxor.u32 %v7039, 2147483648
    %v7044 = vmul.f32 %v7043, 1.442695
    %v7045 = vpow.pop %v7044
    %v7046 = vadd.f32 %v7045, 1.0
    %v7047 = vrcp.pop %v7046
    %v7048 = vmul.f32 1.0, %v7047
    %v7049 = vxor.u32 %v7040, 2147483648
    %v7050 = vmul.f32 %v7049, 1.442695
    %v7051 = vpow.pop %v7050
    %v7052 = vadd.f32 %v7051, 1.0
    %v7053 = vrcp.pop %v7052
    %v7054 = vmul.f32 1.0, %v7053
    %v7055 = vtanh.pop %v7041
    %v7056 = vxor.u32 %v7042, 2147483648
    %v7057 = vmul.f32 %v7056, 1.442695
    %v7058 = vpow.pop %v7057
    %v7059 = vadd.f32 %v7058, 1.0
    %v7060 = vrcp.pop %v7059
    %v7061 = vmul.f32 1.0, %v7060
    %v7062 = vmul.f32 %v7054, %v6890
    %v7063 = vmul.f32 %v7048, %v7055
    %v7064 = vadd.f32 %v7062, %v7063
    %v7065 = vtanh.pop %v7064
    %v7066 = vmul.f32 %v7061, %v7065
    %v7067 = vld [vmem:[%s3361] sm:$0xff]
    %v7068 = vld [vmem:[%s3361 + $0x8] sm:$0xff]
    %v7069 = vld [vmem:[%s3361 + $0x10] sm:$0xff]
    %v7070 = vld [vmem:[%s3361 + $0x18] sm:$0xff]
    %7071 = vmatprep.subr.mxu0 %v6486
    %7072 = vmatpush1.msra.mxu0 %v6485
    %7073 = vmatprep.subr.mxu0 %v6490
    %7074 = vmatpush1.msra.mxu0 %v6489
    %7075 = vmatprep.subr.mxu0 %v6494
    %7076 = vmatpush1.msra.mxu0 %v6493
    %7077 = vmatprep.subr.mxu0 %v6498
    %7078 = vmatpush1.msra.mxu0 %v6497
    %7079 = vmatprep.subr.mxu0 %v6502
    %7080 = vmatpush1.msra.mxu0 %v6501
    %7081 = vmatprep.subr.mxu0 %v6506
    %7082 = vmatpush1.msra.mxu0 %v6505
    %7083 = vmatprep.subr.mxu0 %v6510
    %7084 = vmatpush1.msra.mxu0 %v6509
    %7085 = vmatprep.subr.mxu0 %v6514
    %7086 = vmatpush1.msra.mxu0 %v6513
    %7087 = vmatprep.subr.mxu0 %v6518
    %7088 = vmatpush1.msra.mxu0 %v6517
    %7089 = vmatprep.subr.mxu0 %v6522
    %7090 = vmatpush1.msra.mxu0 %v6521
    %7091 = vmatprep.subr.mxu0 %v6526
    %7092 = vmatpush1.msra.mxu0 %v6525
    %7093 = vmatprep.subr.mxu0 %v6530
    %7094 = vmatpush1.msra.mxu0 %v6529
    %7095 = vmatprep.subr.mxu0 %v6534
    %7096 = vmatpush1.msra.mxu0 %v6533
    %7097 = vmatprep.subr.mxu0 %v6538
    %7098 = vmatpush1.msra.mxu0 %v6537
    %7099 = vmatprep.subr.mxu0 %v6542
    %7100 = vmatpush1.msra.mxu0 %v6541
    %7101 = vmatprep.subr.mxu0 %v6546
    %7102 = vmatpush1.msra.mxu0 %v6545
    %7103 = vmatprep.subr.mxu0 0.0
    %7104 = vmatpush1.msra.mxu0 0.0
    %7105 = vmatprep.subr.mxu0 0.0
    %7106 = vmatpush1.msra.mxu0 0.0
    %7107 = vmatprep.subr.mxu0 0.0
    %7108 = vmatpush1.msra.mxu0 0.0
    %7109 = vmatprep.subr.mxu0 0.0
    %7110 = vmatpush1.msra.mxu0 0.0
    %7111 = vmatprep.subr.mxu0 0.0
    %7112 = vmatpush1.msra.mxu0 0.0
    %7113 = vmatprep.subr.mxu0 0.0
    %7114 = vmatpush1.msra.mxu0 0.0
    %7115 = vmatprep.subr.mxu0 0.0
    %7116 = vmatpush1.msra.mxu0 0.0
    %7117 = vmatprep.subr.mxu0 0.0
    %7118 = vmatpush1.msra.mxu0 0.0
    %7119 = vmatprep.subr.mxu0 0.0
    %7120 = vmatpush1.msra.mxu0 0.0
    %7121 = vmatprep.subr.mxu0 0.0
    %7122 = vmatpush1.msra.mxu0 0.0
    %7123 = vmatprep.subr.mxu0 0.0
    %7124 = vmatpush1.msra.mxu0 0.0
    %7125 = vmatprep.subr.mxu0 0.0
    %7126 = vmatpush1.msra.mxu0 0.0
    %7127 = vmatprep.subr.mxu0 0.0
    %7128 = vmatpush1.msra.mxu0 0.0
    %7129 = vmatprep.subr.mxu0 0.0
    %7130 = vmatpush1.msra.mxu0 0.0
    %7131 = vmatprep.subr.mxu0 0.0
    %7132 = vmatpush1.msra.mxu0 0.0
    %7133 = vmatprep.subr.mxu0 0.0
    %7134 = vmatpush1.msra.mxu0 0.0
    %7135 = vmatprep.mubr.f32.mxu0 0.0
    %7136 = vmatmul.mubr.f32.gmra.mrb[0].mxu0 %v7066
    %v7137 = vpop.f32.mrb[0].mxu0
    %v7138 = vadd.f32 0.0, %v7137
    %v7139 = vpop.f32.mrb[0].mxu0
    %v7140 = vadd.f32 0.0, %v7139
    %7141 = vdwg.mxu0
    %7142 = vmatprep.subr.mxu0 %v6488
    %7143 = vmatpush1.msra.mxu0 %v6487
    %7144 = vmatprep.subr.mxu0 %v6492
    %7145 = vmatpush1.msra.mxu0 %v6491
    %7146 = vmatprep.subr.mxu0 %v6496
    %7147 = vmatpush1.msra.mxu0 %v6495
    %7148 = vmatprep.subr.mxu0 %v6500
    %7149 = vmatpush1.msra.mxu0 %v6499
    %7150 = vmatprep.subr.mxu0 %v6504
    %7151 = vmatpush1.msra.mxu0 %v6503
    %7152 = vmatprep.subr.mxu0 %v6508
    %7153 = vmatpush1.msra.mxu0 %v6507
    %7154 = vmatprep.subr.mxu0 %v6512
    %7155 = vmatpush1.msra.mxu0 %v6511
    %7156 = vmatprep.subr.mxu0 %v6516
    %7157 = vmatpush1.msra.mxu0 %v6515
    %7158 = vmatprep.subr.mxu0 %v6520
    %7159 = vmatpush1.msra.mxu0 %v6519
    %7160 = vmatprep.subr.mxu0 %v6524
    %7161 = vmatpush1.msra.mxu0 %v6523
    %7162 = vmatprep.subr.mxu0 %v6528
    %7163 = vmatpush1.msra.mxu0 %v6527
    %7164 = vmatprep.subr.mxu0 %v6532
    %7165 = vmatpush1.msra.mxu0 %v6531
    %7166 = vmatprep.subr.mxu0 %v6536
    %7167 = vmatpush1.msra.mxu0 %v6535
    %7168 = vmatprep.subr.mxu0 %v6540
    %7169 = vmatpush1.msra.mxu0 %v6539
    %7170 = vmatprep.subr.mxu0 %v6544
    %7171 = vmatpush1.msra.mxu0 %v6543
    %7172 = vmatprep.subr.mxu0 %v6548
    %7173 = vmatpush1.msra.mxu0 %v6547
    %7174 = vmatprep.subr.mxu0 0.0
    %7175 = vmatpush1.msra.mxu0 0.0
    %7176 = vmatprep.subr.mxu0 0.0
    %7177 = vmatpush1.msra.mxu0 0.0
    %7178 = vmatprep.subr.mxu0 0.0
    %7179 = vmatpush1.msra.mxu0 0.0
    %7180 = vmatprep.subr.mxu0 0.0
    %7181 = vmatpush1.msra.mxu0 0.0
    %7182 = vmatprep.subr.mxu0 0.0
    %7183 = vmatpush1.msra.mxu0 0.0
    %7184 = vmatprep.subr.mxu0 0.0
    %7185 = vmatpush1.msra.mxu0 0.0
    %7186 = vmatprep.subr.mxu0 0.0
    %7187 = vmatpush1.msra.mxu0 0.0
    %7188 = vmatprep.subr.mxu0 0.0
    %7189 = vmatpush1.msra.mxu0 0.0
    %7190 = vmatprep.subr.mxu0 0.0
    %7191 = vmatpush1.msra.mxu0 0.0
    %7192 = vmatprep.subr.mxu0 0.0
    %7193 = vmatpush1.msra.mxu0 0.0
    %7194 = vmatprep.subr.mxu0 0.0
    %7195 = vmatpush1.msra.mxu0 0.0
    %7196 = vmatprep.subr.mxu0 0.0
    %7197 = vmatpush1.msra.mxu0 0.0
    %7198 = vmatprep.subr.mxu0 0.0
    %7199 = vmatpush1.msra.mxu0 0.0
    %7200 = vmatprep.subr.mxu0 0.0
    %7201 = vmatpush1.msra.mxu0 0.0
    %7202 = vmatprep.subr.mxu0 0.0
    %7203 = vmatpush1.msra.mxu0 0.0
    %7204 = vmatprep.subr.mxu0 0.0
    %7205 = vmatpush1.msra.mxu0 0.0
    %7206 = vmatprep.mubr.f32.mxu0 0.0
    %7207 = vmatmul.mubr.f32.gmra.mrb[0].mxu0 %v7066
    %v7208 = vpop.f32.mrb[0].mxu0
    %v7209 = vadd.f32 0.0, %v7208
    %v7210 = vpop.f32.mrb[0].mxu0
    %v7211 = vadd.f32 0.0, %v7210
    %7212 = vdwg.mxu0
    %v7213 = vadd.f32 %v7067, %v7138
    %v7214 = vadd.f32 %v7068, %v7140
    %v7215 = vadd.f32 %v7069, %v7209
    %v7216 = vadd.f32 %v7070, %v7211
    %v7217 = vxor.u32 %v7213, 2147483648
    %v7218 = vmul.f32 %v7217, 1.442695
    %v7219 = vpow.pop %v7218
    %v7220 = vadd.f32 %v7219, 1.0
    %v7221 = vrcp.pop %v7220
    %v7222 = vmul.f32 1.0, %v7221
    %v7223 = vxor.u32 %v7214, 2147483648
    %v7224 = vmul.f32 %v7223, 1.442695
    %v7225 = vpow.pop %v7224
    %v7226 = vadd.f32 %v7225, 1.0
    %v7227 = vrcp.pop %v7226
    %v7228 = vmul.f32 1.0, %v7227
    %v7229 = vtanh.pop %v7215
    %v7230 = vxor.u32 %v7216, 2147483648
    %v7231 = vmul.f32 %v7230, 1.442695
    %v7232 = vpow.pop %v7231
    %v7233 = vadd.f32 %v7232, 1.0
    %v7234 = vrcp.pop %v7233
    %v7235 = vmul.f32 1.0, %v7234
    %v7236 = vmul.f32 %v7228, %v7064
    %v7237 = vmul.f32 %v7222, %v7229
    %v7238 = vadd.f32 %v7236, %v7237
    %v7239 = vtanh.pop %v7238
    %v7240 = vmul.f32 %v7235, %v7239
    %v7241 = vld [vmem:[%s3370] sm:$0xff]
    %v7242 = vld [vmem:[%s3370 + $0x8] sm:$0xff]
    %v7243 = vld [vmem:[%s3370 + $0x10] sm:$0xff]
    %v7244 = vld [vmem:[%s3370 + $0x18] sm:$0xff]
    %7245 = vmatprep.subr.mxu0 %v6486
    %7246 = vmatpush1.msra.mxu0 %v6485
    %7247 = vmatprep.subr.mxu0 %v6490
    %7248 = vmatpush1.msra.mxu0 %v6489
    %7249 = vmatprep.subr.mxu0 %v6494
    %7250 = vmatpush1.msra.mxu0 %v6493
    %7251 = vmatprep.subr.mxu0 %v6498
    %7252 = vmatpush1.msra.mxu0 %v6497
    %7253 = vmatprep.subr.mxu0 %v6502
    %7254 = vmatpush1.msra.mxu0 %v6501
    %7255 = vmatprep.subr.mxu0 %v6506
    %7256 = vmatpush1.msra.mxu0 %v6505
    %7257 = vmatprep.subr.mxu0 %v6510
    %7258 = vmatpush1.msra.mxu0 %v6509
    %7259 = vmatprep.subr.mxu0 %v6514
    %7260 = vmatpush1.msra.mxu0 %v6513
    %7261 = vmatprep.subr.mxu0 %v6518
    %7262 = vmatpush1.msra.mxu0 %v6517
    %7263 = vmatprep.subr.mxu0 %v6522
    %7264 = vmatpush1.msra.mxu0 %v6521
    %7265 = vmatprep.subr.mxu0 %v6526
    %7266 = vmatpush1.msra.mxu0 %v6525
    %7267 = vmatprep.subr.mxu0 %v6530
    %7268 = vmatpush1.msra.mxu0 %v6529
    %7269 = vmatprep.subr.mxu0 %v6534
    %7270 = vmatpush1.msra.mxu0 %v6533
    %7271 = vmatprep.subr.mxu0 %v6538
    %7272 = vmatpush1.msra.mxu0 %v6537
    %7273 = vmatprep.subr.mxu0 %v6542
    %7274 = vmatpush1.msra.mxu0 %v6541
    %7275 = vmatprep.subr.mxu0 %v6546
    %7276 = vmatpush1.msra.mxu0 %v6545
    %7277 = vmatprep.subr.mxu0 0.0
    %7278 = vmatpush1.msra.mxu0 0.0
    %7279 = vmatprep.subr.mxu0 0.0
    %7280 = vmatpush1.msra.mxu0 0.0
    %7281 = vmatprep.subr.mxu0 0.0
    %7282 = vmatpush1.msra.mxu0 0.0
    %7283 = vmatprep.subr.mxu0 0.0
    %7284 = vmatpush1.msra.mxu0 0.0
    %7285 = vmatprep.subr.mxu0 0.0
    %7286 = vmatpush1.msra.mxu0 0.0
    %7287 = vmatprep.subr.mxu0 0.0
    %7288 = vmatpush1.msra.mxu0 0.0
    %7289 = vmatprep.subr.mxu0 0.0
    %7290 = vmatpush1.msra.mxu0 0.0
    %7291 = vmatprep.subr.mxu0 0.0
    %7292 = vmatpush1.msra.mxu0 0.0
    %7293 = vmatprep.subr.mxu0 0.0
    %7294 = vmatpush1.msra.mxu0 0.0
    %7295 = vmatprep.subr.mxu0 0.0
    %7296 = vmatpush1.msra.mxu0 0.0
    %7297 = vmatprep.subr.mxu0 0.0
    %7298 = vmatpush1.msra.mxu0 0.0
    %7299 = vmatprep.subr.mxu0 0.0
    %7300 = vmatpush1.msra.mxu0 0.0
    %7301 = vmatprep.subr.mxu0 0.0
    %7302 = vmatpush1.msra.mxu0 0.0
    %7303 = vmatprep.subr.mxu0 0.0
    %7304 = vmatpush1.msra.mxu0 0.0
    %7305 = vmatprep.subr.mxu0 0.0
    %7306 = vmatpush1.msra.mxu0 0.0
    %7307 = vmatprep.subr.mxu0 0.0
    %7308 = vmatpush1.msra.mxu0 0.0
    %7309 = vmatprep.mubr.f32.mxu0 0.0
    %7310 = vmatmul.mubr.f32.gmra.mrb[0].mxu0 %v7240
    %v7311 = vpop.f32.mrb[0].mxu0
    %v7312 = vadd.f32 0.0, %v7311
    %v7313 = vpop.f32.mrb[0].mxu0
    %v7314 = vadd.f32 0.0, %v7313
    %7315 = vdwg.mxu0
    %7316 = vmatprep.subr.mxu0 %v6488
    %7317 = vmatpush1.msra.mxu0 %v6487
    %7318 = vmatprep.subr.mxu0 %v6492
    %7319 = vmatpush1.msra.mxu0 %v6491
    %7320 = vmatprep.subr.mxu0 %v6496
    %7321 = vmatpush1.msra.mxu0 %v6495
    %7322 = vmatprep.subr.mxu0 %v6500
    %7323 = vmatpush1.msra.mxu0 %v6499
    %7324 = vmatprep.subr.mxu0 %v6504
    %7325 = vmatpush1.msra.mxu0 %v6503
    %7326 = vmatprep.subr.mxu0 %v6508
    %7327 = vmatpush1.msra.mxu0 %v6507
    %7328 = vmatprep.subr.mxu0 %v6512
    %7329 = vmatpush1.msra.mxu0 %v6511
    %7330 = vmatprep.subr.mxu0 %v6516
    %7331 = vmatpush1.msra.mxu0 %v6515
    %7332 = vmatprep.subr.mxu0 %v6520
    %7333 = vmatpush1.msra.mxu0 %v6519
    %7334 = vmatprep.subr.mxu0 %v6524
    %7335 = vmatpush1.msra.mxu0 %v6523
    %7336 = vmatprep.subr.mxu0 %v6528
    %7337 = vmatpush1.msra.mxu0 %v6527
    %7338 = vmatprep.subr.mxu0 %v6532
    %7339 = vmatpush1.msra.mxu0 %v6531
    %7340 = vmatprep.subr.mxu0 %v6536
    %7341 = vmatpush1.msra.mxu0 %v6535
    %7342 = vmatprep.subr.mxu0 %v6540
    %7343 = vmatpush1.msra.mxu0 %v6539
    %7344 = vmatprep.subr.mxu0 %v6544
    %7345 = vmatpush1.msra.mxu0 %v6543
    %7346 = vmatprep.subr.mxu0 %v6548
    %7347 = vmatpush1.msra.mxu0 %v6547
    %7348 = vmatprep.subr.mxu0 0.0
    %7349 = vmatpush1.msra.mxu0 0.0
    %7350 = vmatprep.subr.mxu0 0.0
    %7351 = vmatpush1.msra.mxu0 0.0
    %7352 = vmatprep.subr.mxu0 0.0
    %7353 = vmatpush1.msra.mxu0 0.0
    %7354 = vmatprep.subr.mxu0 0.0
    %7355 = vmatpush1.msra.mxu0 0.0
    %7356 = vmatprep.subr.mxu0 0.0
    %7357 = vmatpush1.msra.mxu0 0.0
    %7358 = vmatprep.subr.mxu0 0.0
    %7359 = vmatpush1.msra.mxu0 0.0
    %7360 = vmatprep.subr.mxu0 0.0
    %7361 = vmatpush1.msra.mxu0 0.0
    %7362 = vmatprep.subr.mxu0 0.0
    %7363 = vmatpush1.msra.mxu0 0.0
    %7364 = vmatprep.subr.mxu0 0.0
    %7365 = vmatpush1.msra.mxu0 0.0
    %7366 = vmatprep.subr.mxu0 0.0
    %7367 = vmatpush1.msra.mxu0 0.0
    %7368 = vmatprep.subr.mxu0 0.0
    %7369 = vmatpush1.msra.mxu0 0.0
    %7370 = vmatprep.subr.mxu0 0.0
    %7371 = vmatpush1.msra.mxu0 0.0
    %7372 = vmatprep.subr.mxu0 0.0
    %7373 = vmatpush1.msra.mxu0 0.0
    %7374 = vmatprep.subr.mxu0 0.0
    %7375 = vmatpush1.msra.mxu0 0.0
    %7376 = vmatprep.subr.mxu0 0.0
    %7377 = vmatpush1.msra.mxu0 0.0
    %7378 = vmatprep.subr.mxu0 0.0
    %7379 = vmatpush1.msra.mxu0 0.0
    %7380 = vmatprep.mubr.f32.mxu0 0.0
    %7381 = vmatmul.mubr.f32.gmra.mrb[0].mxu0 %v7240
    %v7382 = vpop.f32.mrb[0].mxu0
    %v7383 = vadd.f32 0.0, %v7382
    %v7384 = vpop.f32.mrb[0].mxu0
    %v7385 = vadd.f32 0.0, %v7384
    %7386 = vdwg.mxu0
    %v7387 = vadd.f32 %v7241, %v7312
    %v7388 = vadd.f32 %v7242, %v7314
    %v7389 = vadd.f32 %v7243, %v7383
    %v7390 = vadd.f32 %v7244, %v7385
    %v7391 = vxor.u32 %v7387, 2147483648
    %v7392 = vmul.f32 %v7391, 1.442695
    %v7393 = vpow.pop %v7392
    %v7394 = vadd.f32 %v7393, 1.0
    %v7395 = vrcp.pop %v7394
    %v7396 = vmul.f32 1.0, %v7395
    %v7397 = vxor.u32 %v7388, 2147483648
    %v7398 = vmul.f32 %v7397, 1.442695
    %v7399 = vpow.pop %v7398
    %v7400 = vadd.f32 %v7399, 1.0
    %v7401 = vrcp.pop %v7400
    %v7402 = vmul.f32 1.0, %v7401
    %v7403 = vtanh.pop %v7389
    %v7404 = vxor.u32 %v7390, 2147483648
    %v7405 = vmul.f32 %v7404, 1.442695
    %v7406 = vpow.pop %v7405
    %v7407 = vadd.f32 %v7406, 1.0
    %v7408 = vrcp.pop %v7407
    %v7409 = vmul.f32 1.0, %v7408
    %v7410 = vmul.f32 %v7402, %v7238
    %v7411 = vmul.f32 %v7396, %v7403
    %v7412 = vadd.f32 %v7410, %v7411
    %v7413 = vtanh.pop %v7412
    %v7414 = vmul.f32 %v7409, %v7413
    %v7415 = vld [vmem:[%s2756] sm:$0xff]
    %v7416 = vld [vmem:[%s2756 + $0x8] sm:$0xff]
    %v7417 = vld [vmem:[%s2756 + $0x10] sm:$0xff]
    %v7418 = vld [vmem:[%s2756 + $0x18] sm:$0xff]
    %7419 = vmatprep.subr.mxu0 %v6486
    %7420 = vmatpush1.msra.mxu0 %v6485
    %7421 = vmatprep.subr.mxu0 %v6490
    %7422 = vmatpush1.msra.mxu0 %v6489
    %7423 = vmatprep.subr.mxu0 %v6494
    %7424 = vmatpush1.msra.mxu0 %v6493
    %7425 = vmatprep.subr.mxu0 %v6498
    %7426 = vmatpush1.msra.mxu0 %v6497
    %7427 = vmatprep.subr.mxu0 %v6502
    %7428 = vmatpush1.msra.mxu0 %v6501
    %7429 = vmatprep.subr.mxu0 %v6506
    %7430 = vmatpush1.msra.mxu0 %v6505
    %7431 = vmatprep.subr.mxu0 %v6510
    %7432 = vmatpush1.msra.mxu0 %v6509
    %7433 = vmatprep.subr.mxu0 %v6514
    %7434 = vmatpush1.msra.mxu0 %v6513
    %7435 = vmatprep.subr.mxu0 %v6518
    %7436 = vmatpush1.msra.mxu0 %v6517
    %7437 = vmatprep.subr.mxu0 %v6522
    %7438 = vmatpush1.msra.mxu0 %v6521
    %7439 = vmatprep.subr.mxu0 %v6526
    %7440 = vmatpush1.msra.mxu0 %v6525
    %7441 = vmatprep.subr.mxu0 %v6530
    %7442 = vmatpush1.msra.mxu0 %v6529
    %7443 = vmatprep.subr.mxu0 %v6534
    %7444 = vmatpush1.msra.mxu0 %v6533
    %7445 = vmatprep.subr.mxu0 %v6538
    %7446 = vmatpush1.msra.mxu0 %v6537
    %7447 = vmatprep.subr.mxu0 %v6542
    %7448 = vmatpush1.msra.mxu0 %v6541
    %7449 = vmatprep.subr.mxu0 %v6546
    %7450 = vmatpush1.msra.mxu0 %v6545
    %7451 = vmatprep.subr.mxu0 0.0
    %7452 = vmatpush1.msra.mxu0 0.0
    %7453 = vmatprep.subr.mxu0 0.0
    %7454 = vmatpush1.msra.mxu0 0.0
    %7455 = vmatprep.subr.mxu0 0.0
    %7456 = vmatpush1.msra.mxu0 0.0
    %7457 = vmatprep.subr.mxu0 0.0
    %7458 = vmatpush1.msra.mxu0 0.0
    %7459 = vmatprep.subr.mxu0 0.0
    %7460 = vmatpush1.msra.mxu0 0.0
    %7461 = vmatprep.subr.mxu0 0.0
    %7462 = vmatpush1.msra.mxu0 0.0
    %7463 = vmatprep.subr.mxu0 0.0
    %7464 = vmatpush1.msra.mxu0 0.0
    %7465 = vmatprep.subr.mxu0 0.0
    %7466 = vmatpush1.msra.mxu0 0.0
    %7467 = vmatprep.subr.mxu0 0.0
    %7468 = vmatpush1.msra.mxu0 0.0
    %7469 = vmatprep.subr.mxu0 0.0
    %7470 = vmatpush1.msra.mxu0 0.0
    %7471 = vmatprep.subr.mxu0 0.0
    %7472 = vmatpush1.msra.mxu0 0.0
    %7473 = vmatprep.subr.mxu0 0.0
    %7474 = vmatpush1.msra.mxu0 0.0
    %7475 = vmatprep.subr.mxu0 0.0
    %7476 = vmatpush1.msra.mxu0 0.0
    %7477 = vmatprep.subr.mxu0 0.0
    %7478 = vmatpush1.msra.mxu0 0.0
    %7479 = vmatprep.subr.mxu0 0.0
    %7480 = vmatpush1.msra.mxu0 0.0
    %7481 = vmatprep.subr.mxu0 0.0
    %7482 = vmatpush1.msra.mxu0 0.0
    %7483 = vmatprep.mubr.f32.mxu0 0.0
    %7484 = vmatmul.mubr.f32.gmra.mrb[0].mxu0 %v7414
    %v7485 = vpop.f32.mrb[0].mxu0
    %v7486 = vadd.f32 0.0, %v7485
    %v7487 = vpop.f32.mrb[0].mxu0
    %v7488 = vadd.f32 0.0, %v7487
    %7489 = vdwg.mxu0
    %7490 = vmatprep.subr.mxu0 %v6488
    %7491 = vmatpush1.msra.mxu0 %v6487
    %7492 = vmatprep.subr.mxu0 %v6492
    %7493 = vmatpush1.msra.mxu0 %v6491
    %7494 = vmatprep.subr.mxu0 %v6496
    %7495 = vmatpush1.msra.mxu0 %v6495
    %7496 = vmatprep.subr.mxu0 %v6500
    %7497 = vmatpush1.msra.mxu0 %v6499
    %7498 = vmatprep.subr.mxu0 %v6504
    %7499 = vmatpush1.msra.mxu0 %v6503
    %7500 = vmatprep.subr.mxu0 %v6508
    %7501 = vmatpush1.msra.mxu0 %v6507
    %7502 = vmatprep.subr.mxu0 %v6512
    %7503 = vmatpush1.msra.mxu0 %v6511
    %7504 = vmatprep.subr.mxu0 %v6516
    %7505 = vmatpush1.msra.mxu0 %v6515
    %7506 = vmatprep.subr.mxu0 %v6520
    %7507 = vmatpush1.msra.mxu0 %v6519
    %7508 = vmatprep.subr.mxu0 %v6524
    %7509 = vmatpush1.msra.mxu0 %v6523
    %7510 = vmatprep.subr.mxu0 %v6528
    %7511 = vmatpush1.msra.mxu0 %v6527
    %7512 = vmatprep.subr.mxu0 %v6532
    %7513 = vmatpush1.msra.mxu0 %v6531
    %7514 = vmatprep.subr.mxu0 %v6536
    %7515 = vmatpush1.msra.mxu0 %v6535
    %7516 = vmatprep.subr.mxu0 %v6540
    %7517 = vmatpush1.msra.mxu0 %v6539
    %7518 = vmatprep.subr.mxu0 %v6544
    %7519 = vmatpush1.msra.mxu0 %v6543
    %7520 = vmatprep.subr.mxu0 %v6548
    %7521 = vmatpush1.msra.mxu0 %v6547
    %7522 = vmatprep.subr.mxu0 0.0
    %7523 = vmatpush1.msra.mxu0 0.0
    %7524 = vmatprep.subr.mxu0 0.0
    %7525 = vmatpush1.msra.mxu0 0.0
    %7526 = vmatprep.subr.mxu0 0.0
    %7527 = vmatpush1.msra.mxu0 0.0
    %7528 = vmatprep.subr.mxu0 0.0
    %7529 = vmatpush1.msra.mxu0 0.0
    %7530 = vmatprep.subr.mxu0 0.0
    %7531 = vmatpush1.msra.mxu0 0.0
    %7532 = vmatprep.subr.mxu0 0.0
    %7533 = vmatpush1.msra.mxu0 0.0
    %7534 = vmatprep.subr.mxu0 0.0
    %7535 = vmatpush1.msra.mxu0 0.0
    %7536 = vmatprep.subr.mxu0 0.0
    %7537 = vmatpush1.msra.mxu0 0.0
    %7538 = vmatprep.subr.mxu0 0.0
    %7539 = vmatpush1.msra.mxu0 0.0
    %7540 = vmatprep.subr.mxu0 0.0
    %7541 = vmatpush1.msra.mxu0 0.0
    %7542 = vmatprep.subr.mxu0 0.0
    %7543 = vmatpush1.msra.mxu0 0.0
    %7544 = vmatprep.subr.mxu0 0.0
    %7545 = vmatpush1.msra.mxu0 0.0
    %7546 = vmatprep.subr.mxu0 0.0
    %7547 = vmatpush1.msra.mxu0 0.0
    %7548 = vmatprep.subr.mxu0 0.0
    %7549 = vmatpush1.msra.mxu0 0.0
    %7550 = vmatprep.subr.mxu0 0.0
    %7551 = vmatpush1.msra.mxu0 0.0
    %7552 = vmatprep.subr.mxu0 0.0
    %7553 = vmatpush1.msra.mxu0 0.0
    %7554 = vmatprep.mubr.f32.mxu0 0.0
    %7555 = vmatmul.mubr.f32.gmra.mrb[0].mxu0 %v7414
    %v7556 = vpop.f32.mrb[0].mxu0
    %v7557 = vadd.f32 0.0, %v7556
    %v7558 = vpop.f32.mrb[0].mxu0
    %v7559 = vadd.f32 0.0, %v7558
    %7560 = vdwg.mxu0
    %v7561 = vadd.f32 %v7415, %v7486
    %v7562 = vadd.f32 %v7416, %v7488
    %v7563 = vadd.f32 %v7417, %v7557
    %v7564 = vadd.f32 %v7418, %v7559
    %v7565 = vxor.u32 %v7561, 2147483648
    %v7566 = vmul.f32 %v7565, 1.442695
    %v7567 = vpow.pop %v7566
    %v7568 = vadd.f32 %v7567, 1.0
    %v7569 = vrcp.pop %v7568
    %v7570 = vmul.f32 1.0, %v7569
    %v7571 = vxor.u32 %v7562, 2147483648
    %v7572 = vmul.f32 %v7571, 1.442695
    %v7573 = vpow.pop %v7572
    %v7574 = vadd.f32 %v7573, 1.0
    %v7575 = vrcp.pop %v7574
    %v7576 = vmul.f32 1.0, %v7575
    %v7577 = vtanh.pop %v7563
    %v7578 = vxor.u32 %v7564, 2147483648
    %v7579 = vmul.f32 %v7578, 1.442695
    %v7580 = vpow.pop %v7579
    %v7581 = vadd.f32 %v7580, 1.0
    %v7582 = vrcp.pop %v7581
    %v7583 = vmul.f32 1.0, %v7582
    %v7584 = vmul.f32 %v7576, %v7412
    %v7585 = vmul.f32 %v7570, %v7577
    %v7586 = vadd.f32 %v7584, %v7585
    %v7587 = vtanh.pop %v7586
    %v7588 = vmul.f32 %v7583, %v7587
    %v7589 = vld [vmem:[%s2142] sm:$0xff]
    %v7590 = vld [vmem:[%s2142 + $0x8] sm:$0xff]
    %v7591 = vld [vmem:[%s2142 + $0x10] sm:$0xff]
    %v7592 = vld [vmem:[%s2142 + $0x18] sm:$0xff]
    %7593 = vmatprep.subr.mxu0 %v6486
    %7594 = vmatpush1.msra.mxu0 %v6485
    %7595 = vmatprep.subr.mxu0 %v6490
    %7596 = vmatpush1.msra.mxu0 %v6489
    %7597 = vmatprep.subr.mxu0 %v6494
    %7598 = vmatpush1.msra.mxu0 %v6493
    %7599 = vmatprep.subr.mxu0 %v6498
    %7600 = vmatpush1.msra.mxu0 %v6497
    %7601 = vmatprep.subr.mxu0 %v6502
    %7602 = vmatpush1.msra.mxu0 %v6501
    %7603 = vmatprep.subr.mxu0 %v6506
    %7604 = vmatpush1.msra.mxu0 %v6505
    %7605 = vmatprep.subr.mxu0 %v6510
    %7606 = vmatpush1.msra.mxu0 %v6509
    %7607 = vmatprep.subr.mxu0 %v6514
    %7608 = vmatpush1.msra.mxu0 %v6513
    %7609 = vmatprep.subr.mxu0 %v6518
    %7610 = vmatpush1.msra.mxu0 %v6517
    %7611 = vmatprep.subr.mxu0 %v6522
    %7612 = vmatpush1.msra.mxu0 %v6521
    %7613 = vmatprep.subr.mxu0 %v6526
    %7614 = vmatpush1.msra.mxu0 %v6525
    %7615 = vmatprep.subr.mxu0 %v6530
    %7616 = vmatpush1.msra.mxu0 %v6529
    %7617 = vmatprep.subr.mxu0 %v6534
    %7618 = vmatpush1.msra.mxu0 %v6533
    %7619 = vmatprep.subr.mxu0 %v6538
    %7620 = vmatpush1.msra.mxu0 %v6537
    %7621 = vmatprep.subr.mxu0 %v6542
    %7622 = vmatpush1.msra.mxu0 %v6541
    %7623 = vmatprep.subr.mxu0 %v6546
    %7624 = vmatpush1.msra.mxu0 %v6545
    %7625 = vmatprep.subr.mxu0 0.0
    %7626 = vmatpush1.msra.mxu0 0.0
    %7627 = vmatprep.subr.mxu0 0.0
    %7628 = vmatpush1.msra.mxu0 0.0
    %7629 = vmatprep.subr.mxu0 0.0
    %7630 = vmatpush1.msra.mxu0 0.0
    %7631 = vmatprep.subr.mxu0 0.0
    %7632 = vmatpush1.msra.mxu0 0.0
    %7633 = vmatprep.subr.mxu0 0.0
    %7634 = vmatpush1.msra.mxu0 0.0
    %7635 = vmatprep.subr.mxu0 0.0
    %7636 = vmatpush1.msra.mxu0 0.0
    %7637 = vmatprep.subr.mxu0 0.0
    %7638 = vmatpush1.msra.mxu0 0.0
    %7639 = vmatprep.subr.mxu0 0.0
    %7640 = vmatpush1.msra.mxu0 0.0
    %7641 = vmatprep.subr.mxu0 0.0
    %7642 = vmatpush1.msra.mxu0 0.0
    %7643 = vmatprep.subr.mxu0 0.0
    %7644 = vmatpush1.msra.mxu0 0.0
    %7645 = vmatprep.subr.mxu0 0.0
    %7646 = vmatpush1.msra.mxu0 0.0
    %7647 = vmatprep.subr.mxu0 0.0
    %7648 = vmatpush1.msra.mxu0 0.0
    %7649 = vmatprep.subr.mxu0 0.0
    %7650 = vmatpush1.msra.mxu0 0.0
    %7651 = vmatprep.subr.mxu0 0.0
    %7652 = vmatpush1.msra.mxu0 0.0
    %7653 = vmatprep.subr.mxu0 0.0
    %7654 = vmatpush1.msra.mxu0 0.0
    %7655 = vmatprep.subr.mxu0 0.0
    %7656 = vmatpush1.msra.mxu0 0.0
    %7657 = vmatprep.mubr.f32.mxu0 0.0
    %7658 = vmatmul.mubr.f32.gmra.mrb[0].mxu0 %v7588
    %v7659 = vpop.f32.mrb[0].mxu0
    %v7660 = vadd.f32 0.0, %v7659
    %v7661 = vpop.f32.mrb[0].mxu0
    %v7662 = vadd.f32 0.0, %v7661
    %7663 = vdwg.mxu0
    %7664 = vmatprep.subr.mxu0 %v6488
    %7665 = vmatpush1.msra.mxu0 %v6487
    %7666 = vmatprep.subr.mxu0 %v6492
    %7667 = vmatpush1.msra.mxu0 %v6491
    %7668 = vmatprep.subr.mxu0 %v6496
    %7669 = vmatpush1.msra.mxu0 %v6495
    %7670 = vmatprep.subr.mxu0 %v6500
    %7671 = vmatpush1.msra.mxu0 %v6499
    %7672 = vmatprep.subr.mxu0 %v6504
    %7673 = vmatpush1.msra.mxu0 %v6503
    %7674 = vmatprep.subr.mxu0 %v6508
    %7675 = vmatpush1.msra.mxu0 %v6507
    %7676 = vmatprep.subr.mxu0 %v6512
    %7677 = vmatpush1.msra.mxu0 %v6511
    %7678 = vmatprep.subr.mxu0 %v6516
    %7679 = vmatpush1.msra.mxu0 %v6515
    %7680 = vmatprep.subr.mxu0 %v6520
    %7681 = vmatpush1.msra.mxu0 %v6519
    %7682 = vmatprep.subr.mxu0 %v6524
    %7683 = vmatpush1.msra.mxu0 %v6523
    %7684 = vmatprep.subr.mxu0 %v6528
    %7685 = vmatpush1.msra.mxu0 %v6527
    %7686 = vmatprep.subr.mxu0 %v6532
    %7687 = vmatpush1.msra.mxu0 %v6531
    %7688 = vmatprep.subr.mxu0 %v6536
    %7689 = vmatpush1.msra.mxu0 %v6535
    %7690 = vmatprep.subr.mxu0 %v6540
    %7691 = vmatpush1.msra.mxu0 %v6539
    %7692 = vmatprep.subr.mxu0 %v6544
    %7693 = vmatpush1.msra.mxu0 %v6543
    %7694 = vmatprep.subr.mxu0 %v6548
    %7695 = vmatpush1.msra.mxu0 %v6547
    %7696 = vmatprep.subr.mxu0 0.0
    %7697 = vmatpush1.msra.mxu0 0.0
    %7698 = vmatprep.subr.mxu0 0.0
    %7699 = vmatpush1.msra.mxu0 0.0
    %7700 = vmatprep.subr.mxu0 0.0
    %7701 = vmatpush1.msra.mxu0 0.0
    %7702 = vmatprep.subr.mxu0 0.0
    %7703 = vmatpush1.msra.mxu0 0.0
    %7704 = vmatprep.subr.mxu0 0.0
    %7705 = vmatpush1.msra.mxu0 0.0
    %7706 = vmatprep.subr.mxu0 0.0
    %7707 = vmatpush1.msra.mxu0 0.0
    %7708 = vmatprep.subr.mxu0 0.0
    %7709 = vmatpush1.msra.mxu0 0.0
    %7710 = vmatprep.subr.mxu0 0.0
    %7711 = vmatpush1.msra.mxu0 0.0
    %7712 = vmatprep.subr.mxu0 0.0
    %7713 = vmatpush1.msra.mxu0 0.0
    %7714 = vmatprep.subr.mxu0 0.0
    %7715 = vmatpush1.msra.mxu0 0.0
    %7716 = vmatprep.subr.mxu0 0.0
    %7717 = vmatpush1.msra.mxu0 0.0
    %7718 = vmatprep.subr.mxu0 0.0
    %7719 = vmatpush1.msra.mxu0 0.0
    %7720 = vmatprep.subr.mxu0 0.0
    %7721 = vmatpush1.msra.mxu0 0.0
    %7722 = vmatprep.subr.mxu0 0.0
    %7723 = vmatpush1.msra.mxu0 0.0
    %7724 = vmatprep.subr.mxu0 0.0
    %7725 = vmatpush1.msra.mxu0 0.0
    %7726 = vmatprep.subr.mxu0 0.0
    %7727 = vmatpush1.msra.mxu0 0.0
    %7728 = vmatprep.mubr.f32.mxu0 0.0
    %7729 = vmatmul.mubr.f32.gmra.mrb[0].mxu0 %v7588
    %v7730 = vpop.f32.mrb[0].mxu0
    %v7731 = vadd.f32 0.0, %v7730
    %v7732 = vpop.f32.mrb[0].mxu0
    %v7733 = vadd.f32 0.0, %v7732
    %7734 = vdwg.mxu0
    %v7735 = vadd.f32 %v7589, %v7660
    %v7736 = vadd.f32 %v7590, %v7662
    %v7737 = vadd.f32 %v7591, %v7731
    %v7738 = vadd.f32 %v7592, %v7733
    %v7739 = vxor.u32 %v7735, 2147483648
    %v7740 = vmul.f32 %v7739, 1.442695
    %v7741 = vpow.pop %v7740
    %v7742 = vadd.f32 %v7741, 1.0
    %v7743 = vrcp.pop %v7742
    %v7744 = vmul.f32 1.0, %v7743
    %v7745 = vxor.u32 %v7736, 2147483648
    %v7746 = vmul.f32 %v7745, 1.442695
    %v7747 = vpow.pop %v7746
    %v7748 = vadd.f32 %v7747, 1.0
    %v7749 = vrcp.pop %v7748
    %v7750 = vmul.f32 1.0, %v7749
    %v7751 = vtanh.pop %v7737
    %v7752 = vxor.u32 %v7738, 2147483648
    %v7753 = vmul.f32 %v7752, 1.442695
    %v7754 = vpow.pop %v7753
    %v7755 = vadd.f32 %v7754, 1.0
    %v7756 = vrcp.pop %v7755
    %v7757 = vmul.f32 1.0, %v7756
    %v7758 = vmul.f32 %v7750, %v7586
    %v7759 = vmul.f32 %v7744, %v7751
    %v7760 = vadd.f32 %v7758, %v7759
    %v7761 = vtanh.pop %v7760
    %v7762 = vmul.f32 %v7757, %v7761
    %v7763 = vld [vmem:[%s1529] sm:$0xff]
    %v7764 = vld [vmem:[%s1529 + $0x8] sm:$0xff]
    %v7765 = vld [vmem:[%s1529 + $0x10] sm:$0xff]
    %v7766 = vld [vmem:[%s1529 + $0x18] sm:$0xff]
    %7767 = vmatprep.subr.mxu0 %v6486
    %7768 = vmatpush1.msra.mxu0 %v6485
    %7769 = vmatprep.subr.mxu0 %v6490
    %7770 = vmatpush1.msra.mxu0 %v6489
    %7771 = vmatprep.subr.mxu0 %v6494
    %7772 = vmatpush1.msra.mxu0 %v6493
    %7773 = vmatprep.subr.mxu0 %v6498
    %7774 = vmatpush1.msra.mxu0 %v6497
    %7775 = vmatprep.subr.mxu0 %v6502
    %7776 = vmatpush1.msra.mxu0 %v6501
    %7777 = vmatprep.subr.mxu0 %v6506
    %7778 = vmatpush1.msra.mxu0 %v6505
    %7779 = vmatprep.subr.mxu0 %v6510
    %7780 = vmatpush1.msra.mxu0 %v6509
    %7781 = vmatprep.subr.mxu0 %v6514
    %7782 = vmatpush1.msra.mxu0 %v6513
    %7783 = vmatprep.subr.mxu0 %v6518
    %7784 = vmatpush1.msra.mxu0 %v6517
    %7785 = vmatprep.subr.mxu0 %v6522
    %7786 = vmatpush1.msra.mxu0 %v6521
    %7787 = vmatprep.subr.mxu0 %v6526
    %7788 = vmatpush1.msra.mxu0 %v6525
    %7789 = vmatprep.subr.mxu0 %v6530
    %7790 = vmatpush1.msra.mxu0 %v6529
    %7791 = vmatprep.subr.mxu0 %v6534
    %7792 = vmatpush1.msra.mxu0 %v6533
    %7793 = vmatprep.subr.mxu0 %v6538
    %7794 = vmatpush1.msra.mxu0 %v6537
    %7795 = vmatprep.subr.mxu0 %v6542
    %7796 = vmatpush1.msra.mxu0 %v6541
    %7797 = vmatprep.subr.mxu0 %v6546
    %7798 = vmatpush1.msra.mxu0 %v6545
    %7799 = vmatprep.subr.mxu0 0.0
    %7800 = vmatpush1.msra.mxu0 0.0
    %7801 = vmatprep.subr.mxu0 0.0
    %7802 = vmatpush1.msra.mxu0 0.0
    %7803 = vmatprep.subr.mxu0 0.0
    %7804 = vmatpush1.msra.mxu0 0.0
    %7805 = vmatprep.subr.mxu0 0.0
    %7806 = vmatpush1.msra.mxu0 0.0
    %7807 = vmatprep.subr.mxu0 0.0
    %7808 = vmatpush1.msra.mxu0 0.0
    %7809 = vmatprep.subr.mxu0 0.0
    %7810 = vmatpush1.msra.mxu0 0.0
    %7811 = vmatprep.subr.mxu0 0.0
    %7812 = vmatpush1.msra.mxu0 0.0
    %7813 = vmatprep.subr.mxu0 0.0
    %7814 = vmatpush1.msra.mxu0 0.0
    %7815 = vmatprep.subr.mxu0 0.0
    %7816 = vmatpush1.msra.mxu0 0.0
    %7817 = vmatprep.subr.mxu0 0.0
    %7818 = vmatpush1.msra.mxu0 0.0
    %7819 = vmatprep.subr.mxu0 0.0
    %7820 = vmatpush1.msra.mxu0 0.0
    %7821 = vmatprep.subr.mxu0 0.0
    %7822 = vmatpush1.msra.mxu0 0.0
    %7823 = vmatprep.subr.mxu0 0.0
    %7824 = vmatpush1.msra.mxu0 0.0
    %7825 = vmatprep.subr.mxu0 0.0
    %7826 = vmatpush1.msra.mxu0 0.0
    %7827 = vmatprep.subr.mxu0 0.0
    %7828 = vmatpush1.msra.mxu0 0.0
    %7829 = vmatprep.subr.mxu0 0.0
    %7830 = vmatpush1.msra.mxu0 0.0
    %7831 = vmatprep.mubr.f32.mxu0 0.0
    %7832 = vmatmul.mubr.f32.gmra.mrb[0].mxu0 %v7762
    %v7833 = vpop.f32.mrb[0].mxu0
    %v7834 = vadd.f32 0.0, %v7833
    %v7835 = vpop.f32.mrb[0].mxu0
    %v7836 = vadd.f32 0.0, %v7835
    %7837 = vdwg.mxu0
    %7838 = vmatprep.subr.mxu0 %v6488
    %7839 = vmatpush1.msra.mxu0 %v6487
    %7840 = vmatprep.subr.mxu0 %v6492
    %7841 = vmatpush1.msra.mxu0 %v6491
    %7842 = vmatprep.subr.mxu0 %v6496
    %7843 = vmatpush1.msra.mxu0 %v6495
    %7844 = vmatprep.subr.mxu0 %v6500
    %7845 = vmatpush1.msra.mxu0 %v6499
    %7846 = vmatprep.subr.mxu0 %v6504
    %7847 = vmatpush1.msra.mxu0 %v6503
    %7848 = vmatprep.subr.mxu0 %v6508
    %7849 = vmatpush1.msra.mxu0 %v6507
    %7850 = vmatprep.subr.mxu0 %v6512
    %7851 = vmatpush1.msra.mxu0 %v6511
    %7852 = vmatprep.subr.mxu0 %v6516
    %7853 = vmatpush1.msra.mxu0 %v6515
    %7854 = vmatprep.subr.mxu0 %v6520
    %7855 = vmatpush1.msra.mxu0 %v6519
    %7856 = vmatprep.subr.mxu0 %v6524
    %7857 = vmatpush1.msra.mxu0 %v6523
    %7858 = vmatprep.subr.mxu0 %v6528
    %7859 = vmatpush1.msra.mxu0 %v6527
    %7860 = vmatprep.subr.mxu0 %v6532
    %7861 = vmatpush1.msra.mxu0 %v6531
    %7862 = vmatprep.subr.mxu0 %v6536
    %7863 = vmatpush1.msra.mxu0 %v6535
    %7864 = vmatprep.subr.mxu0 %v6540
    %7865 = vmatpush1.msra.mxu0 %v6539
    %7866 = vmatprep.subr.mxu0 %v6544
    %7867 = vmatpush1.msra.mxu0 %v6543
    %7868 = vmatprep.subr.mxu0 %v6548
    %7869 = vmatpush1.msra.mxu0 %v6547
    %7870 = vmatprep.subr.mxu0 0.0
    %7871 = vmatpush1.msra.mxu0 0.0
    %7872 = vmatprep.subr.mxu0 0.0
    %7873 = vmatpush1.msra.mxu0 0.0
    %7874 = vmatprep.subr.mxu0 0.0
    %7875 = vmatpush1.msra.mxu0 0.0
    %7876 = vmatprep.subr.mxu0 0.0
    %7877 = vmatpush1.msra.mxu0 0.0
    %7878 = vmatprep.subr.mxu0 0.0
    %7879 = vmatpush1.msra.mxu0 0.0
    %7880 = vmatprep.subr.mxu0 0.0
    %7881 = vmatpush1.msra.mxu0 0.0
    %7882 = vmatprep.subr.mxu0 0.0
    %7883 = vmatpush1.msra.mxu0 0.0
    %7884 = vmatprep.subr.mxu0 0.0
    %7885 = vmatpush1.msra.mxu0 0.0
    %7886 = vmatprep.subr.mxu0 0.0
    %7887 = vmatpush1.msra.mxu0 0.0
    %7888 = vmatprep.subr.mxu0 0.0
    %7889 = vmatpush1.msra.mxu0 0.0
    %7890 = vmatprep.subr.mxu0 0.0
    %7891 = vmatpush1.msra.mxu0 0.0
    %7892 = vmatprep.subr.mxu0 0.0
    %7893 = vmatpush1.msra.mxu0 0.0
    %7894 = vmatprep.subr.mxu0 0.0
    %7895 = vmatpush1.msra.mxu0 0.0
    %7896 = vmatprep.subr.mxu0 0.0
    %7897 = vmatpush1.msra.mxu0 0.0
    %7898 = vmatprep.subr.mxu0 0.0
    %7899 = vmatpush1.msra.mxu0 0.0
    %7900 = vmatprep.subr.mxu0 0.0
    %7901 = vmatpush1.msra.mxu0 0.0
    %7902 = vmatprep.mubr.f32.mxu0 0.0
    %7903 = vmatmul.mubr.f32.gmra.mrb[0].mxu0 %v7762
    %v7904 = vpop.f32.mrb[0].mxu0
    %v7905 = vadd.f32 0.0, %v7904
    %v7906 = vpop.f32.mrb[0].mxu0
    %v7907 = vadd.f32 0.0, %v7906
    %7908 = vdwg.mxu0
    %v7909 = vadd.f32 %v7763, %v7834
    %v7910 = vadd.f32 %v7764, %v7836
    %v7911 = vadd.f32 %v7765, %v7905
    %v7912 = vadd.f32 %v7766, %v7907
    %v7913 = vxor.u32 %v7909, 2147483648
    %v7914 = vmul.f32 %v7913, 1.442695
    %v7915 = vpow.pop %v7914
    %v7916 = vadd.f32 %v7915, 1.0
    %v7917 = vrcp.pop %v7916
    %v7918 = vmul.f32 1.0, %v7917
    %v7919 = vxor.u32 %v7910, 2147483648
    %v7920 = vmul.f32 %v7919, 1.442695
    %v7921 = vpow.pop %v7920
    %v7922 = vadd.f32 %v7921, 1.0
    %v7923 = vrcp.pop %v7922
    %v7924 = vmul.f32 1.0, %v7923
    %v7925 = vtanh.pop %v7911
    %v7926 = vxor.u32 %v7912, 2147483648
    %v7927 = vmul.f32 %v7926, 1.442695
    %v7928 = vpow.pop %v7927
    %v7929 = vadd.f32 %v7928, 1.0
    %v7930 = vrcp.pop %v7929
    %v7931 = vmul.f32 1.0, %v7930
    %v7932 = vmul.f32 %v7924, %v7760
    %v7933 = vmul.f32 %v7918, %v7925
    %v7934 = vadd.f32 %v7932, %v7933
    %v7935 = vtanh.pop %v7934
    %v7936 = vmul.f32 %v7931, %v7935
    %v7937 = vld [vmem:[%s1589] sm:$0xff]
    %v7938 = vld [vmem:[%s1589 + $0x8] sm:$0xff]
    %v7939 = vld [vmem:[#allocation16] sm:$0xff]
    %v7940 = vld [vmem:[#allocation16 + $0x8] sm:$0xff]
    %v7941 = vld [vmem:[#allocation16 + $0x10] sm:$0xff]
    %v7942 = vld [vmem:[#allocation16 + $0x18] sm:$0xff]
    %v7943 = vld [vmem:[#allocation16 + $0x20] sm:$0xff]
    %v7944 = vld [vmem:[#allocation16 + $0x28] sm:$0xff]
    %v7945 = vld [vmem:[#allocation16 + $0x30] sm:$0xff]
    %v7946 = vld [vmem:[#allocation16 + $0x38] sm:$0xff]
    %v7947 = vld [vmem:[#allocation16 + $0x40] sm:$0xff]
    %v7948 = vld [vmem:[#allocation16 + $0x48] sm:$0xff]
    %v7949 = vld [vmem:[#allocation16 + $0x50] sm:$0xff]
    %v7950 = vld [vmem:[#allocation16 + $0x58] sm:$0xff]
    %v7951 = vld [vmem:[#allocation16 + $0x60] sm:$0xff]
    %v7952 = vld [vmem:[#allocation16 + $0x68] sm:$0xff]
    %v7953 = vld [vmem:[#allocation16 + $0x70] sm:$0xff]
    %v7954 = vld [vmem:[#allocation16 + $0x78] sm:$0xff]
    %v7955 = vld [vmem:[#allocation16 + $0x80] sm:$0xff]
    %v7956 = vld [vmem:[#allocation16 + $0x88] sm:$0xff]
    %v7957 = vld [vmem:[#allocation16 + $0x90] sm:$0xff]
    %v7958 = vld [vmem:[#allocation16 + $0x98] sm:$0xff]
    %v7959 = vld [vmem:[#allocation16 + $0xa0] sm:$0xff]
    %v7960 = vld [vmem:[#allocation16 + $0xa8] sm:$0xff]
    %v7961 = vld [vmem:[#allocation16 + $0xb0] sm:$0xff]
    %v7962 = vld [vmem:[#allocation16 + $0xb8] sm:$0xff]
    %v7963 = vld [vmem:[#allocation16 + $0xc0] sm:$0xff]
    %v7964 = vld [vmem:[#allocation16 + $0xc8] sm:$0xff]
    %v7965 = vld [vmem:[#allocation16 + $0xd0] sm:$0xff]
    %v7966 = vld [vmem:[#allocation16 + $0xd8] sm:$0xff]
    %v7967 = vld [vmem:[#allocation16 + $0xe0] sm:$0xff]
    %v7968 = vld [vmem:[#allocation16 + $0xe8] sm:$0xff]
    %v7969 = vld [vmem:[#allocation16 + $0xf0] sm:$0xff]
    %v7970 = vld [vmem:[#allocation16 + $0xf8] sm:$0xff]
    %v7971 = vld [vmem:[#allocation16 + $0x100] sm:$0xff]
    %v7972 = vld [vmem:[#allocation16 + $0x108] sm:$0xff]
    %v7973 = vld [vmem:[#allocation16 + $0x110] sm:$0xff]
    %v7974 = vld [vmem:[#allocation16 + $0x118] sm:$0xff]
    %v7975 = vld [vmem:[#allocation16 + $0x120] sm:$0xff]
    %v7976 = vld [vmem:[#allocation16 + $0x128] sm:$0xff]
    %v7977 = vld [vmem:[#allocation16 + $0x130] sm:$0xff]
    %v7978 = vld [vmem:[#allocation16 + $0x138] sm:$0xff]
    %v7979 = vld [vmem:[#allocation16 + $0x140] sm:$0xff]
    %v7980 = vld [vmem:[#allocation16 + $0x148] sm:$0xff]
    %v7981 = vld [vmem:[#allocation16 + $0x150] sm:$0xff]
    %v7982 = vld [vmem:[#allocation16 + $0x158] sm:$0xff]
    %v7983 = vld [vmem:[#allocation16 + $0x160] sm:$0xff]
    %v7984 = vld [vmem:[#allocation16 + $0x168] sm:$0xff]
    %v7985 = vld [vmem:[#allocation16 + $0x170] sm:$0xff]
    %v7986 = vld [vmem:[#allocation16 + $0x178] sm:$0xff]
    %v7987 = vld [vmem:[#allocation16 + $0x180] sm:$0xff]
    %v7988 = vld [vmem:[#allocation16 + $0x188] sm:$0xff]
    %v7989 = vld [vmem:[#allocation16 + $0x190] sm:$0xff]
    %v7990 = vld [vmem:[#allocation16 + $0x198] sm:$0xff]
    %v7991 = vld [vmem:[#allocation16 + $0x1a0] sm:$0xff]
    %v7992 = vld [vmem:[#allocation16 + $0x1a8] sm:$0xff]
    %v7993 = vld [vmem:[#allocation16 + $0x1b0] sm:$0xff]
    %v7994 = vld [vmem:[#allocation16 + $0x1b8] sm:$0xff]
    %v7995 = vld [vmem:[#allocation16 + $0x1c0] sm:$0xff]
    %v7996 = vld [vmem:[#allocation16 + $0x1c8] sm:$0xff]
    %v7997 = vld [vmem:[#allocation16 + $0x1d0] sm:$0xff]
    %v7998 = vld [vmem:[#allocation16 + $0x1d8] sm:$0xff]
    %v7999 = vld [vmem:[#allocation16 + $0x1e0] sm:$0xff]
    %v8000 = vld [vmem:[#allocation16 + $0x1e8] sm:$0xff]
    %v8001 = vld [vmem:[#allocation16 + $0x1f0] sm:$0xff]
    %v8002 = vld [vmem:[#allocation16 + $0x1f8] sm:$0xff]
    %v8003 = vld [vmem:[#allocation16 + $0x200] sm:$0xff]
    %v8004 = vld [vmem:[#allocation16 + $0x208] sm:$0xff]
    %v8005 = vld [vmem:[#allocation16 + $0x210] sm:$0xff]
    %v8006 = vld [vmem:[#allocation16 + $0x218] sm:$0xff]
    %v8007 = vld [vmem:[#allocation16 + $0x220] sm:$0xff]
    %v8008 = vld [vmem:[#allocation16 + $0x228] sm:$0xff]
    %v8009 = vld [vmem:[#allocation16 + $0x230] sm:$0xff]
    %v8010 = vld [vmem:[#allocation16 + $0x238] sm:$0xff]
    %v8011 = vld [vmem:[#allocation16 + $0x240] sm:$0xff]
    %v8012 = vld [vmem:[#allocation16 + $0x248] sm:$0xff]
    %v8013 = vld [vmem:[#allocation16 + $0x250] sm:$0xff]
    %v8014 = vld [vmem:[#allocation16 + $0x258] sm:$0xff]
    %v8015 = vld [vmem:[#allocation16 + $0x260] sm:$0xff]
    %v8016 = vld [vmem:[#allocation16 + $0x268] sm:$0xff]
    %v8017 = vld [vmem:[#allocation16 + $0x270] sm:$0xff]
    %v8018 = vld [vmem:[#allocation16 + $0x278] sm:$0xff]
    %v8019 = vld [vmem:[#allocation16 + $0x280] sm:$0xff]
    %v8020 = vld [vmem:[#allocation16 + $0x288] sm:$0xff]
    %v8021 = vld [vmem:[#allocation16 + $0x290] sm:$0xff]
    %v8022 = vld [vmem:[#allocation16 + $0x298] sm:$0xff]
    %v8023 = vld [vmem:[#allocation16 + $0x2a0] sm:$0xff]
    %v8024 = vld [vmem:[#allocation16 + $0x2a8] sm:$0xff]
    %v8025 = vld [vmem:[#allocation16 + $0x2b0] sm:$0xff]
    %v8026 = vld [vmem:[#allocation16 + $0x2b8] sm:$0xff]
    %v8027 = vld [vmem:[#allocation16 + $0x2c0] sm:$0xff]
    %v8028 = vld [vmem:[#allocation16 + $0x2c8] sm:$0xff]
    %v8029 = vld [vmem:[#allocation16 + $0x2d0] sm:$0xff]
    %v8030 = vld [vmem:[#allocation16 + $0x2d8] sm:$0xff]
    %v8031 = vld [vmem:[#allocation16 + $0x2e0] sm:$0xff]
    %v8032 = vld [vmem:[#allocation16 + $0x2e8] sm:$0xff]
    %v8033 = vld [vmem:[#allocation16 + $0x2f0] sm:$0xff]
    %v8034 = vld [vmem:[#allocation16 + $0x2f8] sm:$0xff]
    %v8035 = vld [vmem:[#allocation16 + $0x300] sm:$0xff]
    %v8036 = vld [vmem:[#allocation16 + $0x308] sm:$0xff]
    %v8037 = vld [vmem:[#allocation16 + $0x310] sm:$0xff]
    %v8038 = vld [vmem:[#allocation16 + $0x318] sm:$0xff]
    %v8039 = vld [vmem:[#allocation16 + $0x320] sm:$0xff]
    %v8040 = vld [vmem:[#allocation16 + $0x328] sm:$0xff]
    %v8041 = vld [vmem:[#allocation16 + $0x330] sm:$0xff]
    %v8042 = vld [vmem:[#allocation16 + $0x338] sm:$0xff]
    %v8043 = vld [vmem:[#allocation16 + $0x340] sm:$0xff]
    %v8044 = vld [vmem:[#allocation16 + $0x348] sm:$0xff]
    %v8045 = vld [vmem:[#allocation16 + $0x350] sm:$0xff]
    %v8046 = vld [vmem:[#allocation16 + $0x358] sm:$0xff]
    %v8047 = vld [vmem:[#allocation16 + $0x360] sm:$0xff]
    %v8048 = vld [vmem:[#allocation16 + $0x368] sm:$0xff]
    %v8049 = vld [vmem:[#allocation16 + $0x370] sm:$0xff]
    %v8050 = vld [vmem:[#allocation16 + $0x378] sm:$0xff]
    %v8051 = vld [vmem:[#allocation16 + $0x380] sm:$0xff]
    %v8052 = vld [vmem:[#allocation16 + $0x388] sm:$0xff]
    %v8053 = vld [vmem:[#allocation16 + $0x390] sm:$0xff]
    %v8054 = vld [vmem:[#allocation16 + $0x398] sm:$0xff]
    %v8055 = vld [vmem:[#allocation16 + $0x3a0] sm:$0xff]
    %v8056 = vld [vmem:[#allocation16 + $0x3a8] sm:$0xff]
    %v8057 = vld [vmem:[#allocation16 + $0x3b0] sm:$0xff]
    %v8058 = vld [vmem:[#allocation16 + $0x3b8] sm:$0xff]
    %v8059 = vld [vmem:[#allocation16 + $0x3c0] sm:$0xff]
    %v8060 = vld [vmem:[#allocation16 + $0x3c8] sm:$0xff]
    %v8061 = vld [vmem:[#allocation16 + $0x3d0] sm:$0xff]
    %v8062 = vld [vmem:[#allocation16 + $0x3d8] sm:$0xff]
    %v8063 = vld [vmem:[#allocation16 + $0x3e0] sm:$0xff]
    %v8064 = vld [vmem:[#allocation16 + $0x3e8] sm:$0xff]
    %v8065 = vld [vmem:[#allocation16 + $0x3f0] sm:$0xff]
    %v8066 = vld [vmem:[#allocation16 + $0x3f8] sm:$0xff]
    %v8067 = vld [vmem:[%s8] sm:$0xf]
    %v8069 = vlaneseq
    %v8070 = vshrl.u32 %v8069, 7
    %v8071 = vsub.s32 0, %v8070
    %v8072 = vrot.slane %v8067, %v8071
    %v8073 = vlaneseq
    %v8074 = vshrl.u32 %v8073, 7
    %v8075 = vsub.s32 1, %v8074
    %v8076 = vrot.slane %v8067, %v8075
    %v8077 = vlaneseq
    %v8078 = vshrl.u32 %v8077, 7
    %v8079 = vsub.s32 2, %v8078
    %v8080 = vrot.slane %v8067, %v8079
    %v8081 = vlaneseq
    %v8082 = vshrl.u32 %v8081, 7
    %v8083 = vsub.s32 3, %v8082
    %v8084 = vrot.slane %v8067, %v8083
    %8089 = vmatprep.subr.mxu0 %v7940
    %8090 = vmatpush1.msra.mxu0 %v7939
    %8091 = vmatprep.subr.mxu0 %v7944
    %8092 = vmatpush1.msra.mxu0 %v7943
    %8093 = vmatprep.subr.mxu0 %v7948
    %8094 = vmatpush1.msra.mxu0 %v7947
    %8095 = vmatprep.subr.mxu0 %v7952
    %8096 = vmatpush1.msra.mxu0 %v7951
    %8097 = vmatprep.subr.mxu0 %v7956
    %8098 = vmatpush1.msra.mxu0 %v7955
    %8099 = vmatprep.subr.mxu0 %v7960
    %8100 = vmatpush1.msra.mxu0 %v7959
    %8101 = vmatprep.subr.mxu0 %v7964
    %8102 = vmatpush1.msra.mxu0 %v7963
    %8103 = vmatprep.subr.mxu0 %v7968
    %8104 = vmatpush1.msra.mxu0 %v7967
    %8105 = vmatprep.subr.mxu0 %v7972
    %8106 = vmatpush1.msra.mxu0 %v7971
    %8107 = vmatprep.subr.mxu0 %v7976
    %8108 = vmatpush1.msra.mxu0 %v7975
    %8109 = vmatprep.subr.mxu0 %v7980
    %8110 = vmatpush1.msra.mxu0 %v7979
    %8111 = vmatprep.subr.mxu0 %v7984
    %8112 = vmatpush1.msra.mxu0 %v7983
    %8113 = vmatprep.subr.mxu0 %v7988
    %8114 = vmatpush1.msra.mxu0 %v7987
    %8115 = vmatprep.subr.mxu0 %v7992
    %8116 = vmatpush1.msra.mxu0 %v7991
    %8117 = vmatprep.subr.mxu0 %v7996
    %8118 = vmatpush1.msra.mxu0 %v7995
    %8119 = vmatprep.subr.mxu0 %v8000
    %8120 = vmatpush1.msra.mxu0 %v7999
    %8121 = vmatprep.subr.mxu0 %v8004
    %8122 = vmatpush1.msra.mxu0 %v8003
    %8123 = vmatprep.subr.mxu0 %v8008
    %8124 = vmatpush1.msra.mxu0 %v8007
    %8125 = vmatprep.subr.mxu0 %v8012
    %8126 = vmatpush1.msra.mxu0 %v8011
    %8127 = vmatprep.subr.mxu0 %v8016
    %8128 = vmatpush1.msra.mxu0 %v8015
    %8129 = vmatprep.subr.mxu0 %v8020
    %8130 = vmatpush1.msra.mxu0 %v8019
    %8131 = vmatprep.subr.mxu0 %v8024
    %8132 = vmatpush1.msra.mxu0 %v8023
    %8133 = vmatprep.subr.mxu0 %v8028
    %8134 = vmatpush1.msra.mxu0 %v8027
    %8135 = vmatprep.subr.mxu0 %v8032
    %8136 = vmatpush1.msra.mxu0 %v8031
    %8137 = vmatprep.subr.mxu0 %v8036
    %8138 = vmatpush1.msra.mxu0 %v8035
    %8139 = vmatprep.subr.mxu0 %v8040
    %8140 = vmatpush1.msra.mxu0 %v8039
    %8141 = vmatprep.subr.mxu0 %v8044
    %8142 = vmatpush1.msra.mxu0 %v8043
    %8143 = vmatprep.subr.mxu0 %v8048
    %8144 = vmatpush1.msra.mxu0 %v8047
    %8145 = vmatprep.subr.mxu0 %v8052
    %8146 = vmatpush1.msra.mxu0 %v8051
    %8147 = vmatprep.subr.mxu0 %v8056
    %8148 = vmatpush1.msra.mxu0 %v8055
    %8149 = vmatprep.subr.mxu0 %v8060
    %8150 = vmatpush1.msra.mxu0 %v8059
    %8151 = vmatprep.subr.mxu0 %v8064
    %8152 = vmatpush1.msra.mxu0 %v8063
    %8153 = vmatprep.mubr.f32.mxu0 %v7938
    %8154 = vmatmul.mubr.f32.gmra.mrb[0].mxu0 %v7937
    %v8155 = vpop.f32.mrb[0].mxu0
    %v8156 = vadd.f32 %v8072, %v8155
    %v8157 = vpop.f32.mrb[0].mxu0
    %v8158 = vadd.f32 %v8076, %v8157
    %8159 = vdwg.mxu0
    %8160 = vmatprep.subr.mxu0 %v7942
    %8161 = vmatpush1.msra.mxu0 %v7941
    %8162 = vmatprep.subr.mxu0 %v7946
    %8163 = vmatpush1.msra.mxu0 %v7945
    %8164 = vmatprep.subr.mxu0 %v7950
    %8165 = vmatpush1.msra.mxu0 %v7949
    %8166 = vmatprep.subr.mxu0 %v7954
    %8167 = vmatpush1.msra.mxu0 %v7953
    %8168 = vmatprep.subr.mxu0 %v7958
    %8169 = vmatpush1.msra.mxu0 %v7957
    %8170 = vmatprep.subr.mxu0 %v7962
    %8171 = vmatpush1.msra.mxu0 %v7961
    %8172 = vmatprep.subr.mxu0 %v7966
    %8173 = vmatpush1.msra.mxu0 %v7965
    %8174 = vmatprep.subr.mxu0 %v7970
    %8175 = vmatpush1.msra.mxu0 %v7969
    %8176 = vmatprep.subr.mxu0 %v7974
    %8177 = vmatpush1.msra.mxu0 %v7973
    %8178 = vmatprep.subr.mxu0 %v7978
    %8179 = vmatpush1.msra.mxu0 %v7977
    %8180 = vmatprep.subr.mxu0 %v7982
    %8181 = vmatpush1.msra.mxu0 %v7981
    %8182 = vmatprep.subr.mxu0 %v7986
    %8183 = vmatpush1.msra.mxu0 %v7985
    %8184 = vmatprep.subr.mxu0 %v7990
    %8185 = vmatpush1.msra.mxu0 %v7989
    %8186 = vmatprep.subr.mxu0 %v7994
    %8187 = vmatpush1.msra.mxu0 %v7993
    %8188 = vmatprep.subr.mxu0 %v7998
    %8189 = vmatpush1.msra.mxu0 %v7997
    %8190 = vmatprep.subr.mxu0 %v8002
    %8191 = vmatpush1.msra.mxu0 %v8001
    %8192 = vmatprep.subr.mxu0 %v8006
    %8193 = vmatpush1.msra.mxu0 %v8005
    %8194 = vmatprep.subr.mxu0 %v8010
    %8195 = vmatpush1.msra.mxu0 %v8009
    %8196 = vmatprep.subr.mxu0 %v8014
    %8197 = vmatpush1.msra.mxu0 %v8013
    %8198 = vmatprep.subr.mxu0 %v8018
    %8199 = vmatpush1.msra.mxu0 %v8017
    %8200 = vmatprep.subr.mxu0 %v8022
    %8201 = vmatpush1.msra.mxu0 %v8021
    %8202 = vmatprep.subr.mxu0 %v8026
    %8203 = vmatpush1.msra.mxu0 %v8025
    %8204 = vmatprep.subr.mxu0 %v8030
    %8205 = vmatpush1.msra.mxu0 %v8029
    %8206 = vmatprep.subr.mxu0 %v8034
    %8207 = vmatpush1.msra.mxu0 %v8033
    %8208 = vmatprep.subr.mxu0 %v8038
    %8209 = vmatpush1.msra.mxu0 %v8037
    %8210 = vmatprep.subr.mxu0 %v8042
    %8211 = vmatpush1.msra.mxu0 %v8041
    %8212 = vmatprep.subr.mxu0 %v8046
    %8213 = vmatpush1.msra.mxu0 %v8045
    %8214 = vmatprep.subr.mxu0 %v8050
    %8215 = vmatpush1.msra.mxu0 %v8049
    %8216 = vmatprep.subr.mxu0 %v8054
    %8217 = vmatpush1.msra.mxu0 %v8053
    %8218 = vmatprep.subr.mxu0 %v8058
    %8219 = vmatpush1.msra.mxu0 %v8057
    %8220 = vmatprep.subr.mxu0 %v8062
    %8221 = vmatpush1.msra.mxu0 %v8061
    %8222 = vmatprep.subr.mxu0 %v8066
    %8223 = vmatpush1.msra.mxu0 %v8065
    %8224 = vmatprep.mubr.f32.mxu0 %v7938
    %8225 = vmatmul.mubr.f32.gmra.mrb[0].mxu0 %v7937
    %v8226 = vpop.f32.mrb[0].mxu0
    %v8227 = vadd.f32 %v8080, %v8226
    %v8228 = vpop.f32.mrb[0].mxu0
    %v8229 = vadd.f32 %v8084, %v8228
    %8230 = vdwg.mxu0
    %v8231 = vxor.u32 %v8156, 2147483648
    %v8232 = vmul.f32 %v8231, 1.442695
    %v8233 = vpow.pop %v8232
    %v8234 = vadd.f32 %v8233, 1.0
    %v8235 = vrcp.pop %v8234
    %v8236 = vmul.f32 1.0, %v8235
    %v8237 = vxor.u32 %v8158, 2147483648
    %v8238 = vmul.f32 %v8237, 1.442695
    %v8239 = vpow.pop %v8238
    %v8240 = vadd.f32 %v8239, 1.0
    %v8241 = vrcp.pop %v8240
    %v8242 = vmul.f32 1.0, %v8241
    %v8243 = vtanh.pop %v8227
    %v8244 = vxor.u32 %v8229, 2147483648
    %v8245 = vmul.f32 %v8244, 1.442695
    %v8246 = vpow.pop %v8245
    %v8247 = vadd.f32 %v8246, 1.0
    %v8248 = vrcp.pop %v8247
    %v8249 = vmul.f32 1.0, %v8248
    %v8250 = vmul.f32 %v8242, 0.0
    %v8251 = vmul.f32 %v8236, %v8243
    %v8252 = vadd.f32 %v8250, %v8251
    %v8253 = vtanh.pop %v8252
    %v8254 = vmul.f32 %v8249, %v8253
    %v8255 = vld [vmem:[#allocation17] sm:$0xff]
    %v8256 = vld [vmem:[#allocation17 + $0x8] sm:$0xff]
    %v8257 = vld [vmem:[#allocation17 + $0x10] sm:$0xff]
    %v8258 = vld [vmem:[#allocation17 + $0x18] sm:$0xff]
    %v8259 = vld [vmem:[#allocation17 + $0x20] sm:$0xff]
    %v8260 = vld [vmem:[#allocation17 + $0x28] sm:$0xff]
    %v8261 = vld [vmem:[#allocation17 + $0x30] sm:$0xff]
    %v8262 = vld [vmem:[#allocation17 + $0x38] sm:$0xff]
    %v8263 = vld [vmem:[#allocation17 + $0x40] sm:$0xff]
    %v8264 = vld [vmem:[#allocation17 + $0x48] sm:$0xff]
    %v8265 = vld [vmem:[#allocation17 + $0x50] sm:$0xff]
    %v8266 = vld [vmem:[#allocation17 + $0x58] sm:$0xff]
    %v8267 = vld [vmem:[#allocation17 + $0x60] sm:$0xff]
    %v8268 = vld [vmem:[#allocation17 + $0x68] sm:$0xff]
    %v8269 = vld [vmem:[#allocation17 + $0x70] sm:$0xff]
    %v8270 = vld [vmem:[#allocation17 + $0x78] sm:$0xff]
    %v8271 = vld [vmem:[#allocation19] sm:$0xff]
    %v8272 = vld [vmem:[#allocation19 + $0x8] sm:$0xff]
    %v8273 = vld [vmem:[#allocation19 + $0x10] sm:$0xff]
    %v8274 = vld [vmem:[#allocation19 + $0x18] sm:$0xff]
    %v8275 = vld [vmem:[#allocation19 + $0x20] sm:$0xff]
    %v8276 = vld [vmem:[#allocation19 + $0x28] sm:$0xff]
    %v8277 = vld [vmem:[#allocation19 + $0x30] sm:$0xff]
    %v8278 = vld [vmem:[#allocation19 + $0x38] sm:$0xff]
    %v8279 = vld [vmem:[#allocation19 + $0x40] sm:$0xff]
    %v8280 = vld [vmem:[#allocation19 + $0x48] sm:$0xff]
    %v8281 = vld [vmem:[#allocation19 + $0x50] sm:$0xff]
    %v8282 = vld [vmem:[#allocation19 + $0x58] sm:$0xff]
    %v8283 = vld [vmem:[#allocation19 + $0x60] sm:$0xff]
    %v8284 = vld [vmem:[#allocation19 + $0x68] sm:$0xff]
    %v8285 = vld [vmem:[#allocation19 + $0x70] sm:$0xff]
    %v8286 = vld [vmem:[#allocation19 + $0x78] sm:$0xff]
    %8287 = vmatprep.subr.mxu0 0.0
    %8288 = vmatpush1.msra.mxu0 %v8271
    %8289 = vmatprep.subr.mxu0 0.0
    %8290 = vmatpush1.msra.mxu0 %v8272
    %8291 = vmatprep.subr.mxu0 0.0
    %8292 = vmatpush1.msra.mxu0 %v8273
    %8293 = vmatprep.subr.mxu0 0.0
    %8294 = vmatpush1.msra.mxu0 %v8274
    %8295 = vmatprep.subr.mxu0 0.0
    %8296 = vmatpush1.msra.mxu0 %v8275
    %8297 = vmatprep.subr.mxu0 0.0
    %8298 = vmatpush1.msra.mxu0 %v8276
    %8299 = vmatprep.subr.mxu0 0.0
    %8300 = vmatpush1.msra.mxu0 %v8277
    %8301 = vmatprep.subr.mxu0 0.0
    %8302 = vmatpush1.msra.mxu0 %v8278
    %8303 = vmatprep.subr.mxu0 0.0
    %8304 = vmatpush1.msra.mxu0 %v8279
    %8305 = vmatprep.subr.mxu0 0.0
    %8306 = vmatpush1.msra.mxu0 %v8280
    %8307 = vmatprep.subr.mxu0 0.0
    %8308 = vmatpush1.msra.mxu0 %v8281
    %8309 = vmatprep.subr.mxu0 0.0
    %8310 = vmatpush1.msra.mxu0 %v8282
    %8311 = vmatprep.subr.mxu0 0.0
    %8312 = vmatpush1.msra.mxu0 %v8283
    %8313 = vmatprep.subr.mxu0 0.0
    %8314 = vmatpush1.msra.mxu0 %v8284
    %8315 = vmatprep.subr.mxu0 0.0
    %8316 = vmatpush1.msra.mxu0 %v8285
    %8317 = vmatprep.subr.mxu0 0.0
    %8318 = vmatpush1.msra.mxu0 %v8286
    %8319 = vmatprep.subr.mxu0 0.0
    %8320 = vmatpush1.msra.mxu0 0.0
    %8321 = vmatprep.subr.mxu0 0.0
    %8322 = vmatpush1.msra.mxu0 0.0
    %8323 = vmatprep.subr.mxu0 0.0
    %8324 = vmatpush1.msra.mxu0 0.0
    %8325 = vmatprep.subr.mxu0 0.0
    %8326 = vmatpush1.msra.mxu0 0.0
    %8327 = vmatprep.subr.mxu0 0.0
    %8328 = vmatpush1.msra.mxu0 0.0
    %8329 = vmatprep.subr.mxu0 0.0
    %8330 = vmatpush1.msra.mxu0 0.0
    %8331 = vmatprep.subr.mxu0 0.0
    %8332 = vmatpush1.msra.mxu0 0.0
    %8333 = vmatprep.subr.mxu0 0.0
    %8334 = vmatpush1.msra.mxu0 0.0
    %8335 = vmatprep.subr.mxu0 0.0
    %8336 = vmatpush1.msra.mxu0 0.0
    %8337 = vmatprep.subr.mxu0 0.0
    %8338 = vmatpush1.msra.mxu0 0.0
    %8339 = vmatprep.subr.mxu0 0.0
    %8340 = vmatpush1.msra.mxu0 0.0
    %8341 = vmatprep.subr.mxu0 0.0
    %8342 = vmatpush1.msra.mxu0 0.0
    %8343 = vmatprep.subr.mxu0 0.0
    %8344 = vmatpush1.msra.mxu0 0.0
    %8345 = vmatprep.subr.mxu0 0.0
    %8346 = vmatpush1.msra.mxu0 0.0
    %8347 = vmatprep.subr.mxu0 0.0
    %8348 = vmatpush1.msra.mxu0 0.0
    %8349 = vmatprep.subr.mxu0 0.0
    %8350 = vmatpush1.msra.mxu0 0.0
    %8351 = vmatprep.mubr.f32.mxu0 0.0
    %8352 = vmatmul.mubr.f32.gmra.mrb[0].mxu0 %v8254
    %v8353 = vpop.f32.mrb[0].mxu0
    %v8354 = vadd.f32 0.0, %v8353
    %v8355 = vpop.f32.mrb[0].mxu0
    %8356 = vdwg.mxu0
    %8357 = vmatprep.subr.mxu0 0.0
    %8358 = vmatpush1.msra.mxu0 %v8255
    %8359 = vmatprep.subr.mxu0 0.0
    %8360 = vmatpush1.msra.mxu0 %v8256
    %8361 = vmatprep.subr.mxu0 0.0
    %8362 = vmatpush1.msra.mxu0 %v8257
    %8363 = vmatprep.subr.mxu0 0.0
    %8364 = vmatpush1.msra.mxu0 %v8258
    %8365 = vmatprep.subr.mxu0 0.0
    %8366 = vmatpush1.msra.mxu0 %v8259
    %8367 = vmatprep.subr.mxu0 0.0
    %8368 = vmatpush1.msra.mxu0 %v8260
    %8369 = vmatprep.subr.mxu0 0.0
    %8370 = vmatpush1.msra.mxu0 %v8261
    %8371 = vmatprep.subr.mxu0 0.0
    %8372 = vmatpush1.msra.mxu0 %v8262
    %8373 = vmatprep.subr.mxu0 0.0
    %8374 = vmatpush1.msra.mxu0 %v8263
    %8375 = vmatprep.subr.mxu0 0.0
    %8376 = vmatpush1.msra.mxu0 %v8264
    %8377 = vmatprep.subr.mxu0 0.0
    %8378 = vmatpush1.msra.mxu0 %v8265
    %8379 = vmatprep.subr.mxu0 0.0
    %8380 = vmatpush1.msra.mxu0 %v8266
    %8381 = vmatprep.subr.mxu0 0.0
    %8382 = vmatpush1.msra.mxu0 %v8267
    %8383 = vmatprep.subr.mxu0 0.0
    %8384 = vmatpush1.msra.mxu0 %v8268
    %8385 = vmatprep.subr.mxu0 0.0
    %8386 = vmatpush1.msra.mxu0 %v8269
    %8387 = vmatprep.subr.mxu0 0.0
    %8388 = vmatpush1.msra.mxu0 %v8270
    %8389 = vmatprep.subr.mxu0 0.0
    %8390 = vmatpush1.msra.mxu0 0.0
    %8391 = vmatprep.subr.mxu0 0.0
    %8392 = vmatpush1.msra.mxu0 0.0
    %8393 = vmatprep.subr.mxu0 0.0
    %8394 = vmatpush1.msra.mxu0 0.0
    %8395 = vmatprep.subr.mxu0 0.0
    %8396 = vmatpush1.msra.mxu0 0.0
    %8397 = vmatprep.subr.mxu0 0.0
    %8398 = vmatpush1.msra.mxu0 0.0
    %8399 = vmatprep.subr.mxu0 0.0
    %8400 = vmatpush1.msra.mxu0 0.0
    %8401 = vmatprep.subr.mxu0 0.0
    %8402 = vmatpush1.msra.mxu0 0.0
    %8403 = vmatprep.subr.mxu0 0.0
    %8404 = vmatpush1.msra.mxu0 0.0
    %8405 = vmatprep.subr.mxu0 0.0
    %8406 = vmatpush1.msra.mxu0 0.0
    %8407 = vmatprep.subr.mxu0 0.0
    %8408 = vmatpush1.msra.mxu0 0.0
    %8409 = vmatprep.subr.mxu0 0.0
    %8410 = vmatpush1.msra.mxu0 0.0
    %8411 = vmatprep.subr.mxu0 0.0
    %8412 = vmatpush1.msra.mxu0 0.0
    %8413 = vmatprep.subr.mxu0 0.0
    %8414 = vmatpush1.msra.mxu0 0.0
    %8415 = vmatprep.subr.mxu0 0.0
    %8416 = vmatpush1.msra.mxu0 0.0
    %8417 = vmatprep.subr.mxu0 0.0
    %8418 = vmatpush1.msra.mxu0 0.0
    %8419 = vmatprep.subr.mxu0 0.0
    %8420 = vmatpush1.msra.mxu0 0.0
    %8421 = vmatprep.mubr.f32.mxu0 0.0
    %8422 = vmatmul.mubr.f32.gmra.mrb[0].mxu0 %v7936
    %v8423 = vpop.f32.mrb[0].mxu0
    %v8424 = vadd.f32 %v8354, %v8423
    %v8425 = vpop.f32.mrb[0].mxu0
    %8426 = vdwg.mxu0
    %v8427 = vld [vmem:[%s11] sm:$0x1]
    %v8429 = vlaneseq
    %v8430 = vshrl.u32 %v8429, 7
    %v8431 = vsub.s32 0, %v8430
    %v8432 = vrot.slane %v8427, %v8431
    %v8434 = vadd.f32 %v8424, %v8432
    %8435 = vst [vmem:[#allocation20] sm:$0xff] %v8434
    // Predicated region
    $region86: #{tpu_custom_call.1} parent=1 // pred_check
      _
    $region87: #{tpu_custom_call.1} parent=1 // pred_check_branch
      %8437 = sbr.rel (0) target = $region89
    $region88: #{tpu_custom_call.1} parent=1 // pred_region
      %s8439 = ssub.s32 128, 128
      %8440 = vsyncadd [#allocation7], %s8439
      %s8442 = sshll.u32 [#allocation20], 4
      %s8443 = int_to_ptr.vmem [resolvable:$true] %s8442
      %8445 = dma.vmem_to_hbm [thread:$0]  %s8443, 128, %s12, [#allocation7]
    $region89: #{tpu_custom_call.1} parent=1 // pred_fallthru
      _
    // Predicated region
    $region90: #{tpu_custom_call.1} parent=1 // pred_check
      _
    $region91: #{tpu_custom_call.1} parent=1 // pred_check_branch
      %8447 = sbr.rel (0) target = $region93
    $region92: #{tpu_custom_call.1} parent=1 // pred_region
      %8448 = dma.done [#allocation7], 128
    $region93: #{tpu_custom_call.1} parent=1 // pred_fallthru
      _
    %8449 = vsyncpa [#allocation6], 1
    %8450 = vsyncpa [#allocation9], 1
    %8451 = vsyncpa [#allocation12], 1
    %8452 = vsyncpa [#allocation15], 1
    %8453 = vsyncpa [#allocation18], 1
    %8454 = vsyncpa [#allocation7], 1

</llo_original>
